<compile_context>
chip_gen: v6e
topology: v6e:2x2x1
jax: 0.10.0
libtpu: 0.0.40
codegen_flags: <defaults>
</compile_context>

<pallas_src>
import numpy as np
import jax
import jax.numpy as jnp
from jax import lax
from jax.experimental import pallas as pl
from jax.experimental.pallas import tpu as pltpu

LEAKY_SLOPE = 0.01
BN_EPS = 1e-5

# scale/bias table row indices
SB_S0, SB_B0 = 0, 1
SB_S36, SB_B36 = 2, 3
SB_S4, SB_B4 = 4, 5
SB_S7, SB_B7 = 6, 7
SB_BO = 8
SB_SP, SB_BP = 9, 10


# ----------------------------------------------------------------------------
# Host-side resampling matrices
# ----------------------------------------------------------------------------
def avgpool_matrix(out_size, in_size):
    # 1-D factor of AvgPool2d(k=3, s=2, p=1, count_include_pad=True).
    M = np.zeros((out_size, in_size), np.float32)
    for o in range(out_size):
        for k in range(3):
            i = 2 * o + k - 1
            if 0 <= i < in_size:
                M[o, i] = 1.0 / 3.0
    return M


def bilinear_matrix(out_size, in_size):
    # F.interpolate(mode='bilinear', align_corners=False).
    # TODO(synk): very old PyTorch F.upsample used align_corners=True; flip the
    # source-coordinate formula here if the reference checkpoint needs it.
    o = np.arange(out_size, dtype=np.float64)
    src = (o + 0.5) * (in_size / out_size) - 0.5
    i0 = np.floor(src).astype(np.int64)
    frac = src - i0
    i0c = np.clip(i0, 0, in_size - 1)
    i1c = np.clip(i0 + 1, 0, in_size - 1)
    M = np.zeros((out_size, in_size), np.float32)
    for r in range(out_size):
        M[r, i0c[r]] += 1.0 - frac[r]
        M[r, i1c[r]] += frac[r]
    return M


# ----------------------------------------------------------------------------
# Fused FEAM kernel (B images per grid step, everything VMEM/vreg-resident)
# ----------------------------------------------------------------------------
def make_feam_kernel(B, H, W, C, Cin, half, Ho, Wo):
    BH = B * H
    WC = W * C
    PW = Wo * half

    def leaky(y):
        return jnp.where(y > 0, y, LEAKY_SLOPE * y)

    def kernel(x_ref, win_ref, wd1_ref, w36_ref, wo36_ref, sb_ref,
               ahb_ref, mpool_ref, uhb_ref, mup_ref, o_ref):
        # Per-image row index, used to mask rows whose vertical tap falls in the
        # zero padding (also kills cross-image / wrap-around contamination).
        rows = lax.broadcasted_iota(jnp.int32, (BH, 1), 0) % H
        valid_dn = {d: rows < (H - d) for d in (1, 3, 6)}   # tap reads row r + d
        valid_up = {d: rows >= d for d in (1, 3, 6)}        # tap reads row r - d

        def shift_tap(y, d):
            # y[r] -> y[r + d] per image, zero where the tap is out of the image.
            if d == 0:
                return y
            rolled = pltpu.roll(y, (-d) % BH, 0)
            valid = valid_dn[d] if d > 0 else valid_up[-d]
            return jnp.where(valid, rolled, 0.0)

        def banded_conv(xbf, taps):
            # taps: list of (2-D bf16 banded weight, vertical offset d).
            # kx/channel contraction + horizontal zero padding live inside the
            # banded matrix; vertical taps = roll + mask after the matmul.
            acc = None
            for w2d, d in taps:
                y = shift_tap(jnp.dot(xbf, w2d,
                                      preferred_element_type=jnp.float32), d)
                acc = y if acc is None else acc + y
            return acc

        def conv_d1(xbf, widx):
            return banded_conv(xbf, [(wd1_ref[widx, ky], ky - 1)
                                     for ky in range(3)])

        def sbrow(i, width=WC):
            return sb_ref[i:i + 1, 0:width]

        # ---- conv_in: 3x3 (no bias) + LeakyReLU ------------------------------
        x = leaky(banded_conv(x_ref[...].astype(jnp.bfloat16),
                              [(win_ref[ky], ky - 1) for ky in range(3)]))
        # ---- conv[0..2]: 3x3 (no bias) + BN + LeakyReLU ----------------------
        z = leaky(conv_d1(x.astype(jnp.bfloat16), 0)
                  * sbrow(SB_S0) + sbrow(SB_B0))
        zbf = z.astype(jnp.bfloat16)

        # ---- ASPP: fused dil-3 / dil-6 branches, BN + ReLU -------------------
        o36 = jnp.maximum(
            banded_conv(zbf, [(w36_ref[t], d)
                              for t, d in enumerate((-6, -3, 0, 3, 6))])
            * sbrow(SB_S36) + sbrow(SB_B36), 0.0)                    # (BH, WC)

        # ---- ASPP: image-pool branch (avgpool 3/2/1 -> 1x1+BN+ReLU -> up) ----
        t = jnp.dot(ahb_ref[...], zbf,
                    preferred_element_type=jnp.float32)              # (B*Ho, WC)
        pooled = jnp.dot(t.astype(jnp.bfloat16), mpool_ref[...],
                         preferred_element_type=jnp.float32)         # (B*Ho, PW)
        pa = jnp.maximum(pooled * sbrow(SB_SP, PW) + sbrow(SB_BP, PW), 0.0)
        u = jnp.dot(uhb_ref[...], pa.astype(jnp.bfloat16),
                    preferred_element_type=jnp.float32)              # (BH, PW)

        # ---- ASPP conv_out (1x1 + bias); channel concat folded into 2 matmuls
        asp = (jnp.dot(o36.astype(jnp.bfloat16), wo36_ref[...],
                       preferred_element_type=jnp.float32)
               + jnp.dot(u.astype(jnp.bfloat16), mup_ref[...],
                         preferred_element_type=jnp.float32)
               + sbrow(SB_BO))

        # ---- conv[4..6], conv[7..9]: 3x3 + BN + LeakyReLU --------------------
        z = leaky(conv_d1(asp.astype(jnp.bfloat16), 1)
                  * sbrow(SB_S4) + sbrow(SB_B4))
        z = leaky(conv_d1(z.astype(jnp.bfloat16), 2)
                  * sbrow(SB_S7) + sbrow(SB_B7))
        # ---- conv[10] (no bias) + Sigmoid, FEAM residual gate z*x + x --------
        g = jax.nn.sigmoid(conv_d1(z.astype(jnp.bfloat16), 3))
        o_ref[...] = (x * (g + 1.0)).astype(o_ref.dtype)

    return kernel


# ----------------------------------------------------------------------------
# Wrapper: host-side weight expansion/packing + single pallas_call
# ----------------------------------------------------------------------------
def feam_forward(x_nhwc, p, C, *, batch_block=None):
    N, H, W, Cin = x_nhwc.shape
    half = C // 2
    Ho = (H + 2 - 3) // 2 + 1
    Wo = (W + 2 - 3) // 2 + 1
    WC = W * C
    PW = Wo * half
    bf, f32 = jnp.bfloat16, jnp.float32

    # Images per grid step: fill the MXU M dimension (B*H rows, B=8 -> M=128)
    # while keeping >=2 grid steps when N>=2 so both v7x TensorCores get work.
    B = batch_block
    if B is None:
        B = max(1, min(8, N))
        while B > 1 and pl.cdiv(N, B) < 2:
            B //= 2
    steps = pl.cdiv(N, B)
    Np = steps * B

    def np_(a):
        return np.asarray(jax.device_get(a), np.float32)

    def row_conv(w, dil):
        # (3,3,cin,cout) conv weight -> 3 banded (W*cin, W*cout) matrices (one
        # per vertical tap) carrying kx/channel contraction + horizontal pad.
        wn = np_(w)
        _, _, cin, cout = wn.shape
        mats = np.zeros((3, W * cin, W * cout), np.float32)
        for ky in range(3):
            for kx in range(3):
                off = (kx - 1) * dil
                for wo_ in range(W):
                    j = wo_ + off
                    if 0 <= j < W:
                        mats[ky, j * cin:(j + 1) * cin,
                             wo_ * cout:(wo_ + 1) * cout] = wn[ky, kx]
        return mats

    def fused_aspp_banded(w3, w6):
        # dil-3 and dil-6 branches fused: 5 vertical taps {-6,-3,0,3,6}; per
        # pixel the output channels are [dil3 half | dil6 half] (128 lanes).
        w3n, w6n = np_(w3), np_(w6)
        cin, cout = C, 2 * half
        taps = (-6, -3, 0, 3, 6)
        mats = np.zeros((len(taps), W * cin, W * cout), np.float32)
        for ti, d in enumerate(taps):
            for wn, dil, c0 in ((w3n, 3, 0), (w6n, 6, half)):
                if d % dil != 0 or abs(d) > dil:
                    continue
                ky = d // dil + 1
                for kx in range(3):
                    off = (kx - 1) * dil
                    for wo_ in range(W):
                        j = wo_ + off
                        if 0 <= j < W:
                            mats[ti, j * cin:(j + 1) * cin,
                                 wo_ * cout + c0: wo_ * cout + c0 + half] = wn[ky, kx]
        return mats

    tile = lambda v, reps: np.tile(np_(v), reps)

    # Packed per-lane scale/bias table (11 rows x WC lanes).
    sb = np.zeros((11, WC), np.float32)
    sb[SB_S0], sb[SB_B0] = tile(p["s0"], W), tile(p["b0"], W)
    sb[SB_S36] = np.tile(np.concatenate([np_(p["aspp_s3"]), np_(p["aspp_s6"])]), W)
    sb[SB_B36] = np.tile(np.concatenate([np_(p["aspp_b3"]), np_(p["aspp_b6"])]), W)
    sb[SB_S4], sb[SB_B4] = tile(p["s4"], W), tile(p["b4"], W)
    sb[SB_S7], sb[SB_B7] = tile(p["s7"], W), tile(p["b7"], W)
    sb[SB_BO] = tile(p["aspp_bo"], W)
    sb[SB_SP, :PW] = tile(p["aspp_sp"], Wo)
    sb[SB_BP, :PW] = tile(p["aspp_bp"], Wo)

    # Pool / upsample matrices; 1x1 convs folded into them host-side.
    Ah, Aw = avgpool_matrix(Ho, H), avgpool_matrix(Wo, W)
    Uh, Uw = bilinear_matrix(H, Ho), bilinear_matrix(W, Wo)
    eyeB = np.eye(B, dtype=np.float32)
    AhB = np.kron(eyeB, Ah)                                     # (B*Ho, B*H)
    UhB = np.kron(eyeB, Uh)                                     # (B*H,  B*Ho)
    AwC = np.kron(Aw.T, np.eye(C, dtype=np.float32))            # (W*C, Wo*C)
    UwC = np.kron(Uw.T, np.eye(half, dtype=np.float32))         # (Wo*h, W*h)
    wp_blk = np.kron(np.eye(Wo, dtype=np.float32),
                     np_(p["aspp_wp"]).reshape(C, half))        # (Wo*C, Wo*h)
    m_pool = AwC @ wp_blk                                       # (W*C, Wo*h)
    wo = np_(p["aspp_wo"]).reshape(3 * half, C)
    wo36_blk = np.kron(np.eye(W, dtype=np.float32), wo[:2 * half])      # (WC, WC)
    m_up = UwC @ np.kron(np.eye(W, dtype=np.float32), wo[2 * half:])    # (Wo*h, WC)

    wd1 = np.stack([row_conv(p["w0"], 1), row_conv(p["w4"], 1),
                    row_conv(p["w7"], 1), row_conv(p["w10"], 1)])        # (4,3,WC,WC)

    # Activations pre-flattened to a lane-dense (rows, lanes) slab.
    x_flat = x_nhwc.astype(f32).reshape(N * H, W * Cin)
    if Np != N:
        x_flat = jnp.pad(x_flat, ((0, (Np - N) * H), (0, 0)))

    operands = [
        x_flat,
        jnp.asarray(row_conv(p["w_in"], 1), bf),        # (3, W*Cin, WC)
        jnp.asarray(wd1, bf),                           # (4, 3, WC, WC)
        jnp.asarray(fused_aspp_banded(p["aspp_w3"], p["aspp_w6"]), bf),  # (5, WC, WC)
        jnp.asarray(wo36_blk, bf),                      # (WC, WC)
        jnp.asarray(sb, f32),                           # (11, WC)
        jnp.asarray(AhB, bf),                           # (B*Ho, B*H)
        jnp.asarray(m_pool, bf),                        # (WC, PW)
        jnp.asarray(UhB, bf),                           # (B*H, B*Ho)
        jnp.asarray(m_up, bf),                          # (PW, WC)
    ]

    def full_spec(a):
        zeros = (0,) * a.ndim
        return pl.BlockSpec(a.shape, lambda n, _z=zeros: _z)

    in_specs = [pl.BlockSpec((B * H, W * Cin), lambda n: (n, 0))]
    in_specs += [full_spec(a) for a in operands[1:]]

    out = pl.pallas_call(
        make_feam_kernel(B, H, W, C, Cin, half, Ho, Wo),
        out_shape=jax.ShapeDtypeStruct((Np * H, WC), f32),
        grid=(steps,),
        in_specs=in_specs,
        out_specs=pl.BlockSpec((B * H, WC), lambda n: (n, 0)),
        compiler_params=pltpu.CompilerParams(
            dimension_semantics=("parallel",)),
    )(*operands)
    return out[:N * H].reshape(N, H, W, C)


# ----------------------------------------------------------------------------
# Parameter initialization (deterministic, synthetic), BN folded to scale/bias
# ----------------------------------------------------------------------------
def init_params(key, C, first=False):
    keys = jax.random.split(key, 64)
    it = iter(keys)
    nk = lambda: next(it)

    def conv_w(kh, kw, cin, cout):
        return 0.1 * jax.random.normal(nk(), (kh, kw, cin, cout), jnp.float32)

    def bn_params(c):
        gamma = 1.0 + 0.1 * jax.random.normal(nk(), (c,), jnp.float32)
        beta = 0.1 * jax.random.normal(nk(), (c,), jnp.float32)
        mean = 0.1 * jax.random.normal(nk(), (c,), jnp.float32)
        var = 0.5 + jax.random.uniform(nk(), (c,), jnp.float32)
        return gamma, beta, mean, var

    def fold(gamma, beta, mean, var, conv_bias=None):
        scale = gamma / jnp.sqrt(var + BN_EPS)
        b = beta - mean * scale
        if conv_bias is not None:
            b = b + conv_bias * scale
        return scale, b

    cin = C if first else 3 * C
    half = C // 2
    p = {}
    p["w_in"] = conv_w(3, 3, cin, C)                       # conv_in (no bias)
    p["w0"] = conv_w(3, 3, C, C)                           # conv[0] (no bias) + BN
    p["s0"], p["b0"] = fold(*bn_params(C))
    p["aspp_w3"] = conv_w(3, 3, C, half)                   # ASPP dil=3 + BN + ReLU
    b3 = 0.1 * jax.random.normal(nk(), (half,), jnp.float32)
    p["aspp_s3"], p["aspp_b3"] = fold(*bn_params(half), conv_bias=b3)
    p["aspp_w6"] = conv_w(3, 3, C, half)                   # ASPP dil=6 + BN + ReLU
    b6 = 0.1 * jax.random.normal(nk(), (half,), jnp.float32)
    p["aspp_s6"], p["aspp_b6"] = fold(*bn_params(half), conv_bias=b6)
    p["aspp_wp"] = conv_w(1, 1, C, half)                   # pool-branch 1x1 + BN + ReLU
    bp = 0.1 * jax.random.normal(nk(), (half,), jnp.float32)
    p["aspp_sp"], p["aspp_bp"] = fold(*bn_params(half), conv_bias=bp)
    p["aspp_wo"] = conv_w(1, 1, 3 * half, C)               # ASPP conv_out 1x1 (+bias)
    p["aspp_bo"] = 0.1 * jax.random.normal(nk(), (C,), jnp.float32)
    p["w4"] = conv_w(3, 3, C, C)                           # conv[4] (no bias) + BN
    p["s4"], p["b4"] = fold(*bn_params(C))
    p["w7"] = conv_w(3, 3, C, C)                           # conv[7] (no bias) + BN
    p["s7"], p["b7"] = fold(*bn_params(C))
    p["w10"] = conv_w(3, 3, C, C)                          # conv[10] (no bias) + Sigmoid
    return p


# ----------------------------------------------------------------------------
if __name__ == "__main__":
    # FEAM(channel=8, First=False) -> 3*C input channels; N=16 exercises the
    # batched grid (B=8 images per step -> M=128 MXU rows, 2 grid steps).
    N, C, H, W = 16, 8, 16, 16
    key = jax.random.PRNGKey(0)
    k_x, k_p = jax.random.split(key)

    x_in_nchw = jax.random.normal(k_x, (N, 3 * C, H, W), jnp.float32)
    x_in = jnp.transpose(x_in_nchw, (0, 2, 3, 1))          # NHWC for the kernel

    params = init_params(k_p, C, first=False)

    out_nhwc = feam_forward(x_in, params, C)
    out = jnp.transpose(out_nhwc, (0, 3, 1, 2))            # back to NCHW
    jax.block_until_ready(out)
    assert out.shape == (N, C, H, W)
    assert bool(jnp.all(jnp.isfinite(out)))
    print("KERNEL_OK")
</pallas_src>

<mosaic_0001>
module attributes {stable_mosaic.version = 11 : i64} {
  func.func @kernel(%arg0: i32, %arg1: memref<128x384xf32, #tpu.memory_space<vmem>>, %arg2: memref<3x384x128xbf16, #tpu.memory_space<vmem>>, %arg3: memref<4x3x128x128xbf16, #tpu.memory_space<vmem>>, %arg4: memref<5x128x128xbf16, #tpu.memory_space<vmem>>, %arg5: memref<128x128xbf16, #tpu.memory_space<vmem>>, %arg6: memref<11x128xf32, #tpu.memory_space<vmem>>, %arg7: memref<64x128xbf16, #tpu.memory_space<vmem>>, %arg8: memref<128x32xbf16, #tpu.memory_space<vmem>>, %arg9: memref<128x64xbf16, #tpu.memory_space<vmem>>, %arg10: memref<32x128xbf16, #tpu.memory_space<vmem>>, %arg11: memref<128x128xf32, #tpu.memory_space<vmem>>) attributes {dimension_semantics = [#tpu.dimension_semantics<parallel>], iteration_bounds = array<i64: 2>, scalar_prefetch = 0 : i64, scratch_operands = 0 : i64, tpu.core_type = #tpu.core_type<tc>, window_params = [{transform_indices = @transform_0, window_bounds = array<i64: 128, 384>}, {pipeline_mode = #tpu.pipeline_mode<synchronous>, transform_indices = @transform_1, window_bounds = array<i64: 3, 384, 128>}, {pipeline_mode = #tpu.pipeline_mode<synchronous>, transform_indices = @transform_2, window_bounds = array<i64: 4, 3, 128, 128>}, {pipeline_mode = #tpu.pipeline_mode<synchronous>, transform_indices = @transform_3, window_bounds = array<i64: 5, 128, 128>}, {pipeline_mode = #tpu.pipeline_mode<synchronous>, transform_indices = @transform_4, window_bounds = array<i64: 128, 128>}, {pipeline_mode = #tpu.pipeline_mode<synchronous>, transform_indices = @transform_5, window_bounds = array<i64: 11, 128>}, {pipeline_mode = #tpu.pipeline_mode<synchronous>, transform_indices = @transform_6, window_bounds = array<i64: 64, 128>}, {pipeline_mode = #tpu.pipeline_mode<synchronous>, transform_indices = @transform_7, window_bounds = array<i64: 128, 32>}, {pipeline_mode = #tpu.pipeline_mode<synchronous>, transform_indices = @transform_8, window_bounds = array<i64: 128, 64>}, {pipeline_mode = #tpu.pipeline_mode<synchronous>, transform_indices = @transform_9, window_bounds = array<i64: 32, 128>}, {transform_indices = @transform_10, window_bounds = array<i64: 128, 128>}]} {
    %0 = tpu.iota {dimensions = array<i32: 0>} : vector<128x1xi32>
    %c16_i32 = arith.constant 16 : i32
    %c0_i32 = arith.constant 0 : i32
    %1 = arith.cmpi eq, %c16_i32, %c0_i32 : i32
    %c1_i32 = arith.constant 1 : i32
    %2 = arith.select %1, %c1_i32, %c16_i32 : i32
    %3 = vector.broadcast %2 : i32 to vector<128x1xi32>
    %4 = arith.remsi %0, %3 : vector<128x1xi32>
    %c0_i32_0 = arith.constant 0 : i32
    %5 = vector.broadcast %c0_i32_0 : i32 to vector<128x1xi32>
    %6 = arith.cmpi ne, %4, %5 : vector<128x1xi32>
    %c0_i32_1 = arith.constant 0 : i32
    %7 = vector.broadcast %c0_i32_1 : i32 to vector<128x1xi32>
    %8 = arith.cmpi slt, %4, %7 : vector<128x1xi32>
    %c0_i32_2 = arith.constant 0 : i32
    %9 = arith.cmpi slt, %2, %c0_i32_2 : i32
    %10 = vector.broadcast %9 : i1 to vector<128x1xi1>
    %11 = vector.broadcast %10 : vector<128x1xi1> to vector<128x1xi1>
    %12 = arith.xori %8, %11 : vector<128x1xi1>
    %13 = arith.andi %12, %6 : vector<128x1xi1>
    %14 = vector.broadcast %2 : i32 to vector<128x1xi32>
    %15 = arith.addi %4, %14 : vector<128x1xi32>
    %16 = arith.select %13, %15, %4 : vector<128x1xi1>, vector<128x1xi32>
    %c15_i32 = arith.constant 15 : i32
    %17 = vector.broadcast %c15_i32 : i32 to vector<128x1xi32>
    %18 = arith.cmpi slt, %16, %17 : vector<128x1xi32>
    %c13_i32 = arith.constant 13 : i32
    %19 = vector.broadcast %c13_i32 : i32 to vector<128x1xi32>
    %20 = arith.cmpi slt, %16, %19 : vector<128x1xi32>
    %c10_i32 = arith.constant 10 : i32
    %21 = vector.broadcast %c10_i32 : i32 to vector<128x1xi32>
    %22 = arith.cmpi slt, %16, %21 : vector<128x1xi32>
    %c1_i32_3 = arith.constant 1 : i32
    %23 = vector.broadcast %c1_i32_3 : i32 to vector<128x1xi32>
    %24 = arith.cmpi sge, %16, %23 : vector<128x1xi32>
    %c3_i32 = arith.constant 3 : i32
    %25 = vector.broadcast %c3_i32 : i32 to vector<128x1xi32>
    %26 = arith.cmpi sge, %16, %25 : vector<128x1xi32>
    %c6_i32 = arith.constant 6 : i32
    %27 = vector.broadcast %c6_i32 : i32 to vector<128x1xi32>
    %28 = arith.cmpi sge, %16, %27 : vector<128x1xi32>
    %c0 = arith.constant 0 : index
    %c0_4 = arith.constant 0 : index
    %29 = vector.load %arg1[%c0, %c0_4] : memref<128x384xf32, #tpu.memory_space<vmem>>, vector<128x384xf32>
    %30 = arith.truncf %29 : vector<128x384xf32> to vector<128x384xbf16>
    %c0_5 = arith.constant 0 : index
    %c0_6 = arith.constant 0 : index
    %c0_7 = arith.constant 0 : index
    %31 = vector.load %arg2[%c0_5, %c0_6, %c0_7] : memref<3x384x128xbf16, #tpu.memory_space<vmem>>, vector<1x384x128xbf16>
    %32 = vector.shape_cast %31 : vector<1x384x128xbf16> to vector<384x128xbf16>
    %c1 = arith.constant 1 : index
    %c0_8 = arith.constant 0 : index
    %c0_9 = arith.constant 0 : index
    %33 = vector.load %arg2[%c1, %c0_8, %c0_9] : memref<3x384x128xbf16, #tpu.memory_space<vmem>>, vector<1x384x128xbf16>
    %34 = vector.shape_cast %33 : vector<1x384x128xbf16> to vector<384x128xbf16>
    %c2 = arith.constant 2 : index
    %c0_10 = arith.constant 0 : index
    %c0_11 = arith.constant 0 : index
    %35 = vector.load %arg2[%c2, %c0_10, %c0_11] : memref<3x384x128xbf16, #tpu.memory_space<vmem>>, vector<1x384x128xbf16>
    %36 = vector.shape_cast %35 : vector<1x384x128xbf16> to vector<384x128xbf16>
    %cst = arith.constant dense<0.000000e+00> : vector<128x128xf32>
    %37 = tpu.matmul %30, %32, %cst {dimension_numbers = #tpu.dot_dimension_numbers<[1], [0], [0], [1], [0, 0, 1, 1], [], []>} : vector<128x384xbf16>, vector<384x128xbf16>, vector<128x128xf32> -> vector<128x128xf32>
    %c1_i32_12 = arith.constant 1 : i32
    %38 = tpu.dynamic_rotate %37 by %c1_i32_12 dim 0 : vector<128x128xf32>, i32 -> vector<128x128xf32>
    %cst_13 = arith.constant 0.000000e+00 : f32
    %39 = vector.shape_cast %24 : vector<128x1xi1> to vector<128x1xi1>
    %40 = vector.broadcast %39 : vector<128x1xi1> to vector<128x128xi1>
    %41 = vector.broadcast %cst_13 : f32 to vector<128x128xf32>
    %42 = arith.select %40, %38, %41 : vector<128x128xi1>, vector<128x128xf32>
    %cst_14 = arith.constant dense<0.000000e+00> : vector<128x128xf32>
    %43 = tpu.matmul %30, %34, %cst_14 {dimension_numbers = #tpu.dot_dimension_numbers<[1], [0], [0], [1], [0, 0, 1, 1], [], []>} : vector<128x384xbf16>, vector<384x128xbf16>, vector<128x128xf32> -> vector<128x128xf32>
    %44 = arith.addf %42, %43 : vector<128x128xf32>
    %cst_15 = arith.constant dense<0.000000e+00> : vector<128x128xf32>
    %45 = tpu.matmul %30, %36, %cst_15 {dimension_numbers = #tpu.dot_dimension_numbers<[1], [0], [0], [1], [0, 0, 1, 1], [], []>} : vector<128x384xbf16>, vector<384x128xbf16>, vector<128x128xf32> -> vector<128x128xf32>
    %c127_i32 = arith.constant 127 : i32
    %46 = tpu.dynamic_rotate %45 by %c127_i32 dim 0 : vector<128x128xf32>, i32 -> vector<128x128xf32>
    %cst_16 = arith.constant 0.000000e+00 : f32
    %47 = vector.shape_cast %18 : vector<128x1xi1> to vector<128x1xi1>
    %48 = vector.broadcast %47 : vector<128x1xi1> to vector<128x128xi1>
    %49 = vector.broadcast %cst_16 : f32 to vector<128x128xf32>
    %50 = arith.select %48, %46, %49 : vector<128x128xi1>, vector<128x128xf32>
    %51 = arith.addf %44, %50 : vector<128x128xf32>
    %cst_17 = arith.constant 0.000000e+00 : f32
    %52 = vector.broadcast %cst_17 : f32 to vector<128x128xf32>
    %53 = arith.cmpf ogt, %51, %52 : vector<128x128xf32>
    %cst_18 = arith.constant 0.00999999977 : f32
    %54 = vector.broadcast %cst_18 : f32 to vector<128x128xf32>
    %55 = arith.mulf %54, %51 : vector<128x128xf32>
    %56 = arith.select %53, %51, %55 : vector<128x128xi1>, vector<128x128xf32>
    %57 = arith.truncf %56 : vector<128x128xf32> to vector<128x128xbf16>
    %c0_19 = arith.constant 0 : index
    %c0_20 = arith.constant 0 : index
    %c0_21 = arith.constant 0 : index
    %c0_22 = arith.constant 0 : index
    %58 = vector.load %arg3[%c0_19, %c0_20, %c0_21, %c0_22] : memref<4x3x128x128xbf16, #tpu.memory_space<vmem>>, vector<1x1x128x128xbf16>
    %59 = vector.shape_cast %58 : vector<1x1x128x128xbf16> to vector<128x128xbf16>
    %c0_23 = arith.constant 0 : index
    %c1_24 = arith.constant 1 : index
    %c0_25 = arith.constant 0 : index
    %c0_26 = arith.constant 0 : index
    %60 = vector.load %arg3[%c0_23, %c1_24, %c0_25, %c0_26] : memref<4x3x128x128xbf16, #tpu.memory_space<vmem>>, vector<1x1x128x128xbf16>
    %61 = vector.shape_cast %60 : vector<1x1x128x128xbf16> to vector<128x128xbf16>
    %c0_27 = arith.constant 0 : index
    %c2_28 = arith.constant 2 : index
    %c0_29 = arith.constant 0 : index
    %c0_30 = arith.constant 0 : index
    %62 = vector.load %arg3[%c0_27, %c2_28, %c0_29, %c0_30] : memref<4x3x128x128xbf16, #tpu.memory_space<vmem>>, vector<1x1x128x128xbf16>
    %63 = vector.shape_cast %62 : vector<1x1x128x128xbf16> to vector<128x128xbf16>
    %cst_31 = arith.constant dense<0.000000e+00> : vector<128x128xf32>
    %64 = tpu.matmul %57, %59, %cst_31 {dimension_numbers = #tpu.dot_dimension_numbers<[1], [0], [0], [1], [0, 0, 1, 1], [], []>} : vector<128x128xbf16>, vector<128x128xbf16>, vector<128x128xf32> -> vector<128x128xf32>
    %c1_i32_32 = arith.constant 1 : i32
    %65 = tpu.dynamic_rotate %64 by %c1_i32_32 dim 0 : vector<128x128xf32>, i32 -> vector<128x128xf32>
    %cst_33 = arith.constant 0.000000e+00 : f32
    %66 = vector.shape_cast %24 : vector<128x1xi1> to vector<128x1xi1>
    %67 = vector.broadcast %66 : vector<128x1xi1> to vector<128x128xi1>
    %68 = vector.broadcast %cst_33 : f32 to vector<128x128xf32>
    %69 = arith.select %67, %65, %68 : vector<128x128xi1>, vector<128x128xf32>
    %cst_34 = arith.constant dense<0.000000e+00> : vector<128x128xf32>
    %70 = tpu.matmul %57, %61, %cst_34 {dimension_numbers = #tpu.dot_dimension_numbers<[1], [0], [0], [1], [0, 0, 1, 1], [], []>} : vector<128x128xbf16>, vector<128x128xbf16>, vector<128x128xf32> -> vector<128x128xf32>
    %71 = arith.addf %69, %70 : vector<128x128xf32>
    %cst_35 = arith.constant dense<0.000000e+00> : vector<128x128xf32>
    %72 = tpu.matmul %57, %63, %cst_35 {dimension_numbers = #tpu.dot_dimension_numbers<[1], [0], [0], [1], [0, 0, 1, 1], [], []>} : vector<128x128xbf16>, vector<128x128xbf16>, vector<128x128xf32> -> vector<128x128xf32>
    %c127_i32_36 = arith.constant 127 : i32
    %73 = tpu.dynamic_rotate %72 by %c127_i32_36 dim 0 : vector<128x128xf32>, i32 -> vector<128x128xf32>
    %cst_37 = arith.constant 0.000000e+00 : f32
    %74 = vector.shape_cast %18 : vector<128x1xi1> to vector<128x1xi1>
    %75 = vector.broadcast %74 : vector<128x1xi1> to vector<128x128xi1>
    %76 = vector.broadcast %cst_37 : f32 to vector<128x128xf32>
    %77 = arith.select %75, %73, %76 : vector<128x128xi1>, vector<128x128xf32>
    %78 = arith.addf %71, %77 : vector<128x128xf32>
    %c0_38 = arith.constant 0 : index
    %c0_39 = arith.constant 0 : index
    %79 = vector.load %arg6[%c0_38, %c0_39] : memref<11x128xf32, #tpu.memory_space<vmem>>, vector<1x128xf32>
    %80 = vector.broadcast %79 : vector<1x128xf32> to vector<128x128xf32>
    %81 = arith.mulf %78, %80 : vector<128x128xf32>
    %c1_40 = arith.constant 1 : index
    %c0_41 = arith.constant 0 : index
    %82 = vector.load %arg6[%c1_40, %c0_41] : memref<11x128xf32, #tpu.memory_space<vmem>>, vector<1x128xf32>
    %83 = vector.broadcast %82 : vector<1x128xf32> to vector<128x128xf32>
    %84 = arith.addf %81, %83 : vector<128x128xf32>
    %cst_42 = arith.constant 0.000000e+00 : f32
    %85 = vector.broadcast %cst_42 : f32 to vector<128x128xf32>
    %86 = arith.cmpf ogt, %84, %85 : vector<128x128xf32>
    %cst_43 = arith.constant 0.00999999977 : f32
    %87 = vector.broadcast %cst_43 : f32 to vector<128x128xf32>
    %88 = arith.mulf %87, %84 : vector<128x128xf32>
    %89 = arith.select %86, %84, %88 : vector<128x128xi1>, vector<128x128xf32>
    %90 = arith.truncf %89 : vector<128x128xf32> to vector<128x128xbf16>
    %c0_44 = arith.constant 0 : index
    %c0_45 = arith.constant 0 : index
    %c0_46 = arith.constant 0 : index
    %91 = vector.load %arg4[%c0_44, %c0_45, %c0_46] : memref<5x128x128xbf16, #tpu.memory_space<vmem>>, vector<1x128x128xbf16>
    %92 = vector.shape_cast %91 : vector<1x128x128xbf16> to vector<128x128xbf16>
    %c1_47 = arith.constant 1 : index
    %c0_48 = arith.constant 0 : index
    %c0_49 = arith.constant 0 : index
    %93 = vector.load %arg4[%c1_47, %c0_48, %c0_49] : memref<5x128x128xbf16, #tpu.memory_space<vmem>>, vector<1x128x128xbf16>
    %94 = vector.shape_cast %93 : vector<1x128x128xbf16> to vector<128x128xbf16>
    %c2_50 = arith.constant 2 : index
    %c0_51 = arith.constant 0 : index
    %c0_52 = arith.constant 0 : index
    %95 = vector.load %arg4[%c2_50, %c0_51, %c0_52] : memref<5x128x128xbf16, #tpu.memory_space<vmem>>, vector<1x128x128xbf16>
    %96 = vector.shape_cast %95 : vector<1x128x128xbf16> to vector<128x128xbf16>
    %c3 = arith.constant 3 : index
    %c0_53 = arith.constant 0 : index
    %c0_54 = arith.constant 0 : index
    %97 = vector.load %arg4[%c3, %c0_53, %c0_54] : memref<5x128x128xbf16, #tpu.memory_space<vmem>>, vector<1x128x128xbf16>
    %98 = vector.shape_cast %97 : vector<1x128x128xbf16> to vector<128x128xbf16>
    %c4 = arith.constant 4 : index
    %c0_55 = arith.constant 0 : index
    %c0_56 = arith.constant 0 : index
    %99 = vector.load %arg4[%c4, %c0_55, %c0_56] : memref<5x128x128xbf16, #tpu.memory_space<vmem>>, vector<1x128x128xbf16>
    %100 = vector.shape_cast %99 : vector<1x128x128xbf16> to vector<128x128xbf16>
    %cst_57 = arith.constant dense<0.000000e+00> : vector<128x128xf32>
    %101 = tpu.matmul %90, %92, %cst_57 {dimension_numbers = #tpu.dot_dimension_numbers<[1], [0], [0], [1], [0, 0, 1, 1], [], []>} : vector<128x128xbf16>, vector<128x128xbf16>, vector<128x128xf32> -> vector<128x128xf32>
    %c6_i32_58 = arith.constant 6 : i32
    %102 = tpu.dynamic_rotate %101 by %c6_i32_58 dim 0 : vector<128x128xf32>, i32 -> vector<128x128xf32>
    %cst_59 = arith.constant 0.000000e+00 : f32
    %103 = vector.shape_cast %28 : vector<128x1xi1> to vector<128x1xi1>
    %104 = vector.broadcast %103 : vector<128x1xi1> to vector<128x128xi1>
    %105 = vector.broadcast %cst_59 : f32 to vector<128x128xf32>
    %106 = arith.select %104, %102, %105 : vector<128x128xi1>, vector<128x128xf32>
    %cst_60 = arith.constant dense<0.000000e+00> : vector<128x128xf32>
    %107 = tpu.matmul %90, %94, %cst_60 {dimension_numbers = #tpu.dot_dimension_numbers<[1], [0], [0], [1], [0, 0, 1, 1], [], []>} : vector<128x128xbf16>, vector<128x128xbf16>, vector<128x128xf32> -> vector<128x128xf32>
    %c3_i32_61 = arith.constant 3 : i32
    %108 = tpu.dynamic_rotate %107 by %c3_i32_61 dim 0 : vector<128x128xf32>, i32 -> vector<128x128xf32>
    %cst_62 = arith.constant 0.000000e+00 : f32
    %109 = vector.shape_cast %26 : vector<128x1xi1> to vector<128x1xi1>
    %110 = vector.broadcast %109 : vector<128x1xi1> to vector<128x128xi1>
    %111 = vector.broadcast %cst_62 : f32 to vector<128x128xf32>
    %112 = arith.select %110, %108, %111 : vector<128x128xi1>, vector<128x128xf32>
    %113 = arith.addf %106, %112 : vector<128x128xf32>
    %cst_63 = arith.constant dense<0.000000e+00> : vector<128x128xf32>
    %114 = tpu.matmul %90, %96, %cst_63 {dimension_numbers = #tpu.dot_dimension_numbers<[1], [0], [0], [1], [0, 0, 1, 1], [], []>} : vector<128x128xbf16>, vector<128x128xbf16>, vector<128x128xf32> -> vector<128x128xf32>
    %115 = arith.addf %113, %114 : vector<128x128xf32>
    %cst_64 = arith.constant dense<0.000000e+00> : vector<128x128xf32>
    %116 = tpu.matmul %90, %98, %cst_64 {dimension_numbers = #tpu.dot_dimension_numbers<[1], [0], [0], [1], [0, 0, 1, 1], [], []>} : vector<128x128xbf16>, vector<128x128xbf16>, vector<128x128xf32> -> vector<128x128xf32>
    %c125_i32 = arith.constant 125 : i32
    %117 = tpu.dynamic_rotate %116 by %c125_i32 dim 0 : vector<128x128xf32>, i32 -> vector<128x128xf32>
    %cst_65 = arith.constant 0.000000e+00 : f32
    %118 = vector.shape_cast %20 : vector<128x1xi1> to vector<128x1xi1>
    %119 = vector.broadcast %118 : vector<128x1xi1> to vector<128x128xi1>
    %120 = vector.broadcast %cst_65 : f32 to vector<128x128xf32>
    %121 = arith.select %119, %117, %120 : vector<128x128xi1>, vector<128x128xf32>
    %122 = arith.addf %115, %121 : vector<128x128xf32>
    %cst_66 = arith.constant dense<0.000000e+00> : vector<128x128xf32>
    %123 = tpu.matmul %90, %100, %cst_66 {dimension_numbers = #tpu.dot_dimension_numbers<[1], [0], [0], [1], [0, 0, 1, 1], [], []>} : vector<128x128xbf16>, vector<128x128xbf16>, vector<128x128xf32> -> vector<128x128xf32>
    %c122_i32 = arith.constant 122 : i32
    %124 = tpu.dynamic_rotate %123 by %c122_i32 dim 0 : vector<128x128xf32>, i32 -> vector<128x128xf32>
    %cst_67 = arith.constant 0.000000e+00 : f32
    %125 = vector.shape_cast %22 : vector<128x1xi1> to vector<128x1xi1>
    %126 = vector.broadcast %125 : vector<128x1xi1> to vector<128x128xi1>
    %127 = vector.broadcast %cst_67 : f32 to vector<128x128xf32>
    %128 = arith.select %126, %124, %127 : vector<128x128xi1>, vector<128x128xf32>
    %129 = arith.addf %122, %128 : vector<128x128xf32>
    %c2_68 = arith.constant 2 : index
    %c0_69 = arith.constant 0 : index
    %130 = vector.load %arg6[%c2_68, %c0_69] : memref<11x128xf32, #tpu.memory_space<vmem>>, vector<1x128xf32>
    %131 = vector.broadcast %130 : vector<1x128xf32> to vector<128x128xf32>
    %132 = arith.mulf %129, %131 : vector<128x128xf32>
    %c3_70 = arith.constant 3 : index
    %c0_71 = arith.constant 0 : index
    %133 = vector.load %arg6[%c3_70, %c0_71] : memref<11x128xf32, #tpu.memory_space<vmem>>, vector<1x128xf32>
    %134 = vector.broadcast %133 : vector<1x128xf32> to vector<128x128xf32>
    %135 = arith.addf %132, %134 : vector<128x128xf32>
    %cst_72 = arith.constant 0.000000e+00 : f32
    %136 = vector.broadcast %cst_72 : f32 to vector<128x128xf32>
    %137 = arith.maximumf %135, %136 : vector<128x128xf32>
    %c0_73 = arith.constant 0 : index
    %c0_74 = arith.constant 0 : index
    %138 = vector.load %arg7[%c0_73, %c0_74] : memref<64x128xbf16, #tpu.memory_space<vmem>>, vector<64x128xbf16>
    %cst_75 = arith.constant dense<0.000000e+00> : vector<64x128xf32>
    %139 = tpu.matmul %138, %90, %cst_75 {dimension_numbers = #tpu.dot_dimension_numbers<[1], [0], [0], [1], [0, 0, 1, 1], [], []>} : vector<64x128xbf16>, vector<128x128xbf16>, vector<64x128xf32> -> vector<64x128xf32>
    %140 = arith.truncf %139 : vector<64x128xf32> to vector<64x128xbf16>
    %c0_76 = arith.constant 0 : index
    %c0_77 = arith.constant 0 : index
    %141 = vector.load %arg8[%c0_76, %c0_77] : memref<128x32xbf16, #tpu.memory_space<vmem>>, vector<128x32xbf16>
    %cst_78 = arith.constant dense<0.000000e+00> : vector<64x32xf32>
    %142 = tpu.matmul %140, %141, %cst_78 {dimension_numbers = #tpu.dot_dimension_numbers<[1], [0], [0], [1], [0, 0, 1, 1], [], []>} : vector<64x128xbf16>, vector<128x32xbf16>, vector<64x32xf32> -> vector<64x32xf32>
    %c9 = arith.constant 9 : index
    %c0_79 = arith.constant 0 : index
    %143 = vector.load %arg6[%c9, %c0_79] : memref<11x128xf32, #tpu.memory_space<vmem>>, vector<1x32xf32>
    %144 = vector.broadcast %143 : vector<1x32xf32> to vector<64x32xf32>
    %145 = arith.mulf %142, %144 : vector<64x32xf32>
    %c10 = arith.constant 10 : index
    %c0_80 = arith.constant 0 : index
    %146 = vector.load %arg6[%c10, %c0_80] : memref<11x128xf32, #tpu.memory_space<vmem>>, vector<1x32xf32>
    %147 = vector.broadcast %146 : vector<1x32xf32> to vector<64x32xf32>
    %148 = arith.addf %145, %147 : vector<64x32xf32>
    %cst_81 = arith.constant 0.000000e+00 : f32
    %149 = vector.broadcast %cst_81 : f32 to vector<64x32xf32>
    %150 = arith.maximumf %148, %149 : vector<64x32xf32>
    %c0_82 = arith.constant 0 : index
    %c0_83 = arith.constant 0 : index
    %151 = vector.load %arg9[%c0_82, %c0_83] : memref<128x64xbf16, #tpu.memory_space<vmem>>, vector<128x64xbf16>
    %152 = arith.truncf %150 : vector<64x32xf32> to vector<64x32xbf16>
    %cst_84 = arith.constant dense<0.000000e+00> : vector<128x32xf32>
    %153 = tpu.matmul %151, %152, %cst_84 {dimension_numbers = #tpu.dot_dimension_numbers<[1], [0], [0], [1], [0, 0, 1, 1], [], []>} : vector<128x64xbf16>, vector<64x32xbf16>, vector<128x32xf32> -> vector<128x32xf32>
    %154 = arith.truncf %137 : vector<128x128xf32> to vector<128x128xbf16>
    %c0_85 = arith.constant 0 : index
    %c0_86 = arith.constant 0 : index
    %155 = vector.load %arg5[%c0_85, %c0_86] : memref<128x128xbf16, #tpu.memory_space<vmem>>, vector<128x128xbf16>
    %cst_87 = arith.constant dense<0.000000e+00> : vector<128x128xf32>
    %156 = tpu.matmul %154, %155, %cst_87 {dimension_numbers = #tpu.dot_dimension_numbers<[1], [0], [0], [1], [0, 0, 1, 1], [], []>} : vector<128x128xbf16>, vector<128x128xbf16>, vector<128x128xf32> -> vector<128x128xf32>
    %157 = arith.truncf %153 : vector<128x32xf32> to vector<128x32xbf16>
    %c0_88 = arith.constant 0 : index
    %c0_89 = arith.constant 0 : index
    %158 = vector.load %arg10[%c0_88, %c0_89] : memref<32x128xbf16, #tpu.memory_space<vmem>>, vector<32x128xbf16>
    %cst_90 = arith.constant dense<0.000000e+00> : vector<128x128xf32>
    %159 = tpu.matmul %157, %158, %cst_90 {dimension_numbers = #tpu.dot_dimension_numbers<[1], [0], [0], [1], [0, 0, 1, 1], [], []>} : vector<128x32xbf16>, vector<32x128xbf16>, vector<128x128xf32> -> vector<128x128xf32>
    %160 = arith.addf %156, %159 : vector<128x128xf32>
    %c8 = arith.constant 8 : index
    %c0_91 = arith.constant 0 : index
    %161 = vector.load %arg6[%c8, %c0_91] : memref<11x128xf32, #tpu.memory_space<vmem>>, vector<1x128xf32>
    %162 = vector.broadcast %161 : vector<1x128xf32> to vector<128x128xf32>
    %163 = arith.addf %160, %162 : vector<128x128xf32>
    %164 = arith.truncf %163 : vector<128x128xf32> to vector<128x128xbf16>
    %c1_92 = arith.constant 1 : index
    %c0_93 = arith.constant 0 : index
    %c0_94 = arith.constant 0 : index
    %c0_95 = arith.constant 0 : index
    %165 = vector.load %arg3[%c1_92, %c0_93, %c0_94, %c0_95] : memref<4x3x128x128xbf16, #tpu.memory_space<vmem>>, vector<1x1x128x128xbf16>
    %166 = vector.shape_cast %165 : vector<1x1x128x128xbf16> to vector<128x128xbf16>
    %c1_96 = arith.constant 1 : index
    %c1_97 = arith.constant 1 : index
    %c0_98 = arith.constant 0 : index
    %c0_99 = arith.constant 0 : index
    %167 = vector.load %arg3[%c1_96, %c1_97, %c0_98, %c0_99] : memref<4x3x128x128xbf16, #tpu.memory_space<vmem>>, vector<1x1x128x128xbf16>
    %168 = vector.shape_cast %167 : vector<1x1x128x128xbf16> to vector<128x128xbf16>
    %c1_100 = arith.constant 1 : index
    %c2_101 = arith.constant 2 : index
    %c0_102 = arith.constant 0 : index
    %c0_103 = arith.constant 0 : index
    %169 = vector.load %arg3[%c1_100, %c2_101, %c0_102, %c0_103] : memref<4x3x128x128xbf16, #tpu.memory_space<vmem>>, vector<1x1x128x128xbf16>
    %170 = vector.shape_cast %169 : vector<1x1x128x128xbf16> to vector<128x128xbf16>
    %cst_104 = arith.constant dense<0.000000e+00> : vector<128x128xf32>
    %171 = tpu.matmul %164, %166, %cst_104 {dimension_numbers = #tpu.dot_dimension_numbers<[1], [0], [0], [1], [0, 0, 1, 1], [], []>} : vector<128x128xbf16>, vector<128x128xbf16>, vector<128x128xf32> -> vector<128x128xf32>
    %c1_i32_105 = arith.constant 1 : i32
    %172 = tpu.dynamic_rotate %171 by %c1_i32_105 dim 0 : vector<128x128xf32>, i32 -> vector<128x128xf32>
    %cst_106 = arith.constant 0.000000e+00 : f32
    %173 = vector.shape_cast %24 : vector<128x1xi1> to vector<128x1xi1>
    %174 = vector.broadcast %173 : vector<128x1xi1> to vector<128x128xi1>
    %175 = vector.broadcast %cst_106 : f32 to vector<128x128xf32>
    %176 = arith.select %174, %172, %175 : vector<128x128xi1>, vector<128x128xf32>
    %cst_107 = arith.constant dense<0.000000e+00> : vector<128x128xf32>
    %177 = tpu.matmul %164, %168, %cst_107 {dimension_numbers = #tpu.dot_dimension_numbers<[1], [0], [0], [1], [0, 0, 1, 1], [], []>} : vector<128x128xbf16>, vector<128x128xbf16>, vector<128x128xf32> -> vector<128x128xf32>
    %178 = arith.addf %176, %177 : vector<128x128xf32>
    %cst_108 = arith.constant dense<0.000000e+00> : vector<128x128xf32>
    %179 = tpu.matmul %164, %170, %cst_108 {dimension_numbers = #tpu.dot_dimension_numbers<[1], [0], [0], [1], [0, 0, 1, 1], [], []>} : vector<128x128xbf16>, vector<128x128xbf16>, vector<128x128xf32> -> vector<128x128xf32>
    %c127_i32_109 = arith.constant 127 : i32
    %180 = tpu.dynamic_rotate %179 by %c127_i32_109 dim 0 : vector<128x128xf32>, i32 -> vector<128x128xf32>
    %cst_110 = arith.constant 0.000000e+00 : f32
    %181 = vector.shape_cast %18 : vector<128x1xi1> to vector<128x1xi1>
    %182 = vector.broadcast %181 : vector<128x1xi1> to vector<128x128xi1>
    %183 = vector.broadcast %cst_110 : f32 to vector<128x128xf32>
    %184 = arith.select %182, %180, %183 : vector<128x128xi1>, vector<128x128xf32>
    %185 = arith.addf %178, %184 : vector<128x128xf32>
    %c4_111 = arith.constant 4 : index
    %c0_112 = arith.constant 0 : index
    %186 = vector.load %arg6[%c4_111, %c0_112] : memref<11x128xf32, #tpu.memory_space<vmem>>, vector<1x128xf32>
    %187 = vector.broadcast %186 : vector<1x128xf32> to vector<128x128xf32>
    %188 = arith.mulf %185, %187 : vector<128x128xf32>
    %c5 = arith.constant 5 : index
    %c0_113 = arith.constant 0 : index
    %189 = vector.load %arg6[%c5, %c0_113] : memref<11x128xf32, #tpu.memory_space<vmem>>, vector<1x128xf32>
    %190 = vector.broadcast %189 : vector<1x128xf32> to vector<128x128xf32>
    %191 = arith.addf %188, %190 : vector<128x128xf32>
    %cst_114 = arith.constant 0.000000e+00 : f32
    %192 = vector.broadcast %cst_114 : f32 to vector<128x128xf32>
    %193 = arith.cmpf ogt, %191, %192 : vector<128x128xf32>
    %cst_115 = arith.constant 0.00999999977 : f32
    %194 = vector.broadcast %cst_115 : f32 to vector<128x128xf32>
    %195 = arith.mulf %194, %191 : vector<128x128xf32>
    %196 = arith.select %193, %191, %195 : vector<128x128xi1>, vector<128x128xf32>
    %197 = arith.truncf %196 : vector<128x128xf32> to vector<128x128xbf16>
    %c2_116 = arith.constant 2 : index
    %c0_117 = arith.constant 0 : index
    %c0_118 = arith.constant 0 : index
    %c0_119 = arith.constant 0 : index
    %198 = vector.load %arg3[%c2_116, %c0_117, %c0_118, %c0_119] : memref<4x3x128x128xbf16, #tpu.memory_space<vmem>>, vector<1x1x128x128xbf16>
    %199 = vector.shape_cast %198 : vector<1x1x128x128xbf16> to vector<128x128xbf16>
    %c2_120 = arith.constant 2 : index
    %c1_121 = arith.constant 1 : index
    %c0_122 = arith.constant 0 : index
    %c0_123 = arith.constant 0 : index
    %200 = vector.load %arg3[%c2_120, %c1_121, %c0_122, %c0_123] : memref<4x3x128x128xbf16, #tpu.memory_space<vmem>>, vector<1x1x128x128xbf16>
    %201 = vector.shape_cast %200 : vector<1x1x128x128xbf16> to vector<128x128xbf16>
    %c2_124 = arith.constant 2 : index
    %c2_125 = arith.constant 2 : index
    %c0_126 = arith.constant 0 : index
    %c0_127 = arith.constant 0 : index
    %202 = vector.load %arg3[%c2_124, %c2_125, %c0_126, %c0_127] : memref<4x3x128x128xbf16, #tpu.memory_space<vmem>>, vector<1x1x128x128xbf16>
    %203 = vector.shape_cast %202 : vector<1x1x128x128xbf16> to vector<128x128xbf16>
    %cst_128 = arith.constant dense<0.000000e+00> : vector<128x128xf32>
    %204 = tpu.matmul %197, %199, %cst_128 {dimension_numbers = #tpu.dot_dimension_numbers<[1], [0], [0], [1], [0, 0, 1, 1], [], []>} : vector<128x128xbf16>, vector<128x128xbf16>, vector<128x128xf32> -> vector<128x128xf32>
    %c1_i32_129 = arith.constant 1 : i32
    %205 = tpu.dynamic_rotate %204 by %c1_i32_129 dim 0 : vector<128x128xf32>, i32 -> vector<128x128xf32>
    %cst_130 = arith.constant 0.000000e+00 : f32
    %206 = vector.shape_cast %24 : vector<128x1xi1> to vector<128x1xi1>
    %207 = vector.broadcast %206 : vector<128x1xi1> to vector<128x128xi1>
    %208 = vector.broadcast %cst_130 : f32 to vector<128x128xf32>
    %209 = arith.select %207, %205, %208 : vector<128x128xi1>, vector<128x128xf32>
    %cst_131 = arith.constant dense<0.000000e+00> : vector<128x128xf32>
    %210 = tpu.matmul %197, %201, %cst_131 {dimension_numbers = #tpu.dot_dimension_numbers<[1], [0], [0], [1], [0, 0, 1, 1], [], []>} : vector<128x128xbf16>, vector<128x128xbf16>, vector<128x128xf32> -> vector<128x128xf32>
    %211 = arith.addf %209, %210 : vector<128x128xf32>
    %cst_132 = arith.constant dense<0.000000e+00> : vector<128x128xf32>
    %212 = tpu.matmul %197, %203, %cst_132 {dimension_numbers = #tpu.dot_dimension_numbers<[1], [0], [0], [1], [0, 0, 1, 1], [], []>} : vector<128x128xbf16>, vector<128x128xbf16>, vector<128x128xf32> -> vector<128x128xf32>
    %c127_i32_133 = arith.constant 127 : i32
    %213 = tpu.dynamic_rotate %212 by %c127_i32_133 dim 0 : vector<128x128xf32>, i32 -> vector<128x128xf32>
    %cst_134 = arith.constant 0.000000e+00 : f32
    %214 = vector.shape_cast %18 : vector<128x1xi1> to vector<128x1xi1>
    %215 = vector.broadcast %214 : vector<128x1xi1> to vector<128x128xi1>
    %216 = vector.broadcast %cst_134 : f32 to vector<128x128xf32>
    %217 = arith.select %215, %213, %216 : vector<128x128xi1>, vector<128x128xf32>
    %218 = arith.addf %211, %217 : vector<128x128xf32>
    %c6 = arith.constant 6 : index
    %c0_135 = arith.constant 0 : index
    %219 = vector.load %arg6[%c6, %c0_135] : memref<11x128xf32, #tpu.memory_space<vmem>>, vector<1x128xf32>
    %220 = vector.broadcast %219 : vector<1x128xf32> to vector<128x128xf32>
    %221 = arith.mulf %218, %220 : vector<128x128xf32>
    %c7 = arith.constant 7 : index
    %c0_136 = arith.constant 0 : index
    %222 = vector.load %arg6[%c7, %c0_136] : memref<11x128xf32, #tpu.memory_space<vmem>>, vector<1x128xf32>
    %223 = vector.broadcast %222 : vector<1x128xf32> to vector<128x128xf32>
    %224 = arith.addf %221, %223 : vector<128x128xf32>
    %cst_137 = arith.constant 0.000000e+00 : f32
    %225 = vector.broadcast %cst_137 : f32 to vector<128x128xf32>
    %226 = arith.cmpf ogt, %224, %225 : vector<128x128xf32>
    %cst_138 = arith.constant 0.00999999977 : f32
    %227 = vector.broadcast %cst_138 : f32 to vector<128x128xf32>
    %228 = arith.mulf %227, %224 : vector<128x128xf32>
    %229 = arith.select %226, %224, %228 : vector<128x128xi1>, vector<128x128xf32>
    %230 = arith.truncf %229 : vector<128x128xf32> to vector<128x128xbf16>
    %c3_139 = arith.constant 3 : index
    %c0_140 = arith.constant 0 : index
    %c0_141 = arith.constant 0 : index
    %c0_142 = arith.constant 0 : index
    %231 = vector.load %arg3[%c3_139, %c0_140, %c0_141, %c0_142] : memref<4x3x128x128xbf16, #tpu.memory_space<vmem>>, vector<1x1x128x128xbf16>
    %232 = vector.shape_cast %231 : vector<1x1x128x128xbf16> to vector<128x128xbf16>
    %c3_143 = arith.constant 3 : index
    %c1_144 = arith.constant 1 : index
    %c0_145 = arith.constant 0 : index
    %c0_146 = arith.constant 0 : index
    %233 = vector.load %arg3[%c3_143, %c1_144, %c0_145, %c0_146] : memref<4x3x128x128xbf16, #tpu.memory_space<vmem>>, vector<1x1x128x128xbf16>
    %234 = vector.shape_cast %233 : vector<1x1x128x128xbf16> to vector<128x128xbf16>
    %c3_147 = arith.constant 3 : index
    %c2_148 = arith.constant 2 : index
    %c0_149 = arith.constant 0 : index
    %c0_150 = arith.constant 0 : index
    %235 = vector.load %arg3[%c3_147, %c2_148, %c0_149, %c0_150] : memref<4x3x128x128xbf16, #tpu.memory_space<vmem>>, vector<1x1x128x128xbf16>
    %236 = vector.shape_cast %235 : vector<1x1x128x128xbf16> to vector<128x128xbf16>
    %cst_151 = arith.constant dense<0.000000e+00> : vector<128x128xf32>
    %237 = tpu.matmul %230, %232, %cst_151 {dimension_numbers = #tpu.dot_dimension_numbers<[1], [0], [0], [1], [0, 0, 1, 1], [], []>} : vector<128x128xbf16>, vector<128x128xbf16>, vector<128x128xf32> -> vector<128x128xf32>
    %c1_i32_152 = arith.constant 1 : i32
    %238 = tpu.dynamic_rotate %237 by %c1_i32_152 dim 0 : vector<128x128xf32>, i32 -> vector<128x128xf32>
    %cst_153 = arith.constant 0.000000e+00 : f32
    %239 = vector.shape_cast %24 : vector<128x1xi1> to vector<128x1xi1>
    %240 = vector.broadcast %239 : vector<128x1xi1> to vector<128x128xi1>
    %241 = vector.broadcast %cst_153 : f32 to vector<128x128xf32>
    %242 = arith.select %240, %238, %241 : vector<128x128xi1>, vector<128x128xf32>
    %cst_154 = arith.constant dense<0.000000e+00> : vector<128x128xf32>
    %243 = tpu.matmul %230, %234, %cst_154 {dimension_numbers = #tpu.dot_dimension_numbers<[1], [0], [0], [1], [0, 0, 1, 1], [], []>} : vector<128x128xbf16>, vector<128x128xbf16>, vector<128x128xf32> -> vector<128x128xf32>
    %244 = arith.addf %242, %243 : vector<128x128xf32>
    %cst_155 = arith.constant dense<0.000000e+00> : vector<128x128xf32>
    %245 = tpu.matmul %230, %236, %cst_155 {dimension_numbers = #tpu.dot_dimension_numbers<[1], [0], [0], [1], [0, 0, 1, 1], [], []>} : vector<128x128xbf16>, vector<128x128xbf16>, vector<128x128xf32> -> vector<128x128xf32>
    %c127_i32_156 = arith.constant 127 : i32
    %246 = tpu.dynamic_rotate %245 by %c127_i32_156 dim 0 : vector<128x128xf32>, i32 -> vector<128x128xf32>
    %cst_157 = arith.constant 0.000000e+00 : f32
    %247 = vector.shape_cast %18 : vector<128x1xi1> to vector<128x1xi1>
    %248 = vector.broadcast %247 : vector<128x1xi1> to vector<128x128xi1>
    %249 = vector.broadcast %cst_157 : f32 to vector<128x128xf32>
    %250 = arith.select %248, %246, %249 : vector<128x128xi1>, vector<128x128xf32>
    %251 = arith.addf %244, %250 : vector<128x128xf32>
    %252 = arith.negf %251 : vector<128x128xf32>
    %253 = math.exp %252 : vector<128x128xf32>
    %cst_158 = arith.constant 1.000000e+00 : f32
    %254 = vector.broadcast %cst_158 : f32 to vector<128x128xf32>
    %255 = arith.addf %254, %253 : vector<128x128xf32>
    %256 = arith.divf %254, %255 : vector<128x128xf32>
    %cst_159 = arith.constant 1.000000e+00 : f32
    %257 = vector.broadcast %cst_159 : f32 to vector<128x128xf32>
    %258 = arith.addf %256, %257 : vector<128x128xf32>
    %259 = arith.mulf %56, %258 : vector<128x128xf32>
    %c0_160 = arith.constant 0 : index
    %c0_161 = arith.constant 0 : index
    %260 = vector.load %arg11[%c0_160, %c0_161] : memref<128x128xf32, #tpu.memory_space<vmem>>, vector<128x128xf32>
    tpu.vector_store %arg11[%c0_160, %c0_161], %259 {strides = array<i32>} : memref<128x128xf32, #tpu.memory_space<vmem>>, vector<128x128xf32>,
    return
  }
  func.func @transform_0(%arg0: i32) -> (i32, i32) {
    %c0_i32 = arith.constant 0 : i32
    %c0_i32_0 = arith.constant 0 : i32
    return %arg0, %c0_i32 : i32, i32
  }
  func.func @transform_1(%arg0: i32) -> (i32, i32, i32) {
    %c0_i32 = arith.constant 0 : i32
    %c0_i32_0 = arith.constant 0 : i32
    %c0_i32_1 = arith.constant 0 : i32
    %c0_i32_2 = arith.constant 0 : i32
    return %c0_i32, %c0_i32_0, %c0_i32_1 : i32, i32, i32
  }
  func.func @transform_2(%arg0: i32) -> (i32, i32, i32, i32) {
    %c0_i32 = arith.constant 0 : i32
    %c0_i32_0 = arith.constant 0 : i32
    %c0_i32_1 = arith.constant 0 : i32
    %c0_i32_2 = arith.constant 0 : i32
    %c0_i32_3 = arith.constant 0 : i32
    return %c0_i32, %c0_i32_0, %c0_i32_1, %c0_i32_2 : i32, i32, i32, i32
  }
  func.func @transform_3(%arg0: i32) -> (i32, i32, i32) {
    %c0_i32 = arith.constant 0 : i32
    %c0_i32_0 = arith.constant 0 : i32
    %c0_i32_1 = arith.constant 0 : i32
    %c0_i32_2 = arith.constant 0 : i32
    return %c0_i32, %c0_i32_0, %c0_i32_1 : i32, i32, i32
  }
  func.func @transform_4(%arg0: i32) -> (i32, i32) {
    %c0_i32 = arith.constant 0 : i32
    %c0_i32_0 = arith.constant 0 : i32
    %c0_i32_1 = arith.constant 0 : i32
    return %c0_i32, %c0_i32_0 : i32, i32
  }
  func.func @transform_5(%arg0: i32) -> (i32, i32) {
    %c0_i32 = arith.constant 0 : i32
    %c0_i32_0 = arith.constant 0 : i32
    %c0_i32_1 = arith.constant 0 : i32
    return %c0_i32, %c0_i32_0 : i32, i32
  }
  func.func @transform_6(%arg0: i32) -> (i32, i32) {
    %c0_i32 = arith.constant 0 : i32
    %c0_i32_0 = arith.constant 0 : i32
    %c0_i32_1 = arith.constant 0 : i32
    return %c0_i32, %c0_i32_0 : i32, i32
  }
  func.func @transform_7(%arg0: i32) -> (i32, i32) {
    %c0_i32 = arith.constant 0 : i32
    %c0_i32_0 = arith.constant 0 : i32
    %c0_i32_1 = arith.constant 0 : i32
    return %c0_i32, %c0_i32_0 : i32, i32
  }
  func.func @transform_8(%arg0: i32) -> (i32, i32) {
    %c0_i32 = arith.constant 0 : i32
    %c0_i32_0 = arith.constant 0 : i32
    %c0_i32_1 = arith.constant 0 : i32
    return %c0_i32, %c0_i32_0 : i32, i32
  }
  func.func @transform_9(%arg0: i32) -> (i32, i32) {
    %c0_i32 = arith.constant 0 : i32
    %c0_i32_0 = arith.constant 0 : i32
    %c0_i32_1 = arith.constant 0 : i32
    return %c0_i32, %c0_i32_0 : i32, i32
  }
  func.func @transform_10(%arg0: i32) -> (i32, i32) {
    %c0_i32 = arith.constant 0 : i32
    %c0_i32_0 = arith.constant 0 : i32
    return %arg0, %c0_i32 : i32, i32
  }
}

</mosaic_0001>

<llo_original>
// kernel: tpu_custom_call.1
$region0: #{tpu_custom_call.1}
  #allocation0 [shape = 'u32[]', space=smem, size = 0x4, offset = 0x4, fixed_abs, tag = 'smem constant byte address 0x4 - core index']
  #allocation1 [shape = 'u32[144,128]{1,0:T(1,128)}', space=vmem, size = 0x12000, scoped, tag = 'internal scratch']
  %s0 = inlined_call_operand.hbm [shape: f32[256,384], index: 0, kind: input, shape index: {}]
  %s1 = inlined_call_operand.hbm [shape: bf16[3,384,128], index: 1, kind: input, shape index: {}]
  %s2 = inlined_call_operand.hbm [shape: bf16[4,3,128,128], index: 2, kind: input, shape index: {}]
  %s3 = inlined_call_operand.hbm [shape: bf16[5,128,128], index: 3, kind: input, shape index: {}]
  %s4 = inlined_call_operand.vmem [shape: bf16[128,128], index: 4, kind: input, shape index: {}]
  %s5 = inlined_call_operand.vmem [shape: f32[11,128], index: 5, kind: input, shape index: {}]
  %s6 = inlined_call_operand.vmem [shape: bf16[64,128], index: 6, kind: input, shape index: {}]
  %s7 = inlined_call_operand.vmem [shape: bf16[128,32], index: 7, kind: input, shape index: {}]
  %s8 = inlined_call_operand.vmem [shape: bf16[128,64], index: 8, kind: input, shape index: {}]
  %s9 = inlined_call_operand.vmem [shape: bf16[32,128], index: 9, kind: input, shape index: {}]
  %s10 = inlined_call_operand.hbm [shape: f32[256,128], index: 10, kind: output, shape index: {}]
  %s11 = sld [smem:[#allocation0]]
  $region89: #{tpu_custom_call.1} parent=0
    _
  %s13 = ssub.s32 1, %s11
  %s14 = scalar_select 0, %s13, %s11
  $region1: #{tpu_custom_call.1} parent=0
    #allocation2 [shape = 'u8[393216]{0}', space=vmem, size = 0x60000, scoped, tag = 'input window, operand 0']
    #allocation3 [shape = 's32[2]{0}', space=sflag, size = 0x8, scoped, tag = 'scoped memory for tpu_custom_call.1']
    #allocation4 [shape = 's32[2]{0}', space=sflag, size = 0x8, scoped, tag = 'scoped memory for tpu_custom_call.1']
    #allocation5 [shape = 'u8[294912]{0}', space=vmem, size = 0x48000, scoped, tag = 'input window, operand 1, single buffered']
    #allocation6 [shape = 's32[1]{0}', space=sflag, size = 0x4, scoped, tag = 'scoped memory for tpu_custom_call.1']
    #allocation7 [shape = 'u8[393216]{0}', space=vmem, size = 0x60000, scoped, tag = 'input window, operand 2, single buffered']
    #allocation8 [shape = 'u8[163840]{0}', space=vmem, size = 0x28000, scoped, tag = 'input window, operand 3, single buffered']
    #allocation9 [shape = 's32[1]{0}', space=sflag, size = 0x4, scoped, tag = 'scoped memory for tpu_custom_call.1']
    #allocation10 [shape = 'u8[131072]{0}', space=vmem, size = 0x20000, scoped, tag = 'output window, operand 0']
    %15 = vsyncpa [#allocation3], 0
    %s16 = scalar_lea.sflag [#allocation3], 1
    %17 = vsyncpa %s16, 0
    %18 = vsyncpa [#allocation6], 0
    %19 = vsyncpa [#allocation9], 0
    %20 = vsyncpa [#allocation4], 0
    %s21 = scalar_lea.sflag [#allocation4], 1
    %22 = vsyncpa %s21, 0
    loop: start=0, step=1, limit=4
    $region2: #{tpu_custom_call.1} parent=1 // loop_pre_header
      _
    $region3: #{tpu_custom_call.1} parent=1 // loop_header
      %s24 = sphi 0, %s28
      %p25 = scmp.ge.s32.totalorder %s24, 4
      %s34 = sphi 0, %s36
      %s37 = sphi 0, %s34
      %s38 = sphi 0, %s37
      %s54 = sphi 0, %s38
      %s58 = sphi 0, %s58
      %s60 = sphi 0, %s58
      %s61 = sphi 0, %s60
      %s75 = sphi 0, %s61
      %s79 = sphi 0, %s79
      %s81 = sphi 0, %s79
      %s82 = sphi 0, %s81
      %s96 = sphi 0, %s82
      %s100 = sphi 0, %s100
      %s102 = sphi 0, %s100
      %s103 = sphi 0, %s102
      %s117 = sphi 0, %s103
      %s121 = sphi 0, %s121
      %s123 = sphi 0, %s121
      %s124 = sphi 0, %s123
      %s138 = sphi 0, %s124
      %s142 = sphi 0, %s142
      %s144 = sphi 0, %s142
      %s145 = sphi 0, %s144
      %s159 = sphi 0, %s145
      %s163 = sphi 0, %s163
      %s165 = sphi 0, %s163
      %s166 = sphi 0, %s165
      %s180 = sphi 0, %s166
      %s184 = sphi 0, %s184
      %s186 = sphi 0, %s184
      %s187 = sphi 0, %s186
      %s201 = sphi 0, %s187
      %s205 = sphi 0, %s205
      %s207 = sphi 0, %s205
      %s208 = sphi 0, %s207
      %s222 = sphi 0, %s208
      %s226 = sphi 0, %s226
      %s228 = sphi 0, %s226
      %s229 = sphi 0, %s228
      %s243 = sphi 0, %s229
      %s249 = sphi 0, %s251
      %s252 = sphi 0, %s249
      %s253 = sphi 0, %s252
      %s269 = sphi 0, %s253
    $region4: #{tpu_custom_call.1} parent=1 // loop_header_branch
      %27 = sbr.rel (%p25) target = $region8
    $region5: #{tpu_custom_call.1} parent=1 // loop_body
      %s29 = ssub.s32 %s24, 1
      %s30 = ssub.s32 %s24, 2
      %s31 = sadd.s32 %s24, 1
      %s32 = ssub.s32 %s24, %s31
      %p33 = scmp.eq.s32.totalorder %s32, 0
      %s35 = sadd.s32 %s34, 1
      %s36 = scalar_select %p33, %s34, %s35
      %p39 = pneg %p33
      %p40 = scmp.eq.s32.totalorder %s24, 1
      %p41 = por %p39, %p40
      %p42 = scmp.ne.s32.totalorder %s34, %s37
      %p43 = scmp.eq.s32.totalorder %s24, 0
      %p44 = por %p42, %p43
      %p45 = scmp.ne.s32.totalorder %s34, %s37
      %p46 = scmp.eq.s32.totalorder %s29, 1
      %p47 = por %p45, %p46
      %p48 = scmp.ne.s32.totalorder %s37, %s38
      %p49 = scmp.eq.s32.totalorder %s29, 0
      %p50 = por %p48, %p49
      %p51 = scmp.ne.s32.totalorder %s37, %s38
      %p52 = scmp.eq.s32.totalorder %s30, 1
      %p53 = por %p51, %p52
      %p55 = scmp.ne.s32.totalorder %s38, %s54
      %p56 = scmp.eq.s32.totalorder %s30, 0
      %p57 = por %p55, %p56
      %s59 = sadd.s32 %s58, 1
      %p62 = scmp.eq.s32.totalorder %s24, 1
      %p63 = scmp.ne.s32.totalorder %s58, %s60
      %p64 = scmp.eq.s32.totalorder %s24, 0
      %p65 = por %p63, %p64
      %p66 = scmp.ne.s32.totalorder %s58, %s60
      %p67 = scmp.eq.s32.totalorder %s29, 1
      %p68 = por %p66, %p67
      %p69 = scmp.ne.s32.totalorder %s60, %s61
      %p70 = scmp.eq.s32.totalorder %s29, 0
      %p71 = por %p69, %p70
      %p72 = scmp.ne.s32.totalorder %s60, %s61
      %p73 = scmp.eq.s32.totalorder %s30, 1
      %p74 = por %p72, %p73
      %p76 = scmp.ne.s32.totalorder %s61, %s75
      %p77 = scmp.eq.s32.totalorder %s30, 0
      %p78 = por %p76, %p77
      %s80 = sadd.s32 %s79, 1
      %p83 = scmp.eq.s32.totalorder %s24, 1
      %p84 = scmp.ne.s32.totalorder %s79, %s81
      %p85 = scmp.eq.s32.totalorder %s24, 0
      %p86 = por %p84, %p85
      %p87 = scmp.ne.s32.totalorder %s79, %s81
      %p88 = scmp.eq.s32.totalorder %s29, 1
      %p89 = por %p87, %p88
      %p90 = scmp.ne.s32.totalorder %s81, %s82
      %p91 = scmp.eq.s32.totalorder %s29, 0
      %p92 = por %p90, %p91
      %p93 = scmp.ne.s32.totalorder %s81, %s82
      %p94 = scmp.eq.s32.totalorder %s30, 1
      %p95 = por %p93, %p94
      %p97 = scmp.ne.s32.totalorder %s82, %s96
      %p98 = scmp.eq.s32.totalorder %s30, 0
      %p99 = por %p97, %p98
      %s101 = sadd.s32 %s100, 1
      %p104 = scmp.eq.s32.totalorder %s24, 1
      %p105 = scmp.ne.s32.totalorder %s100, %s102
      %p106 = scmp.eq.s32.totalorder %s24, 0
      %p107 = por %p105, %p106
      %p108 = scmp.ne.s32.totalorder %s100, %s102
      %p109 = scmp.eq.s32.totalorder %s29, 1
      %p110 = por %p108, %p109
      %p111 = scmp.ne.s32.totalorder %s102, %s103
      %p112 = scmp.eq.s32.totalorder %s29, 0
      %p113 = por %p111, %p112
      %p114 = scmp.ne.s32.totalorder %s102, %s103
      %p115 = scmp.eq.s32.totalorder %s30, 1
      %p116 = por %p114, %p115
      %p118 = scmp.ne.s32.totalorder %s103, %s117
      %p119 = scmp.eq.s32.totalorder %s30, 0
      %p120 = por %p118, %p119
      %s122 = sadd.s32 %s121, 1
      %p125 = scmp.eq.s32.totalorder %s24, 1
      %p126 = scmp.ne.s32.totalorder %s121, %s123
      %p127 = scmp.eq.s32.totalorder %s24, 0
      %p128 = por %p126, %p127
      %p129 = scmp.ne.s32.totalorder %s121, %s123
      %p130 = scmp.eq.s32.totalorder %s29, 1
      %p131 = por %p129, %p130
      %p132 = scmp.ne.s32.totalorder %s123, %s124
      %p133 = scmp.eq.s32.totalorder %s29, 0
      %p134 = por %p132, %p133
      %p135 = scmp.ne.s32.totalorder %s123, %s124
      %p136 = scmp.eq.s32.totalorder %s30, 1
      %p137 = por %p135, %p136
      %p139 = scmp.ne.s32.totalorder %s124, %s138
      %p140 = scmp.eq.s32.totalorder %s30, 0
      %p141 = por %p139, %p140
      %s143 = sadd.s32 %s142, 1
      %p146 = scmp.eq.s32.totalorder %s24, 1
      %p147 = scmp.ne.s32.totalorder %s142, %s144
      %p148 = scmp.eq.s32.totalorder %s24, 0
      %p149 = por %p147, %p148
      %p150 = scmp.ne.s32.totalorder %s142, %s144
      %p151 = scmp.eq.s32.totalorder %s29, 1
      %p152 = por %p150, %p151
      %p153 = scmp.ne.s32.totalorder %s144, %s145
      %p154 = scmp.eq.s32.totalorder %s29, 0
      %p155 = por %p153, %p154
      %p156 = scmp.ne.s32.totalorder %s144, %s145
      %p157 = scmp.eq.s32.totalorder %s30, 1
      %p158 = por %p156, %p157
      %p160 = scmp.ne.s32.totalorder %s145, %s159
      %p161 = scmp.eq.s32.totalorder %s30, 0
      %p162 = por %p160, %p161
      %s164 = sadd.s32 %s163, 1
      %p167 = scmp.eq.s32.totalorder %s24, 1
      %p168 = scmp.ne.s32.totalorder %s163, %s165
      %p169 = scmp.eq.s32.totalorder %s24, 0
      %p170 = por %p168, %p169
      %p171 = scmp.ne.s32.totalorder %s163, %s165
      %p172 = scmp.eq.s32.totalorder %s29, 1
      %p173 = por %p171, %p172
      %p174 = scmp.ne.s32.totalorder %s165, %s166
      %p175 = scmp.eq.s32.totalorder %s29, 0
      %p176 = por %p174, %p175
      %p177 = scmp.ne.s32.totalorder %s165, %s166
      %p178 = scmp.eq.s32.totalorder %s30, 1
      %p179 = por %p177, %p178
      %p181 = scmp.ne.s32.totalorder %s166, %s180
      %p182 = scmp.eq.s32.totalorder %s30, 0
      %p183 = por %p181, %p182
      %s185 = sadd.s32 %s184, 1
      %p188 = scmp.eq.s32.totalorder %s24, 1
      %p189 = scmp.ne.s32.totalorder %s184, %s186
      %p190 = scmp.eq.s32.totalorder %s24, 0
      %p191 = por %p189, %p190
      %p192 = scmp.ne.s32.totalorder %s184, %s186
      %p193 = scmp.eq.s32.totalorder %s29, 1
      %p194 = por %p192, %p193
      %p195 = scmp.ne.s32.totalorder %s186, %s187
      %p196 = scmp.eq.s32.totalorder %s29, 0
      %p197 = por %p195, %p196
      %p198 = scmp.ne.s32.totalorder %s186, %s187
      %p199 = scmp.eq.s32.totalorder %s30, 1
      %p200 = por %p198, %p199
      %p202 = scmp.ne.s32.totalorder %s187, %s201
      %p203 = scmp.eq.s32.totalorder %s30, 0
      %p204 = por %p202, %p203
      %s206 = sadd.s32 %s205, 1
      %p209 = scmp.eq.s32.totalorder %s24, 1
      %p210 = scmp.ne.s32.totalorder %s205, %s207
      %p211 = scmp.eq.s32.totalorder %s24, 0
      %p212 = por %p210, %p211
      %p213 = scmp.ne.s32.totalorder %s205, %s207
      %p214 = scmp.eq.s32.totalorder %s29, 1
      %p215 = por %p213, %p214
      %p216 = scmp.ne.s32.totalorder %s207, %s208
      %p217 = scmp.eq.s32.totalorder %s29, 0
      %p218 = por %p216, %p217
      %p219 = scmp.ne.s32.totalorder %s207, %s208
      %p220 = scmp.eq.s32.totalorder %s30, 1
      %p221 = por %p219, %p220
      %p223 = scmp.ne.s32.totalorder %s208, %s222
      %p224 = scmp.eq.s32.totalorder %s30, 0
      %p225 = por %p223, %p224
      %s227 = sadd.s32 %s226, 1
      %p230 = scmp.eq.s32.totalorder %s24, 1
      %p231 = scmp.ne.s32.totalorder %s226, %s228
      %p232 = scmp.eq.s32.totalorder %s24, 0
      %p233 = por %p231, %p232
      %p234 = scmp.ne.s32.totalorder %s226, %s228
      %p235 = scmp.eq.s32.totalorder %s29, 1
      %p236 = por %p234, %p235
      %p237 = scmp.ne.s32.totalorder %s228, %s229
      %p238 = scmp.eq.s32.totalorder %s29, 0
      %p239 = por %p237, %p238
      %p240 = scmp.ne.s32.totalorder %s228, %s229
      %p241 = scmp.eq.s32.totalorder %s30, 1
      %p242 = por %p240, %p241
      %p244 = scmp.ne.s32.totalorder %s229, %s243
      %p245 = scmp.eq.s32.totalorder %s30, 0
      %p246 = por %p244, %p245
      %s247 = ssub.s32 %s24, %s31
      %p248 = scmp.eq.s32.totalorder %s247, 0
      %s250 = sadd.s32 %s249, 1
      %s251 = scalar_select %p248, %s249, %s250
      %p254 = pneg %p248
      %p255 = scmp.eq.s32.totalorder %s24, 1
      %p256 = por %p254, %p255
      %p257 = scmp.ne.s32.totalorder %s249, %s252
      %p258 = scmp.eq.s32.totalorder %s24, 0
      %p259 = por %p257, %p258
      %p260 = scmp.ne.s32.totalorder %s249, %s252
      %p261 = scmp.eq.s32.totalorder %s29, 1
      %p262 = por %p260, %p261
      %p263 = scmp.ne.s32.totalorder %s252, %s253
      %p264 = scmp.eq.s32.totalorder %s29, 0
      %p265 = por %p263, %p264
      %p266 = scmp.ne.s32.totalorder %s252, %s253
      %p267 = scmp.eq.s32.totalorder %s30, 1
      %p268 = por %p266, %p267
      %p270 = scmp.ne.s32.totalorder %s253, %s269
      %p271 = scmp.eq.s32.totalorder %s30, 0
      %p272 = por %p270, %p271
      %p273 = scmp.le.s32.totalorder 1, %s24
      %p274 = scmp.lt.s32.totalorder %s24, 3
      %p275 = pnand %p273, %p274
      %p276 = pneg %p275
      // Predicated region
      $region9: #{tpu_custom_call.1} parent=5 // pred_check
        _
      $region10: #{tpu_custom_call.1} parent=5 // pred_check_branch
        %278 = sbr.rel (%p275) target = $region12
      $region11: #{tpu_custom_call.1} parent=5 // pred_region
        %s279 = ssub.s32 %s24, 1
        // Predicated region
        $region13: #{tpu_custom_call.1} parent=11 // pred_check
          %p280 = pneg %p71
        $region14: #{tpu_custom_call.1} parent=11 // pred_check_branch
          %282 = sbr.rel (%p280) target = $region16
        $region15: #{tpu_custom_call.1} parent=11 // pred_region
          %s284 = ssub.s32 9216, 9216
          %285 = vsyncadd [#allocation6], %s284
          %s286 = sshll.u32 [#allocation5], 4
          %s287 = int_to_ptr.vmem [resolvable:$true] %s286
          %292 = dma.hbm_to_vmem [thread:$0]  %s1, 9216, %s287, [#allocation6], 64, 64, 4
        $region16: #{tpu_custom_call.1} parent=11 // pred_fallthru
          _
        // Predicated region
        $region17: #{tpu_custom_call.1} parent=11 // pred_check
          %p293 = pneg %p92
        $region18: #{tpu_custom_call.1} parent=11 // pred_check_branch
          %295 = sbr.rel (%p293) target = $region20
        $region19: #{tpu_custom_call.1} parent=11 // pred_region
          %s297 = ssub.s32 12288, 12288
          %298 = vsyncadd [#allocation6], %s297
          %s299 = sshll.u32 [#allocation7], 4
          %s300 = int_to_ptr.vmem [resolvable:$true] %s299
          %305 = dma.hbm_to_vmem [thread:$0]  %s2, 12288, %s300, [#allocation6], 64, 64, 4
        $region20: #{tpu_custom_call.1} parent=11 // pred_fallthru
          _
        // Predicated region
        $region21: #{tpu_custom_call.1} parent=11 // pred_check
          %p306 = pneg %p113
        $region22: #{tpu_custom_call.1} parent=11 // pred_check_branch
          %308 = sbr.rel (%p306) target = $region24
        $region23: #{tpu_custom_call.1} parent=11 // pred_region
          %s310 = ssub.s32 5120, 5120
          %311 = vsyncadd [#allocation9], %s310
          %s312 = sshll.u32 [#allocation8], 4
          %s313 = int_to_ptr.vmem [resolvable:$true] %s312
          %318 = dma.hbm_to_vmem [thread:$0]  %s3, 5120, %s313, [#allocation9], 64, 64, 4
        $region24: #{tpu_custom_call.1} parent=11 // pred_fallthru
          _
        // Predicated region
        $region25: #{tpu_custom_call.1} parent=11 // pred_check
          %p319 = pneg %p134
        $region26: #{tpu_custom_call.1} parent=11 // pred_check_branch
          %321 = sbr.rel (%p319) target = $region28
        $region27: #{tpu_custom_call.1} parent=11 // pred_region
          _
        $region28: #{tpu_custom_call.1} parent=11 // pred_fallthru
          _
        // Predicated region
        $region29: #{tpu_custom_call.1} parent=11 // pred_check
          %p322 = pneg %p155
        $region30: #{tpu_custom_call.1} parent=11 // pred_check_branch
          %324 = sbr.rel (%p322) target = $region32
        $region31: #{tpu_custom_call.1} parent=11 // pred_region
          _
        $region32: #{tpu_custom_call.1} parent=11 // pred_fallthru
          _
        // Predicated region
        $region33: #{tpu_custom_call.1} parent=11 // pred_check
          %p325 = pneg %p176
        $region34: #{tpu_custom_call.1} parent=11 // pred_check_branch
          %327 = sbr.rel (%p325) target = $region36
        $region35: #{tpu_custom_call.1} parent=11 // pred_region
          _
        $region36: #{tpu_custom_call.1} parent=11 // pred_fallthru
          _
        // Predicated region
        $region37: #{tpu_custom_call.1} parent=11 // pred_check
          %p328 = pneg %p197
        $region38: #{tpu_custom_call.1} parent=11 // pred_check_branch
          %330 = sbr.rel (%p328) target = $region40
        $region39: #{tpu_custom_call.1} parent=11 // pred_region
          _
        $region40: #{tpu_custom_call.1} parent=11 // pred_fallthru
          _
        // Predicated region
        $region41: #{tpu_custom_call.1} parent=11 // pred_check
          %p331 = pneg %p218
        $region42: #{tpu_custom_call.1} parent=11 // pred_check_branch
          %333 = sbr.rel (%p331) target = $region44
        $region43: #{tpu_custom_call.1} parent=11 // pred_region
          _
        $region44: #{tpu_custom_call.1} parent=11 // pred_fallthru
          _
        // Predicated region
        $region45: #{tpu_custom_call.1} parent=11 // pred_check
          %p334 = pneg %p239
        $region46: #{tpu_custom_call.1} parent=11 // pred_check_branch
          %336 = sbr.rel (%p334) target = $region48
        $region47: #{tpu_custom_call.1} parent=11 // pred_region
          _
        $region48: #{tpu_custom_call.1} parent=11 // pred_fallthru
          _
      $region12: #{tpu_custom_call.1} parent=5 // pred_fallthru
        _
      %p337 = scmp.lt.s32.totalorder %s24, 2
      // Predicated region
      $region49: #{tpu_custom_call.1} parent=5 // pred_check
        %p338 = pneg %p337
      $region50: #{tpu_custom_call.1} parent=5 // pred_check_branch
        %340 = sbr.rel (%p338) target = $region52
      $region51: #{tpu_custom_call.1} parent=5 // pred_region
        // Predicated region
        $region53: #{tpu_custom_call.1} parent=51 // pred_check
          %p341 = pneg %p44
        $region54: #{tpu_custom_call.1} parent=51 // pred_check_branch
          %343 = sbr.rel (%p341) target = $region56
        $region55: #{tpu_custom_call.1} parent=51 // pred_region
          %s344 = sand.u32 %s34, 1
          %s345 = scalar_lea.sflag [#allocation3], %s344
          %s346 = sand.u32 %s34, 1
          %s347 = smul.addr %s346, 384
          %s348 = scalar_lea.vmem [#allocation2], %s347
          %s349 = smul.u32 16, %s24
          %s351 = ssub.s32 6144, 6144
          %352 = vsyncadd %s345, %s351
          %s353 = smul.addr %s349, 3
          %s354 = smul.addr %s353, 128
          %s355 = scalar_lea.hbm %s0, %s354
          %s356 = sshll.u32 %s348, 4
          %s357 = int_to_ptr.vmem [resolvable:$true] %s356
          %362 = dma.hbm_to_vmem [thread:$0]  %s355, 6144, %s357, %s345, 384, 384, 24
        $region56: #{tpu_custom_call.1} parent=51 // pred_fallthru
          _
      $region52: #{tpu_custom_call.1} parent=5 // pred_fallthru
        _
      %p363 = scmp.le.s32.totalorder 1, %s24
      %p364 = scmp.lt.s32.totalorder %s24, 3
      %p365 = pnand %p363, %p364
      %p366 = pneg %p365
      // Predicated region
      $region57: #{tpu_custom_call.1} parent=5 // pred_check
        _
      $region58: #{tpu_custom_call.1} parent=5 // pred_check_branch
        %368 = sbr.rel (%p365) target = $region60
      $region59: #{tpu_custom_call.1} parent=5 // pred_region
        %s369 = ssub.s32 %s24, 1
        %s370 = sand.u32 %s37, 1
        %s371 = scalar_lea.sflag [#allocation3], %s370
        %s372 = sand.u32 %s37, 1
        %s373 = smul.addr %s372, 384
        %s374 = scalar_lea.vmem [#allocation2], %s373
        // Predicated region
        $region61: #{tpu_custom_call.1} parent=59 // pred_check
          %p375 = pneg %p50
        $region62: #{tpu_custom_call.1} parent=59 // pred_check_branch
          %377 = sbr.rel (%p375) target = $region64
        $region63: #{tpu_custom_call.1} parent=59 // pred_region
          %378 = dma.done %s371, 6144
        $region64: #{tpu_custom_call.1} parent=59 // pred_fallthru
          _
        // Predicated region
        $region65: #{tpu_custom_call.1} parent=59 // pred_check
          %p379 = pneg %p71
        $region66: #{tpu_custom_call.1} parent=59 // pred_check_branch
          %381 = sbr.rel (%p379) target = $region68
        $region67: #{tpu_custom_call.1} parent=59 // pred_region
          %382 = dma.done [#allocation6], 9216
        $region68: #{tpu_custom_call.1} parent=59 // pred_fallthru
          _
        // Predicated region
        $region69: #{tpu_custom_call.1} parent=59 // pred_check
          %p383 = pneg %p92
        $region70: #{tpu_custom_call.1} parent=59 // pred_check_branch
          %385 = sbr.rel (%p383) target = $region72
        $region71: #{tpu_custom_call.1} parent=59 // pred_region
          %386 = dma.done [#allocation6], 12288
        $region72: #{tpu_custom_call.1} parent=59 // pred_fallthru
          _
        // Predicated region
        $region73: #{tpu_custom_call.1} parent=59 // pred_check
          %p387 = pneg %p113
        $region74: #{tpu_custom_call.1} parent=59 // pred_check_branch
          %389 = sbr.rel (%p387) target = $region76
        $region75: #{tpu_custom_call.1} parent=59 // pred_region
          %390 = dma.done [#allocation9], 5120
        $region76: #{tpu_custom_call.1} parent=59 // pred_fallthru
          _
        %s391 = sand.u32 %s37, 1
        %s392 = scalar_lea.sflag [#allocation3], %s391
        %s393 = sand.u32 %s37, 1
        %s394 = smul.addr %s393, 384
        %s395 = scalar_lea.vmem [#allocation2], %s394
        %p396 = pneg %p50
        %p397 = pneg %p47
        %p398 = pneg %p71
        %p399 = pneg %p68
        %p400 = pneg %p92
        %p401 = pneg %p89
        %p402 = pneg %p113
        %p403 = pneg %p110
        %p404 = pneg %p134
        %p405 = pneg %p131
        %p406 = pneg %p155
        %p407 = pneg %p152
        %p408 = pneg %p176
        %p409 = pneg %p173
        %p410 = pneg %p197
        %p411 = pneg %p194
        %p412 = pneg %p218
        %p413 = pneg %p215
        %p414 = pneg %p239
        %p415 = pneg %p236
        %p416 = pneg %p265
        %p417 = pneg %p262
        %s418 = sand.u32 %s252, 1
        %s419 = scalar_lea.sflag [#allocation4], %s418
        %s420 = sand.u32 %s252, 1
        %s421 = smul.addr %s420, 128
        %s422 = scalar_lea.vmem [#allocation10], %s421
        %s423 = smul.u32 16, %s29
        %s424 = smul.u32 16, %s29
        %v426 = vlaneseq
        %v427 = vshrl.u32 %v426, 7
        %v428 = vadd.s32 %v427, 8
        %v429 = vadd.s32 %v427, 16
        %v430 = vadd.s32 %v427, 24
        %v431 = vadd.s32 %v427, 32
        %v432 = vadd.s32 %v427, 40
        %v433 = vadd.s32 %v427, 48
        %v434 = vadd.s32 %v427, 56
        %v435 = vadd.s32 %v427, 64
        %v436 = vadd.s32 %v427, 72
        %v437 = vadd.s32 %v427, 80
        %v438 = vadd.s32 %v427, 88
        %v439 = vadd.s32 %v427, 96
        %v440 = vadd.s32 %v427, 104
        %v441 = vadd.s32 %v427, 112
        %v442 = vadd.s32 %v427, 120
        %vm443 = vcmp.lt.s32.totalorder %v427, 0
        %v444 = vsub.s32 0, %v427
        %v445 = vsel %vm443, %v444, %v427
        %v446 = vshrl.u32 %v445, 4
        %v447 = vand.u32 %v445, 15
        %v448 = vsub.s32 0, %v447
        %v449 = vsel %vm443, %v448, %v447
        %vm450 = vcmp.lt.s32.totalorder %v428, 0
        %v451 = vsub.s32 0, %v428
        %v452 = vsel %vm450, %v451, %v428
        %v453 = vshrl.u32 %v452, 4
        %v454 = vand.u32 %v452, 15
        %v455 = vsub.s32 0, %v454
        %v456 = vsel %vm450, %v455, %v454
        %vm457 = vcmp.lt.s32.totalorder %v429, 0
        %v458 = vsub.s32 0, %v429
        %v459 = vsel %vm457, %v458, %v429
        %v460 = vshrl.u32 %v459, 4
        %v461 = vand.u32 %v459, 15
        %v462 = vsub.s32 0, %v461
        %v463 = vsel %vm457, %v462, %v461
        %vm464 = vcmp.lt.s32.totalorder %v430, 0
        %v465 = vsub.s32 0, %v430
        %v466 = vsel %vm464, %v465, %v430
        %v467 = vshrl.u32 %v466, 4
        %v468 = vand.u32 %v466, 15
        %v469 = vsub.s32 0, %v468
        %v470 = vsel %vm464, %v469, %v468
        %vm471 = vcmp.lt.s32.totalorder %v431, 0
        %v472 = vsub.s32 0, %v431
        %v473 = vsel %vm471, %v472, %v431
        %v474 = vshrl.u32 %v473, 4
        %v475 = vand.u32 %v473, 15
        %v476 = vsub.s32 0, %v475
        %v477 = vsel %vm471, %v476, %v475
        %vm478 = vcmp.lt.s32.totalorder %v432, 0
        %v479 = vsub.s32 0, %v432
        %v480 = vsel %vm478, %v479, %v432
        %v481 = vshrl.u32 %v480, 4
        %v482 = vand.u32 %v480, 15
        %v483 = vsub.s32 0, %v482
        %v484 = vsel %vm478, %v483, %v482
        %vm485 = vcmp.lt.s32.totalorder %v433, 0
        %v486 = vsub.s32 0, %v433
        %v487 = vsel %vm485, %v486, %v433
        %v488 = vshrl.u32 %v487, 4
        %v489 = vand.u32 %v487, 15
        %v490 = vsub.s32 0, %v489
        %v491 = vsel %vm485, %v490, %v489
        %vm492 = vcmp.lt.s32.totalorder %v434, 0
        %v493 = vsub.s32 0, %v434
        %v494 = vsel %vm492, %v493, %v434
        %v495 = vshrl.u32 %v494, 4
        %v496 = vand.u32 %v494, 15
        %v497 = vsub.s32 0, %v496
        %v498 = vsel %vm492, %v497, %v496
        %vm499 = vcmp.lt.s32.totalorder %v435, 0
        %v500 = vsub.s32 0, %v435
        %v501 = vsel %vm499, %v500, %v435
        %v502 = vshrl.u32 %v501, 4
        %v503 = vand.u32 %v501, 15
        %v504 = vsub.s32 0, %v503
        %v505 = vsel %vm499, %v504, %v503
        %vm506 = vcmp.lt.s32.totalorder %v436, 0
        %v507 = vsub.s32 0, %v436
        %v508 = vsel %vm506, %v507, %v436
        %v509 = vshrl.u32 %v508, 4
        %v510 = vand.u32 %v508, 15
        %v511 = vsub.s32 0, %v510
        %v512 = vsel %vm506, %v511, %v510
        %vm513 = vcmp.lt.s32.totalorder %v437, 0
        %v514 = vsub.s32 0, %v437
        %v515 = vsel %vm513, %v514, %v437
        %v516 = vshrl.u32 %v515, 4
        %v517 = vand.u32 %v515, 15
        %v518 = vsub.s32 0, %v517
        %v519 = vsel %vm513, %v518, %v517
        %vm520 = vcmp.lt.s32.totalorder %v438, 0
        %v521 = vsub.s32 0, %v438
        %v522 = vsel %vm520, %v521, %v438
        %v523 = vshrl.u32 %v522, 4
        %v524 = vand.u32 %v522, 15
        %v525 = vsub.s32 0, %v524
        %v526 = vsel %vm520, %v525, %v524
        %vm527 = vcmp.lt.s32.totalorder %v439, 0
        %v528 = vsub.s32 0, %v439
        %v529 = vsel %vm527, %v528, %v439
        %v530 = vshrl.u32 %v529, 4
        %v531 = vand.u32 %v529, 15
        %v532 = vsub.s32 0, %v531
        %v533 = vsel %vm527, %v532, %v531
        %vm534 = vcmp.lt.s32.totalorder %v440, 0
        %v535 = vsub.s32 0, %v440
        %v536 = vsel %vm534, %v535, %v440
        %v537 = vshrl.u32 %v536, 4
        %v538 = vand.u32 %v536, 15
        %v539 = vsub.s32 0, %v538
        %v540 = vsel %vm534, %v539, %v538
        %vm541 = vcmp.lt.s32.totalorder %v441, 0
        %v542 = vsub.s32 0, %v441
        %v543 = vsel %vm541, %v542, %v441
        %v544 = vshrl.u32 %v543, 4
        %v545 = vand.u32 %v543, 15
        %v546 = vsub.s32 0, %v545
        %v547 = vsel %vm541, %v546, %v545
        %vm548 = vcmp.lt.s32.totalorder %v442, 0
        %v549 = vsub.s32 0, %v442
        %v550 = vsel %vm548, %v549, %v442
        %v551 = vshrl.u32 %v550, 4
        %v552 = vand.u32 %v550, 15
        %v553 = vsub.s32 0, %v552
        %v554 = vsel %vm548, %v553, %v552
        %vm555 = vcmp.ne.s32.totalorder %v449, 0
        %vm556 = vcmp.ne.s32.totalorder %v456, 0
        %vm557 = vcmp.ne.s32.totalorder %v463, 0
        %vm558 = vcmp.ne.s32.totalorder %v470, 0
        %vm559 = vcmp.ne.s32.totalorder %v477, 0
        %vm560 = vcmp.ne.s32.totalorder %v484, 0
        %vm561 = vcmp.ne.s32.totalorder %v491, 0
        %vm562 = vcmp.ne.s32.totalorder %v498, 0
        %vm563 = vcmp.ne.s32.totalorder %v505, 0
        %vm564 = vcmp.ne.s32.totalorder %v512, 0
        %vm565 = vcmp.ne.s32.totalorder %v519, 0
        %vm566 = vcmp.ne.s32.totalorder %v526, 0
        %vm567 = vcmp.ne.s32.totalorder %v533, 0
        %vm568 = vcmp.ne.s32.totalorder %v540, 0
        %vm569 = vcmp.ne.s32.totalorder %v547, 0
        %vm570 = vcmp.ne.s32.totalorder %v554, 0
        %vm571 = vcmp.lt.s32.totalorder %v449, 0
        %vm572 = vcmp.lt.s32.totalorder %v456, 0
        %vm573 = vcmp.lt.s32.totalorder %v463, 0
        %vm574 = vcmp.lt.s32.totalorder %v470, 0
        %vm575 = vcmp.lt.s32.totalorder %v477, 0
        %vm576 = vcmp.lt.s32.totalorder %v484, 0
        %vm577 = vcmp.lt.s32.totalorder %v491, 0
        %vm578 = vcmp.lt.s32.totalorder %v498, 0
        %vm579 = vcmp.lt.s32.totalorder %v505, 0
        %vm580 = vcmp.lt.s32.totalorder %v512, 0
        %vm581 = vcmp.lt.s32.totalorder %v519, 0
        %vm582 = vcmp.lt.s32.totalorder %v526, 0
        %vm583 = vcmp.lt.s32.totalorder %v533, 0
        %vm584 = vcmp.lt.s32.totalorder %v540, 0
        %vm585 = vcmp.lt.s32.totalorder %v547, 0
        %vm586 = vcmp.lt.s32.totalorder %v554, 0
        %vm587 = vmand %vm571, %vm555
        %vm588 = vmand %vm572, %vm556
        %vm589 = vmand %vm573, %vm557
        %vm590 = vmand %vm574, %vm558
        %vm591 = vmand %vm575, %vm559
        %vm592 = vmand %vm576, %vm560
        %vm593 = vmand %vm577, %vm561
        %vm594 = vmand %vm578, %vm562
        %vm595 = vmand %vm579, %vm563
        %vm596 = vmand %vm580, %vm564
        %vm597 = vmand %vm581, %vm565
        %vm598 = vmand %vm582, %vm566
        %vm599 = vmand %vm583, %vm567
        %vm600 = vmand %vm584, %vm568
        %vm601 = vmand %vm585, %vm569
        %vm602 = vmand %vm586, %vm570
        %v603 = vadd.s32 %v449, 16
        %v604 = vadd.s32 %v456, 16
        %v605 = vadd.s32 %v463, 16
        %v606 = vadd.s32 %v470, 16
        %v607 = vadd.s32 %v477, 16
        %v608 = vadd.s32 %v484, 16
        %v609 = vadd.s32 %v491, 16
        %v610 = vadd.s32 %v498, 16
        %v611 = vadd.s32 %v505, 16
        %v612 = vadd.s32 %v512, 16
        %v613 = vadd.s32 %v519, 16
        %v614 = vadd.s32 %v526, 16
        %v615 = vadd.s32 %v533, 16
        %v616 = vadd.s32 %v540, 16
        %v617 = vadd.s32 %v547, 16
        %v618 = vadd.s32 %v554, 16
        %v619 = vsel %vm587, %v603, %v449
        %v620 = vsel %vm588, %v604, %v456
        %v621 = vsel %vm589, %v605, %v463
        %v622 = vsel %vm590, %v606, %v470
        %v623 = vsel %vm591, %v607, %v477
        %v624 = vsel %vm592, %v608, %v484
        %v625 = vsel %vm593, %v609, %v491
        %v626 = vsel %vm594, %v610, %v498
        %v627 = vsel %vm595, %v611, %v505
        %v628 = vsel %vm596, %v612, %v512
        %v629 = vsel %vm597, %v613, %v519
        %v630 = vsel %vm598, %v614, %v526
        %v631 = vsel %vm599, %v615, %v533
        %v632 = vsel %vm600, %v616, %v540
        %v633 = vsel %vm601, %v617, %v547
        %v634 = vsel %vm602, %v618, %v554
        %vm635 = vcmp.lt.s32.totalorder %v619, 15
        %vm636 = vcmp.lt.s32.totalorder %v620, 15
        %vm637 = vcmp.lt.s32.totalorder %v621, 15
        %vm638 = vcmp.lt.s32.totalorder %v622, 15
        %vm639 = vcmp.lt.s32.totalorder %v623, 15
        %vm640 = vcmp.lt.s32.totalorder %v624, 15
        %vm641 = vcmp.lt.s32.totalorder %v625, 15
        %vm642 = vcmp.lt.s32.totalorder %v626, 15
        %vm643 = vcmp.lt.s32.totalorder %v627, 15
        %vm644 = vcmp.lt.s32.totalorder %v628, 15
        %vm645 = vcmp.lt.s32.totalorder %v629, 15
        %vm646 = vcmp.lt.s32.totalorder %v630, 15
        %vm647 = vcmp.lt.s32.totalorder %v631, 15
        %vm648 = vcmp.lt.s32.totalorder %v632, 15
        %vm649 = vcmp.lt.s32.totalorder %v633, 15
        %vm650 = vcmp.lt.s32.totalorder %v634, 15
        %vm651 = vcmp.lt.s32.totalorder %v619, 13
        %vm652 = vcmp.lt.s32.totalorder %v620, 13
        %vm653 = vcmp.lt.s32.totalorder %v621, 13
        %vm654 = vcmp.lt.s32.totalorder %v622, 13
        %vm655 = vcmp.lt.s32.totalorder %v623, 13
        %vm656 = vcmp.lt.s32.totalorder %v624, 13
        %vm657 = vcmp.lt.s32.totalorder %v625, 13
        %vm658 = vcmp.lt.s32.totalorder %v626, 13
        %vm659 = vcmp.lt.s32.totalorder %v627, 13
        %vm660 = vcmp.lt.s32.totalorder %v628, 13
        %vm661 = vcmp.lt.s32.totalorder %v629, 13
        %vm662 = vcmp.lt.s32.totalorder %v630, 13
        %vm663 = vcmp.lt.s32.totalorder %v631, 13
        %vm664 = vcmp.lt.s32.totalorder %v632, 13
        %vm665 = vcmp.lt.s32.totalorder %v633, 13
        %vm666 = vcmp.lt.s32.totalorder %v634, 13
        %vm667 = vcmp.lt.s32.totalorder %v619, 10
        %vm668 = vcmp.lt.s32.totalorder %v620, 10
        %vm669 = vcmp.lt.s32.totalorder %v621, 10
        %vm670 = vcmp.lt.s32.totalorder %v622, 10
        %vm671 = vcmp.lt.s32.totalorder %v623, 10
        %vm672 = vcmp.lt.s32.totalorder %v624, 10
        %vm673 = vcmp.lt.s32.totalorder %v625, 10
        %vm674 = vcmp.lt.s32.totalorder %v626, 10
        %vm675 = vcmp.lt.s32.totalorder %v627, 10
        %vm676 = vcmp.lt.s32.totalorder %v628, 10
        %vm677 = vcmp.lt.s32.totalorder %v629, 10
        %vm678 = vcmp.lt.s32.totalorder %v630, 10
        %vm679 = vcmp.lt.s32.totalorder %v631, 10
        %vm680 = vcmp.lt.s32.totalorder %v632, 10
        %vm681 = vcmp.lt.s32.totalorder %v633, 10
        %vm682 = vcmp.lt.s32.totalorder %v634, 10
        %vm683 = vcmp.ge.s32.totalorder %v619, 1
        %vm684 = vcmp.ge.s32.totalorder %v620, 1
        %vm685 = vcmp.ge.s32.totalorder %v621, 1
        %vm686 = vcmp.ge.s32.totalorder %v622, 1
        %vm687 = vcmp.ge.s32.totalorder %v623, 1
        %vm688 = vcmp.ge.s32.totalorder %v624, 1
        %vm689 = vcmp.ge.s32.totalorder %v625, 1
        %vm690 = vcmp.ge.s32.totalorder %v626, 1
        %vm691 = vcmp.ge.s32.totalorder %v627, 1
        %vm692 = vcmp.ge.s32.totalorder %v628, 1
        %vm693 = vcmp.ge.s32.totalorder %v629, 1
        %vm694 = vcmp.ge.s32.totalorder %v630, 1
        %vm695 = vcmp.ge.s32.totalorder %v631, 1
        %vm696 = vcmp.ge.s32.totalorder %v632, 1
        %vm697 = vcmp.ge.s32.totalorder %v633, 1
        %vm698 = vcmp.ge.s32.totalorder %v634, 1
        %vm699 = vcmp.ge.s32.totalorder %v619, 3
        %vm700 = vcmp.ge.s32.totalorder %v620, 3
        %vm701 = vcmp.ge.s32.totalorder %v621, 3
        %vm702 = vcmp.ge.s32.totalorder %v622, 3
        %vm703 = vcmp.ge.s32.totalorder %v623, 3
        %vm704 = vcmp.ge.s32.totalorder %v624, 3
        %vm705 = vcmp.ge.s32.totalorder %v625, 3
        %vm706 = vcmp.ge.s32.totalorder %v626, 3
        %vm707 = vcmp.ge.s32.totalorder %v627, 3
        %vm708 = vcmp.ge.s32.totalorder %v628, 3
        %vm709 = vcmp.ge.s32.totalorder %v629, 3
        %vm710 = vcmp.ge.s32.totalorder %v630, 3
        %vm711 = vcmp.ge.s32.totalorder %v631, 3
        %vm712 = vcmp.ge.s32.totalorder %v632, 3
        %vm713 = vcmp.ge.s32.totalorder %v633, 3
        %vm714 = vcmp.ge.s32.totalorder %v634, 3
        %vm715 = vcmp.ge.s32.totalorder %v619, 6
        %vm716 = vcmp.ge.s32.totalorder %v620, 6
        %vm717 = vcmp.ge.s32.totalorder %v621, 6
        %vm718 = vcmp.ge.s32.totalorder %v622, 6
        %vm719 = vcmp.ge.s32.totalorder %v623, 6
        %vm720 = vcmp.ge.s32.totalorder %v624, 6
        %vm721 = vcmp.ge.s32.totalorder %v625, 6
        %vm722 = vcmp.ge.s32.totalorder %v626, 6
        %vm723 = vcmp.ge.s32.totalorder %v627, 6
        %vm724 = vcmp.ge.s32.totalorder %v628, 6
        %vm725 = vcmp.ge.s32.totalorder %v629, 6
        %vm726 = vcmp.ge.s32.totalorder %v630, 6
        %vm727 = vcmp.ge.s32.totalorder %v631, 6
        %vm728 = vcmp.ge.s32.totalorder %v632, 6
        %vm729 = vcmp.ge.s32.totalorder %v633, 6
        %vm730 = vcmp.ge.s32.totalorder %v634, 6
        %v731 = vld [vmem:[%s374] sm:$0xff]
        %v732 = vld [vmem:[%s374 + $0x8] sm:$0xff]
        %v733 = vld [vmem:[%s374 + $0x10] sm:$0xff]
        %v734 = vld [vmem:[%s374 + $0x18] sm:$0xff]
        %v735 = vld [vmem:[%s374 + $0x20] sm:$0xff]
        %v736 = vld [vmem:[%s374 + $0x28] sm:$0xff]
        %v737 = vld [vmem:[%s374 + $0x30] sm:$0xff]
        %v738 = vld [vmem:[%s374 + $0x38] sm:$0xff]
        %v739 = vld [vmem:[%s374 + $0x40] sm:$0xff]
        %v740 = vld [vmem:[%s374 + $0x48] sm:$0xff]
        %v741 = vld [vmem:[%s374 + $0x50] sm:$0xff]
        %v742 = vld [vmem:[%s374 + $0x58] sm:$0xff]
        %v743 = vld [vmem:[%s374 + $0x60] sm:$0xff]
        %v744 = vld [vmem:[%s374 + $0x68] sm:$0xff]
        %v745 = vld [vmem:[%s374 + $0x70] sm:$0xff]
        %v746 = vld [vmem:[%s374 + $0x78] sm:$0xff]
        %v747 = vld [vmem:[%s374 + $0x80] sm:$0xff]
        %v748 = vld [vmem:[%s374 + $0x88] sm:$0xff]
        %v749 = vld [vmem:[%s374 + $0x90] sm:$0xff]
        %v750 = vld [vmem:[%s374 + $0x98] sm:$0xff]
        %v751 = vld [vmem:[%s374 + $0xa0] sm:$0xff]
        %v752 = vld [vmem:[%s374 + $0xa8] sm:$0xff]
        %v753 = vld [vmem:[%s374 + $0xb0] sm:$0xff]
        %v754 = vld [vmem:[%s374 + $0xb8] sm:$0xff]
        %v755 = vld [vmem:[%s374 + $0xc0] sm:$0xff]
        %v756 = vld [vmem:[%s374 + $0xc8] sm:$0xff]
        %v757 = vld [vmem:[%s374 + $0xd0] sm:$0xff]
        %v758 = vld [vmem:[%s374 + $0xd8] sm:$0xff]
        %v759 = vld [vmem:[%s374 + $0xe0] sm:$0xff]
        %v760 = vld [vmem:[%s374 + $0xe8] sm:$0xff]
        %v761 = vld [vmem:[%s374 + $0xf0] sm:$0xff]
        %v762 = vld [vmem:[%s374 + $0xf8] sm:$0xff]
        %v763 = vld [vmem:[%s374 + $0x100] sm:$0xff]
        %v764 = vld [vmem:[%s374 + $0x108] sm:$0xff]
        %v765 = vld [vmem:[%s374 + $0x110] sm:$0xff]
        %v766 = vld [vmem:[%s374 + $0x118] sm:$0xff]
        %v767 = vld [vmem:[%s374 + $0x120] sm:$0xff]
        %v768 = vld [vmem:[%s374 + $0x128] sm:$0xff]
        %v769 = vld [vmem:[%s374 + $0x130] sm:$0xff]
        %v770 = vld [vmem:[%s374 + $0x138] sm:$0xff]
        %v771 = vld [vmem:[%s374 + $0x140] sm:$0xff]
        %v772 = vld [vmem:[%s374 + $0x148] sm:$0xff]
        %v773 = vld [vmem:[%s374 + $0x150] sm:$0xff]
        %v774 = vld [vmem:[%s374 + $0x158] sm:$0xff]
        %v775 = vld [vmem:[%s374 + $0x160] sm:$0xff]
        %v776 = vld [vmem:[%s374 + $0x168] sm:$0xff]
        %v777 = vld [vmem:[%s374 + $0x170] sm:$0xff]
        %v778 = vld [vmem:[%s374 + $0x178] sm:$0xff]
        %v779 = vpack.c.bf16 %v734, %v731
        %v780 = vpack.c.bf16 %v735, %v732
        %v781 = vpack.c.bf16 %v736, %v733
        %v782 = vpack.c.bf16 %v740, %v737
        %v783 = vpack.c.bf16 %v741, %v738
        %v784 = vpack.c.bf16 %v742, %v739
        %v785 = vpack.c.bf16 %v746, %v743
        %v786 = vpack.c.bf16 %v747, %v744
        %v787 = vpack.c.bf16 %v748, %v745
        %v788 = vpack.c.bf16 %v752, %v749
        %v789 = vpack.c.bf16 %v753, %v750
        %v790 = vpack.c.bf16 %v754, %v751
        %v791 = vpack.c.bf16 %v758, %v755
        %v792 = vpack.c.bf16 %v759, %v756
        %v793 = vpack.c.bf16 %v760, %v757
        %v794 = vpack.c.bf16 %v764, %v761
        %v795 = vpack.c.bf16 %v765, %v762
        %v796 = vpack.c.bf16 %v766, %v763
        %v797 = vpack.c.bf16 %v770, %v767
        %v798 = vpack.c.bf16 %v771, %v768
        %v799 = vpack.c.bf16 %v772, %v769
        %v800 = vpack.c.bf16 %v776, %v773
        %v801 = vpack.c.bf16 %v777, %v774
        %v802 = vpack.c.bf16 %v778, %v775
        %v803 = vld [vmem:[#allocation5] sm:$0xf]
        %v804 = vld [vmem:[#allocation5 + $0x4] sm:$0xf]
        %v805 = vld [vmem:[#allocation5 + $0x8] sm:$0xf]
        %v806 = vld [vmem:[#allocation5 + $0xc] sm:$0xf]
        %v807 = vld [vmem:[#allocation5 + $0x10] sm:$0xf]
        %v808 = vld [vmem:[#allocation5 + $0x14] sm:$0xf]
        %v809 = vld [vmem:[#allocation5 + $0x18] sm:$0xf]
        %v810 = vld [vmem:[#allocation5 + $0x1c] sm:$0xf]
        %v811 = vld [vmem:[#allocation5 + $0x20] sm:$0xf]
        %v812 = vld [vmem:[#allocation5 + $0x24] sm:$0xf]
        %v813 = vld [vmem:[#allocation5 + $0x28] sm:$0xf]
        %v814 = vld [vmem:[#allocation5 + $0x2c] sm:$0xf]
        %v815 = vld [vmem:[#allocation5 + $0x30] sm:$0xf]
        %v816 = vld [vmem:[#allocation5 + $0x34] sm:$0xf]
        %v817 = vld [vmem:[#allocation5 + $0x38] sm:$0xf]
        %v818 = vld [vmem:[#allocation5 + $0x3c] sm:$0xf]
        %v819 = vld [vmem:[#allocation5 + $0x40] sm:$0xf]
        %v820 = vld [vmem:[#allocation5 + $0x44] sm:$0xf]
        %v821 = vld [vmem:[#allocation5 + $0x48] sm:$0xf]
        %v822 = vld [vmem:[#allocation5 + $0x4c] sm:$0xf]
        %v823 = vld [vmem:[#allocation5 + $0x50] sm:$0xf]
        %v824 = vld [vmem:[#allocation5 + $0x54] sm:$0xf]
        %v825 = vld [vmem:[#allocation5 + $0x58] sm:$0xf]
        %v826 = vld [vmem:[#allocation5 + $0x5c] sm:$0xf]
        %v827 = vld [vmem:[#allocation5 + $0x60] sm:$0xf]
        %v828 = vld [vmem:[#allocation5 + $0x64] sm:$0xf]
        %v829 = vld [vmem:[#allocation5 + $0x68] sm:$0xf]
        %v830 = vld [vmem:[#allocation5 + $0x6c] sm:$0xf]
        %v831 = vld [vmem:[#allocation5 + $0x70] sm:$0xf]
        %v832 = vld [vmem:[#allocation5 + $0x74] sm:$0xf]
        %v833 = vld [vmem:[#allocation5 + $0x78] sm:$0xf]
        %v834 = vld [vmem:[#allocation5 + $0x7c] sm:$0xf]
        %v835 = vld [vmem:[#allocation5 + $0x80] sm:$0xf]
        %v836 = vld [vmem:[#allocation5 + $0x84] sm:$0xf]
        %v837 = vld [vmem:[#allocation5 + $0x88] sm:$0xf]
        %v838 = vld [vmem:[#allocation5 + $0x8c] sm:$0xf]
        %v839 = vld [vmem:[#allocation5 + $0x90] sm:$0xf]
        %v840 = vld [vmem:[#allocation5 + $0x94] sm:$0xf]
        %v841 = vld [vmem:[#allocation5 + $0x98] sm:$0xf]
        %v842 = vld [vmem:[#allocation5 + $0x9c] sm:$0xf]
        %v843 = vld [vmem:[#allocation5 + $0xa0] sm:$0xf]
        %v844 = vld [vmem:[#allocation5 + $0xa4] sm:$0xf]
        %v845 = vld [vmem:[#allocation5 + $0xa8] sm:$0xf]
        %v846 = vld [vmem:[#allocation5 + $0xac] sm:$0xf]
        %v847 = vld [vmem:[#allocation5 + $0xb0] sm:$0xf]
        %v848 = vld [vmem:[#allocation5 + $0xb4] sm:$0xf]
        %v849 = vld [vmem:[#allocation5 + $0xb8] sm:$0xf]
        %v850 = vld [vmem:[#allocation5 + $0xbc] sm:$0xf]
        %s851 = scalar_lea.vmem [#allocation5], 192
        %v852 = vld [vmem:[%s851] sm:$0xf]
        %v853 = vld [vmem:[%s851 + $0x4] sm:$0xf]
        %v854 = vld [vmem:[%s851 + $0x8] sm:$0xf]
        %v855 = vld [vmem:[%s851 + $0xc] sm:$0xf]
        %v856 = vld [vmem:[%s851 + $0x10] sm:$0xf]
        %v857 = vld [vmem:[%s851 + $0x14] sm:$0xf]
        %v858 = vld [vmem:[%s851 + $0x18] sm:$0xf]
        %v859 = vld [vmem:[%s851 + $0x1c] sm:$0xf]
        %v860 = vld [vmem:[%s851 + $0x20] sm:$0xf]
        %v861 = vld [vmem:[%s851 + $0x24] sm:$0xf]
        %v862 = vld [vmem:[%s851 + $0x28] sm:$0xf]
        %v863 = vld [vmem:[%s851 + $0x2c] sm:$0xf]
        %v864 = vld [vmem:[%s851 + $0x30] sm:$0xf]
        %v865 = vld [vmem:[%s851 + $0x34] sm:$0xf]
        %v866 = vld [vmem:[%s851 + $0x38] sm:$0xf]
        %v867 = vld [vmem:[%s851 + $0x3c] sm:$0xf]
        %v868 = vld [vmem:[%s851 + $0x40] sm:$0xf]
        %v869 = vld [vmem:[%s851 + $0x44] sm:$0xf]
        %v870 = vld [vmem:[%s851 + $0x48] sm:$0xf]
        %v871 = vld [vmem:[%s851 + $0x4c] sm:$0xf]
        %v872 = vld [vmem:[%s851 + $0x50] sm:$0xf]
        %v873 = vld [vmem:[%s851 + $0x54] sm:$0xf]
        %v874 = vld [vmem:[%s851 + $0x58] sm:$0xf]
        %v875 = vld [vmem:[%s851 + $0x5c] sm:$0xf]
        %v876 = vld [vmem:[%s851 + $0x60] sm:$0xf]
        %v877 = vld [vmem:[%s851 + $0x64] sm:$0xf]
        %v878 = vld [vmem:[%s851 + $0x68] sm:$0xf]
        %v879 = vld [vmem:[%s851 + $0x6c] sm:$0xf]
        %v880 = vld [vmem:[%s851 + $0x70] sm:$0xf]
        %v881 = vld [vmem:[%s851 + $0x74] sm:$0xf]
        %v882 = vld [vmem:[%s851 + $0x78] sm:$0xf]
        %v883 = vld [vmem:[%s851 + $0x7c] sm:$0xf]
        %v884 = vld [vmem:[%s851 + $0x80] sm:$0xf]
        %v885 = vld [vmem:[%s851 + $0x84] sm:$0xf]
        %v886 = vld [vmem:[%s851 + $0x88] sm:$0xf]
        %v887 = vld [vmem:[%s851 + $0x8c] sm:$0xf]
        %v888 = vld [vmem:[%s851 + $0x90] sm:$0xf]
        %v889 = vld [vmem:[%s851 + $0x94] sm:$0xf]
        %v890 = vld [vmem:[%s851 + $0x98] sm:$0xf]
        %v891 = vld [vmem:[%s851 + $0x9c] sm:$0xf]
        %v892 = vld [vmem:[%s851 + $0xa0] sm:$0xf]
        %v893 = vld [vmem:[%s851 + $0xa4] sm:$0xf]
        %v894 = vld [vmem:[%s851 + $0xa8] sm:$0xf]
        %v895 = vld [vmem:[%s851 + $0xac] sm:$0xf]
        %v896 = vld [vmem:[%s851 + $0xb0] sm:$0xf]
        %v897 = vld [vmem:[%s851 + $0xb4] sm:$0xf]
        %v898 = vld [vmem:[%s851 + $0xb8] sm:$0xf]
        %v899 = vld [vmem:[%s851 + $0xbc] sm:$0xf]
        %s900 = scalar_lea.vmem [#allocation5], 384
        %v901 = vld [vmem:[%s900] sm:$0xf]
        %v902 = vld [vmem:[%s900 + $0x4] sm:$0xf]
        %v903 = vld [vmem:[%s900 + $0x8] sm:$0xf]
        %v904 = vld [vmem:[%s900 + $0xc] sm:$0xf]
        %v905 = vld [vmem:[%s900 + $0x10] sm:$0xf]
        %v906 = vld [vmem:[%s900 + $0x14] sm:$0xf]
        %v907 = vld [vmem:[%s900 + $0x18] sm:$0xf]
        %v908 = vld [vmem:[%s900 + $0x1c] sm:$0xf]
        %v909 = vld [vmem:[%s900 + $0x20] sm:$0xf]
        %v910 = vld [vmem:[%s900 + $0x24] sm:$0xf]
        %v911 = vld [vmem:[%s900 + $0x28] sm:$0xf]
        %v912 = vld [vmem:[%s900 + $0x2c] sm:$0xf]
        %v913 = vld [vmem:[%s900 + $0x30] sm:$0xf]
        %v914 = vld [vmem:[%s900 + $0x34] sm:$0xf]
        %v915 = vld [vmem:[%s900 + $0x38] sm:$0xf]
        %v916 = vld [vmem:[%s900 + $0x3c] sm:$0xf]
        %v917 = vld [vmem:[%s900 + $0x40] sm:$0xf]
        %v918 = vld [vmem:[%s900 + $0x44] sm:$0xf]
        %v919 = vld [vmem:[%s900 + $0x48] sm:$0xf]
        %v920 = vld [vmem:[%s900 + $0x4c] sm:$0xf]
        %v921 = vld [vmem:[%s900 + $0x50] sm:$0xf]
        %v922 = vld [vmem:[%s900 + $0x54] sm:$0xf]
        %v923 = vld [vmem:[%s900 + $0x58] sm:$0xf]
        %v924 = vld [vmem:[%s900 + $0x5c] sm:$0xf]
        %v925 = vld [vmem:[%s900 + $0x60] sm:$0xf]
        %v926 = vld [vmem:[%s900 + $0x64] sm:$0xf]
        %v927 = vld [vmem:[%s900 + $0x68] sm:$0xf]
        %v928 = vld [vmem:[%s900 + $0x6c] sm:$0xf]
        %v929 = vld [vmem:[%s900 + $0x70] sm:$0xf]
        %v930 = vld [vmem:[%s900 + $0x74] sm:$0xf]
        %v931 = vld [vmem:[%s900 + $0x78] sm:$0xf]
        %v932 = vld [vmem:[%s900 + $0x7c] sm:$0xf]
        %v933 = vld [vmem:[%s900 + $0x80] sm:$0xf]
        %v934 = vld [vmem:[%s900 + $0x84] sm:$0xf]
        %v935 = vld [vmem:[%s900 + $0x88] sm:$0xf]
        %v936 = vld [vmem:[%s900 + $0x8c] sm:$0xf]
        %v937 = vld [vmem:[%s900 + $0x90] sm:$0xf]
        %v938 = vld [vmem:[%s900 + $0x94] sm:$0xf]
        %v939 = vld [vmem:[%s900 + $0x98] sm:$0xf]
        %v940 = vld [vmem:[%s900 + $0x9c] sm:$0xf]
        %v941 = vld [vmem:[%s900 + $0xa0] sm:$0xf]
        %v942 = vld [vmem:[%s900 + $0xa4] sm:$0xf]
        %v943 = vld [vmem:[%s900 + $0xa8] sm:$0xf]
        %v944 = vld [vmem:[%s900 + $0xac] sm:$0xf]
        %v945 = vld [vmem:[%s900 + $0xb0] sm:$0xf]
        %v946 = vld [vmem:[%s900 + $0xb4] sm:$0xf]
        %v947 = vld [vmem:[%s900 + $0xb8] sm:$0xf]
        %v948 = vld [vmem:[%s900 + $0xbc] sm:$0xf]
        %v997 = vunpack.c.l.b16 %v803
        %v998 = vunpack.c.l.b16 %v804
        %v999 = vunpack.c.l.b16 %v805
        %v1000 = vunpack.c.l.b16 %v806
        %v1001 = vunpack.c.l.b16 %v807
        %v1002 = vunpack.c.l.b16 %v808
        %v1003 = vunpack.c.l.b16 %v809
        %v1004 = vunpack.c.l.b16 %v810
        %v1005 = vunpack.c.l.b16 %v811
        %v1006 = vunpack.c.l.b16 %v812
        %v1007 = vunpack.c.l.b16 %v813
        %v1008 = vunpack.c.l.b16 %v814
        %v1009 = vunpack.c.l.b16 %v815
        %v1010 = vunpack.c.l.b16 %v816
        %v1011 = vunpack.c.l.b16 %v817
        %v1012 = vunpack.c.l.b16 %v818
        %v1013 = vunpack.c.l.b16 %v819
        %v1014 = vunpack.c.l.b16 %v820
        %v1015 = vunpack.c.l.b16 %v821
        %v1016 = vunpack.c.l.b16 %v822
        %v1017 = vunpack.c.l.b16 %v823
        %v1018 = vunpack.c.l.b16 %v824
        %v1019 = vunpack.c.l.b16 %v825
        %v1020 = vunpack.c.l.b16 %v826
        %v1021 = vunpack.c.l.b16 %v827
        %v1022 = vunpack.c.l.b16 %v828
        %v1023 = vunpack.c.l.b16 %v829
        %v1024 = vunpack.c.l.b16 %v830
        %v1025 = vunpack.c.l.b16 %v831
        %v1026 = vunpack.c.l.b16 %v832
        %v1027 = vunpack.c.l.b16 %v833
        %v1028 = vunpack.c.l.b16 %v834
        %v1029 = vunpack.c.l.b16 %v835
        %v1030 = vunpack.c.l.b16 %v836
        %v1031 = vunpack.c.l.b16 %v837
        %v1032 = vunpack.c.l.b16 %v838
        %v1033 = vunpack.c.l.b16 %v839
        %v1034 = vunpack.c.l.b16 %v840
        %v1035 = vunpack.c.l.b16 %v841
        %v1036 = vunpack.c.l.b16 %v842
        %v1037 = vunpack.c.l.b16 %v843
        %v1038 = vunpack.c.l.b16 %v844
        %v1039 = vunpack.c.l.b16 %v845
        %v1040 = vunpack.c.l.b16 %v846
        %v1041 = vunpack.c.l.b16 %v847
        %v1042 = vunpack.c.l.b16 %v848
        %v1043 = vunpack.c.l.b16 %v849
        %v1044 = vunpack.c.l.b16 %v850
        %v1045 = vpack.c.b16 %v998, %v997
        %v1046 = vpack.c.b16 %v1000, %v999
        %v1047 = vpack.c.b16 %v1002, %v1001
        %v1048 = vpack.c.b16 %v1004, %v1003
        %v1049 = vpack.c.b16 %v1006, %v1005
        %v1050 = vpack.c.b16 %v1008, %v1007
        %v1051 = vpack.c.b16 %v1010, %v1009
        %v1052 = vpack.c.b16 %v1012, %v1011
        %v1053 = vpack.c.b16 %v1014, %v1013
        %v1054 = vpack.c.b16 %v1016, %v1015
        %v1055 = vpack.c.b16 %v1018, %v1017
        %v1056 = vpack.c.b16 %v1020, %v1019
        %v1057 = vpack.c.b16 %v1022, %v1021
        %v1058 = vpack.c.b16 %v1024, %v1023
        %v1059 = vpack.c.b16 %v1026, %v1025
        %v1060 = vpack.c.b16 %v1028, %v1027
        %v1061 = vpack.c.b16 %v1030, %v1029
        %v1062 = vpack.c.b16 %v1032, %v1031
        %v1063 = vpack.c.b16 %v1034, %v1033
        %v1064 = vpack.c.b16 %v1036, %v1035
        %v1065 = vpack.c.b16 %v1038, %v1037
        %v1066 = vpack.c.b16 %v1040, %v1039
        %v1067 = vpack.c.b16 %v1042, %v1041
        %v1068 = vpack.c.b16 %v1044, %v1043
        %1093 = vmatprep.subr.bf16.mxu0 0
        %1094 = vmatpush1.bf16.msra.mxu0 %v1052
        %1095 = vmatprep.subr.bf16.mxu0 0
        %1096 = vmatpush1.bf16.msra.mxu0 %v1051
        %1097 = vmatprep.subr.bf16.mxu0 0
        %1098 = vmatpush1.bf16.msra.mxu0 %v1050
        %1099 = vmatprep.subr.bf16.mxu0 0
        %1100 = vmatpush1.bf16.msra.mxu0 %v1049
        %1101 = vmatprep.subr.bf16.mxu0 0
        %1102 = vmatpush1.bf16.msra.mxu0 %v1048
        %1103 = vmatprep.subr.bf16.mxu0 0
        %1104 = vmatpush1.bf16.msra.mxu0 %v1047
        %1105 = vmatprep.subr.bf16.mxu0 0
        %1106 = vmatpush1.bf16.msra.mxu0 %v1046
        %1107 = vmatprep.subr.bf16.mxu0 0
        %1108 = vmatpush1.bf16.msra.mxu0 %v1045
        %1109 = vmatprep.subr.bf16.mxu0 0
        %1110 = vmatpush2.bf16.msra.mxu0 %v1060
        %1111 = vmatprep.subr.bf16.mxu0 0
        %1112 = vmatpush2.bf16.msra.mxu0 %v1059
        %1113 = vmatprep.subr.bf16.mxu0 0
        %1114 = vmatpush2.bf16.msra.mxu0 %v1058
        %1115 = vmatprep.subr.bf16.mxu0 0
        %1116 = vmatpush2.bf16.msra.mxu0 %v1057
        %1117 = vmatprep.subr.bf16.mxu0 0
        %1118 = vmatpush2.bf16.msra.mxu0 %v1056
        %1119 = vmatprep.subr.bf16.mxu0 0
        %1120 = vmatpush2.bf16.msra.mxu0 %v1055
        %1121 = vmatprep.subr.bf16.mxu0 0
        %1122 = vmatpush2.bf16.msra.mxu0 %v1054
        %1123 = vmatprep.subr.bf16.mxu0 0
        %1124 = vmatpush2.bf16.msra.mxu0 %v1053
        %1125 = vmatprep.mubr.bf16.mxu0 %v780
        %1126 = vmatmul.mubr.bf16.gmra.mxu0 %v779
        %v1127 = vpop.f32.mrf.mxu0
        %v1128 = vadd.f32 0.0, %v1127
        %v1129 = vpop.f32.mrf.mxu0
        %v1130 = vpop.f32.mrf.mxu0
        %v1131 = vadd.f32 0.0, %v1130
        %v1132 = vpop.f32.mrf.mxu0
        %1133 = vmatprep.mubr.bf16.mxu0 %v783
        %1134 = vmatmul.mubr.bf16.gmra.mxu0 %v782
        %v1135 = vpop.f32.mrf.mxu0
        %v1136 = vadd.f32 0.0, %v1135
        %v1137 = vpop.f32.mrf.mxu0
        %v1138 = vpop.f32.mrf.mxu0
        %v1139 = vadd.f32 0.0, %v1138
        %v1140 = vpop.f32.mrf.mxu0
        %1141 = vmatprep.mubr.bf16.mxu0 %v786
        %1142 = vmatmul.mubr.bf16.gmra.mxu0 %v785
        %v1143 = vpop.f32.mrf.mxu0
        %v1144 = vadd.f32 0.0, %v1143
        %v1145 = vpop.f32.mrf.mxu0
        %v1146 = vpop.f32.mrf.mxu0
        %v1147 = vadd.f32 0.0, %v1146
        %v1148 = vpop.f32.mrf.mxu0
        %1149 = vmatprep.mubr.bf16.mxu0 %v789
        %1150 = vmatmul.mubr.bf16.gmra.mxu0 %v788
        %v1151 = vpop.f32.mrf.mxu0
        %v1152 = vadd.f32 0.0, %v1151
        %v1153 = vpop.f32.mrf.mxu0
        %v1154 = vpop.f32.mrf.mxu0
        %v1155 = vadd.f32 0.0, %v1154
        %v1156 = vpop.f32.mrf.mxu0
        %1157 = vmatprep.mubr.bf16.mxu0 %v792
        %1158 = vmatmul.mubr.bf16.gmra.mxu0 %v791
        %v1159 = vpop.f32.mrf.mxu0
        %v1160 = vadd.f32 0.0, %v1159
        %v1161 = vpop.f32.mrf.mxu0
        %v1162 = vpop.f32.mrf.mxu0
        %v1163 = vadd.f32 0.0, %v1162
        %v1164 = vpop.f32.mrf.mxu0
        %1165 = vmatprep.mubr.bf16.mxu0 %v795
        %1166 = vmatmul.mubr.bf16.gmra.mxu0 %v794
        %v1167 = vpop.f32.mrf.mxu0
        %v1168 = vadd.f32 0.0, %v1167
        %v1169 = vpop.f32.mrf.mxu0
        %v1170 = vpop.f32.mrf.mxu0
        %v1171 = vadd.f32 0.0, %v1170
        %v1172 = vpop.f32.mrf.mxu0
        %1173 = vmatprep.mubr.bf16.mxu0 %v798
        %1174 = vmatmul.mubr.bf16.gmra.mxu0 %v797
        %v1175 = vpop.f32.mrf.mxu0
        %v1176 = vadd.f32 0.0, %v1175
        %v1177 = vpop.f32.mrf.mxu0
        %v1178 = vpop.f32.mrf.mxu0
        %v1179 = vadd.f32 0.0, %v1178
        %v1180 = vpop.f32.mrf.mxu0
        %1181 = vmatprep.mubr.bf16.mxu0 %v801
        %1182 = vmatmul.mubr.bf16.gmra.mxu0 %v800
        %v1183 = vpop.f32.mrf.mxu0
        %v1184 = vadd.f32 0.0, %v1183
        %v1185 = vpop.f32.mrf.mxu0
        %v1186 = vpop.f32.mrf.mxu0
        %v1187 = vadd.f32 0.0, %v1186
        %v1188 = vpop.f32.mrf.mxu0
        %1189 = vdwg.mxu0
        %1190 = vmatprep.subr.bf16.mxu0 0
        %1191 = vmatpush1.bf16.msra.mxu0 %v1068
        %1192 = vmatprep.subr.bf16.mxu0 0
        %1193 = vmatpush1.bf16.msra.mxu0 %v1067
        %1194 = vmatprep.subr.bf16.mxu0 0
        %1195 = vmatpush1.bf16.msra.mxu0 %v1066
        %1196 = vmatprep.subr.bf16.mxu0 0
        %1197 = vmatpush1.bf16.msra.mxu0 %v1065
        %1198 = vmatprep.subr.bf16.mxu0 0
        %1199 = vmatpush1.bf16.msra.mxu0 %v1064
        %1200 = vmatprep.subr.bf16.mxu0 0
        %1201 = vmatpush1.bf16.msra.mxu0 %v1063
        %1202 = vmatprep.subr.bf16.mxu0 0
        %1203 = vmatpush1.bf16.msra.mxu0 %v1062
        %1204 = vmatprep.subr.bf16.mxu0 0
        %1205 = vmatpush1.bf16.msra.mxu0 %v1061
        %1206 = vmatprep.subr.bf16.mxu0 0
        %1207 = vmatpush2.bf16.msra.mxu0 0
        %1208 = vmatprep.subr.bf16.mxu0 0
        %1209 = vmatpush2.bf16.msra.mxu0 0
        %1210 = vmatprep.subr.bf16.mxu0 0
        %1211 = vmatpush2.bf16.msra.mxu0 0
        %1212 = vmatprep.subr.bf16.mxu0 0
        %1213 = vmatpush2.bf16.msra.mxu0 0
        %1214 = vmatprep.subr.bf16.mxu0 0
        %1215 = vmatpush2.bf16.msra.mxu0 0
        %1216 = vmatprep.subr.bf16.mxu0 0
        %1217 = vmatpush2.bf16.msra.mxu0 0
        %1218 = vmatprep.subr.bf16.mxu0 0
        %1219 = vmatpush2.bf16.msra.mxu0 0
        %1220 = vmatprep.subr.bf16.mxu0 0
        %1221 = vmatpush2.bf16.msra.mxu0 0
        %1222 = vmatprep.mubr.bf16.mxu0 0
        %1223 = vmatmul.mubr.bf16.gmra.mxu0 %v781
        %v1224 = vpop.f32.mrf.mxu0
        %v1225 = vadd.f32 %v1128, %v1224
        %v1226 = vpop.f32.mrf.mxu0
        %v1227 = vpop.f32.mrf.mxu0
        %v1228 = vadd.f32 %v1131, %v1227
        %v1229 = vpop.f32.mrf.mxu0
        %1230 = vmatprep.mubr.bf16.mxu0 0
        %1231 = vmatmul.mubr.bf16.gmra.mxu0 %v784
        %v1232 = vpop.f32.mrf.mxu0
        %v1233 = vadd.f32 %v1136, %v1232
        %v1234 = vpop.f32.mrf.mxu0
        %v1235 = vpop.f32.mrf.mxu0
        %v1236 = vadd.f32 %v1139, %v1235
        %v1237 = vpop.f32.mrf.mxu0
        %1238 = vmatprep.mubr.bf16.mxu0 0
        %1239 = vmatmul.mubr.bf16.gmra.mxu0 %v787
        %v1240 = vpop.f32.mrf.mxu0
        %v1241 = vadd.f32 %v1144, %v1240
        %v1242 = vpop.f32.mrf.mxu0
        %v1243 = vpop.f32.mrf.mxu0
        %v1244 = vadd.f32 %v1147, %v1243
        %v1245 = vpop.f32.mrf.mxu0
        %1246 = vmatprep.mubr.bf16.mxu0 0
        %1247 = vmatmul.mubr.bf16.gmra.mxu0 %v790
        %v1248 = vpop.f32.mrf.mxu0
        %v1249 = vadd.f32 %v1152, %v1248
        %v1250 = vpop.f32.mrf.mxu0
        %v1251 = vpop.f32.mrf.mxu0
        %v1252 = vadd.f32 %v1155, %v1251
        %v1253 = vpop.f32.mrf.mxu0
        %1254 = vmatprep.mubr.bf16.mxu0 0
        %1255 = vmatmul.mubr.bf16.gmra.mxu0 %v793
        %v1256 = vpop.f32.mrf.mxu0
        %v1257 = vadd.f32 %v1160, %v1256
        %v1258 = vpop.f32.mrf.mxu0
        %v1259 = vpop.f32.mrf.mxu0
        %v1260 = vadd.f32 %v1163, %v1259
        %v1261 = vpop.f32.mrf.mxu0
        %1262 = vmatprep.mubr.bf16.mxu0 0
        %1263 = vmatmul.mubr.bf16.gmra.mxu0 %v796
        %v1264 = vpop.f32.mrf.mxu0
        %v1265 = vadd.f32 %v1168, %v1264
        %v1266 = vpop.f32.mrf.mxu0
        %v1267 = vpop.f32.mrf.mxu0
        %v1268 = vadd.f32 %v1171, %v1267
        %v1269 = vpop.f32.mrf.mxu0
        %1270 = vmatprep.mubr.bf16.mxu0 0
        %1271 = vmatmul.mubr.bf16.gmra.mxu0 %v799
        %v1272 = vpop.f32.mrf.mxu0
        %v1273 = vadd.f32 %v1176, %v1272
        %v1274 = vpop.f32.mrf.mxu0
        %v1275 = vpop.f32.mrf.mxu0
        %v1276 = vadd.f32 %v1179, %v1275
        %v1277 = vpop.f32.mrf.mxu0
        %1278 = vmatprep.mubr.bf16.mxu0 0
        %1279 = vmatmul.mubr.bf16.gmra.mxu0 %v802
        %v1280 = vpop.f32.mrf.mxu0
        %v1281 = vadd.f32 %v1184, %v1280
        %v1282 = vpop.f32.mrf.mxu0
        %v1283 = vpop.f32.mrf.mxu0
        %v1284 = vadd.f32 %v1187, %v1283
        %v1285 = vpop.f32.mrf.mxu0
        %1286 = vdwg.mxu0
        %v1287 = vrot.slane %v1225, 7
        %v1288 = vrot.slane %v1228, 7
        %v1289 = vrot.slane %v1233, 7
        %v1290 = vrot.slane %v1236, 7
        %v1291 = vrot.slane %v1241, 7
        %v1292 = vrot.slane %v1244, 7
        %v1293 = vrot.slane %v1249, 7
        %v1294 = vrot.slane %v1252, 7
        %v1295 = vrot.slane %v1257, 7
        %v1296 = vrot.slane %v1260, 7
        %v1297 = vrot.slane %v1265, 7
        %v1298 = vrot.slane %v1268, 7
        %v1299 = vrot.slane %v1273, 7
        %v1300 = vrot.slane %v1276, 7
        %v1301 = vrot.slane %v1281, 7
        %v1302 = vrot.slane %v1284, 7
        %vm1303 = vcmp.lt.s32.totalorder %v427, 1
        %v1304 = vsel %vm1303, %v1301, %v1302
        %v1305 = vsel %vm1303, %v1300, %v1301
        %v1306 = vsel %vm1303, %v1299, %v1300
        %v1307 = vsel %vm1303, %v1298, %v1299
        %v1308 = vsel %vm1303, %v1297, %v1298
        %v1309 = vsel %vm1303, %v1296, %v1297
        %v1310 = vsel %vm1303, %v1295, %v1296
        %v1311 = vsel %vm1303, %v1294, %v1295
        %v1312 = vsel %vm1303, %v1293, %v1294
        %v1313 = vsel %vm1303, %v1292, %v1293
        %v1314 = vsel %vm1303, %v1291, %v1292
        %v1315 = vsel %vm1303, %v1290, %v1291
        %v1316 = vsel %vm1303, %v1289, %v1290
        %v1317 = vsel %vm1303, %v1288, %v1289
        %v1318 = vsel %vm1303, %v1287, %v1288
        %v1319 = vsel %vm1303, %v1302, %v1287
        %v1320 = vsel %vm683, 1, 0
        %v1321 = vsel %vm684, 1, 0
        %v1322 = vsel %vm685, 1, 0
        %v1323 = vsel %vm686, 1, 0
        %v1324 = vsel %vm687, 1, 0
        %v1325 = vsel %vm688, 1, 0
        %v1326 = vsel %vm689, 1, 0
        %v1327 = vsel %vm690, 1, 0
        %v1328 = vsel %vm691, 1, 0
        %v1329 = vsel %vm692, 1, 0
        %v1330 = vsel %vm693, 1, 0
        %v1331 = vsel %vm694, 1, 0
        %v1332 = vsel %vm695, 1, 0
        %v1333 = vsel %vm696, 1, 0
        %v1334 = vsel %vm697, 1, 0
        %v1335 = vsel %vm698, 1, 0
        %vm1336 = vcmp.eq.s32.totalorder %v1320, 1
        %vm1337 = vcmp.eq.s32.totalorder %v1321, 1
        %vm1338 = vcmp.eq.s32.totalorder %v1322, 1
        %vm1339 = vcmp.eq.s32.totalorder %v1323, 1
        %vm1340 = vcmp.eq.s32.totalorder %v1324, 1
        %vm1341 = vcmp.eq.s32.totalorder %v1325, 1
        %vm1342 = vcmp.eq.s32.totalorder %v1326, 1
        %vm1343 = vcmp.eq.s32.totalorder %v1327, 1
        %vm1344 = vcmp.eq.s32.totalorder %v1328, 1
        %vm1345 = vcmp.eq.s32.totalorder %v1329, 1
        %vm1346 = vcmp.eq.s32.totalorder %v1330, 1
        %vm1347 = vcmp.eq.s32.totalorder %v1331, 1
        %vm1348 = vcmp.eq.s32.totalorder %v1332, 1
        %vm1349 = vcmp.eq.s32.totalorder %v1333, 1
        %vm1350 = vcmp.eq.s32.totalorder %v1334, 1
        %vm1351 = vcmp.eq.s32.totalorder %v1335, 1
        %v1352 = vsel %vm1336, %v1319, 0.0
        %v1353 = vsel %vm1337, %v1318, 0.0
        %v1354 = vsel %vm1338, %v1317, 0.0
        %v1355 = vsel %vm1339, %v1316, 0.0
        %v1356 = vsel %vm1340, %v1315, 0.0
        %v1357 = vsel %vm1341, %v1314, 0.0
        %v1358 = vsel %vm1342, %v1313, 0.0
        %v1359 = vsel %vm1343, %v1312, 0.0
        %v1360 = vsel %vm1344, %v1311, 0.0
        %v1361 = vsel %vm1345, %v1310, 0.0
        %v1362 = vsel %vm1346, %v1309, 0.0
        %v1363 = vsel %vm1347, %v1308, 0.0
        %v1364 = vsel %vm1348, %v1307, 0.0
        %v1365 = vsel %vm1349, %v1306, 0.0
        %v1366 = vsel %vm1350, %v1305, 0.0
        %v1367 = vsel %vm1351, %v1304, 0.0
        %v1416 = vunpack.c.l.b16 %v852
        %v1417 = vunpack.c.l.b16 %v853
        %v1418 = vunpack.c.l.b16 %v854
        %v1419 = vunpack.c.l.b16 %v855
        %v1420 = vunpack.c.l.b16 %v856
        %v1421 = vunpack.c.l.b16 %v857
        %v1422 = vunpack.c.l.b16 %v858
        %v1423 = vunpack.c.l.b16 %v859
        %v1424 = vunpack.c.l.b16 %v860
        %v1425 = vunpack.c.l.b16 %v861
        %v1426 = vunpack.c.l.b16 %v862
        %v1427 = vunpack.c.l.b16 %v863
        %v1428 = vunpack.c.l.b16 %v864
        %v1429 = vunpack.c.l.b16 %v865
        %v1430 = vunpack.c.l.b16 %v866
        %v1431 = vunpack.c.l.b16 %v867
        %v1432 = vunpack.c.l.b16 %v868
        %v1433 = vunpack.c.l.b16 %v869
        %v1434 = vunpack.c.l.b16 %v870
        %v1435 = vunpack.c.l.b16 %v871
        %v1436 = vunpack.c.l.b16 %v872
        %v1437 = vunpack.c.l.b16 %v873
        %v1438 = vunpack.c.l.b16 %v874
        %v1439 = vunpack.c.l.b16 %v875
        %v1440 = vunpack.c.l.b16 %v876
        %v1441 = vunpack.c.l.b16 %v877
        %v1442 = vunpack.c.l.b16 %v878
        %v1443 = vunpack.c.l.b16 %v879
        %v1444 = vunpack.c.l.b16 %v880
        %v1445 = vunpack.c.l.b16 %v881
        %v1446 = vunpack.c.l.b16 %v882
        %v1447 = vunpack.c.l.b16 %v883
        %v1448 = vunpack.c.l.b16 %v884
        %v1449 = vunpack.c.l.b16 %v885
        %v1450 = vunpack.c.l.b16 %v886
        %v1451 = vunpack.c.l.b16 %v887
        %v1452 = vunpack.c.l.b16 %v888
        %v1453 = vunpack.c.l.b16 %v889
        %v1454 = vunpack.c.l.b16 %v890
        %v1455 = vunpack.c.l.b16 %v891
        %v1456 = vunpack.c.l.b16 %v892
        %v1457 = vunpack.c.l.b16 %v893
        %v1458 = vunpack.c.l.b16 %v894
        %v1459 = vunpack.c.l.b16 %v895
        %v1460 = vunpack.c.l.b16 %v896
        %v1461 = vunpack.c.l.b16 %v897
        %v1462 = vunpack.c.l.b16 %v898
        %v1463 = vunpack.c.l.b16 %v899
        %v1464 = vpack.c.b16 %v1417, %v1416
        %v1465 = vpack.c.b16 %v1419, %v1418
        %v1466 = vpack.c.b16 %v1421, %v1420
        %v1467 = vpack.c.b16 %v1423, %v1422
        %v1468 = vpack.c.b16 %v1425, %v1424
        %v1469 = vpack.c.b16 %v1427, %v1426
        %v1470 = vpack.c.b16 %v1429, %v1428
        %v1471 = vpack.c.b16 %v1431, %v1430
        %v1472 = vpack.c.b16 %v1433, %v1432
        %v1473 = vpack.c.b16 %v1435, %v1434
        %v1474 = vpack.c.b16 %v1437, %v1436
        %v1475 = vpack.c.b16 %v1439, %v1438
        %v1476 = vpack.c.b16 %v1441, %v1440
        %v1477 = vpack.c.b16 %v1443, %v1442
        %v1478 = vpack.c.b16 %v1445, %v1444
        %v1479 = vpack.c.b16 %v1447, %v1446
        %v1480 = vpack.c.b16 %v1449, %v1448
        %v1481 = vpack.c.b16 %v1451, %v1450
        %v1482 = vpack.c.b16 %v1453, %v1452
        %v1483 = vpack.c.b16 %v1455, %v1454
        %v1484 = vpack.c.b16 %v1457, %v1456
        %v1485 = vpack.c.b16 %v1459, %v1458
        %v1486 = vpack.c.b16 %v1461, %v1460
        %v1487 = vpack.c.b16 %v1463, %v1462
        %1512 = vmatprep.subr.bf16.mxu0 0
        %1513 = vmatpush1.bf16.msra.mxu0 %v1471
        %1514 = vmatprep.subr.bf16.mxu0 0
        %1515 = vmatpush1.bf16.msra.mxu0 %v1470
        %1516 = vmatprep.subr.bf16.mxu0 0
        %1517 = vmatpush1.bf16.msra.mxu0 %v1469
        %1518 = vmatprep.subr.bf16.mxu0 0
        %1519 = vmatpush1.bf16.msra.mxu0 %v1468
        %1520 = vmatprep.subr.bf16.mxu0 0
        %1521 = vmatpush1.bf16.msra.mxu0 %v1467
        %1522 = vmatprep.subr.bf16.mxu0 0
        %1523 = vmatpush1.bf16.msra.mxu0 %v1466
        %1524 = vmatprep.subr.bf16.mxu0 0
        %1525 = vmatpush1.bf16.msra.mxu0 %v1465
        %1526 = vmatprep.subr.bf16.mxu0 0
        %1527 = vmatpush1.bf16.msra.mxu0 %v1464
        %1528 = vmatprep.subr.bf16.mxu0 0
        %1529 = vmatpush2.bf16.msra.mxu0 %v1479
        %1530 = vmatprep.subr.bf16.mxu0 0
        %1531 = vmatpush2.bf16.msra.mxu0 %v1478
        %1532 = vmatprep.subr.bf16.mxu0 0
        %1533 = vmatpush2.bf16.msra.mxu0 %v1477
        %1534 = vmatprep.subr.bf16.mxu0 0
        %1535 = vmatpush2.bf16.msra.mxu0 %v1476
        %1536 = vmatprep.subr.bf16.mxu0 0
        %1537 = vmatpush2.bf16.msra.mxu0 %v1475
        %1538 = vmatprep.subr.bf16.mxu0 0
        %1539 = vmatpush2.bf16.msra.mxu0 %v1474
        %1540 = vmatprep.subr.bf16.mxu0 0
        %1541 = vmatpush2.bf16.msra.mxu0 %v1473
        %1542 = vmatprep.subr.bf16.mxu0 0
        %1543 = vmatpush2.bf16.msra.mxu0 %v1472
        %1544 = vmatprep.mubr.bf16.mxu0 %v780
        %1545 = vmatmul.mubr.bf16.gmra.mxu0 %v779
        %v1546 = vpop.f32.mrf.mxu0
        %v1547 = vadd.f32 0.0, %v1546
        %v1548 = vpop.f32.mrf.mxu0
        %v1549 = vpop.f32.mrf.mxu0
        %v1550 = vadd.f32 0.0, %v1549
        %v1551 = vpop.f32.mrf.mxu0
        %1552 = vmatprep.mubr.bf16.mxu0 %v783
        %1553 = vmatmul.mubr.bf16.gmra.mxu0 %v782
        %v1554 = vpop.f32.mrf.mxu0
        %v1555 = vadd.f32 0.0, %v1554
        %v1556 = vpop.f32.mrf.mxu0
        %v1557 = vpop.f32.mrf.mxu0
        %v1558 = vadd.f32 0.0, %v1557
        %v1559 = vpop.f32.mrf.mxu0
        %1560 = vmatprep.mubr.bf16.mxu0 %v786
        %1561 = vmatmul.mubr.bf16.gmra.mxu0 %v785
        %v1562 = vpop.f32.mrf.mxu0
        %v1563 = vadd.f32 0.0, %v1562
        %v1564 = vpop.f32.mrf.mxu0
        %v1565 = vpop.f32.mrf.mxu0
        %v1566 = vadd.f32 0.0, %v1565
        %v1567 = vpop.f32.mrf.mxu0
        %1568 = vmatprep.mubr.bf16.mxu0 %v789
        %1569 = vmatmul.mubr.bf16.gmra.mxu0 %v788
        %v1570 = vpop.f32.mrf.mxu0
        %v1571 = vadd.f32 0.0, %v1570
        %v1572 = vpop.f32.mrf.mxu0
        %v1573 = vpop.f32.mrf.mxu0
        %v1574 = vadd.f32 0.0, %v1573
        %v1575 = vpop.f32.mrf.mxu0
        %1576 = vmatprep.mubr.bf16.mxu0 %v792
        %1577 = vmatmul.mubr.bf16.gmra.mxu0 %v791
        %v1578 = vpop.f32.mrf.mxu0
        %v1579 = vadd.f32 0.0, %v1578
        %v1580 = vpop.f32.mrf.mxu0
        %v1581 = vpop.f32.mrf.mxu0
        %v1582 = vadd.f32 0.0, %v1581
        %v1583 = vpop.f32.mrf.mxu0
        %1584 = vmatprep.mubr.bf16.mxu0 %v795
        %1585 = vmatmul.mubr.bf16.gmra.mxu0 %v794
        %v1586 = vpop.f32.mrf.mxu0
        %v1587 = vadd.f32 0.0, %v1586
        %v1588 = vpop.f32.mrf.mxu0
        %v1589 = vpop.f32.mrf.mxu0
        %v1590 = vadd.f32 0.0, %v1589
        %v1591 = vpop.f32.mrf.mxu0
        %1592 = vmatprep.mubr.bf16.mxu0 %v798
        %1593 = vmatmul.mubr.bf16.gmra.mxu0 %v797
        %v1594 = vpop.f32.mrf.mxu0
        %v1595 = vadd.f32 0.0, %v1594
        %v1596 = vpop.f32.mrf.mxu0
        %v1597 = vpop.f32.mrf.mxu0
        %v1598 = vadd.f32 0.0, %v1597
        %v1599 = vpop.f32.mrf.mxu0
        %1600 = vmatprep.mubr.bf16.mxu0 %v801
        %1601 = vmatmul.mubr.bf16.gmra.mxu0 %v800
        %v1602 = vpop.f32.mrf.mxu0
        %v1603 = vadd.f32 0.0, %v1602
        %v1604 = vpop.f32.mrf.mxu0
        %v1605 = vpop.f32.mrf.mxu0
        %v1606 = vadd.f32 0.0, %v1605
        %v1607 = vpop.f32.mrf.mxu0
        %1608 = vdwg.mxu0
        %1609 = vmatprep.subr.bf16.mxu0 0
        %1610 = vmatpush1.bf16.msra.mxu0 %v1487
        %1611 = vmatprep.subr.bf16.mxu0 0
        %1612 = vmatpush1.bf16.msra.mxu0 %v1486
        %1613 = vmatprep.subr.bf16.mxu0 0
        %1614 = vmatpush1.bf16.msra.mxu0 %v1485
        %1615 = vmatprep.subr.bf16.mxu0 0
        %1616 = vmatpush1.bf16.msra.mxu0 %v1484
        %1617 = vmatprep.subr.bf16.mxu0 0
        %1618 = vmatpush1.bf16.msra.mxu0 %v1483
        %1619 = vmatprep.subr.bf16.mxu0 0
        %1620 = vmatpush1.bf16.msra.mxu0 %v1482
        %1621 = vmatprep.subr.bf16.mxu0 0
        %1622 = vmatpush1.bf16.msra.mxu0 %v1481
        %1623 = vmatprep.subr.bf16.mxu0 0
        %1624 = vmatpush1.bf16.msra.mxu0 %v1480
        %1625 = vmatprep.subr.bf16.mxu0 0
        %1626 = vmatpush2.bf16.msra.mxu0 0
        %1627 = vmatprep.subr.bf16.mxu0 0
        %1628 = vmatpush2.bf16.msra.mxu0 0
        %1629 = vmatprep.subr.bf16.mxu0 0
        %1630 = vmatpush2.bf16.msra.mxu0 0
        %1631 = vmatprep.subr.bf16.mxu0 0
        %1632 = vmatpush2.bf16.msra.mxu0 0
        %1633 = vmatprep.subr.bf16.mxu0 0
        %1634 = vmatpush2.bf16.msra.mxu0 0
        %1635 = vmatprep.subr.bf16.mxu0 0
        %1636 = vmatpush2.bf16.msra.mxu0 0
        %1637 = vmatprep.subr.bf16.mxu0 0
        %1638 = vmatpush2.bf16.msra.mxu0 0
        %1639 = vmatprep.subr.bf16.mxu0 0
        %1640 = vmatpush2.bf16.msra.mxu0 0
        %1641 = vmatprep.mubr.bf16.mxu0 0
        %1642 = vmatmul.mubr.bf16.gmra.mxu0 %v781
        %v1643 = vpop.f32.mrf.mxu0
        %v1644 = vadd.f32 %v1547, %v1643
        %v1645 = vpop.f32.mrf.mxu0
        %v1646 = vpop.f32.mrf.mxu0
        %v1647 = vadd.f32 %v1550, %v1646
        %v1648 = vpop.f32.mrf.mxu0
        %1649 = vmatprep.mubr.bf16.mxu0 0
        %1650 = vmatmul.mubr.bf16.gmra.mxu0 %v784
        %v1651 = vpop.f32.mrf.mxu0
        %v1652 = vadd.f32 %v1555, %v1651
        %v1653 = vpop.f32.mrf.mxu0
        %v1654 = vpop.f32.mrf.mxu0
        %v1655 = vadd.f32 %v1558, %v1654
        %v1656 = vpop.f32.mrf.mxu0
        %1657 = vmatprep.mubr.bf16.mxu0 0
        %1658 = vmatmul.mubr.bf16.gmra.mxu0 %v787
        %v1659 = vpop.f32.mrf.mxu0
        %v1660 = vadd.f32 %v1563, %v1659
        %v1661 = vpop.f32.mrf.mxu0
        %v1662 = vpop.f32.mrf.mxu0
        %v1663 = vadd.f32 %v1566, %v1662
        %v1664 = vpop.f32.mrf.mxu0
        %1665 = vmatprep.mubr.bf16.mxu0 0
        %1666 = vmatmul.mubr.bf16.gmra.mxu0 %v790
        %v1667 = vpop.f32.mrf.mxu0
        %v1668 = vadd.f32 %v1571, %v1667
        %v1669 = vpop.f32.mrf.mxu0
        %v1670 = vpop.f32.mrf.mxu0
        %v1671 = vadd.f32 %v1574, %v1670
        %v1672 = vpop.f32.mrf.mxu0
        %1673 = vmatprep.mubr.bf16.mxu0 0
        %1674 = vmatmul.mubr.bf16.gmra.mxu0 %v793
        %v1675 = vpop.f32.mrf.mxu0
        %v1676 = vadd.f32 %v1579, %v1675
        %v1677 = vpop.f32.mrf.mxu0
        %v1678 = vpop.f32.mrf.mxu0
        %v1679 = vadd.f32 %v1582, %v1678
        %v1680 = vpop.f32.mrf.mxu0
        %1681 = vmatprep.mubr.bf16.mxu0 0
        %1682 = vmatmul.mubr.bf16.gmra.mxu0 %v796
        %v1683 = vpop.f32.mrf.mxu0
        %v1684 = vadd.f32 %v1587, %v1683
        %v1685 = vpop.f32.mrf.mxu0
        %v1686 = vpop.f32.mrf.mxu0
        %v1687 = vadd.f32 %v1590, %v1686
        %v1688 = vpop.f32.mrf.mxu0
        %1689 = vmatprep.mubr.bf16.mxu0 0
        %1690 = vmatmul.mubr.bf16.gmra.mxu0 %v799
        %v1691 = vpop.f32.mrf.mxu0
        %v1692 = vadd.f32 %v1595, %v1691
        %v1693 = vpop.f32.mrf.mxu0
        %v1694 = vpop.f32.mrf.mxu0
        %v1695 = vadd.f32 %v1598, %v1694
        %v1696 = vpop.f32.mrf.mxu0
        %1697 = vmatprep.mubr.bf16.mxu0 0
        %1698 = vmatmul.mubr.bf16.gmra.mxu0 %v802
        %v1699 = vpop.f32.mrf.mxu0
        %v1700 = vadd.f32 %v1603, %v1699
        %v1701 = vpop.f32.mrf.mxu0
        %v1702 = vpop.f32.mrf.mxu0
        %v1703 = vadd.f32 %v1606, %v1702
        %v1704 = vpop.f32.mrf.mxu0
        %1705 = vdwg.mxu0
        %v1706 = vadd.f32 %v1352, %v1644
        %v1707 = vadd.f32 %v1353, %v1647
        %v1708 = vadd.f32 %v1354, %v1652
        %v1709 = vadd.f32 %v1355, %v1655
        %v1710 = vadd.f32 %v1356, %v1660
        %v1711 = vadd.f32 %v1357, %v1663
        %v1712 = vadd.f32 %v1358, %v1668
        %v1713 = vadd.f32 %v1359, %v1671
        %v1714 = vadd.f32 %v1360, %v1676
        %v1715 = vadd.f32 %v1361, %v1679
        %v1716 = vadd.f32 %v1362, %v1684
        %v1717 = vadd.f32 %v1363, %v1687
        %v1718 = vadd.f32 %v1364, %v1692
        %v1719 = vadd.f32 %v1365, %v1695
        %v1720 = vadd.f32 %v1366, %v1700
        %v1721 = vadd.f32 %v1367, %v1703
        %v1770 = vunpack.c.l.b16 %v901
        %v1771 = vunpack.c.l.b16 %v902
        %v1772 = vunpack.c.l.b16 %v903
        %v1773 = vunpack.c.l.b16 %v904
        %v1774 = vunpack.c.l.b16 %v905
        %v1775 = vunpack.c.l.b16 %v906
        %v1776 = vunpack.c.l.b16 %v907
        %v1777 = vunpack.c.l.b16 %v908
        %v1778 = vunpack.c.l.b16 %v909
        %v1779 = vunpack.c.l.b16 %v910
        %v1780 = vunpack.c.l.b16 %v911
        %v1781 = vunpack.c.l.b16 %v912
        %v1782 = vunpack.c.l.b16 %v913
        %v1783 = vunpack.c.l.b16 %v914
        %v1784 = vunpack.c.l.b16 %v915
        %v1785 = vunpack.c.l.b16 %v916
        %v1786 = vunpack.c.l.b16 %v917
        %v1787 = vunpack.c.l.b16 %v918
        %v1788 = vunpack.c.l.b16 %v919
        %v1789 = vunpack.c.l.b16 %v920
        %v1790 = vunpack.c.l.b16 %v921
        %v1791 = vunpack.c.l.b16 %v922
        %v1792 = vunpack.c.l.b16 %v923
        %v1793 = vunpack.c.l.b16 %v924
        %v1794 = vunpack.c.l.b16 %v925
        %v1795 = vunpack.c.l.b16 %v926
        %v1796 = vunpack.c.l.b16 %v927
        %v1797 = vunpack.c.l.b16 %v928
        %v1798 = vunpack.c.l.b16 %v929
        %v1799 = vunpack.c.l.b16 %v930
        %v1800 = vunpack.c.l.b16 %v931
        %v1801 = vunpack.c.l.b16 %v932
        %v1802 = vunpack.c.l.b16 %v933
        %v1803 = vunpack.c.l.b16 %v934
        %v1804 = vunpack.c.l.b16 %v935
        %v1805 = vunpack.c.l.b16 %v936
        %v1806 = vunpack.c.l.b16 %v937
        %v1807 = vunpack.c.l.b16 %v938
        %v1808 = vunpack.c.l.b16 %v939
        %v1809 = vunpack.c.l.b16 %v940
        %v1810 = vunpack.c.l.b16 %v941
        %v1811 = vunpack.c.l.b16 %v942
        %v1812 = vunpack.c.l.b16 %v943
        %v1813 = vunpack.c.l.b16 %v944
        %v1814 = vunpack.c.l.b16 %v945
        %v1815 = vunpack.c.l.b16 %v946
        %v1816 = vunpack.c.l.b16 %v947
        %v1817 = vunpack.c.l.b16 %v948
        %v1818 = vpack.c.b16 %v1771, %v1770
        %v1819 = vpack.c.b16 %v1773, %v1772
        %v1820 = vpack.c.b16 %v1775, %v1774
        %v1821 = vpack.c.b16 %v1777, %v1776
        %v1822 = vpack.c.b16 %v1779, %v1778
        %v1823 = vpack.c.b16 %v1781, %v1780
        %v1824 = vpack.c.b16 %v1783, %v1782
        %v1825 = vpack.c.b16 %v1785, %v1784
        %v1826 = vpack.c.b16 %v1787, %v1786
        %v1827 = vpack.c.b16 %v1789, %v1788
        %v1828 = vpack.c.b16 %v1791, %v1790
        %v1829 = vpack.c.b16 %v1793, %v1792
        %v1830 = vpack.c.b16 %v1795, %v1794
        %v1831 = vpack.c.b16 %v1797, %v1796
        %v1832 = vpack.c.b16 %v1799, %v1798
        %v1833 = vpack.c.b16 %v1801, %v1800
        %v1834 = vpack.c.b16 %v1803, %v1802
        %v1835 = vpack.c.b16 %v1805, %v1804
        %v1836 = vpack.c.b16 %v1807, %v1806
        %v1837 = vpack.c.b16 %v1809, %v1808
        %v1838 = vpack.c.b16 %v1811, %v1810
        %v1839 = vpack.c.b16 %v1813, %v1812
        %v1840 = vpack.c.b16 %v1815, %v1814
        %v1841 = vpack.c.b16 %v1817, %v1816
        %1866 = vmatprep.subr.bf16.mxu0 0
        %1867 = vmatpush1.bf16.msra.mxu0 %v1825
        %1868 = vmatprep.subr.bf16.mxu0 0
        %1869 = vmatpush1.bf16.msra.mxu0 %v1824
        %1870 = vmatprep.subr.bf16.mxu0 0
        %1871 = vmatpush1.bf16.msra.mxu0 %v1823
        %1872 = vmatprep.subr.bf16.mxu0 0
        %1873 = vmatpush1.bf16.msra.mxu0 %v1822
        %1874 = vmatprep.subr.bf16.mxu0 0
        %1875 = vmatpush1.bf16.msra.mxu0 %v1821
        %1876 = vmatprep.subr.bf16.mxu0 0
        %1877 = vmatpush1.bf16.msra.mxu0 %v1820
        %1878 = vmatprep.subr.bf16.mxu0 0
        %1879 = vmatpush1.bf16.msra.mxu0 %v1819
        %1880 = vmatprep.subr.bf16.mxu0 0
        %1881 = vmatpush1.bf16.msra.mxu0 %v1818
        %1882 = vmatprep.subr.bf16.mxu0 0
        %1883 = vmatpush2.bf16.msra.mxu0 %v1833
        %1884 = vmatprep.subr.bf16.mxu0 0
        %1885 = vmatpush2.bf16.msra.mxu0 %v1832
        %1886 = vmatprep.subr.bf16.mxu0 0
        %1887 = vmatpush2.bf16.msra.mxu0 %v1831
        %1888 = vmatprep.subr.bf16.mxu0 0
        %1889 = vmatpush2.bf16.msra.mxu0 %v1830
        %1890 = vmatprep.subr.bf16.mxu0 0
        %1891 = vmatpush2.bf16.msra.mxu0 %v1829
        %1892 = vmatprep.subr.bf16.mxu0 0
        %1893 = vmatpush2.bf16.msra.mxu0 %v1828
        %1894 = vmatprep.subr.bf16.mxu0 0
        %1895 = vmatpush2.bf16.msra.mxu0 %v1827
        %1896 = vmatprep.subr.bf16.mxu0 0
        %1897 = vmatpush2.bf16.msra.mxu0 %v1826
        %1898 = vmatprep.mubr.bf16.mxu0 %v780
        %1899 = vmatmul.mubr.bf16.gmra.mxu0 %v779
        %v1900 = vpop.f32.mrf.mxu0
        %v1901 = vadd.f32 0.0, %v1900
        %v1902 = vpop.f32.mrf.mxu0
        %v1903 = vpop.f32.mrf.mxu0
        %v1904 = vadd.f32 0.0, %v1903
        %v1905 = vpop.f32.mrf.mxu0
        %1906 = vmatprep.mubr.bf16.mxu0 %v783
        %1907 = vmatmul.mubr.bf16.gmra.mxu0 %v782
        %v1908 = vpop.f32.mrf.mxu0
        %v1909 = vadd.f32 0.0, %v1908
        %v1910 = vpop.f32.mrf.mxu0
        %v1911 = vpop.f32.mrf.mxu0
        %v1912 = vadd.f32 0.0, %v1911
        %v1913 = vpop.f32.mrf.mxu0
        %1914 = vmatprep.mubr.bf16.mxu0 %v786
        %1915 = vmatmul.mubr.bf16.gmra.mxu0 %v785
        %v1916 = vpop.f32.mrf.mxu0
        %v1917 = vadd.f32 0.0, %v1916
        %v1918 = vpop.f32.mrf.mxu0
        %v1919 = vpop.f32.mrf.mxu0
        %v1920 = vadd.f32 0.0, %v1919
        %v1921 = vpop.f32.mrf.mxu0
        %1922 = vmatprep.mubr.bf16.mxu0 %v789
        %1923 = vmatmul.mubr.bf16.gmra.mxu0 %v788
        %v1924 = vpop.f32.mrf.mxu0
        %v1925 = vadd.f32 0.0, %v1924
        %v1926 = vpop.f32.mrf.mxu0
        %v1927 = vpop.f32.mrf.mxu0
        %v1928 = vadd.f32 0.0, %v1927
        %v1929 = vpop.f32.mrf.mxu0
        %1930 = vmatprep.mubr.bf16.mxu0 %v792
        %1931 = vmatmul.mubr.bf16.gmra.mxu0 %v791
        %v1932 = vpop.f32.mrf.mxu0
        %v1933 = vadd.f32 0.0, %v1932
        %v1934 = vpop.f32.mrf.mxu0
        %v1935 = vpop.f32.mrf.mxu0
        %v1936 = vadd.f32 0.0, %v1935
        %v1937 = vpop.f32.mrf.mxu0
        %1938 = vmatprep.mubr.bf16.mxu0 %v795
        %1939 = vmatmul.mubr.bf16.gmra.mxu0 %v794
        %v1940 = vpop.f32.mrf.mxu0
        %v1941 = vadd.f32 0.0, %v1940
        %v1942 = vpop.f32.mrf.mxu0
        %v1943 = vpop.f32.mrf.mxu0
        %v1944 = vadd.f32 0.0, %v1943
        %v1945 = vpop.f32.mrf.mxu0
        %1946 = vmatprep.mubr.bf16.mxu0 %v798
        %1947 = vmatmul.mubr.bf16.gmra.mxu0 %v797
        %v1948 = vpop.f32.mrf.mxu0
        %v1949 = vadd.f32 0.0, %v1948
        %v1950 = vpop.f32.mrf.mxu0
        %v1951 = vpop.f32.mrf.mxu0
        %v1952 = vadd.f32 0.0, %v1951
        %v1953 = vpop.f32.mrf.mxu0
        %1954 = vmatprep.mubr.bf16.mxu0 %v801
        %1955 = vmatmul.mubr.bf16.gmra.mxu0 %v800
        %v1956 = vpop.f32.mrf.mxu0
        %v1957 = vadd.f32 0.0, %v1956
        %v1958 = vpop.f32.mrf.mxu0
        %v1959 = vpop.f32.mrf.mxu0
        %v1960 = vadd.f32 0.0, %v1959
        %v1961 = vpop.f32.mrf.mxu0
        %1962 = vdwg.mxu0
        %1963 = vmatprep.subr.bf16.mxu0 0
        %1964 = vmatpush1.bf16.msra.mxu0 %v1841
        %1965 = vmatprep.subr.bf16.mxu0 0
        %1966 = vmatpush1.bf16.msra.mxu0 %v1840
        %1967 = vmatprep.subr.bf16.mxu0 0
        %1968 = vmatpush1.bf16.msra.mxu0 %v1839
        %1969 = vmatprep.subr.bf16.mxu0 0
        %1970 = vmatpush1.bf16.msra.mxu0 %v1838
        %1971 = vmatprep.subr.bf16.mxu0 0
        %1972 = vmatpush1.bf16.msra.mxu0 %v1837
        %1973 = vmatprep.subr.bf16.mxu0 0
        %1974 = vmatpush1.bf16.msra.mxu0 %v1836
        %1975 = vmatprep.subr.bf16.mxu0 0
        %1976 = vmatpush1.bf16.msra.mxu0 %v1835
        %1977 = vmatprep.subr.bf16.mxu0 0
        %1978 = vmatpush1.bf16.msra.mxu0 %v1834
        %1979 = vmatprep.subr.bf16.mxu0 0
        %1980 = vmatpush2.bf16.msra.mxu0 0
        %1981 = vmatprep.subr.bf16.mxu0 0
        %1982 = vmatpush2.bf16.msra.mxu0 0
        %1983 = vmatprep.subr.bf16.mxu0 0
        %1984 = vmatpush2.bf16.msra.mxu0 0
        %1985 = vmatprep.subr.bf16.mxu0 0
        %1986 = vmatpush2.bf16.msra.mxu0 0
        %1987 = vmatprep.subr.bf16.mxu0 0
        %1988 = vmatpush2.bf16.msra.mxu0 0
        %1989 = vmatprep.subr.bf16.mxu0 0
        %1990 = vmatpush2.bf16.msra.mxu0 0
        %1991 = vmatprep.subr.bf16.mxu0 0
        %1992 = vmatpush2.bf16.msra.mxu0 0
        %1993 = vmatprep.subr.bf16.mxu0 0
        %1994 = vmatpush2.bf16.msra.mxu0 0
        %1995 = vmatprep.mubr.bf16.mxu0 0
        %1996 = vmatmul.mubr.bf16.gmra.mxu0 %v781
        %v1997 = vpop.f32.mrf.mxu0
        %v1998 = vadd.f32 %v1901, %v1997
        %v1999 = vpop.f32.mrf.mxu0
        %v2000 = vpop.f32.mrf.mxu0
        %v2001 = vadd.f32 %v1904, %v2000
        %v2002 = vpop.f32.mrf.mxu0
        %2003 = vmatprep.mubr.bf16.mxu0 0
        %2004 = vmatmul.mubr.bf16.gmra.mxu0 %v784
        %v2005 = vpop.f32.mrf.mxu0
        %v2006 = vadd.f32 %v1909, %v2005
        %v2007 = vpop.f32.mrf.mxu0
        %v2008 = vpop.f32.mrf.mxu0
        %v2009 = vadd.f32 %v1912, %v2008
        %v2010 = vpop.f32.mrf.mxu0
        %2011 = vmatprep.mubr.bf16.mxu0 0
        %2012 = vmatmul.mubr.bf16.gmra.mxu0 %v787
        %v2013 = vpop.f32.mrf.mxu0
        %v2014 = vadd.f32 %v1917, %v2013
        %v2015 = vpop.f32.mrf.mxu0
        %v2016 = vpop.f32.mrf.mxu0
        %v2017 = vadd.f32 %v1920, %v2016
        %v2018 = vpop.f32.mrf.mxu0
        %2019 = vmatprep.mubr.bf16.mxu0 0
        %2020 = vmatmul.mubr.bf16.gmra.mxu0 %v790
        %v2021 = vpop.f32.mrf.mxu0
        %v2022 = vadd.f32 %v1925, %v2021
        %v2023 = vpop.f32.mrf.mxu0
        %v2024 = vpop.f32.mrf.mxu0
        %v2025 = vadd.f32 %v1928, %v2024
        %v2026 = vpop.f32.mrf.mxu0
        %2027 = vmatprep.mubr.bf16.mxu0 0
        %2028 = vmatmul.mubr.bf16.gmra.mxu0 %v793
        %v2029 = vpop.f32.mrf.mxu0
        %v2030 = vadd.f32 %v1933, %v2029
        %v2031 = vpop.f32.mrf.mxu0
        %v2032 = vpop.f32.mrf.mxu0
        %v2033 = vadd.f32 %v1936, %v2032
        %v2034 = vpop.f32.mrf.mxu0
        %2035 = vmatprep.mubr.bf16.mxu0 0
        %2036 = vmatmul.mubr.bf16.gmra.mxu0 %v796
        %v2037 = vpop.f32.mrf.mxu0
        %v2038 = vadd.f32 %v1941, %v2037
        %v2039 = vpop.f32.mrf.mxu0
        %v2040 = vpop.f32.mrf.mxu0
        %v2041 = vadd.f32 %v1944, %v2040
        %v2042 = vpop.f32.mrf.mxu0
        %2043 = vmatprep.mubr.bf16.mxu0 0
        %2044 = vmatmul.mubr.bf16.gmra.mxu0 %v799
        %v2045 = vpop.f32.mrf.mxu0
        %v2046 = vadd.f32 %v1949, %v2045
        %v2047 = vpop.f32.mrf.mxu0
        %v2048 = vpop.f32.mrf.mxu0
        %v2049 = vadd.f32 %v1952, %v2048
        %v2050 = vpop.f32.mrf.mxu0
        %2051 = vmatprep.mubr.bf16.mxu0 0
        %2052 = vmatmul.mubr.bf16.gmra.mxu0 %v802
        %v2053 = vpop.f32.mrf.mxu0
        %v2054 = vadd.f32 %v1957, %v2053
        %v2055 = vpop.f32.mrf.mxu0
        %v2056 = vpop.f32.mrf.mxu0
        %v2057 = vadd.f32 %v1960, %v2056
        %v2058 = vpop.f32.mrf.mxu0
        %2059 = vdwg.mxu0
        %v2060 = vrot.slane %v1998, 1
        %v2061 = vrot.slane %v2001, 1
        %v2062 = vrot.slane %v2006, 1
        %v2063 = vrot.slane %v2009, 1
        %v2064 = vrot.slane %v2014, 1
        %v2065 = vrot.slane %v2017, 1
        %v2066 = vrot.slane %v2022, 1
        %v2067 = vrot.slane %v2025, 1
        %v2068 = vrot.slane %v2030, 1
        %v2069 = vrot.slane %v2033, 1
        %v2070 = vrot.slane %v2038, 1
        %v2071 = vrot.slane %v2041, 1
        %v2072 = vrot.slane %v2046, 1
        %v2073 = vrot.slane %v2049, 1
        %v2074 = vrot.slane %v2054, 1
        %v2075 = vrot.slane %v2057, 1
        %vm2076 = vcmp.lt.s32.totalorder %v427, 7
        %v2077 = vsel %vm2076, %v2074, %v2075
        %v2078 = vsel %vm2076, %v2073, %v2074
        %v2079 = vsel %vm2076, %v2072, %v2073
        %v2080 = vsel %vm2076, %v2071, %v2072
        %v2081 = vsel %vm2076, %v2070, %v2071
        %v2082 = vsel %vm2076, %v2069, %v2070
        %v2083 = vsel %vm2076, %v2068, %v2069
        %v2084 = vsel %vm2076, %v2067, %v2068
        %v2085 = vsel %vm2076, %v2066, %v2067
        %v2086 = vsel %vm2076, %v2065, %v2066
        %v2087 = vsel %vm2076, %v2064, %v2065
        %v2088 = vsel %vm2076, %v2063, %v2064
        %v2089 = vsel %vm2076, %v2062, %v2063
        %v2090 = vsel %vm2076, %v2061, %v2062
        %v2091 = vsel %vm2076, %v2060, %v2061
        %v2092 = vsel %vm2076, %v2075, %v2060
        %v2093 = vsel %vm635, 1, 0
        %v2094 = vsel %vm636, 1, 0
        %v2095 = vsel %vm637, 1, 0
        %v2096 = vsel %vm638, 1, 0
        %v2097 = vsel %vm639, 1, 0
        %v2098 = vsel %vm640, 1, 0
        %v2099 = vsel %vm641, 1, 0
        %v2100 = vsel %vm642, 1, 0
        %v2101 = vsel %vm643, 1, 0
        %v2102 = vsel %vm644, 1, 0
        %v2103 = vsel %vm645, 1, 0
        %v2104 = vsel %vm646, 1, 0
        %v2105 = vsel %vm647, 1, 0
        %v2106 = vsel %vm648, 1, 0
        %v2107 = vsel %vm649, 1, 0
        %v2108 = vsel %vm650, 1, 0
        %vm2109 = vcmp.eq.s32.totalorder %v2093, 1
        %vm2110 = vcmp.eq.s32.totalorder %v2094, 1
        %vm2111 = vcmp.eq.s32.totalorder %v2095, 1
        %vm2112 = vcmp.eq.s32.totalorder %v2096, 1
        %vm2113 = vcmp.eq.s32.totalorder %v2097, 1
        %vm2114 = vcmp.eq.s32.totalorder %v2098, 1
        %vm2115 = vcmp.eq.s32.totalorder %v2099, 1
        %vm2116 = vcmp.eq.s32.totalorder %v2100, 1
        %vm2117 = vcmp.eq.s32.totalorder %v2101, 1
        %vm2118 = vcmp.eq.s32.totalorder %v2102, 1
        %vm2119 = vcmp.eq.s32.totalorder %v2103, 1
        %vm2120 = vcmp.eq.s32.totalorder %v2104, 1
        %vm2121 = vcmp.eq.s32.totalorder %v2105, 1
        %vm2122 = vcmp.eq.s32.totalorder %v2106, 1
        %vm2123 = vcmp.eq.s32.totalorder %v2107, 1
        %vm2124 = vcmp.eq.s32.totalorder %v2108, 1
        %v2125 = vsel %vm2109, %v2091, 0.0
        %v2126 = vsel %vm2110, %v2090, 0.0
        %v2127 = vsel %vm2111, %v2089, 0.0
        %v2128 = vsel %vm2112, %v2088, 0.0
        %v2129 = vsel %vm2113, %v2087, 0.0
        %v2130 = vsel %vm2114, %v2086, 0.0
        %v2131 = vsel %vm2115, %v2085, 0.0
        %v2132 = vsel %vm2116, %v2084, 0.0
        %v2133 = vsel %vm2117, %v2083, 0.0
        %v2134 = vsel %vm2118, %v2082, 0.0
        %v2135 = vsel %vm2119, %v2081, 0.0
        %v2136 = vsel %vm2120, %v2080, 0.0
        %v2137 = vsel %vm2121, %v2079, 0.0
        %v2138 = vsel %vm2122, %v2078, 0.0
        %v2139 = vsel %vm2123, %v2077, 0.0
        %v2140 = vsel %vm2124, %v2092, 0.0
        %v2141 = vadd.f32 %v1706, %v2125
        %v2142 = vadd.f32 %v1707, %v2126
        %v2143 = vadd.f32 %v1708, %v2127
        %v2144 = vadd.f32 %v1709, %v2128
        %v2145 = vadd.f32 %v1710, %v2129
        %v2146 = vadd.f32 %v1711, %v2130
        %v2147 = vadd.f32 %v1712, %v2131
        %v2148 = vadd.f32 %v1713, %v2132
        %v2149 = vadd.f32 %v1714, %v2133
        %v2150 = vadd.f32 %v1715, %v2134
        %v2151 = vadd.f32 %v1716, %v2135
        %v2152 = vadd.f32 %v1717, %v2136
        %v2153 = vadd.f32 %v1718, %v2137
        %v2154 = vadd.f32 %v1719, %v2138
        %v2155 = vadd.f32 %v1720, %v2139
        %v2156 = vadd.f32 %v1721, %v2140
        %vm2157 = vcmp.gt.f32.partialorder %v2141, 0.0
        %vm2158 = vcmp.gt.f32.partialorder %v2142, 0.0
        %vm2159 = vcmp.gt.f32.partialorder %v2143, 0.0
        %vm2160 = vcmp.gt.f32.partialorder %v2144, 0.0
        %vm2161 = vcmp.gt.f32.partialorder %v2145, 0.0
        %vm2162 = vcmp.gt.f32.partialorder %v2146, 0.0
        %vm2163 = vcmp.gt.f32.partialorder %v2147, 0.0
        %vm2164 = vcmp.gt.f32.partialorder %v2148, 0.0
        %vm2165 = vcmp.gt.f32.partialorder %v2149, 0.0
        %vm2166 = vcmp.gt.f32.partialorder %v2150, 0.0
        %vm2167 = vcmp.gt.f32.partialorder %v2151, 0.0
        %vm2168 = vcmp.gt.f32.partialorder %v2152, 0.0
        %vm2169 = vcmp.gt.f32.partialorder %v2153, 0.0
        %vm2170 = vcmp.gt.f32.partialorder %v2154, 0.0
        %vm2171 = vcmp.gt.f32.partialorder %v2155, 0.0
        %vm2172 = vcmp.gt.f32.partialorder %v2156, 0.0
        %v2173 = vmul.f32 %v2141, 0.01
        %v2174 = vmul.f32 %v2142, 0.01
        %v2175 = vmul.f32 %v2143, 0.01
        %v2176 = vmul.f32 %v2144, 0.01
        %v2177 = vmul.f32 %v2145, 0.01
        %v2178 = vmul.f32 %v2146, 0.01
        %v2179 = vmul.f32 %v2147, 0.01
        %v2180 = vmul.f32 %v2148, 0.01
        %v2181 = vmul.f32 %v2149, 0.01
        %v2182 = vmul.f32 %v2150, 0.01
        %v2183 = vmul.f32 %v2151, 0.01
        %v2184 = vmul.f32 %v2152, 0.01
        %v2185 = vmul.f32 %v2153, 0.01
        %v2186 = vmul.f32 %v2154, 0.01
        %v2187 = vmul.f32 %v2155, 0.01
        %v2188 = vmul.f32 %v2156, 0.01
        %v2189 = vsel %vm2157, %v2141, %v2173
        %v2190 = vsel %vm2158, %v2142, %v2174
        %v2191 = vsel %vm2159, %v2143, %v2175
        %v2192 = vsel %vm2160, %v2144, %v2176
        %v2193 = vsel %vm2161, %v2145, %v2177
        %v2194 = vsel %vm2162, %v2146, %v2178
        %v2195 = vsel %vm2163, %v2147, %v2179
        %v2196 = vsel %vm2164, %v2148, %v2180
        %v2197 = vsel %vm2165, %v2149, %v2181
        %v2198 = vsel %vm2166, %v2150, %v2182
        %v2199 = vsel %vm2167, %v2151, %v2183
        %v2200 = vsel %vm2168, %v2152, %v2184
        %v2201 = vsel %vm2169, %v2153, %v2185
        %v2202 = vsel %vm2170, %v2154, %v2186
        %v2203 = vsel %vm2171, %v2155, %v2187
        %v2204 = vsel %vm2172, %v2156, %v2188
        %v2205 = vpack.c.bf16 %v2190, %v2189
        %v2206 = vpack.c.bf16 %v2192, %v2191
        %v2207 = vpack.c.bf16 %v2194, %v2193
        %v2208 = vpack.c.bf16 %v2196, %v2195
        %v2209 = vpack.c.bf16 %v2198, %v2197
        %v2210 = vpack.c.bf16 %v2200, %v2199
        %v2211 = vpack.c.bf16 %v2202, %v2201
        %v2212 = vpack.c.bf16 %v2204, %v2203
        %v2213 = vld [vmem:[#allocation7] sm:$0xf]
        %v2214 = vld [vmem:[#allocation7 + $0x4] sm:$0xf]
        %v2215 = vld [vmem:[#allocation7 + $0x8] sm:$0xf]
        %v2216 = vld [vmem:[#allocation7 + $0xc] sm:$0xf]
        %v2217 = vld [vmem:[#allocation7 + $0x10] sm:$0xf]
        %v2218 = vld [vmem:[#allocation7 + $0x14] sm:$0xf]
        %v2219 = vld [vmem:[#allocation7 + $0x18] sm:$0xf]
        %v2220 = vld [vmem:[#allocation7 + $0x1c] sm:$0xf]
        %v2221 = vld [vmem:[#allocation7 + $0x20] sm:$0xf]
        %v2222 = vld [vmem:[#allocation7 + $0x24] sm:$0xf]
        %v2223 = vld [vmem:[#allocation7 + $0x28] sm:$0xf]
        %v2224 = vld [vmem:[#allocation7 + $0x2c] sm:$0xf]
        %v2225 = vld [vmem:[#allocation7 + $0x30] sm:$0xf]
        %v2226 = vld [vmem:[#allocation7 + $0x34] sm:$0xf]
        %v2227 = vld [vmem:[#allocation7 + $0x38] sm:$0xf]
        %v2228 = vld [vmem:[#allocation7 + $0x3c] sm:$0xf]
        %s2229 = scalar_lea.vmem [#allocation7], 64
        %v2230 = vld [vmem:[%s2229] sm:$0xf]
        %v2231 = vld [vmem:[%s2229 + $0x4] sm:$0xf]
        %v2232 = vld [vmem:[%s2229 + $0x8] sm:$0xf]
        %v2233 = vld [vmem:[%s2229 + $0xc] sm:$0xf]
        %v2234 = vld [vmem:[%s2229 + $0x10] sm:$0xf]
        %v2235 = vld [vmem:[%s2229 + $0x14] sm:$0xf]
        %v2236 = vld [vmem:[%s2229 + $0x18] sm:$0xf]
        %v2237 = vld [vmem:[%s2229 + $0x1c] sm:$0xf]
        %v2238 = vld [vmem:[%s2229 + $0x20] sm:$0xf]
        %v2239 = vld [vmem:[%s2229 + $0x24] sm:$0xf]
        %v2240 = vld [vmem:[%s2229 + $0x28] sm:$0xf]
        %v2241 = vld [vmem:[%s2229 + $0x2c] sm:$0xf]
        %v2242 = vld [vmem:[%s2229 + $0x30] sm:$0xf]
        %v2243 = vld [vmem:[%s2229 + $0x34] sm:$0xf]
        %v2244 = vld [vmem:[%s2229 + $0x38] sm:$0xf]
        %v2245 = vld [vmem:[%s2229 + $0x3c] sm:$0xf]
        %s2246 = scalar_lea.vmem [#allocation7], 128
        %v2247 = vld [vmem:[%s2246] sm:$0xf]
        %v2248 = vld [vmem:[%s2246 + $0x4] sm:$0xf]
        %v2249 = vld [vmem:[%s2246 + $0x8] sm:$0xf]
        %v2250 = vld [vmem:[%s2246 + $0xc] sm:$0xf]
        %v2251 = vld [vmem:[%s2246 + $0x10] sm:$0xf]
        %v2252 = vld [vmem:[%s2246 + $0x14] sm:$0xf]
        %v2253 = vld [vmem:[%s2246 + $0x18] sm:$0xf]
        %v2254 = vld [vmem:[%s2246 + $0x1c] sm:$0xf]
        %v2255 = vld [vmem:[%s2246 + $0x20] sm:$0xf]
        %v2256 = vld [vmem:[%s2246 + $0x24] sm:$0xf]
        %v2257 = vld [vmem:[%s2246 + $0x28] sm:$0xf]
        %v2258 = vld [vmem:[%s2246 + $0x2c] sm:$0xf]
        %v2259 = vld [vmem:[%s2246 + $0x30] sm:$0xf]
        %v2260 = vld [vmem:[%s2246 + $0x34] sm:$0xf]
        %v2261 = vld [vmem:[%s2246 + $0x38] sm:$0xf]
        %v2262 = vld [vmem:[%s2246 + $0x3c] sm:$0xf]
        %v2279 = vunpack.c.l.b16 %v2213
        %v2280 = vunpack.c.l.b16 %v2214
        %v2281 = vunpack.c.l.b16 %v2215
        %v2282 = vunpack.c.l.b16 %v2216
        %v2283 = vunpack.c.l.b16 %v2217
        %v2284 = vunpack.c.l.b16 %v2218
        %v2285 = vunpack.c.l.b16 %v2219
        %v2286 = vunpack.c.l.b16 %v2220
        %v2287 = vunpack.c.l.b16 %v2221
        %v2288 = vunpack.c.l.b16 %v2222
        %v2289 = vunpack.c.l.b16 %v2223
        %v2290 = vunpack.c.l.b16 %v2224
        %v2291 = vunpack.c.l.b16 %v2225
        %v2292 = vunpack.c.l.b16 %v2226
        %v2293 = vunpack.c.l.b16 %v2227
        %v2294 = vunpack.c.l.b16 %v2228
        %v2295 = vpack.c.b16 %v2280, %v2279
        %v2296 = vpack.c.b16 %v2282, %v2281
        %v2297 = vpack.c.b16 %v2284, %v2283
        %v2298 = vpack.c.b16 %v2286, %v2285
        %v2299 = vpack.c.b16 %v2288, %v2287
        %v2300 = vpack.c.b16 %v2290, %v2289
        %v2301 = vpack.c.b16 %v2292, %v2291
        %v2302 = vpack.c.b16 %v2294, %v2293
        %2311 = vmatprep.subr.bf16.mxu0 0
        %2312 = vmatpush1.bf16.msra.mxu0 %v2302
        %2313 = vmatprep.subr.bf16.mxu0 0
        %2314 = vmatpush1.bf16.msra.mxu0 %v2301
        %2315 = vmatprep.subr.bf16.mxu0 0
        %2316 = vmatpush1.bf16.msra.mxu0 %v2300
        %2317 = vmatprep.subr.bf16.mxu0 0
        %2318 = vmatpush1.bf16.msra.mxu0 %v2299
        %2319 = vmatprep.subr.bf16.mxu0 0
        %2320 = vmatpush1.bf16.msra.mxu0 %v2298
        %2321 = vmatprep.subr.bf16.mxu0 0
        %2322 = vmatpush1.bf16.msra.mxu0 %v2297
        %2323 = vmatprep.subr.bf16.mxu0 0
        %2324 = vmatpush1.bf16.msra.mxu0 %v2296
        %2325 = vmatprep.subr.bf16.mxu0 0
        %2326 = vmatpush1.bf16.msra.mxu0 %v2295
        %2327 = vmatprep.subr.bf16.mxu0 0
        %2328 = vmatpush2.bf16.msra.mxu0 0
        %2329 = vmatprep.subr.bf16.mxu0 0
        %2330 = vmatpush2.bf16.msra.mxu0 0
        %2331 = vmatprep.subr.bf16.mxu0 0
        %2332 = vmatpush2.bf16.msra.mxu0 0
        %2333 = vmatprep.subr.bf16.mxu0 0
        %2334 = vmatpush2.bf16.msra.mxu0 0
        %2335 = vmatprep.subr.bf16.mxu0 0
        %2336 = vmatpush2.bf16.msra.mxu0 0
        %2337 = vmatprep.subr.bf16.mxu0 0
        %2338 = vmatpush2.bf16.msra.mxu0 0
        %2339 = vmatprep.subr.bf16.mxu0 0
        %2340 = vmatpush2.bf16.msra.mxu0 0
        %2341 = vmatprep.subr.bf16.mxu0 0
        %2342 = vmatpush2.bf16.msra.mxu0 0
        %2343 = vmatprep.mubr.bf16.mxu0 0
        %2344 = vmatmul.mubr.bf16.gmra.mxu0 %v2205
        %v2345 = vpop.f32.mrf.mxu0
        %v2346 = vadd.f32 0.0, %v2345
        %v2347 = vpop.f32.mrf.mxu0
        %v2348 = vpop.f32.mrf.mxu0
        %v2349 = vadd.f32 0.0, %v2348
        %v2350 = vpop.f32.mrf.mxu0
        %2351 = vmatprep.mubr.bf16.mxu0 0
        %2352 = vmatmul.mubr.bf16.gmra.mxu0 %v2206
        %v2353 = vpop.f32.mrf.mxu0
        %v2354 = vadd.f32 0.0, %v2353
        %v2355 = vpop.f32.mrf.mxu0
        %v2356 = vpop.f32.mrf.mxu0
        %v2357 = vadd.f32 0.0, %v2356
        %v2358 = vpop.f32.mrf.mxu0
        %2359 = vmatprep.mubr.bf16.mxu0 0
        %2360 = vmatmul.mubr.bf16.gmra.mxu0 %v2207
        %v2361 = vpop.f32.mrf.mxu0
        %v2362 = vadd.f32 0.0, %v2361
        %v2363 = vpop.f32.mrf.mxu0
        %v2364 = vpop.f32.mrf.mxu0
        %v2365 = vadd.f32 0.0, %v2364
        %v2366 = vpop.f32.mrf.mxu0
        %2367 = vmatprep.mubr.bf16.mxu0 0
        %2368 = vmatmul.mubr.bf16.gmra.mxu0 %v2208
        %v2369 = vpop.f32.mrf.mxu0
        %v2370 = vadd.f32 0.0, %v2369
        %v2371 = vpop.f32.mrf.mxu0
        %v2372 = vpop.f32.mrf.mxu0
        %v2373 = vadd.f32 0.0, %v2372
        %v2374 = vpop.f32.mrf.mxu0
        %2375 = vmatprep.mubr.bf16.mxu0 0
        %2376 = vmatmul.mubr.bf16.gmra.mxu0 %v2209
        %v2377 = vpop.f32.mrf.mxu0
        %v2378 = vadd.f32 0.0, %v2377
        %v2379 = vpop.f32.mrf.mxu0
        %v2380 = vpop.f32.mrf.mxu0
        %v2381 = vadd.f32 0.0, %v2380
        %v2382 = vpop.f32.mrf.mxu0
        %2383 = vmatprep.mubr.bf16.mxu0 0
        %2384 = vmatmul.mubr.bf16.gmra.mxu0 %v2210
        %v2385 = vpop.f32.mrf.mxu0
        %v2386 = vadd.f32 0.0, %v2385
        %v2387 = vpop.f32.mrf.mxu0
        %v2388 = vpop.f32.mrf.mxu0
        %v2389 = vadd.f32 0.0, %v2388
        %v2390 = vpop.f32.mrf.mxu0
        %2391 = vmatprep.mubr.bf16.mxu0 0
        %2392 = vmatmul.mubr.bf16.gmra.mxu0 %v2211
        %v2393 = vpop.f32.mrf.mxu0
        %v2394 = vadd.f32 0.0, %v2393
        %v2395 = vpop.f32.mrf.mxu0
        %v2396 = vpop.f32.mrf.mxu0
        %v2397 = vadd.f32 0.0, %v2396
        %v2398 = vpop.f32.mrf.mxu0
        %2399 = vmatprep.mubr.bf16.mxu0 0
        %2400 = vmatmul.mubr.bf16.gmra.mxu0 %v2212
        %v2401 = vpop.f32.mrf.mxu0
        %v2402 = vadd.f32 0.0, %v2401
        %v2403 = vpop.f32.mrf.mxu0
        %v2404 = vpop.f32.mrf.mxu0
        %v2405 = vadd.f32 0.0, %v2404
        %v2406 = vpop.f32.mrf.mxu0
        %2407 = vdwg.mxu0
        %v2408 = vrot.slane %v2346, 7
        %v2409 = vrot.slane %v2349, 7
        %v2410 = vrot.slane %v2354, 7
        %v2411 = vrot.slane %v2357, 7
        %v2412 = vrot.slane %v2362, 7
        %v2413 = vrot.slane %v2365, 7
        %v2414 = vrot.slane %v2370, 7
        %v2415 = vrot.slane %v2373, 7
        %v2416 = vrot.slane %v2378, 7
        %v2417 = vrot.slane %v2381, 7
        %v2418 = vrot.slane %v2386, 7
        %v2419 = vrot.slane %v2389, 7
        %v2420 = vrot.slane %v2394, 7
        %v2421 = vrot.slane %v2397, 7
        %v2422 = vrot.slane %v2402, 7
        %v2423 = vrot.slane %v2405, 7
        %v2424 = vsel %vm1303, %v2422, %v2423
        %v2425 = vsel %vm1303, %v2421, %v2422
        %v2426 = vsel %vm1303, %v2420, %v2421
        %v2427 = vsel %vm1303, %v2419, %v2420
        %v2428 = vsel %vm1303, %v2418, %v2419
        %v2429 = vsel %vm1303, %v2417, %v2418
        %v2430 = vsel %vm1303, %v2416, %v2417
        %v2431 = vsel %vm1303, %v2415, %v2416
        %v2432 = vsel %vm1303, %v2414, %v2415
        %v2433 = vsel %vm1303, %v2413, %v2414
        %v2434 = vsel %vm1303, %v2412, %v2413
        %v2435 = vsel %vm1303, %v2411, %v2412
        %v2436 = vsel %vm1303, %v2410, %v2411
        %v2437 = vsel %vm1303, %v2409, %v2410
        %v2438 = vsel %vm1303, %v2408, %v2409
        %v2439 = vsel %vm1303, %v2423, %v2408
        %v2440 = vsel %vm1336, %v2439, 0.0
        %v2441 = vsel %vm1337, %v2438, 0.0
        %v2442 = vsel %vm1338, %v2437, 0.0
        %v2443 = vsel %vm1339, %v2436, 0.0
        %v2444 = vsel %vm1340, %v2435, 0.0
        %v2445 = vsel %vm1341, %v2434, 0.0
        %v2446 = vsel %vm1342, %v2433, 0.0
        %v2447 = vsel %vm1343, %v2432, 0.0
        %v2448 = vsel %vm1344, %v2431, 0.0
        %v2449 = vsel %vm1345, %v2430, 0.0
        %v2450 = vsel %vm1346, %v2429, 0.0
        %v2451 = vsel %vm1347, %v2428, 0.0
        %v2452 = vsel %vm1348, %v2427, 0.0
        %v2453 = vsel %vm1349, %v2426, 0.0
        %v2454 = vsel %vm1350, %v2425, 0.0
        %v2455 = vsel %vm1351, %v2424, 0.0
        %v2472 = vunpack.c.l.b16 %v2230
        %v2473 = vunpack.c.l.b16 %v2231
        %v2474 = vunpack.c.l.b16 %v2232
        %v2475 = vunpack.c.l.b16 %v2233
        %v2476 = vunpack.c.l.b16 %v2234
        %v2477 = vunpack.c.l.b16 %v2235
        %v2478 = vunpack.c.l.b16 %v2236
        %v2479 = vunpack.c.l.b16 %v2237
        %v2480 = vunpack.c.l.b16 %v2238
        %v2481 = vunpack.c.l.b16 %v2239
        %v2482 = vunpack.c.l.b16 %v2240
        %v2483 = vunpack.c.l.b16 %v2241
        %v2484 = vunpack.c.l.b16 %v2242
        %v2485 = vunpack.c.l.b16 %v2243
        %v2486 = vunpack.c.l.b16 %v2244
        %v2487 = vunpack.c.l.b16 %v2245
        %v2488 = vpack.c.b16 %v2473, %v2472
        %v2489 = vpack.c.b16 %v2475, %v2474
        %v2490 = vpack.c.b16 %v2477, %v2476
        %v2491 = vpack.c.b16 %v2479, %v2478
        %v2492 = vpack.c.b16 %v2481, %v2480
        %v2493 = vpack.c.b16 %v2483, %v2482
        %v2494 = vpack.c.b16 %v2485, %v2484
        %v2495 = vpack.c.b16 %v2487, %v2486
        %2504 = vmatprep.subr.bf16.mxu0 0
        %2505 = vmatpush1.bf16.msra.mxu0 %v2495
        %2506 = vmatprep.subr.bf16.mxu0 0
        %2507 = vmatpush1.bf16.msra.mxu0 %v2494
        %2508 = vmatprep.subr.bf16.mxu0 0
        %2509 = vmatpush1.bf16.msra.mxu0 %v2493
        %2510 = vmatprep.subr.bf16.mxu0 0
        %2511 = vmatpush1.bf16.msra.mxu0 %v2492
        %2512 = vmatprep.subr.bf16.mxu0 0
        %2513 = vmatpush1.bf16.msra.mxu0 %v2491
        %2514 = vmatprep.subr.bf16.mxu0 0
        %2515 = vmatpush1.bf16.msra.mxu0 %v2490
        %2516 = vmatprep.subr.bf16.mxu0 0
        %2517 = vmatpush1.bf16.msra.mxu0 %v2489
        %2518 = vmatprep.subr.bf16.mxu0 0
        %2519 = vmatpush1.bf16.msra.mxu0 %v2488
        %2520 = vmatprep.subr.bf16.mxu0 0
        %2521 = vmatpush2.bf16.msra.mxu0 0
        %2522 = vmatprep.subr.bf16.mxu0 0
        %2523 = vmatpush2.bf16.msra.mxu0 0
        %2524 = vmatprep.subr.bf16.mxu0 0
        %2525 = vmatpush2.bf16.msra.mxu0 0
        %2526 = vmatprep.subr.bf16.mxu0 0
        %2527 = vmatpush2.bf16.msra.mxu0 0
        %2528 = vmatprep.subr.bf16.mxu0 0
        %2529 = vmatpush2.bf16.msra.mxu0 0
        %2530 = vmatprep.subr.bf16.mxu0 0
        %2531 = vmatpush2.bf16.msra.mxu0 0
        %2532 = vmatprep.subr.bf16.mxu0 0
        %2533 = vmatpush2.bf16.msra.mxu0 0
        %2534 = vmatprep.subr.bf16.mxu0 0
        %2535 = vmatpush2.bf16.msra.mxu0 0
        %2536 = vmatprep.mubr.bf16.mxu0 0
        %2537 = vmatmul.mubr.bf16.gmra.mxu0 %v2205
        %v2538 = vpop.f32.mrf.mxu0
        %v2539 = vadd.f32 0.0, %v2538
        %v2540 = vpop.f32.mrf.mxu0
        %v2541 = vpop.f32.mrf.mxu0
        %v2542 = vadd.f32 0.0, %v2541
        %v2543 = vpop.f32.mrf.mxu0
        %2544 = vmatprep.mubr.bf16.mxu0 0
        %2545 = vmatmul.mubr.bf16.gmra.mxu0 %v2206
        %v2546 = vpop.f32.mrf.mxu0
        %v2547 = vadd.f32 0.0, %v2546
        %v2548 = vpop.f32.mrf.mxu0
        %v2549 = vpop.f32.mrf.mxu0
        %v2550 = vadd.f32 0.0, %v2549
        %v2551 = vpop.f32.mrf.mxu0
        %2552 = vmatprep.mubr.bf16.mxu0 0
        %2553 = vmatmul.mubr.bf16.gmra.mxu0 %v2207
        %v2554 = vpop.f32.mrf.mxu0
        %v2555 = vadd.f32 0.0, %v2554
        %v2556 = vpop.f32.mrf.mxu0
        %v2557 = vpop.f32.mrf.mxu0
        %v2558 = vadd.f32 0.0, %v2557
        %v2559 = vpop.f32.mrf.mxu0
        %2560 = vmatprep.mubr.bf16.mxu0 0
        %2561 = vmatmul.mubr.bf16.gmra.mxu0 %v2208
        %v2562 = vpop.f32.mrf.mxu0
        %v2563 = vadd.f32 0.0, %v2562
        %v2564 = vpop.f32.mrf.mxu0
        %v2565 = vpop.f32.mrf.mxu0
        %v2566 = vadd.f32 0.0, %v2565
        %v2567 = vpop.f32.mrf.mxu0
        %2568 = vmatprep.mubr.bf16.mxu0 0
        %2569 = vmatmul.mubr.bf16.gmra.mxu0 %v2209
        %v2570 = vpop.f32.mrf.mxu0
        %v2571 = vadd.f32 0.0, %v2570
        %v2572 = vpop.f32.mrf.mxu0
        %v2573 = vpop.f32.mrf.mxu0
        %v2574 = vadd.f32 0.0, %v2573
        %v2575 = vpop.f32.mrf.mxu0
        %2576 = vmatprep.mubr.bf16.mxu0 0
        %2577 = vmatmul.mubr.bf16.gmra.mxu0 %v2210
        %v2578 = vpop.f32.mrf.mxu0
        %v2579 = vadd.f32 0.0, %v2578
        %v2580 = vpop.f32.mrf.mxu0
        %v2581 = vpop.f32.mrf.mxu0
        %v2582 = vadd.f32 0.0, %v2581
        %v2583 = vpop.f32.mrf.mxu0
        %2584 = vmatprep.mubr.bf16.mxu0 0
        %2585 = vmatmul.mubr.bf16.gmra.mxu0 %v2211
        %v2586 = vpop.f32.mrf.mxu0
        %v2587 = vadd.f32 0.0, %v2586
        %v2588 = vpop.f32.mrf.mxu0
        %v2589 = vpop.f32.mrf.mxu0
        %v2590 = vadd.f32 0.0, %v2589
        %v2591 = vpop.f32.mrf.mxu0
        %2592 = vmatprep.mubr.bf16.mxu0 0
        %2593 = vmatmul.mubr.bf16.gmra.mxu0 %v2212
        %v2594 = vpop.f32.mrf.mxu0
        %v2595 = vadd.f32 0.0, %v2594
        %v2596 = vpop.f32.mrf.mxu0
        %v2597 = vpop.f32.mrf.mxu0
        %v2598 = vadd.f32 0.0, %v2597
        %v2599 = vpop.f32.mrf.mxu0
        %2600 = vdwg.mxu0
        %v2601 = vadd.f32 %v2440, %v2539
        %v2602 = vadd.f32 %v2441, %v2542
        %v2603 = vadd.f32 %v2442, %v2547
        %v2604 = vadd.f32 %v2443, %v2550
        %v2605 = vadd.f32 %v2444, %v2555
        %v2606 = vadd.f32 %v2445, %v2558
        %v2607 = vadd.f32 %v2446, %v2563
        %v2608 = vadd.f32 %v2447, %v2566
        %v2609 = vadd.f32 %v2448, %v2571
        %v2610 = vadd.f32 %v2449, %v2574
        %v2611 = vadd.f32 %v2450, %v2579
        %v2612 = vadd.f32 %v2451, %v2582
        %v2613 = vadd.f32 %v2452, %v2587
        %v2614 = vadd.f32 %v2453, %v2590
        %v2615 = vadd.f32 %v2454, %v2595
        %v2616 = vadd.f32 %v2455, %v2598
        %v2633 = vunpack.c.l.b16 %v2247
        %v2634 = vunpack.c.l.b16 %v2248
        %v2635 = vunpack.c.l.b16 %v2249
        %v2636 = vunpack.c.l.b16 %v2250
        %v2637 = vunpack.c.l.b16 %v2251
        %v2638 = vunpack.c.l.b16 %v2252
        %v2639 = vunpack.c.l.b16 %v2253
        %v2640 = vunpack.c.l.b16 %v2254
        %v2641 = vunpack.c.l.b16 %v2255
        %v2642 = vunpack.c.l.b16 %v2256
        %v2643 = vunpack.c.l.b16 %v2257
        %v2644 = vunpack.c.l.b16 %v2258
        %v2645 = vunpack.c.l.b16 %v2259
        %v2646 = vunpack.c.l.b16 %v2260
        %v2647 = vunpack.c.l.b16 %v2261
        %v2648 = vunpack.c.l.b16 %v2262
        %v2649 = vpack.c.b16 %v2634, %v2633
        %v2650 = vpack.c.b16 %v2636, %v2635
        %v2651 = vpack.c.b16 %v2638, %v2637
        %v2652 = vpack.c.b16 %v2640, %v2639
        %v2653 = vpack.c.b16 %v2642, %v2641
        %v2654 = vpack.c.b16 %v2644, %v2643
        %v2655 = vpack.c.b16 %v2646, %v2645
        %v2656 = vpack.c.b16 %v2648, %v2647
        %2665 = vmatprep.subr.bf16.mxu0 0
        %2666 = vmatpush1.bf16.msra.mxu0 %v2656
        %2667 = vmatprep.subr.bf16.mxu0 0
        %2668 = vmatpush1.bf16.msra.mxu0 %v2655
        %2669 = vmatprep.subr.bf16.mxu0 0
        %2670 = vmatpush1.bf16.msra.mxu0 %v2654
        %2671 = vmatprep.subr.bf16.mxu0 0
        %2672 = vmatpush1.bf16.msra.mxu0 %v2653
        %2673 = vmatprep.subr.bf16.mxu0 0
        %2674 = vmatpush1.bf16.msra.mxu0 %v2652
        %2675 = vmatprep.subr.bf16.mxu0 0
        %2676 = vmatpush1.bf16.msra.mxu0 %v2651
        %2677 = vmatprep.subr.bf16.mxu0 0
        %2678 = vmatpush1.bf16.msra.mxu0 %v2650
        %2679 = vmatprep.subr.bf16.mxu0 0
        %2680 = vmatpush1.bf16.msra.mxu0 %v2649
        %2681 = vmatprep.subr.bf16.mxu0 0
        %2682 = vmatpush2.bf16.msra.mxu0 0
        %2683 = vmatprep.subr.bf16.mxu0 0
        %2684 = vmatpush2.bf16.msra.mxu0 0
        %2685 = vmatprep.subr.bf16.mxu0 0
        %2686 = vmatpush2.bf16.msra.mxu0 0
        %2687 = vmatprep.subr.bf16.mxu0 0
        %2688 = vmatpush2.bf16.msra.mxu0 0
        %2689 = vmatprep.subr.bf16.mxu0 0
        %2690 = vmatpush2.bf16.msra.mxu0 0
        %2691 = vmatprep.subr.bf16.mxu0 0
        %2692 = vmatpush2.bf16.msra.mxu0 0
        %2693 = vmatprep.subr.bf16.mxu0 0
        %2694 = vmatpush2.bf16.msra.mxu0 0
        %2695 = vmatprep.subr.bf16.mxu0 0
        %2696 = vmatpush2.bf16.msra.mxu0 0
        %2697 = vmatprep.mubr.bf16.mxu0 0
        %2698 = vmatmul.mubr.bf16.gmra.mxu0 %v2205
        %v2699 = vpop.f32.mrf.mxu0
        %v2700 = vadd.f32 0.0, %v2699
        %v2701 = vpop.f32.mrf.mxu0
        %v2702 = vpop.f32.mrf.mxu0
        %v2703 = vadd.f32 0.0, %v2702
        %v2704 = vpop.f32.mrf.mxu0
        %2705 = vmatprep.mubr.bf16.mxu0 0
        %2706 = vmatmul.mubr.bf16.gmra.mxu0 %v2206
        %v2707 = vpop.f32.mrf.mxu0
        %v2708 = vadd.f32 0.0, %v2707
        %v2709 = vpop.f32.mrf.mxu0
        %v2710 = vpop.f32.mrf.mxu0
        %v2711 = vadd.f32 0.0, %v2710
        %v2712 = vpop.f32.mrf.mxu0
        %2713 = vmatprep.mubr.bf16.mxu0 0
        %2714 = vmatmul.mubr.bf16.gmra.mxu0 %v2207
        %v2715 = vpop.f32.mrf.mxu0
        %v2716 = vadd.f32 0.0, %v2715
        %v2717 = vpop.f32.mrf.mxu0
        %v2718 = vpop.f32.mrf.mxu0
        %v2719 = vadd.f32 0.0, %v2718
        %v2720 = vpop.f32.mrf.mxu0
        %2721 = vmatprep.mubr.bf16.mxu0 0
        %2722 = vmatmul.mubr.bf16.gmra.mxu0 %v2208
        %v2723 = vpop.f32.mrf.mxu0
        %v2724 = vadd.f32 0.0, %v2723
        %v2725 = vpop.f32.mrf.mxu0
        %v2726 = vpop.f32.mrf.mxu0
        %v2727 = vadd.f32 0.0, %v2726
        %v2728 = vpop.f32.mrf.mxu0
        %2729 = vmatprep.mubr.bf16.mxu0 0
        %2730 = vmatmul.mubr.bf16.gmra.mxu0 %v2209
        %v2731 = vpop.f32.mrf.mxu0
        %v2732 = vadd.f32 0.0, %v2731
        %v2733 = vpop.f32.mrf.mxu0
        %v2734 = vpop.f32.mrf.mxu0
        %v2735 = vadd.f32 0.0, %v2734
        %v2736 = vpop.f32.mrf.mxu0
        %2737 = vmatprep.mubr.bf16.mxu0 0
        %2738 = vmatmul.mubr.bf16.gmra.mxu0 %v2210
        %v2739 = vpop.f32.mrf.mxu0
        %v2740 = vadd.f32 0.0, %v2739
        %v2741 = vpop.f32.mrf.mxu0
        %v2742 = vpop.f32.mrf.mxu0
        %v2743 = vadd.f32 0.0, %v2742
        %v2744 = vpop.f32.mrf.mxu0
        %2745 = vmatprep.mubr.bf16.mxu0 0
        %2746 = vmatmul.mubr.bf16.gmra.mxu0 %v2211
        %v2747 = vpop.f32.mrf.mxu0
        %v2748 = vadd.f32 0.0, %v2747
        %v2749 = vpop.f32.mrf.mxu0
        %v2750 = vpop.f32.mrf.mxu0
        %v2751 = vadd.f32 0.0, %v2750
        %v2752 = vpop.f32.mrf.mxu0
        %2753 = vmatprep.mubr.bf16.mxu0 0
        %2754 = vmatmul.mubr.bf16.gmra.mxu0 %v2212
        %v2755 = vpop.f32.mrf.mxu0
        %v2756 = vadd.f32 0.0, %v2755
        %v2757 = vpop.f32.mrf.mxu0
        %v2758 = vpop.f32.mrf.mxu0
        %v2759 = vadd.f32 0.0, %v2758
        %v2760 = vpop.f32.mrf.mxu0
        %2761 = vdwg.mxu0
        %v2762 = vrot.slane %v2700, 1
        %v2763 = vrot.slane %v2703, 1
        %v2764 = vrot.slane %v2708, 1
        %v2765 = vrot.slane %v2711, 1
        %v2766 = vrot.slane %v2716, 1
        %v2767 = vrot.slane %v2719, 1
        %v2768 = vrot.slane %v2724, 1
        %v2769 = vrot.slane %v2727, 1
        %v2770 = vrot.slane %v2732, 1
        %v2771 = vrot.slane %v2735, 1
        %v2772 = vrot.slane %v2740, 1
        %v2773 = vrot.slane %v2743, 1
        %v2774 = vrot.slane %v2748, 1
        %v2775 = vrot.slane %v2751, 1
        %v2776 = vrot.slane %v2756, 1
        %v2777 = vrot.slane %v2759, 1
        %v2778 = vsel %vm2076, %v2776, %v2777
        %v2779 = vsel %vm2076, %v2775, %v2776
        %v2780 = vsel %vm2076, %v2774, %v2775
        %v2781 = vsel %vm2076, %v2773, %v2774
        %v2782 = vsel %vm2076, %v2772, %v2773
        %v2783 = vsel %vm2076, %v2771, %v2772
        %v2784 = vsel %vm2076, %v2770, %v2771
        %v2785 = vsel %vm2076, %v2769, %v2770
        %v2786 = vsel %vm2076, %v2768, %v2769
        %v2787 = vsel %vm2076, %v2767, %v2768
        %v2788 = vsel %vm2076, %v2766, %v2767
        %v2789 = vsel %vm2076, %v2765, %v2766
        %v2790 = vsel %vm2076, %v2764, %v2765
        %v2791 = vsel %vm2076, %v2763, %v2764
        %v2792 = vsel %vm2076, %v2762, %v2763
        %v2793 = vsel %vm2076, %v2777, %v2762
        %v2794 = vsel %vm2109, %v2792, 0.0
        %v2795 = vsel %vm2110, %v2791, 0.0
        %v2796 = vsel %vm2111, %v2790, 0.0
        %v2797 = vsel %vm2112, %v2789, 0.0
        %v2798 = vsel %vm2113, %v2788, 0.0
        %v2799 = vsel %vm2114, %v2787, 0.0
        %v2800 = vsel %vm2115, %v2786, 0.0
        %v2801 = vsel %vm2116, %v2785, 0.0
        %v2802 = vsel %vm2117, %v2784, 0.0
        %v2803 = vsel %vm2118, %v2783, 0.0
        %v2804 = vsel %vm2119, %v2782, 0.0
        %v2805 = vsel %vm2120, %v2781, 0.0
        %v2806 = vsel %vm2121, %v2780, 0.0
        %v2807 = vsel %vm2122, %v2779, 0.0
        %v2808 = vsel %vm2123, %v2778, 0.0
        %v2809 = vsel %vm2124, %v2793, 0.0
        %v2810 = vadd.f32 %v2601, %v2794
        %v2811 = vadd.f32 %v2602, %v2795
        %v2812 = vadd.f32 %v2603, %v2796
        %v2813 = vadd.f32 %v2604, %v2797
        %v2814 = vadd.f32 %v2605, %v2798
        %v2815 = vadd.f32 %v2606, %v2799
        %v2816 = vadd.f32 %v2607, %v2800
        %v2817 = vadd.f32 %v2608, %v2801
        %v2818 = vadd.f32 %v2609, %v2802
        %v2819 = vadd.f32 %v2610, %v2803
        %v2820 = vadd.f32 %v2611, %v2804
        %v2821 = vadd.f32 %v2612, %v2805
        %v2822 = vadd.f32 %v2613, %v2806
        %v2823 = vadd.f32 %v2614, %v2807
        %v2824 = vadd.f32 %v2615, %v2808
        %v2825 = vadd.f32 %v2616, %v2809
        %v2826 = vld [vmem:[%s5] sm:$0x1]
        %v2827 = vlaneseq
        %v2828 = vshrl.u32 %v2827, 7
        %v2829 = vsub.s32 0, %v2828
        %v2830 = vrot.slane %v2826, %v2829
        %v2831 = vmul.f32 %v2810, %v2830
        %v2832 = vmul.f32 %v2811, %v2830
        %v2833 = vmul.f32 %v2812, %v2830
        %v2834 = vmul.f32 %v2813, %v2830
        %v2835 = vmul.f32 %v2814, %v2830
        %v2836 = vmul.f32 %v2815, %v2830
        %v2837 = vmul.f32 %v2816, %v2830
        %v2838 = vmul.f32 %v2817, %v2830
        %v2839 = vmul.f32 %v2818, %v2830
        %v2840 = vmul.f32 %v2819, %v2830
        %v2841 = vmul.f32 %v2820, %v2830
        %v2842 = vmul.f32 %v2821, %v2830
        %v2843 = vmul.f32 %v2822, %v2830
        %v2844 = vmul.f32 %v2823, %v2830
        %v2845 = vmul.f32 %v2824, %v2830
        %v2846 = vmul.f32 %v2825, %v2830
        %v2847 = vld [vmem:[%s5 + $0x1] sm:$0x1]
        %v2848 = vlaneseq
        %v2849 = vshrl.u32 %v2848, 7
        %v2850 = vsub.s32 0, %v2849
        %v2851 = vrot.slane %v2847, %v2850
        %v2852 = vadd.f32 %v2831, %v2851
        %v2853 = vadd.f32 %v2832, %v2851
        %v2854 = vadd.f32 %v2833, %v2851
        %v2855 = vadd.f32 %v2834, %v2851
        %v2856 = vadd.f32 %v2835, %v2851
        %v2857 = vadd.f32 %v2836, %v2851
        %v2858 = vadd.f32 %v2837, %v2851
        %v2859 = vadd.f32 %v2838, %v2851
        %v2860 = vadd.f32 %v2839, %v2851
        %v2861 = vadd.f32 %v2840, %v2851
        %v2862 = vadd.f32 %v2841, %v2851
        %v2863 = vadd.f32 %v2842, %v2851
        %v2864 = vadd.f32 %v2843, %v2851
        %v2865 = vadd.f32 %v2844, %v2851
        %v2866 = vadd.f32 %v2845, %v2851
        %v2867 = vadd.f32 %v2846, %v2851
        %vm2868 = vcmp.gt.f32.partialorder %v2852, 0.0
        %vm2869 = vcmp.gt.f32.partialorder %v2853, 0.0
        %vm2870 = vcmp.gt.f32.partialorder %v2854, 0.0
        %vm2871 = vcmp.gt.f32.partialorder %v2855, 0.0
        %vm2872 = vcmp.gt.f32.partialorder %v2856, 0.0
        %vm2873 = vcmp.gt.f32.partialorder %v2857, 0.0
        %vm2874 = vcmp.gt.f32.partialorder %v2858, 0.0
        %vm2875 = vcmp.gt.f32.partialorder %v2859, 0.0
        %vm2876 = vcmp.gt.f32.partialorder %v2860, 0.0
        %vm2877 = vcmp.gt.f32.partialorder %v2861, 0.0
        %vm2878 = vcmp.gt.f32.partialorder %v2862, 0.0
        %vm2879 = vcmp.gt.f32.partialorder %v2863, 0.0
        %vm2880 = vcmp.gt.f32.partialorder %v2864, 0.0
        %vm2881 = vcmp.gt.f32.partialorder %v2865, 0.0
        %vm2882 = vcmp.gt.f32.partialorder %v2866, 0.0
        %vm2883 = vcmp.gt.f32.partialorder %v2867, 0.0
        %v2884 = vmul.f32 %v2852, 0.01
        %v2885 = vmul.f32 %v2853, 0.01
        %v2886 = vmul.f32 %v2854, 0.01
        %v2887 = vmul.f32 %v2855, 0.01
        %v2888 = vmul.f32 %v2856, 0.01
        %v2889 = vmul.f32 %v2857, 0.01
        %v2890 = vmul.f32 %v2858, 0.01
        %v2891 = vmul.f32 %v2859, 0.01
        %v2892 = vmul.f32 %v2860, 0.01
        %v2893 = vmul.f32 %v2861, 0.01
        %v2894 = vmul.f32 %v2862, 0.01
        %v2895 = vmul.f32 %v2863, 0.01
        %v2896 = vmul.f32 %v2864, 0.01
        %v2897 = vmul.f32 %v2865, 0.01
        %v2898 = vmul.f32 %v2866, 0.01
        %v2899 = vmul.f32 %v2867, 0.01
        %v2900 = vsel %vm2868, %v2852, %v2884
        %v2901 = vsel %vm2869, %v2853, %v2885
        %v2902 = vsel %vm2870, %v2854, %v2886
        %v2903 = vsel %vm2871, %v2855, %v2887
        %v2904 = vsel %vm2872, %v2856, %v2888
        %v2905 = vsel %vm2873, %v2857, %v2889
        %v2906 = vsel %vm2874, %v2858, %v2890
        %v2907 = vsel %vm2875, %v2859, %v2891
        %v2908 = vsel %vm2876, %v2860, %v2892
        %v2909 = vsel %vm2877, %v2861, %v2893
        %v2910 = vsel %vm2878, %v2862, %v2894
        %v2911 = vsel %vm2879, %v2863, %v2895
        %v2912 = vsel %vm2880, %v2864, %v2896
        %v2913 = vsel %vm2881, %v2865, %v2897
        %v2914 = vsel %vm2882, %v2866, %v2898
        %v2915 = vsel %vm2883, %v2867, %v2899
        %v2916 = vpack.c.bf16 %v2901, %v2900
        %v2917 = vpack.c.bf16 %v2903, %v2902
        %v2918 = vpack.c.bf16 %v2905, %v2904
        %v2919 = vpack.c.bf16 %v2907, %v2906
        %v2920 = vpack.c.bf16 %v2909, %v2908
        %v2921 = vpack.c.bf16 %v2911, %v2910
        %v2922 = vpack.c.bf16 %v2913, %v2912
        %v2923 = vpack.c.bf16 %v2915, %v2914
        %v2924 = vld [vmem:[#allocation8] sm:$0xf]
        %v2925 = vld [vmem:[#allocation8 + $0x4] sm:$0xf]
        %v2926 = vld [vmem:[#allocation8 + $0x8] sm:$0xf]
        %v2927 = vld [vmem:[#allocation8 + $0xc] sm:$0xf]
        %v2928 = vld [vmem:[#allocation8 + $0x10] sm:$0xf]
        %v2929 = vld [vmem:[#allocation8 + $0x14] sm:$0xf]
        %v2930 = vld [vmem:[#allocation8 + $0x18] sm:$0xf]
        %v2931 = vld [vmem:[#allocation8 + $0x1c] sm:$0xf]
        %v2932 = vld [vmem:[#allocation8 + $0x20] sm:$0xf]
        %v2933 = vld [vmem:[#allocation8 + $0x24] sm:$0xf]
        %v2934 = vld [vmem:[#allocation8 + $0x28] sm:$0xf]
        %v2935 = vld [vmem:[#allocation8 + $0x2c] sm:$0xf]
        %v2936 = vld [vmem:[#allocation8 + $0x30] sm:$0xf]
        %v2937 = vld [vmem:[#allocation8 + $0x34] sm:$0xf]
        %v2938 = vld [vmem:[#allocation8 + $0x38] sm:$0xf]
        %v2939 = vld [vmem:[#allocation8 + $0x3c] sm:$0xf]
        %s2940 = scalar_lea.vmem [#allocation8], 64
        %v2941 = vld [vmem:[%s2940] sm:$0xf]
        %v2942 = vld [vmem:[%s2940 + $0x4] sm:$0xf]
        %v2943 = vld [vmem:[%s2940 + $0x8] sm:$0xf]
        %v2944 = vld [vmem:[%s2940 + $0xc] sm:$0xf]
        %v2945 = vld [vmem:[%s2940 + $0x10] sm:$0xf]
        %v2946 = vld [vmem:[%s2940 + $0x14] sm:$0xf]
        %v2947 = vld [vmem:[%s2940 + $0x18] sm:$0xf]
        %v2948 = vld [vmem:[%s2940 + $0x1c] sm:$0xf]
        %v2949 = vld [vmem:[%s2940 + $0x20] sm:$0xf]
        %v2950 = vld [vmem:[%s2940 + $0x24] sm:$0xf]
        %v2951 = vld [vmem:[%s2940 + $0x28] sm:$0xf]
        %v2952 = vld [vmem:[%s2940 + $0x2c] sm:$0xf]
        %v2953 = vld [vmem:[%s2940 + $0x30] sm:$0xf]
        %v2954 = vld [vmem:[%s2940 + $0x34] sm:$0xf]
        %v2955 = vld [vmem:[%s2940 + $0x38] sm:$0xf]
        %v2956 = vld [vmem:[%s2940 + $0x3c] sm:$0xf]
        %s2957 = scalar_lea.vmem [#allocation8], 128
        %v2958 = vld [vmem:[%s2957] sm:$0xf]
        %v2959 = vld [vmem:[%s2957 + $0x4] sm:$0xf]
        %v2960 = vld [vmem:[%s2957 + $0x8] sm:$0xf]
        %v2961 = vld [vmem:[%s2957 + $0xc] sm:$0xf]
        %v2962 = vld [vmem:[%s2957 + $0x10] sm:$0xf]
        %v2963 = vld [vmem:[%s2957 + $0x14] sm:$0xf]
        %v2964 = vld [vmem:[%s2957 + $0x18] sm:$0xf]
        %v2965 = vld [vmem:[%s2957 + $0x1c] sm:$0xf]
        %v2966 = vld [vmem:[%s2957 + $0x20] sm:$0xf]
        %v2967 = vld [vmem:[%s2957 + $0x24] sm:$0xf]
        %v2968 = vld [vmem:[%s2957 + $0x28] sm:$0xf]
        %v2969 = vld [vmem:[%s2957 + $0x2c] sm:$0xf]
        %v2970 = vld [vmem:[%s2957 + $0x30] sm:$0xf]
        %v2971 = vld [vmem:[%s2957 + $0x34] sm:$0xf]
        %v2972 = vld [vmem:[%s2957 + $0x38] sm:$0xf]
        %v2973 = vld [vmem:[%s2957 + $0x3c] sm:$0xf]
        %s2974 = scalar_lea.vmem [#allocation8], 192
        %v2975 = vld [vmem:[%s2974] sm:$0xf]
        %v2976 = vld [vmem:[%s2974 + $0x4] sm:$0xf]
        %v2977 = vld [vmem:[%s2974 + $0x8] sm:$0xf]
        %v2978 = vld [vmem:[%s2974 + $0xc] sm:$0xf]
        %v2979 = vld [vmem:[%s2974 + $0x10] sm:$0xf]
        %v2980 = vld [vmem:[%s2974 + $0x14] sm:$0xf]
        %v2981 = vld [vmem:[%s2974 + $0x18] sm:$0xf]
        %v2982 = vld [vmem:[%s2974 + $0x1c] sm:$0xf]
        %v2983 = vld [vmem:[%s2974 + $0x20] sm:$0xf]
        %v2984 = vld [vmem:[%s2974 + $0x24] sm:$0xf]
        %v2985 = vld [vmem:[%s2974 + $0x28] sm:$0xf]
        %v2986 = vld [vmem:[%s2974 + $0x2c] sm:$0xf]
        %v2987 = vld [vmem:[%s2974 + $0x30] sm:$0xf]
        %v2988 = vld [vmem:[%s2974 + $0x34] sm:$0xf]
        %v2989 = vld [vmem:[%s2974 + $0x38] sm:$0xf]
        %v2990 = vld [vmem:[%s2974 + $0x3c] sm:$0xf]
        %s2991 = scalar_lea.vmem [#allocation8], 256
        %v2992 = vld [vmem:[%s2991] sm:$0xf]
        %v2993 = vld [vmem:[%s2991 + $0x4] sm:$0xf]
        %v2994 = vld [vmem:[%s2991 + $0x8] sm:$0xf]
        %v2995 = vld [vmem:[%s2991 + $0xc] sm:$0xf]
        %v2996 = vld [vmem:[%s2991 + $0x10] sm:$0xf]
        %v2997 = vld [vmem:[%s2991 + $0x14] sm:$0xf]
        %v2998 = vld [vmem:[%s2991 + $0x18] sm:$0xf]
        %v2999 = vld [vmem:[%s2991 + $0x1c] sm:$0xf]
        %v3000 = vld [vmem:[%s2991 + $0x20] sm:$0xf]
        %v3001 = vld [vmem:[%s2991 + $0x24] sm:$0xf]
        %v3002 = vld [vmem:[%s2991 + $0x28] sm:$0xf]
        %v3003 = vld [vmem:[%s2991 + $0x2c] sm:$0xf]
        %v3004 = vld [vmem:[%s2991 + $0x30] sm:$0xf]
        %v3005 = vld [vmem:[%s2991 + $0x34] sm:$0xf]
        %v3006 = vld [vmem:[%s2991 + $0x38] sm:$0xf]
        %v3007 = vld [vmem:[%s2991 + $0x3c] sm:$0xf]
        %v3024 = vunpack.c.l.b16 %v2924
        %v3025 = vunpack.c.l.b16 %v2925
        %v3026 = vunpack.c.l.b16 %v2926
        %v3027 = vunpack.c.l.b16 %v2927
        %v3028 = vunpack.c.l.b16 %v2928
        %v3029 = vunpack.c.l.b16 %v2929
        %v3030 = vunpack.c.l.b16 %v2930
        %v3031 = vunpack.c.l.b16 %v2931
        %v3032 = vunpack.c.l.b16 %v2932
        %v3033 = vunpack.c.l.b16 %v2933
        %v3034 = vunpack.c.l.b16 %v2934
        %v3035 = vunpack.c.l.b16 %v2935
        %v3036 = vunpack.c.l.b16 %v2936
        %v3037 = vunpack.c.l.b16 %v2937
        %v3038 = vunpack.c.l.b16 %v2938
        %v3039 = vunpack.c.l.b16 %v2939
        %v3040 = vpack.c.b16 %v3025, %v3024
        %v3041 = vpack.c.b16 %v3027, %v3026
        %v3042 = vpack.c.b16 %v3029, %v3028
        %v3043 = vpack.c.b16 %v3031, %v3030
        %v3044 = vpack.c.b16 %v3033, %v3032
        %v3045 = vpack.c.b16 %v3035, %v3034
        %v3046 = vpack.c.b16 %v3037, %v3036
        %v3047 = vpack.c.b16 %v3039, %v3038
        %3056 = vmatprep.subr.bf16.mxu0 0
        %3057 = vmatpush1.bf16.msra.mxu0 %v3047
        %3058 = vmatprep.subr.bf16.mxu0 0
        %3059 = vmatpush1.bf16.msra.mxu0 %v3046
        %3060 = vmatprep.subr.bf16.mxu0 0
        %3061 = vmatpush1.bf16.msra.mxu0 %v3045
        %3062 = vmatprep.subr.bf16.mxu0 0
        %3063 = vmatpush1.bf16.msra.mxu0 %v3044
        %3064 = vmatprep.subr.bf16.mxu0 0
        %3065 = vmatpush1.bf16.msra.mxu0 %v3043
        %3066 = vmatprep.subr.bf16.mxu0 0
        %3067 = vmatpush1.bf16.msra.mxu0 %v3042
        %3068 = vmatprep.subr.bf16.mxu0 0
        %3069 = vmatpush1.bf16.msra.mxu0 %v3041
        %3070 = vmatprep.subr.bf16.mxu0 0
        %3071 = vmatpush1.bf16.msra.mxu0 %v3040
        %3072 = vmatprep.subr.bf16.mxu0 0
        %3073 = vmatpush2.bf16.msra.mxu0 0
        %3074 = vmatprep.subr.bf16.mxu0 0
        %3075 = vmatpush2.bf16.msra.mxu0 0
        %3076 = vmatprep.subr.bf16.mxu0 0
        %3077 = vmatpush2.bf16.msra.mxu0 0
        %3078 = vmatprep.subr.bf16.mxu0 0
        %3079 = vmatpush2.bf16.msra.mxu0 0
        %3080 = vmatprep.subr.bf16.mxu0 0
        %3081 = vmatpush2.bf16.msra.mxu0 0
        %3082 = vmatprep.subr.bf16.mxu0 0
        %3083 = vmatpush2.bf16.msra.mxu0 0
        %3084 = vmatprep.subr.bf16.mxu0 0
        %3085 = vmatpush2.bf16.msra.mxu0 0
        %3086 = vmatprep.subr.bf16.mxu0 0
        %3087 = vmatpush2.bf16.msra.mxu0 0
        %3088 = vmatprep.mubr.bf16.mxu0 0
        %3089 = vmatmul.mubr.bf16.gmra.mxu0 %v2916
        %v3090 = vpop.f32.mrf.mxu0
        %v3091 = vadd.f32 0.0, %v3090
        %v3092 = vpop.f32.mrf.mxu0
        %v3093 = vpop.f32.mrf.mxu0
        %v3094 = vadd.f32 0.0, %v3093
        %v3095 = vpop.f32.mrf.mxu0
        %3096 = vmatprep.mubr.bf16.mxu0 0
        %3097 = vmatmul.mubr.bf16.gmra.mxu0 %v2917
        %v3098 = vpop.f32.mrf.mxu0
        %v3099 = vadd.f32 0.0, %v3098
        %v3100 = vpop.f32.mrf.mxu0
        %v3101 = vpop.f32.mrf.mxu0
        %v3102 = vadd.f32 0.0, %v3101
        %v3103 = vpop.f32.mrf.mxu0
        %3104 = vmatprep.mubr.bf16.mxu0 0
        %3105 = vmatmul.mubr.bf16.gmra.mxu0 %v2918
        %v3106 = vpop.f32.mrf.mxu0
        %v3107 = vadd.f32 0.0, %v3106
        %v3108 = vpop.f32.mrf.mxu0
        %v3109 = vpop.f32.mrf.mxu0
        %v3110 = vadd.f32 0.0, %v3109
        %v3111 = vpop.f32.mrf.mxu0
        %3112 = vmatprep.mubr.bf16.mxu0 0
        %3113 = vmatmul.mubr.bf16.gmra.mxu0 %v2919
        %v3114 = vpop.f32.mrf.mxu0
        %v3115 = vadd.f32 0.0, %v3114
        %v3116 = vpop.f32.mrf.mxu0
        %v3117 = vpop.f32.mrf.mxu0
        %v3118 = vadd.f32 0.0, %v3117
        %v3119 = vpop.f32.mrf.mxu0
        %3120 = vmatprep.mubr.bf16.mxu0 0
        %3121 = vmatmul.mubr.bf16.gmra.mxu0 %v2920
        %v3122 = vpop.f32.mrf.mxu0
        %v3123 = vadd.f32 0.0, %v3122
        %v3124 = vpop.f32.mrf.mxu0
        %v3125 = vpop.f32.mrf.mxu0
        %v3126 = vadd.f32 0.0, %v3125
        %v3127 = vpop.f32.mrf.mxu0
        %3128 = vmatprep.mubr.bf16.mxu0 0
        %3129 = vmatmul.mubr.bf16.gmra.mxu0 %v2921
        %v3130 = vpop.f32.mrf.mxu0
        %v3131 = vadd.f32 0.0, %v3130
        %v3132 = vpop.f32.mrf.mxu0
        %v3133 = vpop.f32.mrf.mxu0
        %v3134 = vadd.f32 0.0, %v3133
        %v3135 = vpop.f32.mrf.mxu0
        %3136 = vmatprep.mubr.bf16.mxu0 0
        %3137 = vmatmul.mubr.bf16.gmra.mxu0 %v2922
        %v3138 = vpop.f32.mrf.mxu0
        %v3139 = vadd.f32 0.0, %v3138
        %v3140 = vpop.f32.mrf.mxu0
        %v3141 = vpop.f32.mrf.mxu0
        %v3142 = vadd.f32 0.0, %v3141
        %v3143 = vpop.f32.mrf.mxu0
        %3144 = vmatprep.mubr.bf16.mxu0 0
        %3145 = vmatmul.mubr.bf16.gmra.mxu0 %v2923
        %v3146 = vpop.f32.mrf.mxu0
        %v3147 = vadd.f32 0.0, %v3146
        %v3148 = vpop.f32.mrf.mxu0
        %v3149 = vpop.f32.mrf.mxu0
        %v3150 = vadd.f32 0.0, %v3149
        %v3151 = vpop.f32.mrf.mxu0
        %3152 = vdwg.mxu0
        %v3153 = vrot.slane %v3091, 2
        %v3154 = vrot.slane %v3094, 2
        %v3155 = vrot.slane %v3099, 2
        %v3156 = vrot.slane %v3102, 2
        %v3157 = vrot.slane %v3107, 2
        %v3158 = vrot.slane %v3110, 2
        %v3159 = vrot.slane %v3115, 2
        %v3160 = vrot.slane %v3118, 2
        %v3161 = vrot.slane %v3123, 2
        %v3162 = vrot.slane %v3126, 2
        %v3163 = vrot.slane %v3131, 2
        %v3164 = vrot.slane %v3134, 2
        %v3165 = vrot.slane %v3139, 2
        %v3166 = vrot.slane %v3142, 2
        %v3167 = vrot.slane %v3147, 2
        %v3168 = vrot.slane %v3150, 2
        %vm3169 = vcmp.lt.s32.totalorder %v427, 6
        %v3170 = vsel %vm3169, %v3167, %v3168
        %v3171 = vsel %vm3169, %v3166, %v3167
        %v3172 = vsel %vm3169, %v3165, %v3166
        %v3173 = vsel %vm3169, %v3164, %v3165
        %v3174 = vsel %vm3169, %v3163, %v3164
        %v3175 = vsel %vm3169, %v3162, %v3163
        %v3176 = vsel %vm3169, %v3161, %v3162
        %v3177 = vsel %vm3169, %v3160, %v3161
        %v3178 = vsel %vm3169, %v3159, %v3160
        %v3179 = vsel %vm3169, %v3158, %v3159
        %v3180 = vsel %vm3169, %v3157, %v3158
        %v3181 = vsel %vm3169, %v3156, %v3157
        %v3182 = vsel %vm3169, %v3155, %v3156
        %v3183 = vsel %vm3169, %v3154, %v3155
        %v3184 = vsel %vm3169, %v3153, %v3154
        %v3185 = vsel %vm3169, %v3168, %v3153
        %v3186 = vsel %vm715, 1, 0
        %v3187 = vsel %vm716, 1, 0
        %v3188 = vsel %vm717, 1, 0
        %v3189 = vsel %vm718, 1, 0
        %v3190 = vsel %vm719, 1, 0
        %v3191 = vsel %vm720, 1, 0
        %v3192 = vsel %vm721, 1, 0
        %v3193 = vsel %vm722, 1, 0
        %v3194 = vsel %vm723, 1, 0
        %v3195 = vsel %vm724, 1, 0
        %v3196 = vsel %vm725, 1, 0
        %v3197 = vsel %vm726, 1, 0
        %v3198 = vsel %vm727, 1, 0
        %v3199 = vsel %vm728, 1, 0
        %v3200 = vsel %vm729, 1, 0
        %v3201 = vsel %vm730, 1, 0
        %vm3202 = vcmp.eq.s32.totalorder %v3186, 1
        %vm3203 = vcmp.eq.s32.totalorder %v3187, 1
        %vm3204 = vcmp.eq.s32.totalorder %v3188, 1
        %vm3205 = vcmp.eq.s32.totalorder %v3189, 1
        %vm3206 = vcmp.eq.s32.totalorder %v3190, 1
        %vm3207 = vcmp.eq.s32.totalorder %v3191, 1
        %vm3208 = vcmp.eq.s32.totalorder %v3192, 1
        %vm3209 = vcmp.eq.s32.totalorder %v3193, 1
        %vm3210 = vcmp.eq.s32.totalorder %v3194, 1
        %vm3211 = vcmp.eq.s32.totalorder %v3195, 1
        %vm3212 = vcmp.eq.s32.totalorder %v3196, 1
        %vm3213 = vcmp.eq.s32.totalorder %v3197, 1
        %vm3214 = vcmp.eq.s32.totalorder %v3198, 1
        %vm3215 = vcmp.eq.s32.totalorder %v3199, 1
        %vm3216 = vcmp.eq.s32.totalorder %v3200, 1
        %vm3217 = vcmp.eq.s32.totalorder %v3201, 1
        %v3218 = vsel %vm3202, %v3185, 0.0
        %v3219 = vsel %vm3203, %v3184, 0.0
        %v3220 = vsel %vm3204, %v3183, 0.0
        %v3221 = vsel %vm3205, %v3182, 0.0
        %v3222 = vsel %vm3206, %v3181, 0.0
        %v3223 = vsel %vm3207, %v3180, 0.0
        %v3224 = vsel %vm3208, %v3179, 0.0
        %v3225 = vsel %vm3209, %v3178, 0.0
        %v3226 = vsel %vm3210, %v3177, 0.0
        %v3227 = vsel %vm3211, %v3176, 0.0
        %v3228 = vsel %vm3212, %v3175, 0.0
        %v3229 = vsel %vm3213, %v3174, 0.0
        %v3230 = vsel %vm3214, %v3173, 0.0
        %v3231 = vsel %vm3215, %v3172, 0.0
        %v3232 = vsel %vm3216, %v3171, 0.0
        %v3233 = vsel %vm3217, %v3170, 0.0
        %v3250 = vunpack.c.l.b16 %v2941
        %v3251 = vunpack.c.l.b16 %v2942
        %v3252 = vunpack.c.l.b16 %v2943
        %v3253 = vunpack.c.l.b16 %v2944
        %v3254 = vunpack.c.l.b16 %v2945
        %v3255 = vunpack.c.l.b16 %v2946
        %v3256 = vunpack.c.l.b16 %v2947
        %v3257 = vunpack.c.l.b16 %v2948
        %v3258 = vunpack.c.l.b16 %v2949
        %v3259 = vunpack.c.l.b16 %v2950
        %v3260 = vunpack.c.l.b16 %v2951
        %v3261 = vunpack.c.l.b16 %v2952
        %v3262 = vunpack.c.l.b16 %v2953
        %v3263 = vunpack.c.l.b16 %v2954
        %v3264 = vunpack.c.l.b16 %v2955
        %v3265 = vunpack.c.l.b16 %v2956
        %v3266 = vpack.c.b16 %v3251, %v3250
        %v3267 = vpack.c.b16 %v3253, %v3252
        %v3268 = vpack.c.b16 %v3255, %v3254
        %v3269 = vpack.c.b16 %v3257, %v3256
        %v3270 = vpack.c.b16 %v3259, %v3258
        %v3271 = vpack.c.b16 %v3261, %v3260
        %v3272 = vpack.c.b16 %v3263, %v3262
        %v3273 = vpack.c.b16 %v3265, %v3264
        %3282 = vmatprep.subr.bf16.mxu0 0
        %3283 = vmatpush1.bf16.msra.mxu0 %v3273
        %3284 = vmatprep.subr.bf16.mxu0 0
        %3285 = vmatpush1.bf16.msra.mxu0 %v3272
        %3286 = vmatprep.subr.bf16.mxu0 0
        %3287 = vmatpush1.bf16.msra.mxu0 %v3271
        %3288 = vmatprep.subr.bf16.mxu0 0
        %3289 = vmatpush1.bf16.msra.mxu0 %v3270
        %3290 = vmatprep.subr.bf16.mxu0 0
        %3291 = vmatpush1.bf16.msra.mxu0 %v3269
        %3292 = vmatprep.subr.bf16.mxu0 0
        %3293 = vmatpush1.bf16.msra.mxu0 %v3268
        %3294 = vmatprep.subr.bf16.mxu0 0
        %3295 = vmatpush1.bf16.msra.mxu0 %v3267
        %3296 = vmatprep.subr.bf16.mxu0 0
        %3297 = vmatpush1.bf16.msra.mxu0 %v3266
        %3298 = vmatprep.subr.bf16.mxu0 0
        %3299 = vmatpush2.bf16.msra.mxu0 0
        %3300 = vmatprep.subr.bf16.mxu0 0
        %3301 = vmatpush2.bf16.msra.mxu0 0
        %3302 = vmatprep.subr.bf16.mxu0 0
        %3303 = vmatpush2.bf16.msra.mxu0 0
        %3304 = vmatprep.subr.bf16.mxu0 0
        %3305 = vmatpush2.bf16.msra.mxu0 0
        %3306 = vmatprep.subr.bf16.mxu0 0
        %3307 = vmatpush2.bf16.msra.mxu0 0
        %3308 = vmatprep.subr.bf16.mxu0 0
        %3309 = vmatpush2.bf16.msra.mxu0 0
        %3310 = vmatprep.subr.bf16.mxu0 0
        %3311 = vmatpush2.bf16.msra.mxu0 0
        %3312 = vmatprep.subr.bf16.mxu0 0
        %3313 = vmatpush2.bf16.msra.mxu0 0
        %3314 = vmatprep.mubr.bf16.mxu0 0
        %3315 = vmatmul.mubr.bf16.gmra.mxu0 %v2916
        %v3316 = vpop.f32.mrf.mxu0
        %v3317 = vadd.f32 0.0, %v3316
        %v3318 = vpop.f32.mrf.mxu0
        %v3319 = vpop.f32.mrf.mxu0
        %v3320 = vadd.f32 0.0, %v3319
        %v3321 = vpop.f32.mrf.mxu0
        %3322 = vmatprep.mubr.bf16.mxu0 0
        %3323 = vmatmul.mubr.bf16.gmra.mxu0 %v2917
        %v3324 = vpop.f32.mrf.mxu0
        %v3325 = vadd.f32 0.0, %v3324
        %v3326 = vpop.f32.mrf.mxu0
        %v3327 = vpop.f32.mrf.mxu0
        %v3328 = vadd.f32 0.0, %v3327
        %v3329 = vpop.f32.mrf.mxu0
        %3330 = vmatprep.mubr.bf16.mxu0 0
        %3331 = vmatmul.mubr.bf16.gmra.mxu0 %v2918
        %v3332 = vpop.f32.mrf.mxu0
        %v3333 = vadd.f32 0.0, %v3332
        %v3334 = vpop.f32.mrf.mxu0
        %v3335 = vpop.f32.mrf.mxu0
        %v3336 = vadd.f32 0.0, %v3335
        %v3337 = vpop.f32.mrf.mxu0
        %3338 = vmatprep.mubr.bf16.mxu0 0
        %3339 = vmatmul.mubr.bf16.gmra.mxu0 %v2919
        %v3340 = vpop.f32.mrf.mxu0
        %v3341 = vadd.f32 0.0, %v3340
        %v3342 = vpop.f32.mrf.mxu0
        %v3343 = vpop.f32.mrf.mxu0
        %v3344 = vadd.f32 0.0, %v3343
        %v3345 = vpop.f32.mrf.mxu0
        %3346 = vmatprep.mubr.bf16.mxu0 0
        %3347 = vmatmul.mubr.bf16.gmra.mxu0 %v2920
        %v3348 = vpop.f32.mrf.mxu0
        %v3349 = vadd.f32 0.0, %v3348
        %v3350 = vpop.f32.mrf.mxu0
        %v3351 = vpop.f32.mrf.mxu0
        %v3352 = vadd.f32 0.0, %v3351
        %v3353 = vpop.f32.mrf.mxu0
        %3354 = vmatprep.mubr.bf16.mxu0 0
        %3355 = vmatmul.mubr.bf16.gmra.mxu0 %v2921
        %v3356 = vpop.f32.mrf.mxu0
        %v3357 = vadd.f32 0.0, %v3356
        %v3358 = vpop.f32.mrf.mxu0
        %v3359 = vpop.f32.mrf.mxu0
        %v3360 = vadd.f32 0.0, %v3359
        %v3361 = vpop.f32.mrf.mxu0
        %3362 = vmatprep.mubr.bf16.mxu0 0
        %3363 = vmatmul.mubr.bf16.gmra.mxu0 %v2922
        %v3364 = vpop.f32.mrf.mxu0
        %v3365 = vadd.f32 0.0, %v3364
        %v3366 = vpop.f32.mrf.mxu0
        %v3367 = vpop.f32.mrf.mxu0
        %v3368 = vadd.f32 0.0, %v3367
        %v3369 = vpop.f32.mrf.mxu0
        %3370 = vmatprep.mubr.bf16.mxu0 0
        %3371 = vmatmul.mubr.bf16.gmra.mxu0 %v2923
        %v3372 = vpop.f32.mrf.mxu0
        %v3373 = vadd.f32 0.0, %v3372
        %v3374 = vpop.f32.mrf.mxu0
        %v3375 = vpop.f32.mrf.mxu0
        %v3376 = vadd.f32 0.0, %v3375
        %v3377 = vpop.f32.mrf.mxu0
        %3378 = vdwg.mxu0
        %v3379 = vrot.slane %v3317, 5
        %v3380 = vrot.slane %v3320, 5
        %v3381 = vrot.slane %v3325, 5
        %v3382 = vrot.slane %v3328, 5
        %v3383 = vrot.slane %v3333, 5
        %v3384 = vrot.slane %v3336, 5
        %v3385 = vrot.slane %v3341, 5
        %v3386 = vrot.slane %v3344, 5
        %v3387 = vrot.slane %v3349, 5
        %v3388 = vrot.slane %v3352, 5
        %v3389 = vrot.slane %v3357, 5
        %v3390 = vrot.slane %v3360, 5
        %v3391 = vrot.slane %v3365, 5
        %v3392 = vrot.slane %v3368, 5
        %v3393 = vrot.slane %v3373, 5
        %v3394 = vrot.slane %v3376, 5
        %vm3395 = vcmp.lt.s32.totalorder %v427, 3
        %v3396 = vsel %vm3395, %v3393, %v3394
        %v3397 = vsel %vm3395, %v3392, %v3393
        %v3398 = vsel %vm3395, %v3391, %v3392
        %v3399 = vsel %vm3395, %v3390, %v3391
        %v3400 = vsel %vm3395, %v3389, %v3390
        %v3401 = vsel %vm3395, %v3388, %v3389
        %v3402 = vsel %vm3395, %v3387, %v3388
        %v3403 = vsel %vm3395, %v3386, %v3387
        %v3404 = vsel %vm3395, %v3385, %v3386
        %v3405 = vsel %vm3395, %v3384, %v3385
        %v3406 = vsel %vm3395, %v3383, %v3384
        %v3407 = vsel %vm3395, %v3382, %v3383
        %v3408 = vsel %vm3395, %v3381, %v3382
        %v3409 = vsel %vm3395, %v3380, %v3381
        %v3410 = vsel %vm3395, %v3379, %v3380
        %v3411 = vsel %vm3395, %v3394, %v3379
        %v3412 = vsel %vm699, 1, 0
        %v3413 = vsel %vm700, 1, 0
        %v3414 = vsel %vm701, 1, 0
        %v3415 = vsel %vm702, 1, 0
        %v3416 = vsel %vm703, 1, 0
        %v3417 = vsel %vm704, 1, 0
        %v3418 = vsel %vm705, 1, 0
        %v3419 = vsel %vm706, 1, 0
        %v3420 = vsel %vm707, 1, 0
        %v3421 = vsel %vm708, 1, 0
        %v3422 = vsel %vm709, 1, 0
        %v3423 = vsel %vm710, 1, 0
        %v3424 = vsel %vm711, 1, 0
        %v3425 = vsel %vm712, 1, 0
        %v3426 = vsel %vm713, 1, 0
        %v3427 = vsel %vm714, 1, 0
        %vm3428 = vcmp.eq.s32.totalorder %v3412, 1
        %vm3429 = vcmp.eq.s32.totalorder %v3413, 1
        %vm3430 = vcmp.eq.s32.totalorder %v3414, 1
        %vm3431 = vcmp.eq.s32.totalorder %v3415, 1
        %vm3432 = vcmp.eq.s32.totalorder %v3416, 1
        %vm3433 = vcmp.eq.s32.totalorder %v3417, 1
        %vm3434 = vcmp.eq.s32.totalorder %v3418, 1
        %vm3435 = vcmp.eq.s32.totalorder %v3419, 1
        %vm3436 = vcmp.eq.s32.totalorder %v3420, 1
        %vm3437 = vcmp.eq.s32.totalorder %v3421, 1
        %vm3438 = vcmp.eq.s32.totalorder %v3422, 1
        %vm3439 = vcmp.eq.s32.totalorder %v3423, 1
        %vm3440 = vcmp.eq.s32.totalorder %v3424, 1
        %vm3441 = vcmp.eq.s32.totalorder %v3425, 1
        %vm3442 = vcmp.eq.s32.totalorder %v3426, 1
        %vm3443 = vcmp.eq.s32.totalorder %v3427, 1
        %v3444 = vsel %vm3428, %v3411, 0.0
        %v3445 = vsel %vm3429, %v3410, 0.0
        %v3446 = vsel %vm3430, %v3409, 0.0
        %v3447 = vsel %vm3431, %v3408, 0.0
        %v3448 = vsel %vm3432, %v3407, 0.0
        %v3449 = vsel %vm3433, %v3406, 0.0
        %v3450 = vsel %vm3434, %v3405, 0.0
        %v3451 = vsel %vm3435, %v3404, 0.0
        %v3452 = vsel %vm3436, %v3403, 0.0
        %v3453 = vsel %vm3437, %v3402, 0.0
        %v3454 = vsel %vm3438, %v3401, 0.0
        %v3455 = vsel %vm3439, %v3400, 0.0
        %v3456 = vsel %vm3440, %v3399, 0.0
        %v3457 = vsel %vm3441, %v3398, 0.0
        %v3458 = vsel %vm3442, %v3397, 0.0
        %v3459 = vsel %vm3443, %v3396, 0.0
        %v3460 = vadd.f32 %v3218, %v3444
        %v3461 = vadd.f32 %v3219, %v3445
        %v3462 = vadd.f32 %v3220, %v3446
        %v3463 = vadd.f32 %v3221, %v3447
        %v3464 = vadd.f32 %v3222, %v3448
        %v3465 = vadd.f32 %v3223, %v3449
        %v3466 = vadd.f32 %v3224, %v3450
        %v3467 = vadd.f32 %v3225, %v3451
        %v3468 = vadd.f32 %v3226, %v3452
        %v3469 = vadd.f32 %v3227, %v3453
        %v3470 = vadd.f32 %v3228, %v3454
        %v3471 = vadd.f32 %v3229, %v3455
        %v3472 = vadd.f32 %v3230, %v3456
        %v3473 = vadd.f32 %v3231, %v3457
        %v3474 = vadd.f32 %v3232, %v3458
        %v3475 = vadd.f32 %v3233, %v3459
        %v3492 = vunpack.c.l.b16 %v2958
        %v3493 = vunpack.c.l.b16 %v2959
        %v3494 = vunpack.c.l.b16 %v2960
        %v3495 = vunpack.c.l.b16 %v2961
        %v3496 = vunpack.c.l.b16 %v2962
        %v3497 = vunpack.c.l.b16 %v2963
        %v3498 = vunpack.c.l.b16 %v2964
        %v3499 = vunpack.c.l.b16 %v2965
        %v3500 = vunpack.c.l.b16 %v2966
        %v3501 = vunpack.c.l.b16 %v2967
        %v3502 = vunpack.c.l.b16 %v2968
        %v3503 = vunpack.c.l.b16 %v2969
        %v3504 = vunpack.c.l.b16 %v2970
        %v3505 = vunpack.c.l.b16 %v2971
        %v3506 = vunpack.c.l.b16 %v2972
        %v3507 = vunpack.c.l.b16 %v2973
        %v3508 = vpack.c.b16 %v3493, %v3492
        %v3509 = vpack.c.b16 %v3495, %v3494
        %v3510 = vpack.c.b16 %v3497, %v3496
        %v3511 = vpack.c.b16 %v3499, %v3498
        %v3512 = vpack.c.b16 %v3501, %v3500
        %v3513 = vpack.c.b16 %v3503, %v3502
        %v3514 = vpack.c.b16 %v3505, %v3504
        %v3515 = vpack.c.b16 %v3507, %v3506
        %3524 = vmatprep.subr.bf16.mxu0 0
        %3525 = vmatpush1.bf16.msra.mxu0 %v3515
        %3526 = vmatprep.subr.bf16.mxu0 0
        %3527 = vmatpush1.bf16.msra.mxu0 %v3514
        %3528 = vmatprep.subr.bf16.mxu0 0
        %3529 = vmatpush1.bf16.msra.mxu0 %v3513
        %3530 = vmatprep.subr.bf16.mxu0 0
        %3531 = vmatpush1.bf16.msra.mxu0 %v3512
        %3532 = vmatprep.subr.bf16.mxu0 0
        %3533 = vmatpush1.bf16.msra.mxu0 %v3511
        %3534 = vmatprep.subr.bf16.mxu0 0
        %3535 = vmatpush1.bf16.msra.mxu0 %v3510
        %3536 = vmatprep.subr.bf16.mxu0 0
        %3537 = vmatpush1.bf16.msra.mxu0 %v3509
        %3538 = vmatprep.subr.bf16.mxu0 0
        %3539 = vmatpush1.bf16.msra.mxu0 %v3508
        %3540 = vmatprep.subr.bf16.mxu0 0
        %3541 = vmatpush2.bf16.msra.mxu0 0
        %3542 = vmatprep.subr.bf16.mxu0 0
        %3543 = vmatpush2.bf16.msra.mxu0 0
        %3544 = vmatprep.subr.bf16.mxu0 0
        %3545 = vmatpush2.bf16.msra.mxu0 0
        %3546 = vmatprep.subr.bf16.mxu0 0
        %3547 = vmatpush2.bf16.msra.mxu0 0
        %3548 = vmatprep.subr.bf16.mxu0 0
        %3549 = vmatpush2.bf16.msra.mxu0 0
        %3550 = vmatprep.subr.bf16.mxu0 0
        %3551 = vmatpush2.bf16.msra.mxu0 0
        %3552 = vmatprep.subr.bf16.mxu0 0
        %3553 = vmatpush2.bf16.msra.mxu0 0
        %3554 = vmatprep.subr.bf16.mxu0 0
        %3555 = vmatpush2.bf16.msra.mxu0 0
        %3556 = vmatprep.mubr.bf16.mxu0 0
        %3557 = vmatmul.mubr.bf16.gmra.mxu0 %v2916
        %v3558 = vpop.f32.mrf.mxu0
        %v3559 = vadd.f32 0.0, %v3558
        %v3560 = vpop.f32.mrf.mxu0
        %v3561 = vpop.f32.mrf.mxu0
        %v3562 = vadd.f32 0.0, %v3561
        %v3563 = vpop.f32.mrf.mxu0
        %3564 = vmatprep.mubr.bf16.mxu0 0
        %3565 = vmatmul.mubr.bf16.gmra.mxu0 %v2917
        %v3566 = vpop.f32.mrf.mxu0
        %v3567 = vadd.f32 0.0, %v3566
        %v3568 = vpop.f32.mrf.mxu0
        %v3569 = vpop.f32.mrf.mxu0
        %v3570 = vadd.f32 0.0, %v3569
        %v3571 = vpop.f32.mrf.mxu0
        %3572 = vmatprep.mubr.bf16.mxu0 0
        %3573 = vmatmul.mubr.bf16.gmra.mxu0 %v2918
        %v3574 = vpop.f32.mrf.mxu0
        %v3575 = vadd.f32 0.0, %v3574
        %v3576 = vpop.f32.mrf.mxu0
        %v3577 = vpop.f32.mrf.mxu0
        %v3578 = vadd.f32 0.0, %v3577
        %v3579 = vpop.f32.mrf.mxu0
        %3580 = vmatprep.mubr.bf16.mxu0 0
        %3581 = vmatmul.mubr.bf16.gmra.mxu0 %v2919
        %v3582 = vpop.f32.mrf.mxu0
        %v3583 = vadd.f32 0.0, %v3582
        %v3584 = vpop.f32.mrf.mxu0
        %v3585 = vpop.f32.mrf.mxu0
        %v3586 = vadd.f32 0.0, %v3585
        %v3587 = vpop.f32.mrf.mxu0
        %3588 = vmatprep.mubr.bf16.mxu0 0
        %3589 = vmatmul.mubr.bf16.gmra.mxu0 %v2920
        %v3590 = vpop.f32.mrf.mxu0
        %v3591 = vadd.f32 0.0, %v3590
        %v3592 = vpop.f32.mrf.mxu0
        %v3593 = vpop.f32.mrf.mxu0
        %v3594 = vadd.f32 0.0, %v3593
        %v3595 = vpop.f32.mrf.mxu0
        %3596 = vmatprep.mubr.bf16.mxu0 0
        %3597 = vmatmul.mubr.bf16.gmra.mxu0 %v2921
        %v3598 = vpop.f32.mrf.mxu0
        %v3599 = vadd.f32 0.0, %v3598
        %v3600 = vpop.f32.mrf.mxu0
        %v3601 = vpop.f32.mrf.mxu0
        %v3602 = vadd.f32 0.0, %v3601
        %v3603 = vpop.f32.mrf.mxu0
        %3604 = vmatprep.mubr.bf16.mxu0 0
        %3605 = vmatmul.mubr.bf16.gmra.mxu0 %v2922
        %v3606 = vpop.f32.mrf.mxu0
        %v3607 = vadd.f32 0.0, %v3606
        %v3608 = vpop.f32.mrf.mxu0
        %v3609 = vpop.f32.mrf.mxu0
        %v3610 = vadd.f32 0.0, %v3609
        %v3611 = vpop.f32.mrf.mxu0
        %3612 = vmatprep.mubr.bf16.mxu0 0
        %3613 = vmatmul.mubr.bf16.gmra.mxu0 %v2923
        %v3614 = vpop.f32.mrf.mxu0
        %v3615 = vadd.f32 0.0, %v3614
        %v3616 = vpop.f32.mrf.mxu0
        %v3617 = vpop.f32.mrf.mxu0
        %v3618 = vadd.f32 0.0, %v3617
        %v3619 = vpop.f32.mrf.mxu0
        %3620 = vdwg.mxu0
        %v3621 = vadd.f32 %v3460, %v3559
        %v3622 = vadd.f32 %v3461, %v3562
        %v3623 = vadd.f32 %v3462, %v3567
        %v3624 = vadd.f32 %v3463, %v3570
        %v3625 = vadd.f32 %v3464, %v3575
        %v3626 = vadd.f32 %v3465, %v3578
        %v3627 = vadd.f32 %v3466, %v3583
        %v3628 = vadd.f32 %v3467, %v3586
        %v3629 = vadd.f32 %v3468, %v3591
        %v3630 = vadd.f32 %v3469, %v3594
        %v3631 = vadd.f32 %v3470, %v3599
        %v3632 = vadd.f32 %v3471, %v3602
        %v3633 = vadd.f32 %v3472, %v3607
        %v3634 = vadd.f32 %v3473, %v3610
        %v3635 = vadd.f32 %v3474, %v3615
        %v3636 = vadd.f32 %v3475, %v3618
        %v3653 = vunpack.c.l.b16 %v2975
        %v3654 = vunpack.c.l.b16 %v2976
        %v3655 = vunpack.c.l.b16 %v2977
        %v3656 = vunpack.c.l.b16 %v2978
        %v3657 = vunpack.c.l.b16 %v2979
        %v3658 = vunpack.c.l.b16 %v2980
        %v3659 = vunpack.c.l.b16 %v2981
        %v3660 = vunpack.c.l.b16 %v2982
        %v3661 = vunpack.c.l.b16 %v2983
        %v3662 = vunpack.c.l.b16 %v2984
        %v3663 = vunpack.c.l.b16 %v2985
        %v3664 = vunpack.c.l.b16 %v2986
        %v3665 = vunpack.c.l.b16 %v2987
        %v3666 = vunpack.c.l.b16 %v2988
        %v3667 = vunpack.c.l.b16 %v2989
        %v3668 = vunpack.c.l.b16 %v2990
        %v3669 = vpack.c.b16 %v3654, %v3653
        %v3670 = vpack.c.b16 %v3656, %v3655
        %v3671 = vpack.c.b16 %v3658, %v3657
        %v3672 = vpack.c.b16 %v3660, %v3659
        %v3673 = vpack.c.b16 %v3662, %v3661
        %v3674 = vpack.c.b16 %v3664, %v3663
        %v3675 = vpack.c.b16 %v3666, %v3665
        %v3676 = vpack.c.b16 %v3668, %v3667
        %3685 = vmatprep.subr.bf16.mxu0 0
        %3686 = vmatpush1.bf16.msra.mxu0 %v3676
        %3687 = vmatprep.subr.bf16.mxu0 0
        %3688 = vmatpush1.bf16.msra.mxu0 %v3675
        %3689 = vmatprep.subr.bf16.mxu0 0
        %3690 = vmatpush1.bf16.msra.mxu0 %v3674
        %3691 = vmatprep.subr.bf16.mxu0 0
        %3692 = vmatpush1.bf16.msra.mxu0 %v3673
        %3693 = vmatprep.subr.bf16.mxu0 0
        %3694 = vmatpush1.bf16.msra.mxu0 %v3672
        %3695 = vmatprep.subr.bf16.mxu0 0
        %3696 = vmatpush1.bf16.msra.mxu0 %v3671
        %3697 = vmatprep.subr.bf16.mxu0 0
        %3698 = vmatpush1.bf16.msra.mxu0 %v3670
        %3699 = vmatprep.subr.bf16.mxu0 0
        %3700 = vmatpush1.bf16.msra.mxu0 %v3669
        %3701 = vmatprep.subr.bf16.mxu0 0
        %3702 = vmatpush2.bf16.msra.mxu0 0
        %3703 = vmatprep.subr.bf16.mxu0 0
        %3704 = vmatpush2.bf16.msra.mxu0 0
        %3705 = vmatprep.subr.bf16.mxu0 0
        %3706 = vmatpush2.bf16.msra.mxu0 0
        %3707 = vmatprep.subr.bf16.mxu0 0
        %3708 = vmatpush2.bf16.msra.mxu0 0
        %3709 = vmatprep.subr.bf16.mxu0 0
        %3710 = vmatpush2.bf16.msra.mxu0 0
        %3711 = vmatprep.subr.bf16.mxu0 0
        %3712 = vmatpush2.bf16.msra.mxu0 0
        %3713 = vmatprep.subr.bf16.mxu0 0
        %3714 = vmatpush2.bf16.msra.mxu0 0
        %3715 = vmatprep.subr.bf16.mxu0 0
        %3716 = vmatpush2.bf16.msra.mxu0 0
        %3717 = vmatprep.mubr.bf16.mxu0 0
        %3718 = vmatmul.mubr.bf16.gmra.mxu0 %v2916
        %v3719 = vpop.f32.mrf.mxu0
        %v3720 = vadd.f32 0.0, %v3719
        %v3721 = vpop.f32.mrf.mxu0
        %v3722 = vpop.f32.mrf.mxu0
        %v3723 = vadd.f32 0.0, %v3722
        %v3724 = vpop.f32.mrf.mxu0
        %3725 = vmatprep.mubr.bf16.mxu0 0
        %3726 = vmatmul.mubr.bf16.gmra.mxu0 %v2917
        %v3727 = vpop.f32.mrf.mxu0
        %v3728 = vadd.f32 0.0, %v3727
        %v3729 = vpop.f32.mrf.mxu0
        %v3730 = vpop.f32.mrf.mxu0
        %v3731 = vadd.f32 0.0, %v3730
        %v3732 = vpop.f32.mrf.mxu0
        %3733 = vmatprep.mubr.bf16.mxu0 0
        %3734 = vmatmul.mubr.bf16.gmra.mxu0 %v2918
        %v3735 = vpop.f32.mrf.mxu0
        %v3736 = vadd.f32 0.0, %v3735
        %v3737 = vpop.f32.mrf.mxu0
        %v3738 = vpop.f32.mrf.mxu0
        %v3739 = vadd.f32 0.0, %v3738
        %v3740 = vpop.f32.mrf.mxu0
        %3741 = vmatprep.mubr.bf16.mxu0 0
        %3742 = vmatmul.mubr.bf16.gmra.mxu0 %v2919
        %v3743 = vpop.f32.mrf.mxu0
        %v3744 = vadd.f32 0.0, %v3743
        %v3745 = vpop.f32.mrf.mxu0
        %v3746 = vpop.f32.mrf.mxu0
        %v3747 = vadd.f32 0.0, %v3746
        %v3748 = vpop.f32.mrf.mxu0
        %3749 = vmatprep.mubr.bf16.mxu0 0
        %3750 = vmatmul.mubr.bf16.gmra.mxu0 %v2920
        %v3751 = vpop.f32.mrf.mxu0
        %v3752 = vadd.f32 0.0, %v3751
        %v3753 = vpop.f32.mrf.mxu0
        %v3754 = vpop.f32.mrf.mxu0
        %v3755 = vadd.f32 0.0, %v3754
        %v3756 = vpop.f32.mrf.mxu0
        %3757 = vmatprep.mubr.bf16.mxu0 0
        %3758 = vmatmul.mubr.bf16.gmra.mxu0 %v2921
        %v3759 = vpop.f32.mrf.mxu0
        %v3760 = vadd.f32 0.0, %v3759
        %v3761 = vpop.f32.mrf.mxu0
        %v3762 = vpop.f32.mrf.mxu0
        %v3763 = vadd.f32 0.0, %v3762
        %v3764 = vpop.f32.mrf.mxu0
        %3765 = vmatprep.mubr.bf16.mxu0 0
        %3766 = vmatmul.mubr.bf16.gmra.mxu0 %v2922
        %v3767 = vpop.f32.mrf.mxu0
        %v3768 = vadd.f32 0.0, %v3767
        %v3769 = vpop.f32.mrf.mxu0
        %v3770 = vpop.f32.mrf.mxu0
        %v3771 = vadd.f32 0.0, %v3770
        %v3772 = vpop.f32.mrf.mxu0
        %3773 = vmatprep.mubr.bf16.mxu0 0
        %3774 = vmatmul.mubr.bf16.gmra.mxu0 %v2923
        %v3775 = vpop.f32.mrf.mxu0
        %v3776 = vadd.f32 0.0, %v3775
        %v3777 = vpop.f32.mrf.mxu0
        %v3778 = vpop.f32.mrf.mxu0
        %v3779 = vadd.f32 0.0, %v3778
        %v3780 = vpop.f32.mrf.mxu0
        %3781 = vdwg.mxu0
        %v3782 = vrot.slane %v3720, 3
        %v3783 = vrot.slane %v3723, 3
        %v3784 = vrot.slane %v3728, 3
        %v3785 = vrot.slane %v3731, 3
        %v3786 = vrot.slane %v3736, 3
        %v3787 = vrot.slane %v3739, 3
        %v3788 = vrot.slane %v3744, 3
        %v3789 = vrot.slane %v3747, 3
        %v3790 = vrot.slane %v3752, 3
        %v3791 = vrot.slane %v3755, 3
        %v3792 = vrot.slane %v3760, 3
        %v3793 = vrot.slane %v3763, 3
        %v3794 = vrot.slane %v3768, 3
        %v3795 = vrot.slane %v3771, 3
        %v3796 = vrot.slane %v3776, 3
        %v3797 = vrot.slane %v3779, 3
        %vm3798 = vcmp.lt.s32.totalorder %v427, 5
        %v3799 = vsel %vm3798, %v3796, %v3797
        %v3800 = vsel %vm3798, %v3795, %v3796
        %v3801 = vsel %vm3798, %v3794, %v3795
        %v3802 = vsel %vm3798, %v3793, %v3794
        %v3803 = vsel %vm3798, %v3792, %v3793
        %v3804 = vsel %vm3798, %v3791, %v3792
        %v3805 = vsel %vm3798, %v3790, %v3791
        %v3806 = vsel %vm3798, %v3789, %v3790
        %v3807 = vsel %vm3798, %v3788, %v3789
        %v3808 = vsel %vm3798, %v3787, %v3788
        %v3809 = vsel %vm3798, %v3786, %v3787
        %v3810 = vsel %vm3798, %v3785, %v3786
        %v3811 = vsel %vm3798, %v3784, %v3785
        %v3812 = vsel %vm3798, %v3783, %v3784
        %v3813 = vsel %vm3798, %v3782, %v3783
        %v3814 = vsel %vm3798, %v3797, %v3782
        %v3815 = vsel %vm651, 1, 0
        %v3816 = vsel %vm652, 1, 0
        %v3817 = vsel %vm653, 1, 0
        %v3818 = vsel %vm654, 1, 0
        %v3819 = vsel %vm655, 1, 0
        %v3820 = vsel %vm656, 1, 0
        %v3821 = vsel %vm657, 1, 0
        %v3822 = vsel %vm658, 1, 0
        %v3823 = vsel %vm659, 1, 0
        %v3824 = vsel %vm660, 1, 0
        %v3825 = vsel %vm661, 1, 0
        %v3826 = vsel %vm662, 1, 0
        %v3827 = vsel %vm663, 1, 0
        %v3828 = vsel %vm664, 1, 0
        %v3829 = vsel %vm665, 1, 0
        %v3830 = vsel %vm666, 1, 0
        %vm3831 = vcmp.eq.s32.totalorder %v3815, 1
        %vm3832 = vcmp.eq.s32.totalorder %v3816, 1
        %vm3833 = vcmp.eq.s32.totalorder %v3817, 1
        %vm3834 = vcmp.eq.s32.totalorder %v3818, 1
        %vm3835 = vcmp.eq.s32.totalorder %v3819, 1
        %vm3836 = vcmp.eq.s32.totalorder %v3820, 1
        %vm3837 = vcmp.eq.s32.totalorder %v3821, 1
        %vm3838 = vcmp.eq.s32.totalorder %v3822, 1
        %vm3839 = vcmp.eq.s32.totalorder %v3823, 1
        %vm3840 = vcmp.eq.s32.totalorder %v3824, 1
        %vm3841 = vcmp.eq.s32.totalorder %v3825, 1
        %vm3842 = vcmp.eq.s32.totalorder %v3826, 1
        %vm3843 = vcmp.eq.s32.totalorder %v3827, 1
        %vm3844 = vcmp.eq.s32.totalorder %v3828, 1
        %vm3845 = vcmp.eq.s32.totalorder %v3829, 1
        %vm3846 = vcmp.eq.s32.totalorder %v3830, 1
        %v3847 = vsel %vm3831, %v3813, 0.0
        %v3848 = vsel %vm3832, %v3812, 0.0
        %v3849 = vsel %vm3833, %v3811, 0.0
        %v3850 = vsel %vm3834, %v3810, 0.0
        %v3851 = vsel %vm3835, %v3809, 0.0
        %v3852 = vsel %vm3836, %v3808, 0.0
        %v3853 = vsel %vm3837, %v3807, 0.0
        %v3854 = vsel %vm3838, %v3806, 0.0
        %v3855 = vsel %vm3839, %v3805, 0.0
        %v3856 = vsel %vm3840, %v3804, 0.0
        %v3857 = vsel %vm3841, %v3803, 0.0
        %v3858 = vsel %vm3842, %v3802, 0.0
        %v3859 = vsel %vm3843, %v3801, 0.0
        %v3860 = vsel %vm3844, %v3800, 0.0
        %v3861 = vsel %vm3845, %v3799, 0.0
        %v3862 = vsel %vm3846, %v3814, 0.0
        %v3863 = vadd.f32 %v3621, %v3847
        %v3864 = vadd.f32 %v3622, %v3848
        %v3865 = vadd.f32 %v3623, %v3849
        %v3866 = vadd.f32 %v3624, %v3850
        %v3867 = vadd.f32 %v3625, %v3851
        %v3868 = vadd.f32 %v3626, %v3852
        %v3869 = vadd.f32 %v3627, %v3853
        %v3870 = vadd.f32 %v3628, %v3854
        %v3871 = vadd.f32 %v3629, %v3855
        %v3872 = vadd.f32 %v3630, %v3856
        %v3873 = vadd.f32 %v3631, %v3857
        %v3874 = vadd.f32 %v3632, %v3858
        %v3875 = vadd.f32 %v3633, %v3859
        %v3876 = vadd.f32 %v3634, %v3860
        %v3877 = vadd.f32 %v3635, %v3861
        %v3878 = vadd.f32 %v3636, %v3862
        %v3895 = vunpack.c.l.b16 %v2992
        %v3896 = vunpack.c.l.b16 %v2993
        %v3897 = vunpack.c.l.b16 %v2994
        %v3898 = vunpack.c.l.b16 %v2995
        %v3899 = vunpack.c.l.b16 %v2996
        %v3900 = vunpack.c.l.b16 %v2997
        %v3901 = vunpack.c.l.b16 %v2998
        %v3902 = vunpack.c.l.b16 %v2999
        %v3903 = vunpack.c.l.b16 %v3000
        %v3904 = vunpack.c.l.b16 %v3001
        %v3905 = vunpack.c.l.b16 %v3002
        %v3906 = vunpack.c.l.b16 %v3003
        %v3907 = vunpack.c.l.b16 %v3004
        %v3908 = vunpack.c.l.b16 %v3005
        %v3909 = vunpack.c.l.b16 %v3006
        %v3910 = vunpack.c.l.b16 %v3007
        %v3911 = vpack.c.b16 %v3896, %v3895
        %v3912 = vpack.c.b16 %v3898, %v3897
        %v3913 = vpack.c.b16 %v3900, %v3899
        %v3914 = vpack.c.b16 %v3902, %v3901
        %v3915 = vpack.c.b16 %v3904, %v3903
        %v3916 = vpack.c.b16 %v3906, %v3905
        %v3917 = vpack.c.b16 %v3908, %v3907
        %v3918 = vpack.c.b16 %v3910, %v3909
        %3927 = vmatprep.subr.bf16.mxu0 0
        %3928 = vmatpush1.bf16.msra.mxu0 %v3918
        %3929 = vmatprep.subr.bf16.mxu0 0
        %3930 = vmatpush1.bf16.msra.mxu0 %v3917
        %3931 = vmatprep.subr.bf16.mxu0 0
        %3932 = vmatpush1.bf16.msra.mxu0 %v3916
        %3933 = vmatprep.subr.bf16.mxu0 0
        %3934 = vmatpush1.bf16.msra.mxu0 %v3915
        %3935 = vmatprep.subr.bf16.mxu0 0
        %3936 = vmatpush1.bf16.msra.mxu0 %v3914
        %3937 = vmatprep.subr.bf16.mxu0 0
        %3938 = vmatpush1.bf16.msra.mxu0 %v3913
        %3939 = vmatprep.subr.bf16.mxu0 0
        %3940 = vmatpush1.bf16.msra.mxu0 %v3912
        %3941 = vmatprep.subr.bf16.mxu0 0
        %3942 = vmatpush1.bf16.msra.mxu0 %v3911
        %3943 = vmatprep.subr.bf16.mxu0 0
        %3944 = vmatpush2.bf16.msra.mxu0 0
        %3945 = vmatprep.subr.bf16.mxu0 0
        %3946 = vmatpush2.bf16.msra.mxu0 0
        %3947 = vmatprep.subr.bf16.mxu0 0
        %3948 = vmatpush2.bf16.msra.mxu0 0
        %3949 = vmatprep.subr.bf16.mxu0 0
        %3950 = vmatpush2.bf16.msra.mxu0 0
        %3951 = vmatprep.subr.bf16.mxu0 0
        %3952 = vmatpush2.bf16.msra.mxu0 0
        %3953 = vmatprep.subr.bf16.mxu0 0
        %3954 = vmatpush2.bf16.msra.mxu0 0
        %3955 = vmatprep.subr.bf16.mxu0 0
        %3956 = vmatpush2.bf16.msra.mxu0 0
        %3957 = vmatprep.subr.bf16.mxu0 0
        %3958 = vmatpush2.bf16.msra.mxu0 0
        %3959 = vmatprep.mubr.bf16.mxu0 0
        %3960 = vmatmul.mubr.bf16.gmra.mxu0 %v2916
        %v3961 = vpop.f32.mrf.mxu0
        %v3962 = vadd.f32 0.0, %v3961
        %v3963 = vpop.f32.mrf.mxu0
        %v3964 = vpop.f32.mrf.mxu0
        %v3965 = vadd.f32 0.0, %v3964
        %v3966 = vpop.f32.mrf.mxu0
        %3967 = vmatprep.mubr.bf16.mxu0 0
        %3968 = vmatmul.mubr.bf16.gmra.mxu0 %v2917
        %v3969 = vpop.f32.mrf.mxu0
        %v3970 = vadd.f32 0.0, %v3969
        %v3971 = vpop.f32.mrf.mxu0
        %v3972 = vpop.f32.mrf.mxu0
        %v3973 = vadd.f32 0.0, %v3972
        %v3974 = vpop.f32.mrf.mxu0
        %3975 = vmatprep.mubr.bf16.mxu0 0
        %3976 = vmatmul.mubr.bf16.gmra.mxu0 %v2918
        %v3977 = vpop.f32.mrf.mxu0
        %v3978 = vadd.f32 0.0, %v3977
        %v3979 = vpop.f32.mrf.mxu0
        %v3980 = vpop.f32.mrf.mxu0
        %v3981 = vadd.f32 0.0, %v3980
        %v3982 = vpop.f32.mrf.mxu0
        %3983 = vmatprep.mubr.bf16.mxu0 0
        %3984 = vmatmul.mubr.bf16.gmra.mxu0 %v2919
        %v3985 = vpop.f32.mrf.mxu0
        %v3986 = vadd.f32 0.0, %v3985
        %v3987 = vpop.f32.mrf.mxu0
        %v3988 = vpop.f32.mrf.mxu0
        %v3989 = vadd.f32 0.0, %v3988
        %v3990 = vpop.f32.mrf.mxu0
        %3991 = vmatprep.mubr.bf16.mxu0 0
        %3992 = vmatmul.mubr.bf16.gmra.mxu0 %v2920
        %v3993 = vpop.f32.mrf.mxu0
        %v3994 = vadd.f32 0.0, %v3993
        %v3995 = vpop.f32.mrf.mxu0
        %v3996 = vpop.f32.mrf.mxu0
        %v3997 = vadd.f32 0.0, %v3996
        %v3998 = vpop.f32.mrf.mxu0
        %3999 = vmatprep.mubr.bf16.mxu0 0
        %4000 = vmatmul.mubr.bf16.gmra.mxu0 %v2921
        %v4001 = vpop.f32.mrf.mxu0
        %v4002 = vadd.f32 0.0, %v4001
        %v4003 = vpop.f32.mrf.mxu0
        %v4004 = vpop.f32.mrf.mxu0
        %v4005 = vadd.f32 0.0, %v4004
        %v4006 = vpop.f32.mrf.mxu0
        %4007 = vmatprep.mubr.bf16.mxu0 0
        %4008 = vmatmul.mubr.bf16.gmra.mxu0 %v2922
        %v4009 = vpop.f32.mrf.mxu0
        %v4010 = vadd.f32 0.0, %v4009
        %v4011 = vpop.f32.mrf.mxu0
        %v4012 = vpop.f32.mrf.mxu0
        %v4013 = vadd.f32 0.0, %v4012
        %v4014 = vpop.f32.mrf.mxu0
        %4015 = vmatprep.mubr.bf16.mxu0 0
        %4016 = vmatmul.mubr.bf16.gmra.mxu0 %v2923
        %v4017 = vpop.f32.mrf.mxu0
        %v4018 = vadd.f32 0.0, %v4017
        %v4019 = vpop.f32.mrf.mxu0
        %v4020 = vpop.f32.mrf.mxu0
        %v4021 = vadd.f32 0.0, %v4020
        %v4022 = vpop.f32.mrf.mxu0
        %4023 = vdwg.mxu0
        %v4024 = vrot.slane %v3962, 6
        %v4025 = vrot.slane %v3965, 6
        %v4026 = vrot.slane %v3970, 6
        %v4027 = vrot.slane %v3973, 6
        %v4028 = vrot.slane %v3978, 6
        %v4029 = vrot.slane %v3981, 6
        %v4030 = vrot.slane %v3986, 6
        %v4031 = vrot.slane %v3989, 6
        %v4032 = vrot.slane %v3994, 6
        %v4033 = vrot.slane %v3997, 6
        %v4034 = vrot.slane %v4002, 6
        %v4035 = vrot.slane %v4005, 6
        %v4036 = vrot.slane %v4010, 6
        %v4037 = vrot.slane %v4013, 6
        %v4038 = vrot.slane %v4018, 6
        %v4039 = vrot.slane %v4021, 6
        %vm4040 = vcmp.lt.s32.totalorder %v427, 2
        %v4041 = vsel %vm4040, %v4038, %v4039
        %v4042 = vsel %vm4040, %v4037, %v4038
        %v4043 = vsel %vm4040, %v4036, %v4037
        %v4044 = vsel %vm4040, %v4035, %v4036
        %v4045 = vsel %vm4040, %v4034, %v4035
        %v4046 = vsel %vm4040, %v4033, %v4034
        %v4047 = vsel %vm4040, %v4032, %v4033
        %v4048 = vsel %vm4040, %v4031, %v4032
        %v4049 = vsel %vm4040, %v4030, %v4031
        %v4050 = vsel %vm4040, %v4029, %v4030
        %v4051 = vsel %vm4040, %v4028, %v4029
        %v4052 = vsel %vm4040, %v4027, %v4028
        %v4053 = vsel %vm4040, %v4026, %v4027
        %v4054 = vsel %vm4040, %v4025, %v4026
        %v4055 = vsel %vm4040, %v4024, %v4025
        %v4056 = vsel %vm4040, %v4039, %v4024
        %v4057 = vsel %vm667, 1, 0
        %v4058 = vsel %vm668, 1, 0
        %v4059 = vsel %vm669, 1, 0
        %v4060 = vsel %vm670, 1, 0
        %v4061 = vsel %vm671, 1, 0
        %v4062 = vsel %vm672, 1, 0
        %v4063 = vsel %vm673, 1, 0
        %v4064 = vsel %vm674, 1, 0
        %v4065 = vsel %vm675, 1, 0
        %v4066 = vsel %vm676, 1, 0
        %v4067 = vsel %vm677, 1, 0
        %v4068 = vsel %vm678, 1, 0
        %v4069 = vsel %vm679, 1, 0
        %v4070 = vsel %vm680, 1, 0
        %v4071 = vsel %vm681, 1, 0
        %v4072 = vsel %vm682, 1, 0
        %vm4073 = vcmp.eq.s32.totalorder %v4057, 1
        %vm4074 = vcmp.eq.s32.totalorder %v4058, 1
        %vm4075 = vcmp.eq.s32.totalorder %v4059, 1
        %vm4076 = vcmp.eq.s32.totalorder %v4060, 1
        %vm4077 = vcmp.eq.s32.totalorder %v4061, 1
        %vm4078 = vcmp.eq.s32.totalorder %v4062, 1
        %vm4079 = vcmp.eq.s32.totalorder %v4063, 1
        %vm4080 = vcmp.eq.s32.totalorder %v4064, 1
        %vm4081 = vcmp.eq.s32.totalorder %v4065, 1
        %vm4082 = vcmp.eq.s32.totalorder %v4066, 1
        %vm4083 = vcmp.eq.s32.totalorder %v4067, 1
        %vm4084 = vcmp.eq.s32.totalorder %v4068, 1
        %vm4085 = vcmp.eq.s32.totalorder %v4069, 1
        %vm4086 = vcmp.eq.s32.totalorder %v4070, 1
        %vm4087 = vcmp.eq.s32.totalorder %v4071, 1
        %vm4088 = vcmp.eq.s32.totalorder %v4072, 1
        %v4089 = vsel %vm4073, %v4055, 0.0
        %v4090 = vsel %vm4074, %v4054, 0.0
        %v4091 = vsel %vm4075, %v4053, 0.0
        %v4092 = vsel %vm4076, %v4052, 0.0
        %v4093 = vsel %vm4077, %v4051, 0.0
        %v4094 = vsel %vm4078, %v4050, 0.0
        %v4095 = vsel %vm4079, %v4049, 0.0
        %v4096 = vsel %vm4080, %v4048, 0.0
        %v4097 = vsel %vm4081, %v4047, 0.0
        %v4098 = vsel %vm4082, %v4046, 0.0
        %v4099 = vsel %vm4083, %v4045, 0.0
        %v4100 = vsel %vm4084, %v4044, 0.0
        %v4101 = vsel %vm4085, %v4043, 0.0
        %v4102 = vsel %vm4086, %v4042, 0.0
        %v4103 = vsel %vm4087, %v4041, 0.0
        %v4104 = vsel %vm4088, %v4056, 0.0
        %v4105 = vadd.f32 %v3863, %v4089
        %v4106 = vadd.f32 %v3864, %v4090
        %v4107 = vadd.f32 %v3865, %v4091
        %v4108 = vadd.f32 %v3866, %v4092
        %v4109 = vadd.f32 %v3867, %v4093
        %v4110 = vadd.f32 %v3868, %v4094
        %v4111 = vadd.f32 %v3869, %v4095
        %v4112 = vadd.f32 %v3870, %v4096
        %v4113 = vadd.f32 %v3871, %v4097
        %v4114 = vadd.f32 %v3872, %v4098
        %v4115 = vadd.f32 %v3873, %v4099
        %v4116 = vadd.f32 %v3874, %v4100
        %v4117 = vadd.f32 %v3875, %v4101
        %v4118 = vadd.f32 %v3876, %v4102
        %v4119 = vadd.f32 %v3877, %v4103
        %v4120 = vadd.f32 %v3878, %v4104
        %v4121 = vld [vmem:[%s5 + $0x2] sm:$0x1]
        %v4122 = vlaneseq
        %v4123 = vshrl.u32 %v4122, 7
        %v4124 = vsub.s32 0, %v4123
        %v4125 = vrot.slane %v4121, %v4124
        %v4126 = vmul.f32 %v4105, %v4125
        %v4127 = vmul.f32 %v4106, %v4125
        %v4128 = vmul.f32 %v4107, %v4125
        %v4129 = vmul.f32 %v4108, %v4125
        %v4130 = vmul.f32 %v4109, %v4125
        %v4131 = vmul.f32 %v4110, %v4125
        %v4132 = vmul.f32 %v4111, %v4125
        %v4133 = vmul.f32 %v4112, %v4125
        %v4134 = vmul.f32 %v4113, %v4125
        %v4135 = vmul.f32 %v4114, %v4125
        %v4136 = vmul.f32 %v4115, %v4125
        %v4137 = vmul.f32 %v4116, %v4125
        %v4138 = vmul.f32 %v4117, %v4125
        %v4139 = vmul.f32 %v4118, %v4125
        %v4140 = vmul.f32 %v4119, %v4125
        %v4141 = vmul.f32 %v4120, %v4125
        %v4142 = vld [vmem:[%s5 + $0x3] sm:$0x1]
        %v4143 = vlaneseq
        %v4144 = vshrl.u32 %v4143, 7
        %v4145 = vsub.s32 0, %v4144
        %v4146 = vrot.slane %v4142, %v4145
        %v4147 = vadd.f32 %v4126, %v4146
        %v4148 = vadd.f32 %v4127, %v4146
        %v4149 = vadd.f32 %v4128, %v4146
        %v4150 = vadd.f32 %v4129, %v4146
        %v4151 = vadd.f32 %v4130, %v4146
        %v4152 = vadd.f32 %v4131, %v4146
        %v4153 = vadd.f32 %v4132, %v4146
        %v4154 = vadd.f32 %v4133, %v4146
        %v4155 = vadd.f32 %v4134, %v4146
        %v4156 = vadd.f32 %v4135, %v4146
        %v4157 = vadd.f32 %v4136, %v4146
        %v4158 = vadd.f32 %v4137, %v4146
        %v4159 = vadd.f32 %v4138, %v4146
        %v4160 = vadd.f32 %v4139, %v4146
        %v4161 = vadd.f32 %v4140, %v4146
        %v4162 = vadd.f32 %v4141, %v4146
        %v4163 = vmax.f32 %v4147, 0.0
        %v4164 = vmax.f32 %v4148, 0.0
        %v4165 = vmax.f32 %v4149, 0.0
        %v4166 = vmax.f32 %v4150, 0.0
        %v4167 = vmax.f32 %v4151, 0.0
        %v4168 = vmax.f32 %v4152, 0.0
        %v4169 = vmax.f32 %v4153, 0.0
        %v4170 = vmax.f32 %v4154, 0.0
        %v4171 = vmax.f32 %v4155, 0.0
        %v4172 = vmax.f32 %v4156, 0.0
        %v4173 = vmax.f32 %v4157, 0.0
        %v4174 = vmax.f32 %v4158, 0.0
        %v4175 = vmax.f32 %v4159, 0.0
        %v4176 = vmax.f32 %v4160, 0.0
        %v4177 = vmax.f32 %v4161, 0.0
        %v4178 = vmax.f32 %v4162, 0.0
        %v4179 = vld [vmem:[%s6] sm:$0xf]
        %v4180 = vld [vmem:[%s6 + $0x4] sm:$0xf]
        %v4181 = vld [vmem:[%s6 + $0x8] sm:$0xf]
        %v4182 = vld [vmem:[%s6 + $0xc] sm:$0xf]
        %v4183 = vld [vmem:[%s6 + $0x10] sm:$0xf]
        %v4184 = vld [vmem:[%s6 + $0x14] sm:$0xf]
        %v4185 = vld [vmem:[%s6 + $0x18] sm:$0xf]
        %v4186 = vld [vmem:[%s6 + $0x1c] sm:$0xf]
        %v4195 = vunpack.c.l.b16 %v4179
        %v4196 = vunpack.c.l.b16 %v4180
        %v4197 = vunpack.c.l.b16 %v4181
        %v4198 = vunpack.c.l.b16 %v4182
        %v4199 = vunpack.c.l.b16 %v4183
        %v4200 = vunpack.c.l.b16 %v4184
        %v4201 = vunpack.c.l.b16 %v4185
        %v4202 = vunpack.c.l.b16 %v4186
        %v4203 = vpack.c.b16 %v4196, %v4195
        %v4204 = vpack.c.b16 %v4198, %v4197
        %v4205 = vpack.c.b16 %v4200, %v4199
        %v4206 = vpack.c.b16 %v4202, %v4201
        %4211 = vmatprep.subr.bf16.mxu0 0
        %4212 = vmatpush1.bf16.msra.mxu0 %v2923
        %4213 = vmatprep.subr.bf16.mxu0 0
        %4214 = vmatpush1.bf16.msra.mxu0 %v2922
        %4215 = vmatprep.subr.bf16.mxu0 0
        %4216 = vmatpush1.bf16.msra.mxu0 %v2921
        %4217 = vmatprep.subr.bf16.mxu0 0
        %4218 = vmatpush1.bf16.msra.mxu0 %v2920
        %4219 = vmatprep.subr.bf16.mxu0 0
        %4220 = vmatpush1.bf16.msra.mxu0 %v2919
        %4221 = vmatprep.subr.bf16.mxu0 0
        %4222 = vmatpush1.bf16.msra.mxu0 %v2918
        %4223 = vmatprep.subr.bf16.mxu0 0
        %4224 = vmatpush1.bf16.msra.mxu0 %v2917
        %4225 = vmatprep.subr.bf16.mxu0 0
        %4226 = vmatpush1.bf16.msra.mxu0 %v2916
        %4227 = vmatprep.subr.bf16.mxu0 0
        %4228 = vmatpush2.bf16.msra.mxu0 0
        %4229 = vmatprep.subr.bf16.mxu0 0
        %4230 = vmatpush2.bf16.msra.mxu0 0
        %4231 = vmatprep.subr.bf16.mxu0 0
        %4232 = vmatpush2.bf16.msra.mxu0 0
        %4233 = vmatprep.subr.bf16.mxu0 0
        %4234 = vmatpush2.bf16.msra.mxu0 0
        %4235 = vmatprep.subr.bf16.mxu0 0
        %4236 = vmatpush2.bf16.msra.mxu0 0
        %4237 = vmatprep.subr.bf16.mxu0 0
        %4238 = vmatpush2.bf16.msra.mxu0 0
        %4239 = vmatprep.subr.bf16.mxu0 0
        %4240 = vmatpush2.bf16.msra.mxu0 0
        %4241 = vmatprep.subr.bf16.mxu0 0
        %4242 = vmatpush2.bf16.msra.mxu0 0
        %4243 = vmatprep.mubr.bf16.mxu0 0
        %4244 = vmatmul.mubr.bf16.gmra.mxu0 %v4203
        %v4245 = vpop.f32.mrf.mxu0
        %v4246 = vadd.f32 0.0, %v4245
        %v4247 = vpop.f32.mrf.mxu0
        %v4248 = vpop.f32.mrf.mxu0
        %v4249 = vadd.f32 0.0, %v4248
        %v4250 = vpop.f32.mrf.mxu0
        %4251 = vmatprep.mubr.bf16.mxu0 0
        %4252 = vmatmul.mubr.bf16.gmra.mxu0 %v4204
        %v4253 = vpop.f32.mrf.mxu0
        %v4254 = vadd.f32 0.0, %v4253
        %v4255 = vpop.f32.mrf.mxu0
        %v4256 = vpop.f32.mrf.mxu0
        %v4257 = vadd.f32 0.0, %v4256
        %v4258 = vpop.f32.mrf.mxu0
        %4259 = vmatprep.mubr.bf16.mxu0 0
        %4260 = vmatmul.mubr.bf16.gmra.mxu0 %v4205
        %v4261 = vpop.f32.mrf.mxu0
        %v4262 = vadd.f32 0.0, %v4261
        %v4263 = vpop.f32.mrf.mxu0
        %v4264 = vpop.f32.mrf.mxu0
        %v4265 = vadd.f32 0.0, %v4264
        %v4266 = vpop.f32.mrf.mxu0
        %4267 = vmatprep.mubr.bf16.mxu0 0
        %4268 = vmatmul.mubr.bf16.gmra.mxu0 %v4206
        %v4269 = vpop.f32.mrf.mxu0
        %v4270 = vadd.f32 0.0, %v4269
        %v4271 = vpop.f32.mrf.mxu0
        %v4272 = vpop.f32.mrf.mxu0
        %v4273 = vadd.f32 0.0, %v4272
        %v4274 = vpop.f32.mrf.mxu0
        %4275 = vdwg.mxu0
        %v4276 = vpack.c.bf16 %v4249, %v4246
        %v4277 = vpack.c.bf16 %v4257, %v4254
        %v4278 = vpack.c.bf16 %v4265, %v4262
        %v4279 = vpack.c.bf16 %v4273, %v4270
        %v4280 = vld [vmem:[%s7] sm:$0xf]
        %v4281 = vld [vmem:[%s7 + $0x4] sm:$0xf]
        %v4282 = vld [vmem:[%s7 + $0x8] sm:$0xf]
        %v4283 = vld [vmem:[%s7 + $0xc] sm:$0xf]
        %v4284 = vld [vmem:[%s7 + $0x10] sm:$0xf]
        %v4285 = vld [vmem:[%s7 + $0x14] sm:$0xf]
        %v4286 = vld [vmem:[%s7 + $0x18] sm:$0xf]
        %v4287 = vld [vmem:[%s7 + $0x1c] sm:$0xf]
        %v4288 = vld [vmem:[%s7 + $0x20] sm:$0xf]
        %v4289 = vld [vmem:[%s7 + $0x24] sm:$0xf]
        %v4290 = vld [vmem:[%s7 + $0x28] sm:$0xf]
        %v4291 = vld [vmem:[%s7 + $0x2c] sm:$0xf]
        %v4292 = vld [vmem:[%s7 + $0x30] sm:$0xf]
        %v4293 = vld [vmem:[%s7 + $0x34] sm:$0xf]
        %v4294 = vld [vmem:[%s7 + $0x38] sm:$0xf]
        %v4295 = vld [vmem:[%s7 + $0x3c] sm:$0xf]
        %v4312 = vunpack.c.l.b16 %v4280
        %v4313 = vunpack.c.l.b16 %v4281
        %v4314 = vunpack.c.l.b16 %v4282
        %v4315 = vunpack.c.l.b16 %v4283
        %v4316 = vunpack.c.l.b16 %v4284
        %v4317 = vunpack.c.l.b16 %v4285
        %v4318 = vunpack.c.l.b16 %v4286
        %v4319 = vunpack.c.l.b16 %v4287
        %v4320 = vunpack.c.l.b16 %v4288
        %v4321 = vunpack.c.l.b16 %v4289
        %v4322 = vunpack.c.l.b16 %v4290
        %v4323 = vunpack.c.l.b16 %v4291
        %v4324 = vunpack.c.l.b16 %v4292
        %v4325 = vunpack.c.l.b16 %v4293
        %v4326 = vunpack.c.l.b16 %v4294
        %v4327 = vunpack.c.l.b16 %v4295
        %v4328 = vpack.c.b16 %v4313, %v4312
        %v4329 = vpack.c.b16 %v4315, %v4314
        %v4330 = vpack.c.b16 %v4317, %v4316
        %v4331 = vpack.c.b16 %v4319, %v4318
        %v4332 = vpack.c.b16 %v4321, %v4320
        %v4333 = vpack.c.b16 %v4323, %v4322
        %v4334 = vpack.c.b16 %v4325, %v4324
        %v4335 = vpack.c.b16 %v4327, %v4326
        %4344 = vmatprep.subr.bf16.mxu0 0
        %4345 = vmatpush1.bf16.msra.mxu0 %v4335
        %4346 = vmatprep.subr.bf16.mxu0 0
        %4347 = vmatpush1.bf16.msra.mxu0 %v4334
        %4348 = vmatprep.subr.bf16.mxu0 0
        %4349 = vmatpush1.bf16.msra.mxu0 %v4333
        %4350 = vmatprep.subr.bf16.mxu0 0
        %4351 = vmatpush1.bf16.msra.mxu0 %v4332
        %4352 = vmatprep.subr.bf16.mxu0 0
        %4353 = vmatpush1.bf16.msra.mxu0 %v4331
        %4354 = vmatprep.subr.bf16.mxu0 0
        %4355 = vmatpush1.bf16.msra.mxu0 %v4330
        %4356 = vmatprep.subr.bf16.mxu0 0
        %4357 = vmatpush1.bf16.msra.mxu0 %v4329
        %4358 = vmatprep.subr.bf16.mxu0 0
        %4359 = vmatpush1.bf16.msra.mxu0 %v4328
        %4360 = vmatprep.subr.bf16.mxu0 0
        %4361 = vmatpush2.bf16.msra.mxu0 0
        %4362 = vmatprep.subr.bf16.mxu0 0
        %4363 = vmatpush2.bf16.msra.mxu0 0
        %4364 = vmatprep.subr.bf16.mxu0 0
        %4365 = vmatpush2.bf16.msra.mxu0 0
        %4366 = vmatprep.subr.bf16.mxu0 0
        %4367 = vmatpush2.bf16.msra.mxu0 0
        %4368 = vmatprep.subr.bf16.mxu0 0
        %4369 = vmatpush2.bf16.msra.mxu0 0
        %4370 = vmatprep.subr.bf16.mxu0 0
        %4371 = vmatpush2.bf16.msra.mxu0 0
        %4372 = vmatprep.subr.bf16.mxu0 0
        %4373 = vmatpush2.bf16.msra.mxu0 0
        %4374 = vmatprep.subr.bf16.mxu0 0
        %4375 = vmatpush2.bf16.msra.mxu0 0
        %4376 = vmatprep.mubr.bf16.mxu0 0
        %4377 = vmatmul.mubr.bf16.gmra.mxu0 %v4276
        %v4378 = vpop.f32.mrf.mxu0
        %v4379 = vadd.f32 0.0, %v4378
        %v4380 = vpop.f32.mrf.mxu0
        %v4381 = vpop.f32.mrf.mxu0
        %v4382 = vadd.f32 0.0, %v4381
        %v4383 = vpop.f32.mrf.mxu0
        %4384 = vmatprep.mubr.bf16.mxu0 0
        %4385 = vmatmul.mubr.bf16.gmra.mxu0 %v4277
        %v4386 = vpop.f32.mrf.mxu0
        %v4387 = vadd.f32 0.0, %v4386
        %v4388 = vpop.f32.mrf.mxu0
        %v4389 = vpop.f32.mrf.mxu0
        %v4390 = vadd.f32 0.0, %v4389
        %v4391 = vpop.f32.mrf.mxu0
        %4392 = vmatprep.mubr.bf16.mxu0 0
        %4393 = vmatmul.mubr.bf16.gmra.mxu0 %v4278
        %v4394 = vpop.f32.mrf.mxu0
        %v4395 = vadd.f32 0.0, %v4394
        %v4396 = vpop.f32.mrf.mxu0
        %v4397 = vpop.f32.mrf.mxu0
        %v4398 = vadd.f32 0.0, %v4397
        %v4399 = vpop.f32.mrf.mxu0
        %4400 = vmatprep.mubr.bf16.mxu0 0
        %4401 = vmatmul.mubr.bf16.gmra.mxu0 %v4279
        %v4402 = vpop.f32.mrf.mxu0
        %v4403 = vadd.f32 0.0, %v4402
        %v4404 = vpop.f32.mrf.mxu0
        %v4405 = vpop.f32.mrf.mxu0
        %v4406 = vadd.f32 0.0, %v4405
        %v4407 = vpop.f32.mrf.mxu0
        %4408 = vdwg.mxu0
        %v4409 = vld [vmem:[%s5 + $0x9] sm:$0x1]
        %v4410 = vlaneseq
        %v4411 = vshrl.u32 %v4410, 7
        %v4412 = vsub.s32 0, %v4411
        %v4413 = vrot.slane %v4409, %v4412
        %v4414 = vmul.f32 %v4379, %v4413
        %v4415 = vmul.f32 %v4382, %v4413
        %v4416 = vmul.f32 %v4387, %v4413
        %v4417 = vmul.f32 %v4390, %v4413
        %v4418 = vmul.f32 %v4395, %v4413
        %v4419 = vmul.f32 %v4398, %v4413
        %v4420 = vmul.f32 %v4403, %v4413
        %v4421 = vmul.f32 %v4406, %v4413
        %v4422 = vld [vmem:[%s5 + $0xa] sm:$0x1]
        %v4423 = vlaneseq
        %v4424 = vshrl.u32 %v4423, 7
        %v4425 = vsub.s32 0, %v4424
        %v4426 = vrot.slane %v4422, %v4425
        %v4427 = vadd.f32 %v4414, %v4426
        %v4428 = vadd.f32 %v4415, %v4426
        %v4429 = vadd.f32 %v4416, %v4426
        %v4430 = vadd.f32 %v4417, %v4426
        %v4431 = vadd.f32 %v4418, %v4426
        %v4432 = vadd.f32 %v4419, %v4426
        %v4433 = vadd.f32 %v4420, %v4426
        %v4434 = vadd.f32 %v4421, %v4426
        %v4435 = vmax.f32 %v4427, 0.0
        %v4436 = vmax.f32 %v4428, 0.0
        %v4437 = vmax.f32 %v4429, 0.0
        %v4438 = vmax.f32 %v4430, 0.0
        %v4439 = vmax.f32 %v4431, 0.0
        %v4440 = vmax.f32 %v4432, 0.0
        %v4441 = vmax.f32 %v4433, 0.0
        %v4442 = vmax.f32 %v4434, 0.0
        %v4443 = vld [vmem:[%s8] sm:$0xf]
        %v4444 = vld [vmem:[%s8 + $0x4] sm:$0xf]
        %v4445 = vld [vmem:[%s8 + $0x8] sm:$0xf]
        %v4446 = vld [vmem:[%s8 + $0xc] sm:$0xf]
        %v4447 = vld [vmem:[%s8 + $0x10] sm:$0xf]
        %v4448 = vld [vmem:[%s8 + $0x14] sm:$0xf]
        %v4449 = vld [vmem:[%s8 + $0x18] sm:$0xf]
        %v4450 = vld [vmem:[%s8 + $0x1c] sm:$0xf]
        %v4451 = vld [vmem:[%s8 + $0x20] sm:$0xf]
        %v4452 = vld [vmem:[%s8 + $0x24] sm:$0xf]
        %v4453 = vld [vmem:[%s8 + $0x28] sm:$0xf]
        %v4454 = vld [vmem:[%s8 + $0x2c] sm:$0xf]
        %v4455 = vld [vmem:[%s8 + $0x30] sm:$0xf]
        %v4456 = vld [vmem:[%s8 + $0x34] sm:$0xf]
        %v4457 = vld [vmem:[%s8 + $0x38] sm:$0xf]
        %v4458 = vld [vmem:[%s8 + $0x3c] sm:$0xf]
        %v4459 = vpack.c.bf16 %v4436, %v4435
        %v4460 = vpack.c.bf16 %v4438, %v4437
        %v4461 = vpack.c.bf16 %v4440, %v4439
        %v4462 = vpack.c.bf16 %v4442, %v4441
        %v4479 = vunpack.c.l.b16 %v4443
        %v4480 = vunpack.c.l.b16 %v4444
        %v4481 = vunpack.c.l.b16 %v4445
        %v4482 = vunpack.c.l.b16 %v4446
        %v4483 = vunpack.c.l.b16 %v4447
        %v4484 = vunpack.c.l.b16 %v4448
        %v4485 = vunpack.c.l.b16 %v4449
        %v4486 = vunpack.c.l.b16 %v4450
        %v4487 = vunpack.c.l.b16 %v4451
        %v4488 = vunpack.c.l.b16 %v4452
        %v4489 = vunpack.c.l.b16 %v4453
        %v4490 = vunpack.c.l.b16 %v4454
        %v4491 = vunpack.c.l.b16 %v4455
        %v4492 = vunpack.c.l.b16 %v4456
        %v4493 = vunpack.c.l.b16 %v4457
        %v4494 = vunpack.c.l.b16 %v4458
        %v4495 = vpack.c.b16 %v4480, %v4479
        %v4496 = vpack.c.b16 %v4482, %v4481
        %v4497 = vpack.c.b16 %v4484, %v4483
        %v4498 = vpack.c.b16 %v4486, %v4485
        %v4499 = vpack.c.b16 %v4488, %v4487
        %v4500 = vpack.c.b16 %v4490, %v4489
        %v4501 = vpack.c.b16 %v4492, %v4491
        %v4502 = vpack.c.b16 %v4494, %v4493
        %vm4503 = vcmask 523264
        %v4505 = vsel %vm4503, %v4495, 0
        %v4508 = vsel %vm4503, %v4496, 0
        %v4511 = vsel %vm4503, %v4497, 0
        %v4514 = vsel %vm4503, %v4498, 0
        %v4517 = vsel %vm4503, %v4499, 0
        %v4520 = vsel %vm4503, %v4500, 0
        %v4523 = vsel %vm4503, %v4501, 0
        %v4526 = vsel %vm4503, %v4502, 0
        %4528 = vmatprep.subr.bf16.mxu0 0
        %4529 = vmatpush1.bf16.msra.mxu0 0
        %4530 = vmatprep.subr.bf16.mxu0 0
        %4531 = vmatpush1.bf16.msra.mxu0 0
        %4532 = vmatprep.subr.bf16.mxu0 0
        %4533 = vmatpush1.bf16.msra.mxu0 0
        %4534 = vmatprep.subr.bf16.mxu0 0
        %4535 = vmatpush1.bf16.msra.mxu0 0
        %4536 = vmatprep.subr.bf16.mxu0 0
        %4537 = vmatpush1.bf16.msra.mxu0 %v4462
        %4538 = vmatprep.subr.bf16.mxu0 0
        %4539 = vmatpush1.bf16.msra.mxu0 %v4461
        %4540 = vmatprep.subr.bf16.mxu0 0
        %4541 = vmatpush1.bf16.msra.mxu0 %v4460
        %4542 = vmatprep.subr.bf16.mxu0 0
        %4543 = vmatpush1.bf16.msra.mxu0 %v4459
        %4544 = vmatprep.subr.bf16.mxu0 0
        %4545 = vmatpush2.bf16.msra.mxu0 0
        %4546 = vmatprep.subr.bf16.mxu0 0
        %4547 = vmatpush2.bf16.msra.mxu0 0
        %4548 = vmatprep.subr.bf16.mxu0 0
        %4549 = vmatpush2.bf16.msra.mxu0 0
        %4550 = vmatprep.subr.bf16.mxu0 0
        %4551 = vmatpush2.bf16.msra.mxu0 0
        %4552 = vmatprep.subr.bf16.mxu0 0
        %4553 = vmatpush2.bf16.msra.mxu0 0
        %4554 = vmatprep.subr.bf16.mxu0 0
        %4555 = vmatpush2.bf16.msra.mxu0 0
        %4556 = vmatprep.subr.bf16.mxu0 0
        %4557 = vmatpush2.bf16.msra.mxu0 0
        %4558 = vmatprep.subr.bf16.mxu0 0
        %4559 = vmatpush2.bf16.msra.mxu0 0
        %4560 = vmatprep.mubr.bf16.mxu0 0
        %4561 = vmatmul.mubr.bf16.gmra.mxu0 %v4505
        %v4562 = vpop.f32.mrf.mxu0
        %v4563 = vadd.f32 0.0, %v4562
        %v4564 = vpop.f32.mrf.mxu0
        %v4565 = vpop.f32.mrf.mxu0
        %v4566 = vadd.f32 0.0, %v4565
        %v4567 = vpop.f32.mrf.mxu0
        %4568 = vmatprep.mubr.bf16.mxu0 0
        %4569 = vmatmul.mubr.bf16.gmra.mxu0 %v4508
        %v4570 = vpop.f32.mrf.mxu0
        %v4571 = vadd.f32 0.0, %v4570
        %v4572 = vpop.f32.mrf.mxu0
        %v4573 = vpop.f32.mrf.mxu0
        %v4574 = vadd.f32 0.0, %v4573
        %v4575 = vpop.f32.mrf.mxu0
        %4576 = vmatprep.mubr.bf16.mxu0 0
        %4577 = vmatmul.mubr.bf16.gmra.mxu0 %v4511
        %v4578 = vpop.f32.mrf.mxu0
        %v4579 = vadd.f32 0.0, %v4578
        %v4580 = vpop.f32.mrf.mxu0
        %v4581 = vpop.f32.mrf.mxu0
        %v4582 = vadd.f32 0.0, %v4581
        %v4583 = vpop.f32.mrf.mxu0
        %4584 = vmatprep.mubr.bf16.mxu0 0
        %4585 = vmatmul.mubr.bf16.gmra.mxu0 %v4514
        %v4586 = vpop.f32.mrf.mxu0
        %v4587 = vadd.f32 0.0, %v4586
        %v4588 = vpop.f32.mrf.mxu0
        %v4589 = vpop.f32.mrf.mxu0
        %v4590 = vadd.f32 0.0, %v4589
        %v4591 = vpop.f32.mrf.mxu0
        %4592 = vmatprep.mubr.bf16.mxu0 0
        %4593 = vmatmul.mubr.bf16.gmra.mxu0 %v4517
        %v4594 = vpop.f32.mrf.mxu0
        %v4595 = vadd.f32 0.0, %v4594
        %v4596 = vpop.f32.mrf.mxu0
        %v4597 = vpop.f32.mrf.mxu0
        %v4598 = vadd.f32 0.0, %v4597
        %v4599 = vpop.f32.mrf.mxu0
        %4600 = vmatprep.mubr.bf16.mxu0 0
        %4601 = vmatmul.mubr.bf16.gmra.mxu0 %v4520
        %v4602 = vpop.f32.mrf.mxu0
        %v4603 = vadd.f32 0.0, %v4602
        %v4604 = vpop.f32.mrf.mxu0
        %v4605 = vpop.f32.mrf.mxu0
        %v4606 = vadd.f32 0.0, %v4605
        %v4607 = vpop.f32.mrf.mxu0
        %4608 = vmatprep.mubr.bf16.mxu0 0
        %4609 = vmatmul.mubr.bf16.gmra.mxu0 %v4523
        %v4610 = vpop.f32.mrf.mxu0
        %v4611 = vadd.f32 0.0, %v4610
        %v4612 = vpop.f32.mrf.mxu0
        %v4613 = vpop.f32.mrf.mxu0
        %v4614 = vadd.f32 0.0, %v4613
        %v4615 = vpop.f32.mrf.mxu0
        %4616 = vmatprep.mubr.bf16.mxu0 0
        %4617 = vmatmul.mubr.bf16.gmra.mxu0 %v4526
        %v4618 = vpop.f32.mrf.mxu0
        %v4619 = vadd.f32 0.0, %v4618
        %v4620 = vpop.f32.mrf.mxu0
        %v4621 = vpop.f32.mrf.mxu0
        %v4622 = vadd.f32 0.0, %v4621
        %v4623 = vpop.f32.mrf.mxu0
        %4624 = vdwg.mxu0
        %v4625 = vpack.c.bf16 %v4164, %v4163
        %v4626 = vpack.c.bf16 %v4166, %v4165
        %v4627 = vpack.c.bf16 %v4168, %v4167
        %v4628 = vpack.c.bf16 %v4170, %v4169
        %v4629 = vpack.c.bf16 %v4172, %v4171
        %v4630 = vpack.c.bf16 %v4174, %v4173
        %v4631 = vpack.c.bf16 %v4176, %v4175
        %v4632 = vpack.c.bf16 %v4178, %v4177
        %v4633 = vld [vmem:[%s4] sm:$0xf]
        %v4634 = vld [vmem:[%s4 + $0x4] sm:$0xf]
        %v4635 = vld [vmem:[%s4 + $0x8] sm:$0xf]
        %v4636 = vld [vmem:[%s4 + $0xc] sm:$0xf]
        %v4637 = vld [vmem:[%s4 + $0x10] sm:$0xf]
        %v4638 = vld [vmem:[%s4 + $0x14] sm:$0xf]
        %v4639 = vld [vmem:[%s4 + $0x18] sm:$0xf]
        %v4640 = vld [vmem:[%s4 + $0x1c] sm:$0xf]
        %v4641 = vld [vmem:[%s4 + $0x20] sm:$0xf]
        %v4642 = vld [vmem:[%s4 + $0x24] sm:$0xf]
        %v4643 = vld [vmem:[%s4 + $0x28] sm:$0xf]
        %v4644 = vld [vmem:[%s4 + $0x2c] sm:$0xf]
        %v4645 = vld [vmem:[%s4 + $0x30] sm:$0xf]
        %v4646 = vld [vmem:[%s4 + $0x34] sm:$0xf]
        %v4647 = vld [vmem:[%s4 + $0x38] sm:$0xf]
        %v4648 = vld [vmem:[%s4 + $0x3c] sm:$0xf]
        %v4649 = vpack.c.bf16 %v4566, %v4563
        %v4650 = vpack.c.bf16 %v4574, %v4571
        %v4651 = vpack.c.bf16 %v4582, %v4579
        %v4652 = vpack.c.bf16 %v4590, %v4587
        %v4653 = vpack.c.bf16 %v4598, %v4595
        %v4654 = vpack.c.bf16 %v4606, %v4603
        %v4655 = vpack.c.bf16 %v4614, %v4611
        %v4656 = vpack.c.bf16 %v4622, %v4619
        %v4657 = vld [vmem:[%s9] sm:$0xf]
        %v4658 = vld [vmem:[%s9 + $0x4] sm:$0xf]
        %v4659 = vld [vmem:[%s9 + $0x8] sm:$0xf]
        %v4660 = vld [vmem:[%s9 + $0xc] sm:$0xf]
        %v4665 = vunpack.c.l.b16 %v4657
        %v4666 = vunpack.c.l.b16 %v4658
        %v4667 = vunpack.c.l.b16 %v4659
        %v4668 = vunpack.c.l.b16 %v4660
        %v4669 = vpack.c.b16 %v4666, %v4665
        %v4670 = vpack.c.b16 %v4668, %v4667
        %vm4673 = vcmask 261120
        %v4675 = vsel %vm4673, %v4649, 0
        %v4678 = vsel %vm4673, %v4650, 0
        %v4681 = vsel %vm4673, %v4651, 0
        %v4684 = vsel %vm4673, %v4652, 0
        %v4687 = vsel %vm4673, %v4653, 0
        %v4690 = vsel %vm4673, %v4654, 0
        %v4693 = vsel %vm4673, %v4655, 0
        %v4696 = vsel %vm4673, %v4656, 0
        %4698 = vmatprep.subr.bf16.mxu0 0
        %4699 = vmatpush1.bf16.msra.mxu0 0
        %4700 = vmatprep.subr.bf16.mxu0 0
        %4701 = vmatpush1.bf16.msra.mxu0 0
        %4702 = vmatprep.subr.bf16.mxu0 0
        %4703 = vmatpush1.bf16.msra.mxu0 0
        %4704 = vmatprep.subr.bf16.mxu0 0
        %4705 = vmatpush1.bf16.msra.mxu0 0
        %4706 = vmatprep.subr.bf16.mxu0 0
        %4707 = vmatpush1.bf16.msra.mxu0 0
        %4708 = vmatprep.subr.bf16.mxu0 0
        %4709 = vmatpush1.bf16.msra.mxu0 0
        %4710 = vmatprep.subr.bf16.mxu0 0
        %4711 = vmatpush1.bf16.msra.mxu0 %v4670
        %4712 = vmatprep.subr.bf16.mxu0 0
        %4713 = vmatpush1.bf16.msra.mxu0 %v4669
        %4714 = vmatprep.subr.bf16.mxu0 0
        %4715 = vmatpush2.bf16.msra.mxu0 0
        %4716 = vmatprep.subr.bf16.mxu0 0
        %4717 = vmatpush2.bf16.msra.mxu0 0
        %4718 = vmatprep.subr.bf16.mxu0 0
        %4719 = vmatpush2.bf16.msra.mxu0 0
        %4720 = vmatprep.subr.bf16.mxu0 0
        %4721 = vmatpush2.bf16.msra.mxu0 0
        %4722 = vmatprep.subr.bf16.mxu0 0
        %4723 = vmatpush2.bf16.msra.mxu0 0
        %4724 = vmatprep.subr.bf16.mxu0 0
        %4725 = vmatpush2.bf16.msra.mxu0 0
        %4726 = vmatprep.subr.bf16.mxu0 0
        %4727 = vmatpush2.bf16.msra.mxu0 0
        %4728 = vmatprep.subr.bf16.mxu0 0
        %4729 = vmatpush2.bf16.msra.mxu0 0
        %4730 = vmatprep.mubr.bf16.mxu0 0
        %4731 = vmatmul.mubr.bf16.gmra.mxu0 %v4675
        %v4732 = vpop.f32.mrf.mxu0
        %v4733 = vadd.f32 0.0, %v4732
        %v4734 = vpop.f32.mrf.mxu0
        %v4735 = vpop.f32.mrf.mxu0
        %v4736 = vadd.f32 0.0, %v4735
        %v4737 = vpop.f32.mrf.mxu0
        %4738 = vmatprep.mubr.bf16.mxu0 0
        %4739 = vmatmul.mubr.bf16.gmra.mxu0 %v4678
        %v4740 = vpop.f32.mrf.mxu0
        %v4741 = vadd.f32 0.0, %v4740
        %v4742 = vpop.f32.mrf.mxu0
        %v4743 = vpop.f32.mrf.mxu0
        %v4744 = vadd.f32 0.0, %v4743
        %v4745 = vpop.f32.mrf.mxu0
        %4746 = vmatprep.mubr.bf16.mxu0 0
        %4747 = vmatmul.mubr.bf16.gmra.mxu0 %v4681
        %v4748 = vpop.f32.mrf.mxu0
        %v4749 = vadd.f32 0.0, %v4748
        %v4750 = vpop.f32.mrf.mxu0
        %v4751 = vpop.f32.mrf.mxu0
        %v4752 = vadd.f32 0.0, %v4751
        %v4753 = vpop.f32.mrf.mxu0
        %4754 = vmatprep.mubr.bf16.mxu0 0
        %4755 = vmatmul.mubr.bf16.gmra.mxu0 %v4684
        %v4756 = vpop.f32.mrf.mxu0
        %v4757 = vadd.f32 0.0, %v4756
        %v4758 = vpop.f32.mrf.mxu0
        %v4759 = vpop.f32.mrf.mxu0
        %v4760 = vadd.f32 0.0, %v4759
        %v4761 = vpop.f32.mrf.mxu0
        %4762 = vmatprep.mubr.bf16.mxu0 0
        %4763 = vmatmul.mubr.bf16.gmra.mxu0 %v4687
        %v4764 = vpop.f32.mrf.mxu0
        %v4765 = vadd.f32 0.0, %v4764
        %v4766 = vpop.f32.mrf.mxu0
        %v4767 = vpop.f32.mrf.mxu0
        %v4768 = vadd.f32 0.0, %v4767
        %v4769 = vpop.f32.mrf.mxu0
        %4770 = vmatprep.mubr.bf16.mxu0 0
        %4771 = vmatmul.mubr.bf16.gmra.mxu0 %v4690
        %v4772 = vpop.f32.mrf.mxu0
        %v4773 = vadd.f32 0.0, %v4772
        %v4774 = vpop.f32.mrf.mxu0
        %v4775 = vpop.f32.mrf.mxu0
        %v4776 = vadd.f32 0.0, %v4775
        %v4777 = vpop.f32.mrf.mxu0
        %4778 = vmatprep.mubr.bf16.mxu0 0
        %4779 = vmatmul.mubr.bf16.gmra.mxu0 %v4693
        %v4780 = vpop.f32.mrf.mxu0
        %v4781 = vadd.f32 0.0, %v4780
        %v4782 = vpop.f32.mrf.mxu0
        %v4783 = vpop.f32.mrf.mxu0
        %v4784 = vadd.f32 0.0, %v4783
        %v4785 = vpop.f32.mrf.mxu0
        %4786 = vmatprep.mubr.bf16.mxu0 0
        %4787 = vmatmul.mubr.bf16.gmra.mxu0 %v4696
        %v4788 = vpop.f32.mrf.mxu0
        %v4789 = vadd.f32 0.0, %v4788
        %v4790 = vpop.f32.mrf.mxu0
        %v4791 = vpop.f32.mrf.mxu0
        %v4792 = vadd.f32 0.0, %v4791
        %v4793 = vpop.f32.mrf.mxu0
        %4794 = vdwg.mxu0
        %v4811 = vunpack.c.l.b16 %v4633
        %v4812 = vunpack.c.l.b16 %v4634
        %v4813 = vunpack.c.l.b16 %v4635
        %v4814 = vunpack.c.l.b16 %v4636
        %v4815 = vunpack.c.l.b16 %v4637
        %v4816 = vunpack.c.l.b16 %v4638
        %v4817 = vunpack.c.l.b16 %v4639
        %v4818 = vunpack.c.l.b16 %v4640
        %v4819 = vunpack.c.l.b16 %v4641
        %v4820 = vunpack.c.l.b16 %v4642
        %v4821 = vunpack.c.l.b16 %v4643
        %v4822 = vunpack.c.l.b16 %v4644
        %v4823 = vunpack.c.l.b16 %v4645
        %v4824 = vunpack.c.l.b16 %v4646
        %v4825 = vunpack.c.l.b16 %v4647
        %v4826 = vunpack.c.l.b16 %v4648
        %v4827 = vpack.c.b16 %v4812, %v4811
        %v4828 = vpack.c.b16 %v4814, %v4813
        %v4829 = vpack.c.b16 %v4816, %v4815
        %v4830 = vpack.c.b16 %v4818, %v4817
        %v4831 = vpack.c.b16 %v4820, %v4819
        %v4832 = vpack.c.b16 %v4822, %v4821
        %v4833 = vpack.c.b16 %v4824, %v4823
        %v4834 = vpack.c.b16 %v4826, %v4825
        %4843 = vmatprep.subr.bf16.mxu0 0
        %4844 = vmatpush1.bf16.msra.mxu0 %v4834
        %4845 = vmatprep.subr.bf16.mxu0 0
        %4846 = vmatpush1.bf16.msra.mxu0 %v4833
        %4847 = vmatprep.subr.bf16.mxu0 0
        %4848 = vmatpush1.bf16.msra.mxu0 %v4832
        %4849 = vmatprep.subr.bf16.mxu0 0
        %4850 = vmatpush1.bf16.msra.mxu0 %v4831
        %4851 = vmatprep.subr.bf16.mxu0 0
        %4852 = vmatpush1.bf16.msra.mxu0 %v4830
        %4853 = vmatprep.subr.bf16.mxu0 0
        %4854 = vmatpush1.bf16.msra.mxu0 %v4829
        %4855 = vmatprep.subr.bf16.mxu0 0
        %4856 = vmatpush1.bf16.msra.mxu0 %v4828
        %4857 = vmatprep.subr.bf16.mxu0 0
        %4858 = vmatpush1.bf16.msra.mxu0 %v4827
        %4859 = vmatprep.subr.bf16.mxu0 0
        %4860 = vmatpush2.bf16.msra.mxu0 0
        %4861 = vmatprep.subr.bf16.mxu0 0
        %4862 = vmatpush2.bf16.msra.mxu0 0
        %4863 = vmatprep.subr.bf16.mxu0 0
        %4864 = vmatpush2.bf16.msra.mxu0 0
        %4865 = vmatprep.subr.bf16.mxu0 0
        %4866 = vmatpush2.bf16.msra.mxu0 0
        %4867 = vmatprep.subr.bf16.mxu0 0
        %4868 = vmatpush2.bf16.msra.mxu0 0
        %4869 = vmatprep.subr.bf16.mxu0 0
        %4870 = vmatpush2.bf16.msra.mxu0 0
        %4871 = vmatprep.subr.bf16.mxu0 0
        %4872 = vmatpush2.bf16.msra.mxu0 0
        %4873 = vmatprep.subr.bf16.mxu0 0
        %4874 = vmatpush2.bf16.msra.mxu0 0
        %4875 = vmatprep.mubr.bf16.mxu0 0
        %4876 = vmatmul.mubr.bf16.gmra.mxu0 %v4625
        %v4877 = vpop.f32.mrf.mxu0
        %v4878 = vadd.f32 %v4733, %v4877
        %v4879 = vpop.f32.mrf.mxu0
        %v4880 = vpop.f32.mrf.mxu0
        %v4881 = vadd.f32 %v4736, %v4880
        %v4882 = vpop.f32.mrf.mxu0
        %4883 = vmatprep.mubr.bf16.mxu0 0
        %4884 = vmatmul.mubr.bf16.gmra.mxu0 %v4626
        %v4885 = vpop.f32.mrf.mxu0
        %v4886 = vadd.f32 %v4741, %v4885
        %v4887 = vpop.f32.mrf.mxu0
        %v4888 = vpop.f32.mrf.mxu0
        %v4889 = vadd.f32 %v4744, %v4888
        %v4890 = vpop.f32.mrf.mxu0
        %4891 = vmatprep.mubr.bf16.mxu0 0
        %4892 = vmatmul.mubr.bf16.gmra.mxu0 %v4627
        %v4893 = vpop.f32.mrf.mxu0
        %v4894 = vadd.f32 %v4749, %v4893
        %v4895 = vpop.f32.mrf.mxu0
        %v4896 = vpop.f32.mrf.mxu0
        %v4897 = vadd.f32 %v4752, %v4896
        %v4898 = vpop.f32.mrf.mxu0
        %4899 = vmatprep.mubr.bf16.mxu0 0
        %4900 = vmatmul.mubr.bf16.gmra.mxu0 %v4628
        %v4901 = vpop.f32.mrf.mxu0
        %v4902 = vadd.f32 %v4757, %v4901
        %v4903 = vpop.f32.mrf.mxu0
        %v4904 = vpop.f32.mrf.mxu0
        %v4905 = vadd.f32 %v4760, %v4904
        %v4906 = vpop.f32.mrf.mxu0
        %4907 = vmatprep.mubr.bf16.mxu0 0
        %4908 = vmatmul.mubr.bf16.gmra.mxu0 %v4629
        %v4909 = vpop.f32.mrf.mxu0
        %v4910 = vadd.f32 %v4765, %v4909
        %v4911 = vpop.f32.mrf.mxu0
        %v4912 = vpop.f32.mrf.mxu0
        %v4913 = vadd.f32 %v4768, %v4912
        %v4914 = vpop.f32.mrf.mxu0
        %4915 = vmatprep.mubr.bf16.mxu0 0
        %4916 = vmatmul.mubr.bf16.gmra.mxu0 %v4630
        %v4917 = vpop.f32.mrf.mxu0
        %v4918 = vadd.f32 %v4773, %v4917
        %v4919 = vpop.f32.mrf.mxu0
        %v4920 = vpop.f32.mrf.mxu0
        %v4921 = vadd.f32 %v4776, %v4920
        %v4922 = vpop.f32.mrf.mxu0
        %4923 = vmatprep.mubr.bf16.mxu0 0
        %4924 = vmatmul.mubr.bf16.gmra.mxu0 %v4631
        %v4925 = vpop.f32.mrf.mxu0
        %v4926 = vadd.f32 %v4781, %v4925
        %v4927 = vpop.f32.mrf.mxu0
        %v4928 = vpop.f32.mrf.mxu0
        %v4929 = vadd.f32 %v4784, %v4928
        %v4930 = vpop.f32.mrf.mxu0
        %4931 = vmatprep.mubr.bf16.mxu0 0
        %4932 = vmatmul.mubr.bf16.gmra.mxu0 %v4632
        %v4933 = vpop.f32.mrf.mxu0
        %v4934 = vadd.f32 %v4789, %v4933
        %v4935 = vpop.f32.mrf.mxu0
        %v4936 = vpop.f32.mrf.mxu0
        %v4937 = vadd.f32 %v4792, %v4936
        %v4938 = vpop.f32.mrf.mxu0
        %4939 = vdwg.mxu0
        %v4940 = vld [vmem:[%s5 + $0x8] sm:$0x1]
        %v4941 = vlaneseq
        %v4942 = vshrl.u32 %v4941, 7
        %v4943 = vsub.s32 0, %v4942
        %v4944 = vrot.slane %v4940, %v4943
        %v4945 = vadd.f32 %v4878, %v4944
        %v4946 = vadd.f32 %v4881, %v4944
        %v4947 = vadd.f32 %v4886, %v4944
        %v4948 = vadd.f32 %v4889, %v4944
        %v4949 = vadd.f32 %v4894, %v4944
        %v4950 = vadd.f32 %v4897, %v4944
        %v4951 = vadd.f32 %v4902, %v4944
        %v4952 = vadd.f32 %v4905, %v4944
        %v4953 = vadd.f32 %v4910, %v4944
        %v4954 = vadd.f32 %v4913, %v4944
        %v4955 = vadd.f32 %v4918, %v4944
        %v4956 = vadd.f32 %v4921, %v4944
        %v4957 = vadd.f32 %v4926, %v4944
        %v4958 = vadd.f32 %v4929, %v4944
        %v4959 = vadd.f32 %v4934, %v4944
        %v4960 = vadd.f32 %v4937, %v4944
        %v4961 = vpack.c.bf16 %v4946, %v4945
        %v4962 = vpack.c.bf16 %v4948, %v4947
        %v4963 = vpack.c.bf16 %v4950, %v4949
        %v4964 = vpack.c.bf16 %v4952, %v4951
        %v4965 = vpack.c.bf16 %v4954, %v4953
        %v4966 = vpack.c.bf16 %v4956, %v4955
        %v4967 = vpack.c.bf16 %v4958, %v4957
        %v4968 = vpack.c.bf16 %v4960, %v4959
        %s4969 = scalar_lea.vmem [#allocation7], 192
        %v4970 = vld [vmem:[%s4969] sm:$0xf]
        %v4971 = vld [vmem:[%s4969 + $0x4] sm:$0xf]
        %v4972 = vld [vmem:[%s4969 + $0x8] sm:$0xf]
        %v4973 = vld [vmem:[%s4969 + $0xc] sm:$0xf]
        %v4974 = vld [vmem:[%s4969 + $0x10] sm:$0xf]
        %v4975 = vld [vmem:[%s4969 + $0x14] sm:$0xf]
        %v4976 = vld [vmem:[%s4969 + $0x18] sm:$0xf]
        %v4977 = vld [vmem:[%s4969 + $0x1c] sm:$0xf]
        %v4978 = vld [vmem:[%s4969 + $0x20] sm:$0xf]
        %v4979 = vld [vmem:[%s4969 + $0x24] sm:$0xf]
        %v4980 = vld [vmem:[%s4969 + $0x28] sm:$0xf]
        %v4981 = vld [vmem:[%s4969 + $0x2c] sm:$0xf]
        %v4982 = vld [vmem:[%s4969 + $0x30] sm:$0xf]
        %v4983 = vld [vmem:[%s4969 + $0x34] sm:$0xf]
        %v4984 = vld [vmem:[%s4969 + $0x38] sm:$0xf]
        %v4985 = vld [vmem:[%s4969 + $0x3c] sm:$0xf]
        %s4986 = scalar_lea.vmem [#allocation7], 256
        %v4987 = vld [vmem:[%s4986] sm:$0xf]
        %v4988 = vld [vmem:[%s4986 + $0x4] sm:$0xf]
        %v4989 = vld [vmem:[%s4986 + $0x8] sm:$0xf]
        %v4990 = vld [vmem:[%s4986 + $0xc] sm:$0xf]
        %v4991 = vld [vmem:[%s4986 + $0x10] sm:$0xf]
        %v4992 = vld [vmem:[%s4986 + $0x14] sm:$0xf]
        %v4993 = vld [vmem:[%s4986 + $0x18] sm:$0xf]
        %v4994 = vld [vmem:[%s4986 + $0x1c] sm:$0xf]
        %v4995 = vld [vmem:[%s4986 + $0x20] sm:$0xf]
        %v4996 = vld [vmem:[%s4986 + $0x24] sm:$0xf]
        %v4997 = vld [vmem:[%s4986 + $0x28] sm:$0xf]
        %v4998 = vld [vmem:[%s4986 + $0x2c] sm:$0xf]
        %v4999 = vld [vmem:[%s4986 + $0x30] sm:$0xf]
        %v5000 = vld [vmem:[%s4986 + $0x34] sm:$0xf]
        %v5001 = vld [vmem:[%s4986 + $0x38] sm:$0xf]
        %v5002 = vld [vmem:[%s4986 + $0x3c] sm:$0xf]
        %s5003 = scalar_lea.vmem [#allocation7], 320
        %v5004 = vld [vmem:[%s5003] sm:$0xf]
        %v5005 = vld [vmem:[%s5003 + $0x4] sm:$0xf]
        %v5006 = vld [vmem:[%s5003 + $0x8] sm:$0xf]
        %v5007 = vld [vmem:[%s5003 + $0xc] sm:$0xf]
        %v5008 = vld [vmem:[%s5003 + $0x10] sm:$0xf]
        %v5009 = vld [vmem:[%s5003 + $0x14] sm:$0xf]
        %v5010 = vld [vmem:[%s5003 + $0x18] sm:$0xf]
        %v5011 = vld [vmem:[%s5003 + $0x1c] sm:$0xf]
        %v5012 = vld [vmem:[%s5003 + $0x20] sm:$0xf]
        %v5013 = vld [vmem:[%s5003 + $0x24] sm:$0xf]
        %v5014 = vld [vmem:[%s5003 + $0x28] sm:$0xf]
        %v5015 = vld [vmem:[%s5003 + $0x2c] sm:$0xf]
        %v5016 = vld [vmem:[%s5003 + $0x30] sm:$0xf]
        %v5017 = vld [vmem:[%s5003 + $0x34] sm:$0xf]
        %v5018 = vld [vmem:[%s5003 + $0x38] sm:$0xf]
        %v5019 = vld [vmem:[%s5003 + $0x3c] sm:$0xf]
        %v5036 = vunpack.c.l.b16 %v4970
        %v5037 = vunpack.c.l.b16 %v4971
        %v5038 = vunpack.c.l.b16 %v4972
        %v5039 = vunpack.c.l.b16 %v4973
        %v5040 = vunpack.c.l.b16 %v4974
        %v5041 = vunpack.c.l.b16 %v4975
        %v5042 = vunpack.c.l.b16 %v4976
        %v5043 = vunpack.c.l.b16 %v4977
        %v5044 = vunpack.c.l.b16 %v4978
        %v5045 = vunpack.c.l.b16 %v4979
        %v5046 = vunpack.c.l.b16 %v4980
        %v5047 = vunpack.c.l.b16 %v4981
        %v5048 = vunpack.c.l.b16 %v4982
        %v5049 = vunpack.c.l.b16 %v4983
        %v5050 = vunpack.c.l.b16 %v4984
        %v5051 = vunpack.c.l.b16 %v4985
        %v5052 = vpack.c.b16 %v5037, %v5036
        %v5053 = vpack.c.b16 %v5039, %v5038
        %v5054 = vpack.c.b16 %v5041, %v5040
        %v5055 = vpack.c.b16 %v5043, %v5042
        %v5056 = vpack.c.b16 %v5045, %v5044
        %v5057 = vpack.c.b16 %v5047, %v5046
        %v5058 = vpack.c.b16 %v5049, %v5048
        %v5059 = vpack.c.b16 %v5051, %v5050
        %5068 = vmatprep.subr.bf16.mxu0 0
        %5069 = vmatpush1.bf16.msra.mxu0 %v5059
        %5070 = vmatprep.subr.bf16.mxu0 0
        %5071 = vmatpush1.bf16.msra.mxu0 %v5058
        %5072 = vmatprep.subr.bf16.mxu0 0
        %5073 = vmatpush1.bf16.msra.mxu0 %v5057
        %5074 = vmatprep.subr.bf16.mxu0 0
        %5075 = vmatpush1.bf16.msra.mxu0 %v5056
        %5076 = vmatprep.subr.bf16.mxu0 0
        %5077 = vmatpush1.bf16.msra.mxu0 %v5055
        %5078 = vmatprep.subr.bf16.mxu0 0
        %5079 = vmatpush1.bf16.msra.mxu0 %v5054
        %5080 = vmatprep.subr.bf16.mxu0 0
        %5081 = vmatpush1.bf16.msra.mxu0 %v5053
        %5082 = vmatprep.subr.bf16.mxu0 0
        %5083 = vmatpush1.bf16.msra.mxu0 %v5052
        %5084 = vmatprep.subr.bf16.mxu0 0
        %5085 = vmatpush2.bf16.msra.mxu0 0
        %5086 = vmatprep.subr.bf16.mxu0 0
        %5087 = vmatpush2.bf16.msra.mxu0 0
        %5088 = vmatprep.subr.bf16.mxu0 0
        %5089 = vmatpush2.bf16.msra.mxu0 0
        %5090 = vmatprep.subr.bf16.mxu0 0
        %5091 = vmatpush2.bf16.msra.mxu0 0
        %5092 = vmatprep.subr.bf16.mxu0 0
        %5093 = vmatpush2.bf16.msra.mxu0 0
        %5094 = vmatprep.subr.bf16.mxu0 0
        %5095 = vmatpush2.bf16.msra.mxu0 0
        %5096 = vmatprep.subr.bf16.mxu0 0
        %5097 = vmatpush2.bf16.msra.mxu0 0
        %5098 = vmatprep.subr.bf16.mxu0 0
        %5099 = vmatpush2.bf16.msra.mxu0 0
        %5100 = vmatprep.mubr.bf16.mxu0 0
        %5101 = vmatmul.mubr.bf16.gmra.mxu0 %v4961
        %v5102 = vpop.f32.mrf.mxu0
        %v5103 = vadd.f32 0.0, %v5102
        %v5104 = vpop.f32.mrf.mxu0
        %v5105 = vpop.f32.mrf.mxu0
        %v5106 = vadd.f32 0.0, %v5105
        %v5107 = vpop.f32.mrf.mxu0
        %5108 = vmatprep.mubr.bf16.mxu0 0
        %5109 = vmatmul.mubr.bf16.gmra.mxu0 %v4962
        %v5110 = vpop.f32.mrf.mxu0
        %v5111 = vadd.f32 0.0, %v5110
        %v5112 = vpop.f32.mrf.mxu0
        %v5113 = vpop.f32.mrf.mxu0
        %v5114 = vadd.f32 0.0, %v5113
        %v5115 = vpop.f32.mrf.mxu0
        %5116 = vmatprep.mubr.bf16.mxu0 0
        %5117 = vmatmul.mubr.bf16.gmra.mxu0 %v4963
        %v5118 = vpop.f32.mrf.mxu0
        %v5119 = vadd.f32 0.0, %v5118
        %v5120 = vpop.f32.mrf.mxu0
        %v5121 = vpop.f32.mrf.mxu0
        %v5122 = vadd.f32 0.0, %v5121
        %v5123 = vpop.f32.mrf.mxu0
        %5124 = vmatprep.mubr.bf16.mxu0 0
        %5125 = vmatmul.mubr.bf16.gmra.mxu0 %v4964
        %v5126 = vpop.f32.mrf.mxu0
        %v5127 = vadd.f32 0.0, %v5126
        %v5128 = vpop.f32.mrf.mxu0
        %v5129 = vpop.f32.mrf.mxu0
        %v5130 = vadd.f32 0.0, %v5129
        %v5131 = vpop.f32.mrf.mxu0
        %5132 = vmatprep.mubr.bf16.mxu0 0
        %5133 = vmatmul.mubr.bf16.gmra.mxu0 %v4965
        %v5134 = vpop.f32.mrf.mxu0
        %v5135 = vadd.f32 0.0, %v5134
        %v5136 = vpop.f32.mrf.mxu0
        %v5137 = vpop.f32.mrf.mxu0
        %v5138 = vadd.f32 0.0, %v5137
        %v5139 = vpop.f32.mrf.mxu0
        %5140 = vmatprep.mubr.bf16.mxu0 0
        %5141 = vmatmul.mubr.bf16.gmra.mxu0 %v4966
        %v5142 = vpop.f32.mrf.mxu0
        %v5143 = vadd.f32 0.0, %v5142
        %v5144 = vpop.f32.mrf.mxu0
        %v5145 = vpop.f32.mrf.mxu0
        %v5146 = vadd.f32 0.0, %v5145
        %v5147 = vpop.f32.mrf.mxu0
        %5148 = vmatprep.mubr.bf16.mxu0 0
        %5149 = vmatmul.mubr.bf16.gmra.mxu0 %v4967
        %v5150 = vpop.f32.mrf.mxu0
        %v5151 = vadd.f32 0.0, %v5150
        %v5152 = vpop.f32.mrf.mxu0
        %v5153 = vpop.f32.mrf.mxu0
        %v5154 = vadd.f32 0.0, %v5153
        %v5155 = vpop.f32.mrf.mxu0
        %5156 = vmatprep.mubr.bf16.mxu0 0
        %5157 = vmatmul.mubr.bf16.gmra.mxu0 %v4968
        %v5158 = vpop.f32.mrf.mxu0
        %v5159 = vadd.f32 0.0, %v5158
        %v5160 = vpop.f32.mrf.mxu0
        %v5161 = vpop.f32.mrf.mxu0
        %v5162 = vadd.f32 0.0, %v5161
        %v5163 = vpop.f32.mrf.mxu0
        %5164 = vdwg.mxu0
        %v5165 = vrot.slane %v5103, 7
        %v5166 = vrot.slane %v5106, 7
        %v5167 = vrot.slane %v5111, 7
        %v5168 = vrot.slane %v5114, 7
        %v5169 = vrot.slane %v5119, 7
        %v5170 = vrot.slane %v5122, 7
        %v5171 = vrot.slane %v5127, 7
        %v5172 = vrot.slane %v5130, 7
        %v5173 = vrot.slane %v5135, 7
        %v5174 = vrot.slane %v5138, 7
        %v5175 = vrot.slane %v5143, 7
        %v5176 = vrot.slane %v5146, 7
        %v5177 = vrot.slane %v5151, 7
        %v5178 = vrot.slane %v5154, 7
        %v5179 = vrot.slane %v5159, 7
        %v5180 = vrot.slane %v5162, 7
        %v5181 = vsel %vm1303, %v5179, %v5180
        %v5182 = vsel %vm1303, %v5178, %v5179
        %v5183 = vsel %vm1303, %v5177, %v5178
        %v5184 = vsel %vm1303, %v5176, %v5177
        %v5185 = vsel %vm1303, %v5175, %v5176
        %v5186 = vsel %vm1303, %v5174, %v5175
        %v5187 = vsel %vm1303, %v5173, %v5174
        %v5188 = vsel %vm1303, %v5172, %v5173
        %v5189 = vsel %vm1303, %v5171, %v5172
        %v5190 = vsel %vm1303, %v5170, %v5171
        %v5191 = vsel %vm1303, %v5169, %v5170
        %v5192 = vsel %vm1303, %v5168, %v5169
        %v5193 = vsel %vm1303, %v5167, %v5168
        %v5194 = vsel %vm1303, %v5166, %v5167
        %v5195 = vsel %vm1303, %v5165, %v5166
        %v5196 = vsel %vm1303, %v5180, %v5165
        %v5197 = vsel %vm1336, %v5196, 0.0
        %v5198 = vsel %vm1337, %v5195, 0.0
        %v5199 = vsel %vm1338, %v5194, 0.0
        %v5200 = vsel %vm1339, %v5193, 0.0
        %v5201 = vsel %vm1340, %v5192, 0.0
        %v5202 = vsel %vm1341, %v5191, 0.0
        %v5203 = vsel %vm1342, %v5190, 0.0
        %v5204 = vsel %vm1343, %v5189, 0.0
        %v5205 = vsel %vm1344, %v5188, 0.0
        %v5206 = vsel %vm1345, %v5187, 0.0
        %v5207 = vsel %vm1346, %v5186, 0.0
        %v5208 = vsel %vm1347, %v5185, 0.0
        %v5209 = vsel %vm1348, %v5184, 0.0
        %v5210 = vsel %vm1349, %v5183, 0.0
        %v5211 = vsel %vm1350, %v5182, 0.0
        %v5212 = vsel %vm1351, %v5181, 0.0
        %v5229 = vunpack.c.l.b16 %v4987
        %v5230 = vunpack.c.l.b16 %v4988
        %v5231 = vunpack.c.l.b16 %v4989
        %v5232 = vunpack.c.l.b16 %v4990
        %v5233 = vunpack.c.l.b16 %v4991
        %v5234 = vunpack.c.l.b16 %v4992
        %v5235 = vunpack.c.l.b16 %v4993
        %v5236 = vunpack.c.l.b16 %v4994
        %v5237 = vunpack.c.l.b16 %v4995
        %v5238 = vunpack.c.l.b16 %v4996
        %v5239 = vunpack.c.l.b16 %v4997
        %v5240 = vunpack.c.l.b16 %v4998
        %v5241 = vunpack.c.l.b16 %v4999
        %v5242 = vunpack.c.l.b16 %v5000
        %v5243 = vunpack.c.l.b16 %v5001
        %v5244 = vunpack.c.l.b16 %v5002
        %v5245 = vpack.c.b16 %v5230, %v5229
        %v5246 = vpack.c.b16 %v5232, %v5231
        %v5247 = vpack.c.b16 %v5234, %v5233
        %v5248 = vpack.c.b16 %v5236, %v5235
        %v5249 = vpack.c.b16 %v5238, %v5237
        %v5250 = vpack.c.b16 %v5240, %v5239
        %v5251 = vpack.c.b16 %v5242, %v5241
        %v5252 = vpack.c.b16 %v5244, %v5243
        %5261 = vmatprep.subr.bf16.mxu0 0
        %5262 = vmatpush1.bf16.msra.mxu0 %v5252
        %5263 = vmatprep.subr.bf16.mxu0 0
        %5264 = vmatpush1.bf16.msra.mxu0 %v5251
        %5265 = vmatprep.subr.bf16.mxu0 0
        %5266 = vmatpush1.bf16.msra.mxu0 %v5250
        %5267 = vmatprep.subr.bf16.mxu0 0
        %5268 = vmatpush1.bf16.msra.mxu0 %v5249
        %5269 = vmatprep.subr.bf16.mxu0 0
        %5270 = vmatpush1.bf16.msra.mxu0 %v5248
        %5271 = vmatprep.subr.bf16.mxu0 0
        %5272 = vmatpush1.bf16.msra.mxu0 %v5247
        %5273 = vmatprep.subr.bf16.mxu0 0
        %5274 = vmatpush1.bf16.msra.mxu0 %v5246
        %5275 = vmatprep.subr.bf16.mxu0 0
        %5276 = vmatpush1.bf16.msra.mxu0 %v5245
        %5277 = vmatprep.subr.bf16.mxu0 0
        %5278 = vmatpush2.bf16.msra.mxu0 0
        %5279 = vmatprep.subr.bf16.mxu0 0
        %5280 = vmatpush2.bf16.msra.mxu0 0
        %5281 = vmatprep.subr.bf16.mxu0 0
        %5282 = vmatpush2.bf16.msra.mxu0 0
        %5283 = vmatprep.subr.bf16.mxu0 0
        %5284 = vmatpush2.bf16.msra.mxu0 0
        %5285 = vmatprep.subr.bf16.mxu0 0
        %5286 = vmatpush2.bf16.msra.mxu0 0
        %5287 = vmatprep.subr.bf16.mxu0 0
        %5288 = vmatpush2.bf16.msra.mxu0 0
        %5289 = vmatprep.subr.bf16.mxu0 0
        %5290 = vmatpush2.bf16.msra.mxu0 0
        %5291 = vmatprep.subr.bf16.mxu0 0
        %5292 = vmatpush2.bf16.msra.mxu0 0
        %5293 = vmatprep.mubr.bf16.mxu0 0
        %5294 = vmatmul.mubr.bf16.gmra.mxu0 %v4961
        %v5295 = vpop.f32.mrf.mxu0
        %v5296 = vadd.f32 0.0, %v5295
        %v5297 = vpop.f32.mrf.mxu0
        %v5298 = vpop.f32.mrf.mxu0
        %v5299 = vadd.f32 0.0, %v5298
        %v5300 = vpop.f32.mrf.mxu0
        %5301 = vmatprep.mubr.bf16.mxu0 0
        %5302 = vmatmul.mubr.bf16.gmra.mxu0 %v4962
        %v5303 = vpop.f32.mrf.mxu0
        %v5304 = vadd.f32 0.0, %v5303
        %v5305 = vpop.f32.mrf.mxu0
        %v5306 = vpop.f32.mrf.mxu0
        %v5307 = vadd.f32 0.0, %v5306
        %v5308 = vpop.f32.mrf.mxu0
        %5309 = vmatprep.mubr.bf16.mxu0 0
        %5310 = vmatmul.mubr.bf16.gmra.mxu0 %v4963
        %v5311 = vpop.f32.mrf.mxu0
        %v5312 = vadd.f32 0.0, %v5311
        %v5313 = vpop.f32.mrf.mxu0
        %v5314 = vpop.f32.mrf.mxu0
        %v5315 = vadd.f32 0.0, %v5314
        %v5316 = vpop.f32.mrf.mxu0
        %5317 = vmatprep.mubr.bf16.mxu0 0
        %5318 = vmatmul.mubr.bf16.gmra.mxu0 %v4964
        %v5319 = vpop.f32.mrf.mxu0
        %v5320 = vadd.f32 0.0, %v5319
        %v5321 = vpop.f32.mrf.mxu0
        %v5322 = vpop.f32.mrf.mxu0
        %v5323 = vadd.f32 0.0, %v5322
        %v5324 = vpop.f32.mrf.mxu0
        %5325 = vmatprep.mubr.bf16.mxu0 0
        %5326 = vmatmul.mubr.bf16.gmra.mxu0 %v4965
        %v5327 = vpop.f32.mrf.mxu0
        %v5328 = vadd.f32 0.0, %v5327
        %v5329 = vpop.f32.mrf.mxu0
        %v5330 = vpop.f32.mrf.mxu0
        %v5331 = vadd.f32 0.0, %v5330
        %v5332 = vpop.f32.mrf.mxu0
        %5333 = vmatprep.mubr.bf16.mxu0 0
        %5334 = vmatmul.mubr.bf16.gmra.mxu0 %v4966
        %v5335 = vpop.f32.mrf.mxu0
        %v5336 = vadd.f32 0.0, %v5335
        %v5337 = vpop.f32.mrf.mxu0
        %v5338 = vpop.f32.mrf.mxu0
        %v5339 = vadd.f32 0.0, %v5338
        %v5340 = vpop.f32.mrf.mxu0
        %5341 = vmatprep.mubr.bf16.mxu0 0
        %5342 = vmatmul.mubr.bf16.gmra.mxu0 %v4967
        %v5343 = vpop.f32.mrf.mxu0
        %v5344 = vadd.f32 0.0, %v5343
        %v5345 = vpop.f32.mrf.mxu0
        %v5346 = vpop.f32.mrf.mxu0
        %v5347 = vadd.f32 0.0, %v5346
        %v5348 = vpop.f32.mrf.mxu0
        %5349 = vmatprep.mubr.bf16.mxu0 0
        %5350 = vmatmul.mubr.bf16.gmra.mxu0 %v4968
        %v5351 = vpop.f32.mrf.mxu0
        %v5352 = vadd.f32 0.0, %v5351
        %v5353 = vpop.f32.mrf.mxu0
        %v5354 = vpop.f32.mrf.mxu0
        %v5355 = vadd.f32 0.0, %v5354
        %v5356 = vpop.f32.mrf.mxu0
        %5357 = vdwg.mxu0
        %v5358 = vadd.f32 %v5197, %v5296
        %v5359 = vadd.f32 %v5198, %v5299
        %v5360 = vadd.f32 %v5199, %v5304
        %v5361 = vadd.f32 %v5200, %v5307
        %v5362 = vadd.f32 %v5201, %v5312
        %v5363 = vadd.f32 %v5202, %v5315
        %v5364 = vadd.f32 %v5203, %v5320
        %v5365 = vadd.f32 %v5204, %v5323
        %v5366 = vadd.f32 %v5205, %v5328
        %v5367 = vadd.f32 %v5206, %v5331
        %v5368 = vadd.f32 %v5207, %v5336
        %v5369 = vadd.f32 %v5208, %v5339
        %v5370 = vadd.f32 %v5209, %v5344
        %v5371 = vadd.f32 %v5210, %v5347
        %v5372 = vadd.f32 %v5211, %v5352
        %v5373 = vadd.f32 %v5212, %v5355
        %v5390 = vunpack.c.l.b16 %v5004
        %v5391 = vunpack.c.l.b16 %v5005
        %v5392 = vunpack.c.l.b16 %v5006
        %v5393 = vunpack.c.l.b16 %v5007
        %v5394 = vunpack.c.l.b16 %v5008
        %v5395 = vunpack.c.l.b16 %v5009
        %v5396 = vunpack.c.l.b16 %v5010
        %v5397 = vunpack.c.l.b16 %v5011
        %v5398 = vunpack.c.l.b16 %v5012
        %v5399 = vunpack.c.l.b16 %v5013
        %v5400 = vunpack.c.l.b16 %v5014
        %v5401 = vunpack.c.l.b16 %v5015
        %v5402 = vunpack.c.l.b16 %v5016
        %v5403 = vunpack.c.l.b16 %v5017
        %v5404 = vunpack.c.l.b16 %v5018
        %v5405 = vunpack.c.l.b16 %v5019
        %v5406 = vpack.c.b16 %v5391, %v5390
        %v5407 = vpack.c.b16 %v5393, %v5392
        %v5408 = vpack.c.b16 %v5395, %v5394
        %v5409 = vpack.c.b16 %v5397, %v5396
        %v5410 = vpack.c.b16 %v5399, %v5398
        %v5411 = vpack.c.b16 %v5401, %v5400
        %v5412 = vpack.c.b16 %v5403, %v5402
        %v5413 = vpack.c.b16 %v5405, %v5404
        %5422 = vmatprep.subr.bf16.mxu0 0
        %5423 = vmatpush1.bf16.msra.mxu0 %v5413
        %5424 = vmatprep.subr.bf16.mxu0 0
        %5425 = vmatpush1.bf16.msra.mxu0 %v5412
        %5426 = vmatprep.subr.bf16.mxu0 0
        %5427 = vmatpush1.bf16.msra.mxu0 %v5411
        %5428 = vmatprep.subr.bf16.mxu0 0
        %5429 = vmatpush1.bf16.msra.mxu0 %v5410
        %5430 = vmatprep.subr.bf16.mxu0 0
        %5431 = vmatpush1.bf16.msra.mxu0 %v5409
        %5432 = vmatprep.subr.bf16.mxu0 0
        %5433 = vmatpush1.bf16.msra.mxu0 %v5408
        %5434 = vmatprep.subr.bf16.mxu0 0
        %5435 = vmatpush1.bf16.msra.mxu0 %v5407
        %5436 = vmatprep.subr.bf16.mxu0 0
        %5437 = vmatpush1.bf16.msra.mxu0 %v5406
        %5438 = vmatprep.subr.bf16.mxu0 0
        %5439 = vmatpush2.bf16.msra.mxu0 0
        %5440 = vmatprep.subr.bf16.mxu0 0
        %5441 = vmatpush2.bf16.msra.mxu0 0
        %5442 = vmatprep.subr.bf16.mxu0 0
        %5443 = vmatpush2.bf16.msra.mxu0 0
        %5444 = vmatprep.subr.bf16.mxu0 0
        %5445 = vmatpush2.bf16.msra.mxu0 0
        %5446 = vmatprep.subr.bf16.mxu0 0
        %5447 = vmatpush2.bf16.msra.mxu0 0
        %5448 = vmatprep.subr.bf16.mxu0 0
        %5449 = vmatpush2.bf16.msra.mxu0 0
        %5450 = vmatprep.subr.bf16.mxu0 0
        %5451 = vmatpush2.bf16.msra.mxu0 0
        %5452 = vmatprep.subr.bf16.mxu0 0
        %5453 = vmatpush2.bf16.msra.mxu0 0
        %5454 = vmatprep.mubr.bf16.mxu0 0
        %5455 = vmatmul.mubr.bf16.gmra.mxu0 %v4961
        %v5456 = vpop.f32.mrf.mxu0
        %v5457 = vadd.f32 0.0, %v5456
        %v5458 = vpop.f32.mrf.mxu0
        %v5459 = vpop.f32.mrf.mxu0
        %v5460 = vadd.f32 0.0, %v5459
        %v5461 = vpop.f32.mrf.mxu0
        %5462 = vmatprep.mubr.bf16.mxu0 0
        %5463 = vmatmul.mubr.bf16.gmra.mxu0 %v4962
        %v5464 = vpop.f32.mrf.mxu0
        %v5465 = vadd.f32 0.0, %v5464
        %v5466 = vpop.f32.mrf.mxu0
        %v5467 = vpop.f32.mrf.mxu0
        %v5468 = vadd.f32 0.0, %v5467
        %v5469 = vpop.f32.mrf.mxu0
        %5470 = vmatprep.mubr.bf16.mxu0 0
        %5471 = vmatmul.mubr.bf16.gmra.mxu0 %v4963
        %v5472 = vpop.f32.mrf.mxu0
        %v5473 = vadd.f32 0.0, %v5472
        %v5474 = vpop.f32.mrf.mxu0
        %v5475 = vpop.f32.mrf.mxu0
        %v5476 = vadd.f32 0.0, %v5475
        %v5477 = vpop.f32.mrf.mxu0
        %5478 = vmatprep.mubr.bf16.mxu0 0
        %5479 = vmatmul.mubr.bf16.gmra.mxu0 %v4964
        %v5480 = vpop.f32.mrf.mxu0
        %v5481 = vadd.f32 0.0, %v5480
        %v5482 = vpop.f32.mrf.mxu0
        %v5483 = vpop.f32.mrf.mxu0
        %v5484 = vadd.f32 0.0, %v5483
        %v5485 = vpop.f32.mrf.mxu0
        %5486 = vmatprep.mubr.bf16.mxu0 0
        %5487 = vmatmul.mubr.bf16.gmra.mxu0 %v4965
        %v5488 = vpop.f32.mrf.mxu0
        %v5489 = vadd.f32 0.0, %v5488
        %v5490 = vpop.f32.mrf.mxu0
        %v5491 = vpop.f32.mrf.mxu0
        %v5492 = vadd.f32 0.0, %v5491
        %v5493 = vpop.f32.mrf.mxu0
        %5494 = vmatprep.mubr.bf16.mxu0 0
        %5495 = vmatmul.mubr.bf16.gmra.mxu0 %v4966
        %v5496 = vpop.f32.mrf.mxu0
        %v5497 = vadd.f32 0.0, %v5496
        %v5498 = vpop.f32.mrf.mxu0
        %v5499 = vpop.f32.mrf.mxu0
        %v5500 = vadd.f32 0.0, %v5499
        %v5501 = vpop.f32.mrf.mxu0
        %5502 = vmatprep.mubr.bf16.mxu0 0
        %5503 = vmatmul.mubr.bf16.gmra.mxu0 %v4967
        %v5504 = vpop.f32.mrf.mxu0
        %v5505 = vadd.f32 0.0, %v5504
        %v5506 = vpop.f32.mrf.mxu0
        %v5507 = vpop.f32.mrf.mxu0
        %v5508 = vadd.f32 0.0, %v5507
        %v5509 = vpop.f32.mrf.mxu0
        %5510 = vmatprep.mubr.bf16.mxu0 0
        %5511 = vmatmul.mubr.bf16.gmra.mxu0 %v4968
        %v5512 = vpop.f32.mrf.mxu0
        %v5513 = vadd.f32 0.0, %v5512
        %v5514 = vpop.f32.mrf.mxu0
        %v5515 = vpop.f32.mrf.mxu0
        %v5516 = vadd.f32 0.0, %v5515
        %v5517 = vpop.f32.mrf.mxu0
        %5518 = vdwg.mxu0
        %v5519 = vrot.slane %v5457, 1
        %v5520 = vrot.slane %v5460, 1
        %v5521 = vrot.slane %v5465, 1
        %v5522 = vrot.slane %v5468, 1
        %v5523 = vrot.slane %v5473, 1
        %v5524 = vrot.slane %v5476, 1
        %v5525 = vrot.slane %v5481, 1
        %v5526 = vrot.slane %v5484, 1
        %v5527 = vrot.slane %v5489, 1
        %v5528 = vrot.slane %v5492, 1
        %v5529 = vrot.slane %v5497, 1
        %v5530 = vrot.slane %v5500, 1
        %v5531 = vrot.slane %v5505, 1
        %v5532 = vrot.slane %v5508, 1
        %v5533 = vrot.slane %v5513, 1
        %v5534 = vrot.slane %v5516, 1
        %v5535 = vsel %vm2076, %v5533, %v5534
        %v5536 = vsel %vm2076, %v5532, %v5533
        %v5537 = vsel %vm2076, %v5531, %v5532
        %v5538 = vsel %vm2076, %v5530, %v5531
        %v5539 = vsel %vm2076, %v5529, %v5530
        %v5540 = vsel %vm2076, %v5528, %v5529
        %v5541 = vsel %vm2076, %v5527, %v5528
        %v5542 = vsel %vm2076, %v5526, %v5527
        %v5543 = vsel %vm2076, %v5525, %v5526
        %v5544 = vsel %vm2076, %v5524, %v5525
        %v5545 = vsel %vm2076, %v5523, %v5524
        %v5546 = vsel %vm2076, %v5522, %v5523
        %v5547 = vsel %vm2076, %v5521, %v5522
        %v5548 = vsel %vm2076, %v5520, %v5521
        %v5549 = vsel %vm2076, %v5519, %v5520
        %v5550 = vsel %vm2076, %v5534, %v5519
        %v5551 = vsel %vm2109, %v5549, 0.0
        %v5552 = vsel %vm2110, %v5548, 0.0
        %v5553 = vsel %vm2111, %v5547, 0.0
        %v5554 = vsel %vm2112, %v5546, 0.0
        %v5555 = vsel %vm2113, %v5545, 0.0
        %v5556 = vsel %vm2114, %v5544, 0.0
        %v5557 = vsel %vm2115, %v5543, 0.0
        %v5558 = vsel %vm2116, %v5542, 0.0
        %v5559 = vsel %vm2117, %v5541, 0.0
        %v5560 = vsel %vm2118, %v5540, 0.0
        %v5561 = vsel %vm2119, %v5539, 0.0
        %v5562 = vsel %vm2120, %v5538, 0.0
        %v5563 = vsel %vm2121, %v5537, 0.0
        %v5564 = vsel %vm2122, %v5536, 0.0
        %v5565 = vsel %vm2123, %v5535, 0.0
        %v5566 = vsel %vm2124, %v5550, 0.0
        %v5567 = vadd.f32 %v5358, %v5551
        %v5568 = vadd.f32 %v5359, %v5552
        %v5569 = vadd.f32 %v5360, %v5553
        %v5570 = vadd.f32 %v5361, %v5554
        %v5571 = vadd.f32 %v5362, %v5555
        %v5572 = vadd.f32 %v5363, %v5556
        %v5573 = vadd.f32 %v5364, %v5557
        %v5574 = vadd.f32 %v5365, %v5558
        %v5575 = vadd.f32 %v5366, %v5559
        %v5576 = vadd.f32 %v5367, %v5560
        %v5577 = vadd.f32 %v5368, %v5561
        %v5578 = vadd.f32 %v5369, %v5562
        %v5579 = vadd.f32 %v5370, %v5563
        %v5580 = vadd.f32 %v5371, %v5564
        %v5581 = vadd.f32 %v5372, %v5565
        %v5582 = vadd.f32 %v5373, %v5566
        %v5583 = vld [vmem:[%s5 + $0x4] sm:$0x1]
        %v5584 = vlaneseq
        %v5585 = vshrl.u32 %v5584, 7
        %v5586 = vsub.s32 0, %v5585
        %v5587 = vrot.slane %v5583, %v5586
        %v5588 = vmul.f32 %v5567, %v5587
        %v5589 = vmul.f32 %v5568, %v5587
        %v5590 = vmul.f32 %v5569, %v5587
        %v5591 = vmul.f32 %v5570, %v5587
        %v5592 = vmul.f32 %v5571, %v5587
        %v5593 = vmul.f32 %v5572, %v5587
        %v5594 = vmul.f32 %v5573, %v5587
        %v5595 = vmul.f32 %v5574, %v5587
        %v5596 = vmul.f32 %v5575, %v5587
        %v5597 = vmul.f32 %v5576, %v5587
        %v5598 = vmul.f32 %v5577, %v5587
        %v5599 = vmul.f32 %v5578, %v5587
        %v5600 = vmul.f32 %v5579, %v5587
        %v5601 = vmul.f32 %v5580, %v5587
        %v5602 = vmul.f32 %v5581, %v5587
        %v5603 = vmul.f32 %v5582, %v5587
        %v5604 = vld [vmem:[%s5 + $0x5] sm:$0x1]
        %v5605 = vlaneseq
        %v5606 = vshrl.u32 %v5605, 7
        %v5607 = vsub.s32 0, %v5606
        %v5608 = vrot.slane %v5604, %v5607
        %v5609 = vadd.f32 %v5588, %v5608
        %v5610 = vadd.f32 %v5589, %v5608
        %v5611 = vadd.f32 %v5590, %v5608
        %v5612 = vadd.f32 %v5591, %v5608
        %v5613 = vadd.f32 %v5592, %v5608
        %v5614 = vadd.f32 %v5593, %v5608
        %v5615 = vadd.f32 %v5594, %v5608
        %v5616 = vadd.f32 %v5595, %v5608
        %v5617 = vadd.f32 %v5596, %v5608
        %v5618 = vadd.f32 %v5597, %v5608
        %v5619 = vadd.f32 %v5598, %v5608
        %v5620 = vadd.f32 %v5599, %v5608
        %v5621 = vadd.f32 %v5600, %v5608
        %v5622 = vadd.f32 %v5601, %v5608
        %v5623 = vadd.f32 %v5602, %v5608
        %v5624 = vadd.f32 %v5603, %v5608
        %vm5625 = vcmp.gt.f32.partialorder %v5609, 0.0
        %vm5626 = vcmp.gt.f32.partialorder %v5610, 0.0
        %vm5627 = vcmp.gt.f32.partialorder %v5611, 0.0
        %vm5628 = vcmp.gt.f32.partialorder %v5612, 0.0
        %vm5629 = vcmp.gt.f32.partialorder %v5613, 0.0
        %vm5630 = vcmp.gt.f32.partialorder %v5614, 0.0
        %vm5631 = vcmp.gt.f32.partialorder %v5615, 0.0
        %vm5632 = vcmp.gt.f32.partialorder %v5616, 0.0
        %vm5633 = vcmp.gt.f32.partialorder %v5617, 0.0
        %vm5634 = vcmp.gt.f32.partialorder %v5618, 0.0
        %vm5635 = vcmp.gt.f32.partialorder %v5619, 0.0
        %vm5636 = vcmp.gt.f32.partialorder %v5620, 0.0
        %vm5637 = vcmp.gt.f32.partialorder %v5621, 0.0
        %vm5638 = vcmp.gt.f32.partialorder %v5622, 0.0
        %vm5639 = vcmp.gt.f32.partialorder %v5623, 0.0
        %vm5640 = vcmp.gt.f32.partialorder %v5624, 0.0
        %v5641 = vmul.f32 %v5609, 0.01
        %v5642 = vmul.f32 %v5610, 0.01
        %v5643 = vmul.f32 %v5611, 0.01
        %v5644 = vmul.f32 %v5612, 0.01
        %v5645 = vmul.f32 %v5613, 0.01
        %v5646 = vmul.f32 %v5614, 0.01
        %v5647 = vmul.f32 %v5615, 0.01
        %v5648 = vmul.f32 %v5616, 0.01
        %v5649 = vmul.f32 %v5617, 0.01
        %v5650 = vmul.f32 %v5618, 0.01
        %v5651 = vmul.f32 %v5619, 0.01
        %v5652 = vmul.f32 %v5620, 0.01
        %v5653 = vmul.f32 %v5621, 0.01
        %v5654 = vmul.f32 %v5622, 0.01
        %v5655 = vmul.f32 %v5623, 0.01
        %v5656 = vmul.f32 %v5624, 0.01
        %v5657 = vsel %vm5625, %v5609, %v5641
        %v5658 = vsel %vm5626, %v5610, %v5642
        %v5659 = vsel %vm5627, %v5611, %v5643
        %v5660 = vsel %vm5628, %v5612, %v5644
        %v5661 = vsel %vm5629, %v5613, %v5645
        %v5662 = vsel %vm5630, %v5614, %v5646
        %v5663 = vsel %vm5631, %v5615, %v5647
        %v5664 = vsel %vm5632, %v5616, %v5648
        %v5665 = vsel %vm5633, %v5617, %v5649
        %v5666 = vsel %vm5634, %v5618, %v5650
        %v5667 = vsel %vm5635, %v5619, %v5651
        %v5668 = vsel %vm5636, %v5620, %v5652
        %v5669 = vsel %vm5637, %v5621, %v5653
        %v5670 = vsel %vm5638, %v5622, %v5654
        %v5671 = vsel %vm5639, %v5623, %v5655
        %v5672 = vsel %vm5640, %v5624, %v5656
        %v5673 = vpack.c.bf16 %v5658, %v5657
        %v5674 = vpack.c.bf16 %v5660, %v5659
        %v5675 = vpack.c.bf16 %v5662, %v5661
        %v5676 = vpack.c.bf16 %v5664, %v5663
        %v5677 = vpack.c.bf16 %v5666, %v5665
        %v5678 = vpack.c.bf16 %v5668, %v5667
        %v5679 = vpack.c.bf16 %v5670, %v5669
        %v5680 = vpack.c.bf16 %v5672, %v5671
        %s5681 = scalar_lea.vmem [#allocation7], 384
        %v5682 = vld [vmem:[%s5681] sm:$0xf]
        %v5683 = vld [vmem:[%s5681 + $0x4] sm:$0xf]
        %v5684 = vld [vmem:[%s5681 + $0x8] sm:$0xf]
        %v5685 = vld [vmem:[%s5681 + $0xc] sm:$0xf]
        %v5686 = vld [vmem:[%s5681 + $0x10] sm:$0xf]
        %v5687 = vld [vmem:[%s5681 + $0x14] sm:$0xf]
        %v5688 = vld [vmem:[%s5681 + $0x18] sm:$0xf]
        %v5689 = vld [vmem:[%s5681 + $0x1c] sm:$0xf]
        %v5690 = vld [vmem:[%s5681 + $0x20] sm:$0xf]
        %v5691 = vld [vmem:[%s5681 + $0x24] sm:$0xf]
        %v5692 = vld [vmem:[%s5681 + $0x28] sm:$0xf]
        %v5693 = vld [vmem:[%s5681 + $0x2c] sm:$0xf]
        %v5694 = vld [vmem:[%s5681 + $0x30] sm:$0xf]
        %v5695 = vld [vmem:[%s5681 + $0x34] sm:$0xf]
        %v5696 = vld [vmem:[%s5681 + $0x38] sm:$0xf]
        %v5697 = vld [vmem:[%s5681 + $0x3c] sm:$0xf]
        %s5698 = scalar_lea.vmem [#allocation7], 448
        %v5699 = vld [vmem:[%s5698] sm:$0xf]
        %v5700 = vld [vmem:[%s5698 + $0x4] sm:$0xf]
        %v5701 = vld [vmem:[%s5698 + $0x8] sm:$0xf]
        %v5702 = vld [vmem:[%s5698 + $0xc] sm:$0xf]
        %v5703 = vld [vmem:[%s5698 + $0x10] sm:$0xf]
        %v5704 = vld [vmem:[%s5698 + $0x14] sm:$0xf]
        %v5705 = vld [vmem:[%s5698 + $0x18] sm:$0xf]
        %v5706 = vld [vmem:[%s5698 + $0x1c] sm:$0xf]
        %v5707 = vld [vmem:[%s5698 + $0x20] sm:$0xf]
        %v5708 = vld [vmem:[%s5698 + $0x24] sm:$0xf]
        %v5709 = vld [vmem:[%s5698 + $0x28] sm:$0xf]
        %v5710 = vld [vmem:[%s5698 + $0x2c] sm:$0xf]
        %v5711 = vld [vmem:[%s5698 + $0x30] sm:$0xf]
        %v5712 = vld [vmem:[%s5698 + $0x34] sm:$0xf]
        %v5713 = vld [vmem:[%s5698 + $0x38] sm:$0xf]
        %v5714 = vld [vmem:[%s5698 + $0x3c] sm:$0xf]
        %s5715 = scalar_lea.vmem [#allocation7], 512
        %v5716 = vld [vmem:[%s5715] sm:$0xf]
        %v5717 = vld [vmem:[%s5715 + $0x4] sm:$0xf]
        %v5718 = vld [vmem:[%s5715 + $0x8] sm:$0xf]
        %v5719 = vld [vmem:[%s5715 + $0xc] sm:$0xf]
        %v5720 = vld [vmem:[%s5715 + $0x10] sm:$0xf]
        %v5721 = vld [vmem:[%s5715 + $0x14] sm:$0xf]
        %v5722 = vld [vmem:[%s5715 + $0x18] sm:$0xf]
        %v5723 = vld [vmem:[%s5715 + $0x1c] sm:$0xf]
        %v5724 = vld [vmem:[%s5715 + $0x20] sm:$0xf]
        %v5725 = vld [vmem:[%s5715 + $0x24] sm:$0xf]
        %v5726 = vld [vmem:[%s5715 + $0x28] sm:$0xf]
        %v5727 = vld [vmem:[%s5715 + $0x2c] sm:$0xf]
        %v5728 = vld [vmem:[%s5715 + $0x30] sm:$0xf]
        %v5729 = vld [vmem:[%s5715 + $0x34] sm:$0xf]
        %v5730 = vld [vmem:[%s5715 + $0x38] sm:$0xf]
        %v5731 = vld [vmem:[%s5715 + $0x3c] sm:$0xf]
        %v5748 = vunpack.c.l.b16 %v5682
        %v5749 = vunpack.c.l.b16 %v5683
        %v5750 = vunpack.c.l.b16 %v5684
        %v5751 = vunpack.c.l.b16 %v5685
        %v5752 = vunpack.c.l.b16 %v5686
        %v5753 = vunpack.c.l.b16 %v5687
        %v5754 = vunpack.c.l.b16 %v5688
        %v5755 = vunpack.c.l.b16 %v5689
        %v5756 = vunpack.c.l.b16 %v5690
        %v5757 = vunpack.c.l.b16 %v5691
        %v5758 = vunpack.c.l.b16 %v5692
        %v5759 = vunpack.c.l.b16 %v5693
        %v5760 = vunpack.c.l.b16 %v5694
        %v5761 = vunpack.c.l.b16 %v5695
        %v5762 = vunpack.c.l.b16 %v5696
        %v5763 = vunpack.c.l.b16 %v5697
        %v5764 = vpack.c.b16 %v5749, %v5748
        %v5765 = vpack.c.b16 %v5751, %v5750
        %v5766 = vpack.c.b16 %v5753, %v5752
        %v5767 = vpack.c.b16 %v5755, %v5754
        %v5768 = vpack.c.b16 %v5757, %v5756
        %v5769 = vpack.c.b16 %v5759, %v5758
        %v5770 = vpack.c.b16 %v5761, %v5760
        %v5771 = vpack.c.b16 %v5763, %v5762
        %5780 = vmatprep.subr.bf16.mxu0 0
        %5781 = vmatpush1.bf16.msra.mxu0 %v5771
        %5782 = vmatprep.subr.bf16.mxu0 0
        %5783 = vmatpush1.bf16.msra.mxu0 %v5770
        %5784 = vmatprep.subr.bf16.mxu0 0
        %5785 = vmatpush1.bf16.msra.mxu0 %v5769
        %5786 = vmatprep.subr.bf16.mxu0 0
        %5787 = vmatpush1.bf16.msra.mxu0 %v5768
        %5788 = vmatprep.subr.bf16.mxu0 0
        %5789 = vmatpush1.bf16.msra.mxu0 %v5767
        %5790 = vmatprep.subr.bf16.mxu0 0
        %5791 = vmatpush1.bf16.msra.mxu0 %v5766
        %5792 = vmatprep.subr.bf16.mxu0 0
        %5793 = vmatpush1.bf16.msra.mxu0 %v5765
        %5794 = vmatprep.subr.bf16.mxu0 0
        %5795 = vmatpush1.bf16.msra.mxu0 %v5764
        %5796 = vmatprep.subr.bf16.mxu0 0
        %5797 = vmatpush2.bf16.msra.mxu0 0
        %5798 = vmatprep.subr.bf16.mxu0 0
        %5799 = vmatpush2.bf16.msra.mxu0 0
        %5800 = vmatprep.subr.bf16.mxu0 0
        %5801 = vmatpush2.bf16.msra.mxu0 0
        %5802 = vmatprep.subr.bf16.mxu0 0
        %5803 = vmatpush2.bf16.msra.mxu0 0
        %5804 = vmatprep.subr.bf16.mxu0 0
        %5805 = vmatpush2.bf16.msra.mxu0 0
        %5806 = vmatprep.subr.bf16.mxu0 0
        %5807 = vmatpush2.bf16.msra.mxu0 0
        %5808 = vmatprep.subr.bf16.mxu0 0
        %5809 = vmatpush2.bf16.msra.mxu0 0
        %5810 = vmatprep.subr.bf16.mxu0 0
        %5811 = vmatpush2.bf16.msra.mxu0 0
        %5812 = vmatprep.mubr.bf16.mxu0 0
        %5813 = vmatmul.mubr.bf16.gmra.mxu0 %v5673
        %v5814 = vpop.f32.mrf.mxu0
        %v5815 = vadd.f32 0.0, %v5814
        %v5816 = vpop.f32.mrf.mxu0
        %v5817 = vpop.f32.mrf.mxu0
        %v5818 = vadd.f32 0.0, %v5817
        %v5819 = vpop.f32.mrf.mxu0
        %5820 = vmatprep.mubr.bf16.mxu0 0
        %5821 = vmatmul.mubr.bf16.gmra.mxu0 %v5674
        %v5822 = vpop.f32.mrf.mxu0
        %v5823 = vadd.f32 0.0, %v5822
        %v5824 = vpop.f32.mrf.mxu0
        %v5825 = vpop.f32.mrf.mxu0
        %v5826 = vadd.f32 0.0, %v5825
        %v5827 = vpop.f32.mrf.mxu0
        %5828 = vmatprep.mubr.bf16.mxu0 0
        %5829 = vmatmul.mubr.bf16.gmra.mxu0 %v5675
        %v5830 = vpop.f32.mrf.mxu0
        %v5831 = vadd.f32 0.0, %v5830
        %v5832 = vpop.f32.mrf.mxu0
        %v5833 = vpop.f32.mrf.mxu0
        %v5834 = vadd.f32 0.0, %v5833
        %v5835 = vpop.f32.mrf.mxu0
        %5836 = vmatprep.mubr.bf16.mxu0 0
        %5837 = vmatmul.mubr.bf16.gmra.mxu0 %v5676
        %v5838 = vpop.f32.mrf.mxu0
        %v5839 = vadd.f32 0.0, %v5838
        %v5840 = vpop.f32.mrf.mxu0
        %v5841 = vpop.f32.mrf.mxu0
        %v5842 = vadd.f32 0.0, %v5841
        %v5843 = vpop.f32.mrf.mxu0
        %5844 = vmatprep.mubr.bf16.mxu0 0
        %5845 = vmatmul.mubr.bf16.gmra.mxu0 %v5677
        %v5846 = vpop.f32.mrf.mxu0
        %v5847 = vadd.f32 0.0, %v5846
        %v5848 = vpop.f32.mrf.mxu0
        %v5849 = vpop.f32.mrf.mxu0
        %v5850 = vadd.f32 0.0, %v5849
        %v5851 = vpop.f32.mrf.mxu0
        %5852 = vmatprep.mubr.bf16.mxu0 0
        %5853 = vmatmul.mubr.bf16.gmra.mxu0 %v5678
        %v5854 = vpop.f32.mrf.mxu0
        %v5855 = vadd.f32 0.0, %v5854
        %v5856 = vpop.f32.mrf.mxu0
        %v5857 = vpop.f32.mrf.mxu0
        %v5858 = vadd.f32 0.0, %v5857
        %v5859 = vpop.f32.mrf.mxu0
        %5860 = vmatprep.mubr.bf16.mxu0 0
        %5861 = vmatmul.mubr.bf16.gmra.mxu0 %v5679
        %v5862 = vpop.f32.mrf.mxu0
        %v5863 = vadd.f32 0.0, %v5862
        %v5864 = vpop.f32.mrf.mxu0
        %v5865 = vpop.f32.mrf.mxu0
        %v5866 = vadd.f32 0.0, %v5865
        %v5867 = vpop.f32.mrf.mxu0
        %5868 = vmatprep.mubr.bf16.mxu0 0
        %5869 = vmatmul.mubr.bf16.gmra.mxu0 %v5680
        %v5870 = vpop.f32.mrf.mxu0
        %v5871 = vadd.f32 0.0, %v5870
        %v5872 = vpop.f32.mrf.mxu0
        %v5873 = vpop.f32.mrf.mxu0
        %v5874 = vadd.f32 0.0, %v5873
        %v5875 = vpop.f32.mrf.mxu0
        %5876 = vdwg.mxu0
        %v5877 = vrot.slane %v5815, 7
        %v5878 = vrot.slane %v5818, 7
        %v5879 = vrot.slane %v5823, 7
        %v5880 = vrot.slane %v5826, 7
        %v5881 = vrot.slane %v5831, 7
        %v5882 = vrot.slane %v5834, 7
        %v5883 = vrot.slane %v5839, 7
        %v5884 = vrot.slane %v5842, 7
        %v5885 = vrot.slane %v5847, 7
        %v5886 = vrot.slane %v5850, 7
        %v5887 = vrot.slane %v5855, 7
        %v5888 = vrot.slane %v5858, 7
        %v5889 = vrot.slane %v5863, 7
        %v5890 = vrot.slane %v5866, 7
        %v5891 = vrot.slane %v5871, 7
        %v5892 = vrot.slane %v5874, 7
        %v5893 = vsel %vm1303, %v5891, %v5892
        %v5894 = vsel %vm1303, %v5890, %v5891
        %v5895 = vsel %vm1303, %v5889, %v5890
        %v5896 = vsel %vm1303, %v5888, %v5889
        %v5897 = vsel %vm1303, %v5887, %v5888
        %v5898 = vsel %vm1303, %v5886, %v5887
        %v5899 = vsel %vm1303, %v5885, %v5886
        %v5900 = vsel %vm1303, %v5884, %v5885
        %v5901 = vsel %vm1303, %v5883, %v5884
        %v5902 = vsel %vm1303, %v5882, %v5883
        %v5903 = vsel %vm1303, %v5881, %v5882
        %v5904 = vsel %vm1303, %v5880, %v5881
        %v5905 = vsel %vm1303, %v5879, %v5880
        %v5906 = vsel %vm1303, %v5878, %v5879
        %v5907 = vsel %vm1303, %v5877, %v5878
        %v5908 = vsel %vm1303, %v5892, %v5877
        %v5909 = vsel %vm1336, %v5908, 0.0
        %v5910 = vsel %vm1337, %v5907, 0.0
        %v5911 = vsel %vm1338, %v5906, 0.0
        %v5912 = vsel %vm1339, %v5905, 0.0
        %v5913 = vsel %vm1340, %v5904, 0.0
        %v5914 = vsel %vm1341, %v5903, 0.0
        %v5915 = vsel %vm1342, %v5902, 0.0
        %v5916 = vsel %vm1343, %v5901, 0.0
        %v5917 = vsel %vm1344, %v5900, 0.0
        %v5918 = vsel %vm1345, %v5899, 0.0
        %v5919 = vsel %vm1346, %v5898, 0.0
        %v5920 = vsel %vm1347, %v5897, 0.0
        %v5921 = vsel %vm1348, %v5896, 0.0
        %v5922 = vsel %vm1349, %v5895, 0.0
        %v5923 = vsel %vm1350, %v5894, 0.0
        %v5924 = vsel %vm1351, %v5893, 0.0
        %v5941 = vunpack.c.l.b16 %v5699
        %v5942 = vunpack.c.l.b16 %v5700
        %v5943 = vunpack.c.l.b16 %v5701
        %v5944 = vunpack.c.l.b16 %v5702
        %v5945 = vunpack.c.l.b16 %v5703
        %v5946 = vunpack.c.l.b16 %v5704
        %v5947 = vunpack.c.l.b16 %v5705
        %v5948 = vunpack.c.l.b16 %v5706
        %v5949 = vunpack.c.l.b16 %v5707
        %v5950 = vunpack.c.l.b16 %v5708
        %v5951 = vunpack.c.l.b16 %v5709
        %v5952 = vunpack.c.l.b16 %v5710
        %v5953 = vunpack.c.l.b16 %v5711
        %v5954 = vunpack.c.l.b16 %v5712
        %v5955 = vunpack.c.l.b16 %v5713
        %v5956 = vunpack.c.l.b16 %v5714
        %v5957 = vpack.c.b16 %v5942, %v5941
        %v5958 = vpack.c.b16 %v5944, %v5943
        %v5959 = vpack.c.b16 %v5946, %v5945
        %v5960 = vpack.c.b16 %v5948, %v5947
        %v5961 = vpack.c.b16 %v5950, %v5949
        %v5962 = vpack.c.b16 %v5952, %v5951
        %v5963 = vpack.c.b16 %v5954, %v5953
        %v5964 = vpack.c.b16 %v5956, %v5955
        %5973 = vmatprep.subr.bf16.mxu0 0
        %5974 = vmatpush1.bf16.msra.mxu0 %v5964
        %5975 = vmatprep.subr.bf16.mxu0 0
        %5976 = vmatpush1.bf16.msra.mxu0 %v5963
        %5977 = vmatprep.subr.bf16.mxu0 0
        %5978 = vmatpush1.bf16.msra.mxu0 %v5962
        %5979 = vmatprep.subr.bf16.mxu0 0
        %5980 = vmatpush1.bf16.msra.mxu0 %v5961
        %5981 = vmatprep.subr.bf16.mxu0 0
        %5982 = vmatpush1.bf16.msra.mxu0 %v5960
        %5983 = vmatprep.subr.bf16.mxu0 0
        %5984 = vmatpush1.bf16.msra.mxu0 %v5959
        %5985 = vmatprep.subr.bf16.mxu0 0
        %5986 = vmatpush1.bf16.msra.mxu0 %v5958
        %5987 = vmatprep.subr.bf16.mxu0 0
        %5988 = vmatpush1.bf16.msra.mxu0 %v5957
        %5989 = vmatprep.subr.bf16.mxu0 0
        %5990 = vmatpush2.bf16.msra.mxu0 0
        %5991 = vmatprep.subr.bf16.mxu0 0
        %5992 = vmatpush2.bf16.msra.mxu0 0
        %5993 = vmatprep.subr.bf16.mxu0 0
        %5994 = vmatpush2.bf16.msra.mxu0 0
        %5995 = vmatprep.subr.bf16.mxu0 0
        %5996 = vmatpush2.bf16.msra.mxu0 0
        %5997 = vmatprep.subr.bf16.mxu0 0
        %5998 = vmatpush2.bf16.msra.mxu0 0
        %5999 = vmatprep.subr.bf16.mxu0 0
        %6000 = vmatpush2.bf16.msra.mxu0 0
        %6001 = vmatprep.subr.bf16.mxu0 0
        %6002 = vmatpush2.bf16.msra.mxu0 0
        %6003 = vmatprep.subr.bf16.mxu0 0
        %6004 = vmatpush2.bf16.msra.mxu0 0
        %6005 = vmatprep.mubr.bf16.mxu0 0
        %6006 = vmatmul.mubr.bf16.gmra.mxu0 %v5673
        %v6007 = vpop.f32.mrf.mxu0
        %v6008 = vadd.f32 0.0, %v6007
        %v6009 = vpop.f32.mrf.mxu0
        %v6010 = vpop.f32.mrf.mxu0
        %v6011 = vadd.f32 0.0, %v6010
        %v6012 = vpop.f32.mrf.mxu0
        %6013 = vmatprep.mubr.bf16.mxu0 0
        %6014 = vmatmul.mubr.bf16.gmra.mxu0 %v5674
        %v6015 = vpop.f32.mrf.mxu0
        %v6016 = vadd.f32 0.0, %v6015
        %v6017 = vpop.f32.mrf.mxu0
        %v6018 = vpop.f32.mrf.mxu0
        %v6019 = vadd.f32 0.0, %v6018
        %v6020 = vpop.f32.mrf.mxu0
        %6021 = vmatprep.mubr.bf16.mxu0 0
        %6022 = vmatmul.mubr.bf16.gmra.mxu0 %v5675
        %v6023 = vpop.f32.mrf.mxu0
        %v6024 = vadd.f32 0.0, %v6023
        %v6025 = vpop.f32.mrf.mxu0
        %v6026 = vpop.f32.mrf.mxu0
        %v6027 = vadd.f32 0.0, %v6026
        %v6028 = vpop.f32.mrf.mxu0
        %6029 = vmatprep.mubr.bf16.mxu0 0
        %6030 = vmatmul.mubr.bf16.gmra.mxu0 %v5676
        %v6031 = vpop.f32.mrf.mxu0
        %v6032 = vadd.f32 0.0, %v6031
        %v6033 = vpop.f32.mrf.mxu0
        %v6034 = vpop.f32.mrf.mxu0
        %v6035 = vadd.f32 0.0, %v6034
        %v6036 = vpop.f32.mrf.mxu0
        %6037 = vmatprep.mubr.bf16.mxu0 0
        %6038 = vmatmul.mubr.bf16.gmra.mxu0 %v5677
        %v6039 = vpop.f32.mrf.mxu0
        %v6040 = vadd.f32 0.0, %v6039
        %v6041 = vpop.f32.mrf.mxu0
        %v6042 = vpop.f32.mrf.mxu0
        %v6043 = vadd.f32 0.0, %v6042
        %v6044 = vpop.f32.mrf.mxu0
        %6045 = vmatprep.mubr.bf16.mxu0 0
        %6046 = vmatmul.mubr.bf16.gmra.mxu0 %v5678
        %v6047 = vpop.f32.mrf.mxu0
        %v6048 = vadd.f32 0.0, %v6047
        %v6049 = vpop.f32.mrf.mxu0
        %v6050 = vpop.f32.mrf.mxu0
        %v6051 = vadd.f32 0.0, %v6050
        %v6052 = vpop.f32.mrf.mxu0
        %6053 = vmatprep.mubr.bf16.mxu0 0
        %6054 = vmatmul.mubr.bf16.gmra.mxu0 %v5679
        %v6055 = vpop.f32.mrf.mxu0
        %v6056 = vadd.f32 0.0, %v6055
        %v6057 = vpop.f32.mrf.mxu0
        %v6058 = vpop.f32.mrf.mxu0
        %v6059 = vadd.f32 0.0, %v6058
        %v6060 = vpop.f32.mrf.mxu0
        %6061 = vmatprep.mubr.bf16.mxu0 0
        %6062 = vmatmul.mubr.bf16.gmra.mxu0 %v5680
        %v6063 = vpop.f32.mrf.mxu0
        %v6064 = vadd.f32 0.0, %v6063
        %v6065 = vpop.f32.mrf.mxu0
        %v6066 = vpop.f32.mrf.mxu0
        %v6067 = vadd.f32 0.0, %v6066
        %v6068 = vpop.f32.mrf.mxu0
        %6069 = vdwg.mxu0
        %v6070 = vadd.f32 %v5909, %v6008
        %v6071 = vadd.f32 %v5910, %v6011
        %v6072 = vadd.f32 %v5911, %v6016
        %v6073 = vadd.f32 %v5912, %v6019
        %v6074 = vadd.f32 %v5913, %v6024
        %v6075 = vadd.f32 %v5914, %v6027
        %v6076 = vadd.f32 %v5915, %v6032
        %v6077 = vadd.f32 %v5916, %v6035
        %v6078 = vadd.f32 %v5917, %v6040
        %v6079 = vadd.f32 %v5918, %v6043
        %v6080 = vadd.f32 %v5919, %v6048
        %v6081 = vadd.f32 %v5920, %v6051
        %v6082 = vadd.f32 %v5921, %v6056
        %v6083 = vadd.f32 %v5922, %v6059
        %v6084 = vadd.f32 %v5923, %v6064
        %v6085 = vadd.f32 %v5924, %v6067
        %v6102 = vunpack.c.l.b16 %v5716
        %v6103 = vunpack.c.l.b16 %v5717
        %v6104 = vunpack.c.l.b16 %v5718
        %v6105 = vunpack.c.l.b16 %v5719
        %v6106 = vunpack.c.l.b16 %v5720
        %v6107 = vunpack.c.l.b16 %v5721
        %v6108 = vunpack.c.l.b16 %v5722
        %v6109 = vunpack.c.l.b16 %v5723
        %v6110 = vunpack.c.l.b16 %v5724
        %v6111 = vunpack.c.l.b16 %v5725
        %v6112 = vunpack.c.l.b16 %v5726
        %v6113 = vunpack.c.l.b16 %v5727
        %v6114 = vunpack.c.l.b16 %v5728
        %v6115 = vunpack.c.l.b16 %v5729
        %v6116 = vunpack.c.l.b16 %v5730
        %v6117 = vunpack.c.l.b16 %v5731
        %v6118 = vpack.c.b16 %v6103, %v6102
        %v6119 = vpack.c.b16 %v6105, %v6104
        %v6120 = vpack.c.b16 %v6107, %v6106
        %v6121 = vpack.c.b16 %v6109, %v6108
        %v6122 = vpack.c.b16 %v6111, %v6110
        %v6123 = vpack.c.b16 %v6113, %v6112
        %v6124 = vpack.c.b16 %v6115, %v6114
        %v6125 = vpack.c.b16 %v6117, %v6116
        %6134 = vmatprep.subr.bf16.mxu0 0
        %6135 = vmatpush1.bf16.msra.mxu0 %v6125
        %6136 = vmatprep.subr.bf16.mxu0 0
        %6137 = vmatpush1.bf16.msra.mxu0 %v6124
        %6138 = vmatprep.subr.bf16.mxu0 0
        %6139 = vmatpush1.bf16.msra.mxu0 %v6123
        %6140 = vmatprep.subr.bf16.mxu0 0
        %6141 = vmatpush1.bf16.msra.mxu0 %v6122
        %6142 = vmatprep.subr.bf16.mxu0 0
        %6143 = vmatpush1.bf16.msra.mxu0 %v6121
        %6144 = vmatprep.subr.bf16.mxu0 0
        %6145 = vmatpush1.bf16.msra.mxu0 %v6120
        %6146 = vmatprep.subr.bf16.mxu0 0
        %6147 = vmatpush1.bf16.msra.mxu0 %v6119
        %6148 = vmatprep.subr.bf16.mxu0 0
        %6149 = vmatpush1.bf16.msra.mxu0 %v6118
        %6150 = vmatprep.subr.bf16.mxu0 0
        %6151 = vmatpush2.bf16.msra.mxu0 0
        %6152 = vmatprep.subr.bf16.mxu0 0
        %6153 = vmatpush2.bf16.msra.mxu0 0
        %6154 = vmatprep.subr.bf16.mxu0 0
        %6155 = vmatpush2.bf16.msra.mxu0 0
        %6156 = vmatprep.subr.bf16.mxu0 0
        %6157 = vmatpush2.bf16.msra.mxu0 0
        %6158 = vmatprep.subr.bf16.mxu0 0
        %6159 = vmatpush2.bf16.msra.mxu0 0
        %6160 = vmatprep.subr.bf16.mxu0 0
        %6161 = vmatpush2.bf16.msra.mxu0 0
        %6162 = vmatprep.subr.bf16.mxu0 0
        %6163 = vmatpush2.bf16.msra.mxu0 0
        %6164 = vmatprep.subr.bf16.mxu0 0
        %6165 = vmatpush2.bf16.msra.mxu0 0
        %6166 = vmatprep.mubr.bf16.mxu0 0
        %6167 = vmatmul.mubr.bf16.gmra.mxu0 %v5673
        %v6168 = vpop.f32.mrf.mxu0
        %v6169 = vadd.f32 0.0, %v6168
        %v6170 = vpop.f32.mrf.mxu0
        %v6171 = vpop.f32.mrf.mxu0
        %v6172 = vadd.f32 0.0, %v6171
        %v6173 = vpop.f32.mrf.mxu0
        %6174 = vmatprep.mubr.bf16.mxu0 0
        %6175 = vmatmul.mubr.bf16.gmra.mxu0 %v5674
        %v6176 = vpop.f32.mrf.mxu0
        %v6177 = vadd.f32 0.0, %v6176
        %v6178 = vpop.f32.mrf.mxu0
        %v6179 = vpop.f32.mrf.mxu0
        %v6180 = vadd.f32 0.0, %v6179
        %v6181 = vpop.f32.mrf.mxu0
        %6182 = vmatprep.mubr.bf16.mxu0 0
        %6183 = vmatmul.mubr.bf16.gmra.mxu0 %v5675
        %v6184 = vpop.f32.mrf.mxu0
        %v6185 = vadd.f32 0.0, %v6184
        %v6186 = vpop.f32.mrf.mxu0
        %v6187 = vpop.f32.mrf.mxu0
        %v6188 = vadd.f32 0.0, %v6187
        %v6189 = vpop.f32.mrf.mxu0
        %6190 = vmatprep.mubr.bf16.mxu0 0
        %6191 = vmatmul.mubr.bf16.gmra.mxu0 %v5676
        %v6192 = vpop.f32.mrf.mxu0
        %v6193 = vadd.f32 0.0, %v6192
        %v6194 = vpop.f32.mrf.mxu0
        %v6195 = vpop.f32.mrf.mxu0
        %v6196 = vadd.f32 0.0, %v6195
        %v6197 = vpop.f32.mrf.mxu0
        %6198 = vmatprep.mubr.bf16.mxu0 0
        %6199 = vmatmul.mubr.bf16.gmra.mxu0 %v5677
        %v6200 = vpop.f32.mrf.mxu0
        %v6201 = vadd.f32 0.0, %v6200
        %v6202 = vpop.f32.mrf.mxu0
        %v6203 = vpop.f32.mrf.mxu0
        %v6204 = vadd.f32 0.0, %v6203
        %v6205 = vpop.f32.mrf.mxu0
        %6206 = vmatprep.mubr.bf16.mxu0 0
        %6207 = vmatmul.mubr.bf16.gmra.mxu0 %v5678
        %v6208 = vpop.f32.mrf.mxu0
        %v6209 = vadd.f32 0.0, %v6208
        %v6210 = vpop.f32.mrf.mxu0
        %v6211 = vpop.f32.mrf.mxu0
        %v6212 = vadd.f32 0.0, %v6211
        %v6213 = vpop.f32.mrf.mxu0
        %6214 = vmatprep.mubr.bf16.mxu0 0
        %6215 = vmatmul.mubr.bf16.gmra.mxu0 %v5679
        %v6216 = vpop.f32.mrf.mxu0
        %v6217 = vadd.f32 0.0, %v6216
        %v6218 = vpop.f32.mrf.mxu0
        %v6219 = vpop.f32.mrf.mxu0
        %v6220 = vadd.f32 0.0, %v6219
        %v6221 = vpop.f32.mrf.mxu0
        %6222 = vmatprep.mubr.bf16.mxu0 0
        %6223 = vmatmul.mubr.bf16.gmra.mxu0 %v5680
        %v6224 = vpop.f32.mrf.mxu0
        %v6225 = vadd.f32 0.0, %v6224
        %v6226 = vpop.f32.mrf.mxu0
        %v6227 = vpop.f32.mrf.mxu0
        %v6228 = vadd.f32 0.0, %v6227
        %v6229 = vpop.f32.mrf.mxu0
        %6230 = vdwg.mxu0
        %v6231 = vrot.slane %v6169, 1
        %v6232 = vrot.slane %v6172, 1
        %v6233 = vrot.slane %v6177, 1
        %v6234 = vrot.slane %v6180, 1
        %v6235 = vrot.slane %v6185, 1
        %v6236 = vrot.slane %v6188, 1
        %v6237 = vrot.slane %v6193, 1
        %v6238 = vrot.slane %v6196, 1
        %v6239 = vrot.slane %v6201, 1
        %v6240 = vrot.slane %v6204, 1
        %v6241 = vrot.slane %v6209, 1
        %v6242 = vrot.slane %v6212, 1
        %v6243 = vrot.slane %v6217, 1
        %v6244 = vrot.slane %v6220, 1
        %v6245 = vrot.slane %v6225, 1
        %v6246 = vrot.slane %v6228, 1
        %v6247 = vsel %vm2076, %v6245, %v6246
        %v6248 = vsel %vm2076, %v6244, %v6245
        %v6249 = vsel %vm2076, %v6243, %v6244
        %v6250 = vsel %vm2076, %v6242, %v6243
        %v6251 = vsel %vm2076, %v6241, %v6242
        %v6252 = vsel %vm2076, %v6240, %v6241
        %v6253 = vsel %vm2076, %v6239, %v6240
        %v6254 = vsel %vm2076, %v6238, %v6239
        %v6255 = vsel %vm2076, %v6237, %v6238
        %v6256 = vsel %vm2076, %v6236, %v6237
        %v6257 = vsel %vm2076, %v6235, %v6236
        %v6258 = vsel %vm2076, %v6234, %v6235
        %v6259 = vsel %vm2076, %v6233, %v6234
        %v6260 = vsel %vm2076, %v6232, %v6233
        %v6261 = vsel %vm2076, %v6231, %v6232
        %v6262 = vsel %vm2076, %v6246, %v6231
        %v6263 = vsel %vm2109, %v6261, 0.0
        %v6264 = vsel %vm2110, %v6260, 0.0
        %v6265 = vsel %vm2111, %v6259, 0.0
        %v6266 = vsel %vm2112, %v6258, 0.0
        %v6267 = vsel %vm2113, %v6257, 0.0
        %v6268 = vsel %vm2114, %v6256, 0.0
        %v6269 = vsel %vm2115, %v6255, 0.0
        %v6270 = vsel %vm2116, %v6254, 0.0
        %v6271 = vsel %vm2117, %v6253, 0.0
        %v6272 = vsel %vm2118, %v6252, 0.0
        %v6273 = vsel %vm2119, %v6251, 0.0
        %v6274 = vsel %vm2120, %v6250, 0.0
        %v6275 = vsel %vm2121, %v6249, 0.0
        %v6276 = vsel %vm2122, %v6248, 0.0
        %v6277 = vsel %vm2123, %v6247, 0.0
        %v6278 = vsel %vm2124, %v6262, 0.0
        %v6279 = vadd.f32 %v6070, %v6263
        %v6280 = vadd.f32 %v6071, %v6264
        %v6281 = vadd.f32 %v6072, %v6265
        %v6282 = vadd.f32 %v6073, %v6266
        %v6283 = vadd.f32 %v6074, %v6267
        %v6284 = vadd.f32 %v6075, %v6268
        %v6285 = vadd.f32 %v6076, %v6269
        %v6286 = vadd.f32 %v6077, %v6270
        %v6287 = vadd.f32 %v6078, %v6271
        %v6288 = vadd.f32 %v6079, %v6272
        %v6289 = vadd.f32 %v6080, %v6273
        %v6290 = vadd.f32 %v6081, %v6274
        %v6291 = vadd.f32 %v6082, %v6275
        %v6292 = vadd.f32 %v6083, %v6276
        %v6293 = vadd.f32 %v6084, %v6277
        %v6294 = vadd.f32 %v6085, %v6278
        %v6295 = vld [vmem:[%s5 + $0x6] sm:$0x1]
        %v6296 = vlaneseq
        %v6297 = vshrl.u32 %v6296, 7
        %v6298 = vsub.s32 0, %v6297
        %v6299 = vrot.slane %v6295, %v6298
        %v6300 = vmul.f32 %v6279, %v6299
        %v6301 = vmul.f32 %v6280, %v6299
        %v6302 = vmul.f32 %v6281, %v6299
        %v6303 = vmul.f32 %v6282, %v6299
        %v6304 = vmul.f32 %v6283, %v6299
        %v6305 = vmul.f32 %v6284, %v6299
        %v6306 = vmul.f32 %v6285, %v6299
        %v6307 = vmul.f32 %v6286, %v6299
        %v6308 = vmul.f32 %v6287, %v6299
        %v6309 = vmul.f32 %v6288, %v6299
        %v6310 = vmul.f32 %v6289, %v6299
        %v6311 = vmul.f32 %v6290, %v6299
        %v6312 = vmul.f32 %v6291, %v6299
        %v6313 = vmul.f32 %v6292, %v6299
        %v6314 = vmul.f32 %v6293, %v6299
        %v6315 = vmul.f32 %v6294, %v6299
        %v6316 = vld [vmem:[%s5 + $0x7] sm:$0x1]
        %v6317 = vlaneseq
        %v6318 = vshrl.u32 %v6317, 7
        %v6319 = vsub.s32 0, %v6318
        %v6320 = vrot.slane %v6316, %v6319
        %v6321 = vadd.f32 %v6300, %v6320
        %v6322 = vadd.f32 %v6301, %v6320
        %v6323 = vadd.f32 %v6302, %v6320
        %v6324 = vadd.f32 %v6303, %v6320
        %v6325 = vadd.f32 %v6304, %v6320
        %v6326 = vadd.f32 %v6305, %v6320
        %v6327 = vadd.f32 %v6306, %v6320
        %v6328 = vadd.f32 %v6307, %v6320
        %v6329 = vadd.f32 %v6308, %v6320
        %v6330 = vadd.f32 %v6309, %v6320
        %v6331 = vadd.f32 %v6310, %v6320
        %v6332 = vadd.f32 %v6311, %v6320
        %v6333 = vadd.f32 %v6312, %v6320
        %v6334 = vadd.f32 %v6313, %v6320
        %v6335 = vadd.f32 %v6314, %v6320
        %v6336 = vadd.f32 %v6315, %v6320
        %vm6337 = vcmp.gt.f32.partialorder %v6321, 0.0
        %vm6338 = vcmp.gt.f32.partialorder %v6322, 0.0
        %vm6339 = vcmp.gt.f32.partialorder %v6323, 0.0
        %vm6340 = vcmp.gt.f32.partialorder %v6324, 0.0
        %vm6341 = vcmp.gt.f32.partialorder %v6325, 0.0
        %vm6342 = vcmp.gt.f32.partialorder %v6326, 0.0
        %vm6343 = vcmp.gt.f32.partialorder %v6327, 0.0
        %vm6344 = vcmp.gt.f32.partialorder %v6328, 0.0
        %vm6345 = vcmp.gt.f32.partialorder %v6329, 0.0
        %vm6346 = vcmp.gt.f32.partialorder %v6330, 0.0
        %vm6347 = vcmp.gt.f32.partialorder %v6331, 0.0
        %vm6348 = vcmp.gt.f32.partialorder %v6332, 0.0
        %vm6349 = vcmp.gt.f32.partialorder %v6333, 0.0
        %vm6350 = vcmp.gt.f32.partialorder %v6334, 0.0
        %vm6351 = vcmp.gt.f32.partialorder %v6335, 0.0
        %vm6352 = vcmp.gt.f32.partialorder %v6336, 0.0
        %v6353 = vmul.f32 %v6321, 0.01
        %v6354 = vmul.f32 %v6322, 0.01
        %v6355 = vmul.f32 %v6323, 0.01
        %v6356 = vmul.f32 %v6324, 0.01
        %v6357 = vmul.f32 %v6325, 0.01
        %v6358 = vmul.f32 %v6326, 0.01
        %v6359 = vmul.f32 %v6327, 0.01
        %v6360 = vmul.f32 %v6328, 0.01
        %v6361 = vmul.f32 %v6329, 0.01
        %v6362 = vmul.f32 %v6330, 0.01
        %v6363 = vmul.f32 %v6331, 0.01
        %v6364 = vmul.f32 %v6332, 0.01
        %v6365 = vmul.f32 %v6333, 0.01
        %v6366 = vmul.f32 %v6334, 0.01
        %v6367 = vmul.f32 %v6335, 0.01
        %v6368 = vmul.f32 %v6336, 0.01
        %v6369 = vsel %vm6337, %v6321, %v6353
        %v6370 = vsel %vm6338, %v6322, %v6354
        %v6371 = vsel %vm6339, %v6323, %v6355
        %v6372 = vsel %vm6340, %v6324, %v6356
        %v6373 = vsel %vm6341, %v6325, %v6357
        %v6374 = vsel %vm6342, %v6326, %v6358
        %v6375 = vsel %vm6343, %v6327, %v6359
        %v6376 = vsel %vm6344, %v6328, %v6360
        %v6377 = vsel %vm6345, %v6329, %v6361
        %v6378 = vsel %vm6346, %v6330, %v6362
        %v6379 = vsel %vm6347, %v6331, %v6363
        %v6380 = vsel %vm6348, %v6332, %v6364
        %v6381 = vsel %vm6349, %v6333, %v6365
        %v6382 = vsel %vm6350, %v6334, %v6366
        %v6383 = vsel %vm6351, %v6335, %v6367
        %v6384 = vsel %vm6352, %v6336, %v6368
        %v6385 = vpack.c.bf16 %v6370, %v6369
        %v6386 = vpack.c.bf16 %v6372, %v6371
        %v6387 = vpack.c.bf16 %v6374, %v6373
        %v6388 = vpack.c.bf16 %v6376, %v6375
        %v6389 = vpack.c.bf16 %v6378, %v6377
        %v6390 = vpack.c.bf16 %v6380, %v6379
        %v6391 = vpack.c.bf16 %v6382, %v6381
        %v6392 = vpack.c.bf16 %v6384, %v6383
        %s6393 = scalar_lea.vmem [#allocation7], 576
        %v6394 = vld [vmem:[%s6393] sm:$0xf]
        %v6395 = vld [vmem:[%s6393 + $0x4] sm:$0xf]
        %v6396 = vld [vmem:[%s6393 + $0x8] sm:$0xf]
        %v6397 = vld [vmem:[%s6393 + $0xc] sm:$0xf]
        %v6398 = vld [vmem:[%s6393 + $0x10] sm:$0xf]
        %v6399 = vld [vmem:[%s6393 + $0x14] sm:$0xf]
        %v6400 = vld [vmem:[%s6393 + $0x18] sm:$0xf]
        %v6401 = vld [vmem:[%s6393 + $0x1c] sm:$0xf]
        %v6402 = vld [vmem:[%s6393 + $0x20] sm:$0xf]
        %v6403 = vld [vmem:[%s6393 + $0x24] sm:$0xf]
        %v6404 = vld [vmem:[%s6393 + $0x28] sm:$0xf]
        %v6405 = vld [vmem:[%s6393 + $0x2c] sm:$0xf]
        %v6406 = vld [vmem:[%s6393 + $0x30] sm:$0xf]
        %v6407 = vld [vmem:[%s6393 + $0x34] sm:$0xf]
        %v6408 = vld [vmem:[%s6393 + $0x38] sm:$0xf]
        %v6409 = vld [vmem:[%s6393 + $0x3c] sm:$0xf]
        %s6410 = scalar_lea.vmem [#allocation7], 640
        %v6411 = vld [vmem:[%s6410] sm:$0xf]
        %v6412 = vld [vmem:[%s6410 + $0x4] sm:$0xf]
        %v6413 = vld [vmem:[%s6410 + $0x8] sm:$0xf]
        %v6414 = vld [vmem:[%s6410 + $0xc] sm:$0xf]
        %v6415 = vld [vmem:[%s6410 + $0x10] sm:$0xf]
        %v6416 = vld [vmem:[%s6410 + $0x14] sm:$0xf]
        %v6417 = vld [vmem:[%s6410 + $0x18] sm:$0xf]
        %v6418 = vld [vmem:[%s6410 + $0x1c] sm:$0xf]
        %v6419 = vld [vmem:[%s6410 + $0x20] sm:$0xf]
        %v6420 = vld [vmem:[%s6410 + $0x24] sm:$0xf]
        %v6421 = vld [vmem:[%s6410 + $0x28] sm:$0xf]
        %v6422 = vld [vmem:[%s6410 + $0x2c] sm:$0xf]
        %v6423 = vld [vmem:[%s6410 + $0x30] sm:$0xf]
        %v6424 = vld [vmem:[%s6410 + $0x34] sm:$0xf]
        %v6425 = vld [vmem:[%s6410 + $0x38] sm:$0xf]
        %v6426 = vld [vmem:[%s6410 + $0x3c] sm:$0xf]
        %s6427 = scalar_lea.vmem [#allocation7], 704
        %v6428 = vld [vmem:[%s6427] sm:$0xf]
        %v6429 = vld [vmem:[%s6427 + $0x4] sm:$0xf]
        %v6430 = vld [vmem:[%s6427 + $0x8] sm:$0xf]
        %v6431 = vld [vmem:[%s6427 + $0xc] sm:$0xf]
        %v6432 = vld [vmem:[%s6427 + $0x10] sm:$0xf]
        %v6433 = vld [vmem:[%s6427 + $0x14] sm:$0xf]
        %v6434 = vld [vmem:[%s6427 + $0x18] sm:$0xf]
        %v6435 = vld [vmem:[%s6427 + $0x1c] sm:$0xf]
        %v6436 = vld [vmem:[%s6427 + $0x20] sm:$0xf]
        %v6437 = vld [vmem:[%s6427 + $0x24] sm:$0xf]
        %v6438 = vld [vmem:[%s6427 + $0x28] sm:$0xf]
        %v6439 = vld [vmem:[%s6427 + $0x2c] sm:$0xf]
        %v6440 = vld [vmem:[%s6427 + $0x30] sm:$0xf]
        %v6441 = vld [vmem:[%s6427 + $0x34] sm:$0xf]
        %v6442 = vld [vmem:[%s6427 + $0x38] sm:$0xf]
        %v6443 = vld [vmem:[%s6427 + $0x3c] sm:$0xf]
        %v6460 = vunpack.c.l.b16 %v6394
        %v6461 = vunpack.c.l.b16 %v6395
        %v6462 = vunpack.c.l.b16 %v6396
        %v6463 = vunpack.c.l.b16 %v6397
        %v6464 = vunpack.c.l.b16 %v6398
        %v6465 = vunpack.c.l.b16 %v6399
        %v6466 = vunpack.c.l.b16 %v6400
        %v6467 = vunpack.c.l.b16 %v6401
        %v6468 = vunpack.c.l.b16 %v6402
        %v6469 = vunpack.c.l.b16 %v6403
        %v6470 = vunpack.c.l.b16 %v6404
        %v6471 = vunpack.c.l.b16 %v6405
        %v6472 = vunpack.c.l.b16 %v6406
        %v6473 = vunpack.c.l.b16 %v6407
        %v6474 = vunpack.c.l.b16 %v6408
        %v6475 = vunpack.c.l.b16 %v6409
        %v6476 = vpack.c.b16 %v6461, %v6460
        %v6477 = vpack.c.b16 %v6463, %v6462
        %v6478 = vpack.c.b16 %v6465, %v6464
        %v6479 = vpack.c.b16 %v6467, %v6466
        %v6480 = vpack.c.b16 %v6469, %v6468
        %v6481 = vpack.c.b16 %v6471, %v6470
        %v6482 = vpack.c.b16 %v6473, %v6472
        %v6483 = vpack.c.b16 %v6475, %v6474
        %6492 = vmatprep.subr.bf16.mxu0 0
        %6493 = vmatpush1.bf16.msra.mxu0 %v6483
        %6494 = vmatprep.subr.bf16.mxu0 0
        %6495 = vmatpush1.bf16.msra.mxu0 %v6482
        %6496 = vmatprep.subr.bf16.mxu0 0
        %6497 = vmatpush1.bf16.msra.mxu0 %v6481
        %6498 = vmatprep.subr.bf16.mxu0 0
        %6499 = vmatpush1.bf16.msra.mxu0 %v6480
        %6500 = vmatprep.subr.bf16.mxu0 0
        %6501 = vmatpush1.bf16.msra.mxu0 %v6479
        %6502 = vmatprep.subr.bf16.mxu0 0
        %6503 = vmatpush1.bf16.msra.mxu0 %v6478
        %6504 = vmatprep.subr.bf16.mxu0 0
        %6505 = vmatpush1.bf16.msra.mxu0 %v6477
        %6506 = vmatprep.subr.bf16.mxu0 0
        %6507 = vmatpush1.bf16.msra.mxu0 %v6476
        %6508 = vmatprep.subr.bf16.mxu0 0
        %6509 = vmatpush2.bf16.msra.mxu0 0
        %6510 = vmatprep.subr.bf16.mxu0 0
        %6511 = vmatpush2.bf16.msra.mxu0 0
        %6512 = vmatprep.subr.bf16.mxu0 0
        %6513 = vmatpush2.bf16.msra.mxu0 0
        %6514 = vmatprep.subr.bf16.mxu0 0
        %6515 = vmatpush2.bf16.msra.mxu0 0
        %6516 = vmatprep.subr.bf16.mxu0 0
        %6517 = vmatpush2.bf16.msra.mxu0 0
        %6518 = vmatprep.subr.bf16.mxu0 0
        %6519 = vmatpush2.bf16.msra.mxu0 0
        %6520 = vmatprep.subr.bf16.mxu0 0
        %6521 = vmatpush2.bf16.msra.mxu0 0
        %6522 = vmatprep.subr.bf16.mxu0 0
        %6523 = vmatpush2.bf16.msra.mxu0 0
        %6524 = vmatprep.mubr.bf16.mxu0 0
        %6525 = vmatmul.mubr.bf16.gmra.mxu0 %v6385
        %v6526 = vpop.f32.mrf.mxu0
        %v6527 = vadd.f32 0.0, %v6526
        %v6528 = vpop.f32.mrf.mxu0
        %v6529 = vpop.f32.mrf.mxu0
        %v6530 = vadd.f32 0.0, %v6529
        %v6531 = vpop.f32.mrf.mxu0
        %6532 = vmatprep.mubr.bf16.mxu0 0
        %6533 = vmatmul.mubr.bf16.gmra.mxu0 %v6386
        %v6534 = vpop.f32.mrf.mxu0
        %v6535 = vadd.f32 0.0, %v6534
        %v6536 = vpop.f32.mrf.mxu0
        %v6537 = vpop.f32.mrf.mxu0
        %v6538 = vadd.f32 0.0, %v6537
        %v6539 = vpop.f32.mrf.mxu0
        %6540 = vmatprep.mubr.bf16.mxu0 0
        %6541 = vmatmul.mubr.bf16.gmra.mxu0 %v6387
        %v6542 = vpop.f32.mrf.mxu0
        %v6543 = vadd.f32 0.0, %v6542
        %v6544 = vpop.f32.mrf.mxu0
        %v6545 = vpop.f32.mrf.mxu0
        %v6546 = vadd.f32 0.0, %v6545
        %v6547 = vpop.f32.mrf.mxu0
        %6548 = vmatprep.mubr.bf16.mxu0 0
        %6549 = vmatmul.mubr.bf16.gmra.mxu0 %v6388
        %v6550 = vpop.f32.mrf.mxu0
        %v6551 = vadd.f32 0.0, %v6550
        %v6552 = vpop.f32.mrf.mxu0
        %v6553 = vpop.f32.mrf.mxu0
        %v6554 = vadd.f32 0.0, %v6553
        %v6555 = vpop.f32.mrf.mxu0
        %6556 = vmatprep.mubr.bf16.mxu0 0
        %6557 = vmatmul.mubr.bf16.gmra.mxu0 %v6389
        %v6558 = vpop.f32.mrf.mxu0
        %v6559 = vadd.f32 0.0, %v6558
        %v6560 = vpop.f32.mrf.mxu0
        %v6561 = vpop.f32.mrf.mxu0
        %v6562 = vadd.f32 0.0, %v6561
        %v6563 = vpop.f32.mrf.mxu0
        %6564 = vmatprep.mubr.bf16.mxu0 0
        %6565 = vmatmul.mubr.bf16.gmra.mxu0 %v6390
        %v6566 = vpop.f32.mrf.mxu0
        %v6567 = vadd.f32 0.0, %v6566
        %v6568 = vpop.f32.mrf.mxu0
        %v6569 = vpop.f32.mrf.mxu0
        %v6570 = vadd.f32 0.0, %v6569
        %v6571 = vpop.f32.mrf.mxu0
        %6572 = vmatprep.mubr.bf16.mxu0 0
        %6573 = vmatmul.mubr.bf16.gmra.mxu0 %v6391
        %v6574 = vpop.f32.mrf.mxu0
        %v6575 = vadd.f32 0.0, %v6574
        %v6576 = vpop.f32.mrf.mxu0
        %v6577 = vpop.f32.mrf.mxu0
        %v6578 = vadd.f32 0.0, %v6577
        %v6579 = vpop.f32.mrf.mxu0
        %6580 = vmatprep.mubr.bf16.mxu0 0
        %6581 = vmatmul.mubr.bf16.gmra.mxu0 %v6392
        %v6582 = vpop.f32.mrf.mxu0
        %v6583 = vadd.f32 0.0, %v6582
        %v6584 = vpop.f32.mrf.mxu0
        %v6585 = vpop.f32.mrf.mxu0
        %v6586 = vadd.f32 0.0, %v6585
        %v6587 = vpop.f32.mrf.mxu0
        %6588 = vdwg.mxu0
        %v6589 = vrot.slane %v6527, 7
        %v6590 = vrot.slane %v6530, 7
        %v6591 = vrot.slane %v6535, 7
        %v6592 = vrot.slane %v6538, 7
        %v6593 = vrot.slane %v6543, 7
        %v6594 = vrot.slane %v6546, 7
        %v6595 = vrot.slane %v6551, 7
        %v6596 = vrot.slane %v6554, 7
        %v6597 = vrot.slane %v6559, 7
        %v6598 = vrot.slane %v6562, 7
        %v6599 = vrot.slane %v6567, 7
        %v6600 = vrot.slane %v6570, 7
        %v6601 = vrot.slane %v6575, 7
        %v6602 = vrot.slane %v6578, 7
        %v6603 = vrot.slane %v6583, 7
        %v6604 = vrot.slane %v6586, 7
        %v6605 = vsel %vm1303, %v6603, %v6604
        %v6606 = vsel %vm1303, %v6602, %v6603
        %v6607 = vsel %vm1303, %v6601, %v6602
        %v6608 = vsel %vm1303, %v6600, %v6601
        %v6609 = vsel %vm1303, %v6599, %v6600
        %v6610 = vsel %vm1303, %v6598, %v6599
        %v6611 = vsel %vm1303, %v6597, %v6598
        %v6612 = vsel %vm1303, %v6596, %v6597
        %v6613 = vsel %vm1303, %v6595, %v6596
        %v6614 = vsel %vm1303, %v6594, %v6595
        %v6615 = vsel %vm1303, %v6593, %v6594
        %v6616 = vsel %vm1303, %v6592, %v6593
        %v6617 = vsel %vm1303, %v6591, %v6592
        %v6618 = vsel %vm1303, %v6590, %v6591
        %v6619 = vsel %vm1303, %v6589, %v6590
        %v6620 = vsel %vm1303, %v6604, %v6589
        %v6621 = vsel %vm1336, %v6620, 0.0
        %v6622 = vsel %vm1337, %v6619, 0.0
        %v6623 = vsel %vm1338, %v6618, 0.0
        %v6624 = vsel %vm1339, %v6617, 0.0
        %v6625 = vsel %vm1340, %v6616, 0.0
        %v6626 = vsel %vm1341, %v6615, 0.0
        %v6627 = vsel %vm1342, %v6614, 0.0
        %v6628 = vsel %vm1343, %v6613, 0.0
        %v6629 = vsel %vm1344, %v6612, 0.0
        %v6630 = vsel %vm1345, %v6611, 0.0
        %v6631 = vsel %vm1346, %v6610, 0.0
        %v6632 = vsel %vm1347, %v6609, 0.0
        %v6633 = vsel %vm1348, %v6608, 0.0
        %v6634 = vsel %vm1349, %v6607, 0.0
        %v6635 = vsel %vm1350, %v6606, 0.0
        %v6636 = vsel %vm1351, %v6605, 0.0
        %v6653 = vunpack.c.l.b16 %v6411
        %v6654 = vunpack.c.l.b16 %v6412
        %v6655 = vunpack.c.l.b16 %v6413
        %v6656 = vunpack.c.l.b16 %v6414
        %v6657 = vunpack.c.l.b16 %v6415
        %v6658 = vunpack.c.l.b16 %v6416
        %v6659 = vunpack.c.l.b16 %v6417
        %v6660 = vunpack.c.l.b16 %v6418
        %v6661 = vunpack.c.l.b16 %v6419
        %v6662 = vunpack.c.l.b16 %v6420
        %v6663 = vunpack.c.l.b16 %v6421
        %v6664 = vunpack.c.l.b16 %v6422
        %v6665 = vunpack.c.l.b16 %v6423
        %v6666 = vunpack.c.l.b16 %v6424
        %v6667 = vunpack.c.l.b16 %v6425
        %v6668 = vunpack.c.l.b16 %v6426
        %v6669 = vpack.c.b16 %v6654, %v6653
        %v6670 = vpack.c.b16 %v6656, %v6655
        %v6671 = vpack.c.b16 %v6658, %v6657
        %v6672 = vpack.c.b16 %v6660, %v6659
        %v6673 = vpack.c.b16 %v6662, %v6661
        %v6674 = vpack.c.b16 %v6664, %v6663
        %v6675 = vpack.c.b16 %v6666, %v6665
        %v6676 = vpack.c.b16 %v6668, %v6667
        %6685 = vmatprep.subr.bf16.mxu0 0
        %6686 = vmatpush1.bf16.msra.mxu0 %v6676
        %6687 = vmatprep.subr.bf16.mxu0 0
        %6688 = vmatpush1.bf16.msra.mxu0 %v6675
        %6689 = vmatprep.subr.bf16.mxu0 0
        %6690 = vmatpush1.bf16.msra.mxu0 %v6674
        %6691 = vmatprep.subr.bf16.mxu0 0
        %6692 = vmatpush1.bf16.msra.mxu0 %v6673
        %6693 = vmatprep.subr.bf16.mxu0 0
        %6694 = vmatpush1.bf16.msra.mxu0 %v6672
        %6695 = vmatprep.subr.bf16.mxu0 0
        %6696 = vmatpush1.bf16.msra.mxu0 %v6671
        %6697 = vmatprep.subr.bf16.mxu0 0
        %6698 = vmatpush1.bf16.msra.mxu0 %v6670
        %6699 = vmatprep.subr.bf16.mxu0 0
        %6700 = vmatpush1.bf16.msra.mxu0 %v6669
        %6701 = vmatprep.subr.bf16.mxu0 0
        %6702 = vmatpush2.bf16.msra.mxu0 0
        %6703 = vmatprep.subr.bf16.mxu0 0
        %6704 = vmatpush2.bf16.msra.mxu0 0
        %6705 = vmatprep.subr.bf16.mxu0 0
        %6706 = vmatpush2.bf16.msra.mxu0 0
        %6707 = vmatprep.subr.bf16.mxu0 0
        %6708 = vmatpush2.bf16.msra.mxu0 0
        %6709 = vmatprep.subr.bf16.mxu0 0
        %6710 = vmatpush2.bf16.msra.mxu0 0
        %6711 = vmatprep.subr.bf16.mxu0 0
        %6712 = vmatpush2.bf16.msra.mxu0 0
        %6713 = vmatprep.subr.bf16.mxu0 0
        %6714 = vmatpush2.bf16.msra.mxu0 0
        %6715 = vmatprep.subr.bf16.mxu0 0
        %6716 = vmatpush2.bf16.msra.mxu0 0
        %6717 = vmatprep.mubr.bf16.mxu0 0
        %6718 = vmatmul.mubr.bf16.gmra.mxu0 %v6385
        %v6719 = vpop.f32.mrf.mxu0
        %v6720 = vadd.f32 0.0, %v6719
        %v6721 = vpop.f32.mrf.mxu0
        %v6722 = vpop.f32.mrf.mxu0
        %v6723 = vadd.f32 0.0, %v6722
        %v6724 = vpop.f32.mrf.mxu0
        %6725 = vmatprep.mubr.bf16.mxu0 0
        %6726 = vmatmul.mubr.bf16.gmra.mxu0 %v6386
        %v6727 = vpop.f32.mrf.mxu0
        %v6728 = vadd.f32 0.0, %v6727
        %v6729 = vpop.f32.mrf.mxu0
        %v6730 = vpop.f32.mrf.mxu0
        %v6731 = vadd.f32 0.0, %v6730
        %v6732 = vpop.f32.mrf.mxu0
        %6733 = vmatprep.mubr.bf16.mxu0 0
        %6734 = vmatmul.mubr.bf16.gmra.mxu0 %v6387
        %v6735 = vpop.f32.mrf.mxu0
        %v6736 = vadd.f32 0.0, %v6735
        %v6737 = vpop.f32.mrf.mxu0
        %v6738 = vpop.f32.mrf.mxu0
        %v6739 = vadd.f32 0.0, %v6738
        %v6740 = vpop.f32.mrf.mxu0
        %6741 = vmatprep.mubr.bf16.mxu0 0
        %6742 = vmatmul.mubr.bf16.gmra.mxu0 %v6388
        %v6743 = vpop.f32.mrf.mxu0
        %v6744 = vadd.f32 0.0, %v6743
        %v6745 = vpop.f32.mrf.mxu0
        %v6746 = vpop.f32.mrf.mxu0
        %v6747 = vadd.f32 0.0, %v6746
        %v6748 = vpop.f32.mrf.mxu0
        %6749 = vmatprep.mubr.bf16.mxu0 0
        %6750 = vmatmul.mubr.bf16.gmra.mxu0 %v6389
        %v6751 = vpop.f32.mrf.mxu0
        %v6752 = vadd.f32 0.0, %v6751
        %v6753 = vpop.f32.mrf.mxu0
        %v6754 = vpop.f32.mrf.mxu0
        %v6755 = vadd.f32 0.0, %v6754
        %v6756 = vpop.f32.mrf.mxu0
        %6757 = vmatprep.mubr.bf16.mxu0 0
        %6758 = vmatmul.mubr.bf16.gmra.mxu0 %v6390
        %v6759 = vpop.f32.mrf.mxu0
        %v6760 = vadd.f32 0.0, %v6759
        %v6761 = vpop.f32.mrf.mxu0
        %v6762 = vpop.f32.mrf.mxu0
        %v6763 = vadd.f32 0.0, %v6762
        %v6764 = vpop.f32.mrf.mxu0
        %6765 = vmatprep.mubr.bf16.mxu0 0
        %6766 = vmatmul.mubr.bf16.gmra.mxu0 %v6391
        %v6767 = vpop.f32.mrf.mxu0
        %v6768 = vadd.f32 0.0, %v6767
        %v6769 = vpop.f32.mrf.mxu0
        %v6770 = vpop.f32.mrf.mxu0
        %v6771 = vadd.f32 0.0, %v6770
        %v6772 = vpop.f32.mrf.mxu0
        %6773 = vmatprep.mubr.bf16.mxu0 0
        %6774 = vmatmul.mubr.bf16.gmra.mxu0 %v6392
        %v6775 = vpop.f32.mrf.mxu0
        %v6776 = vadd.f32 0.0, %v6775
        %v6777 = vpop.f32.mrf.mxu0
        %v6778 = vpop.f32.mrf.mxu0
        %v6779 = vadd.f32 0.0, %v6778
        %v6780 = vpop.f32.mrf.mxu0
        %6781 = vdwg.mxu0
        %v6782 = vadd.f32 %v6621, %v6720
        %v6783 = vadd.f32 %v6622, %v6723
        %v6784 = vadd.f32 %v6623, %v6728
        %v6785 = vadd.f32 %v6624, %v6731
        %v6786 = vadd.f32 %v6625, %v6736
        %v6787 = vadd.f32 %v6626, %v6739
        %v6788 = vadd.f32 %v6627, %v6744
        %v6789 = vadd.f32 %v6628, %v6747
        %v6790 = vadd.f32 %v6629, %v6752
        %v6791 = vadd.f32 %v6630, %v6755
        %v6792 = vadd.f32 %v6631, %v6760
        %v6793 = vadd.f32 %v6632, %v6763
        %v6794 = vadd.f32 %v6633, %v6768
        %v6795 = vadd.f32 %v6634, %v6771
        %v6796 = vadd.f32 %v6635, %v6776
        %v6797 = vadd.f32 %v6636, %v6779
        %v6814 = vunpack.c.l.b16 %v6428
        %v6815 = vunpack.c.l.b16 %v6429
        %v6816 = vunpack.c.l.b16 %v6430
        %v6817 = vunpack.c.l.b16 %v6431
        %v6818 = vunpack.c.l.b16 %v6432
        %v6819 = vunpack.c.l.b16 %v6433
        %v6820 = vunpack.c.l.b16 %v6434
        %v6821 = vunpack.c.l.b16 %v6435
        %v6822 = vunpack.c.l.b16 %v6436
        %v6823 = vunpack.c.l.b16 %v6437
        %v6824 = vunpack.c.l.b16 %v6438
        %v6825 = vunpack.c.l.b16 %v6439
        %v6826 = vunpack.c.l.b16 %v6440
        %v6827 = vunpack.c.l.b16 %v6441
        %v6828 = vunpack.c.l.b16 %v6442
        %v6829 = vunpack.c.l.b16 %v6443
        %v6830 = vpack.c.b16 %v6815, %v6814
        %v6831 = vpack.c.b16 %v6817, %v6816
        %v6832 = vpack.c.b16 %v6819, %v6818
        %v6833 = vpack.c.b16 %v6821, %v6820
        %v6834 = vpack.c.b16 %v6823, %v6822
        %v6835 = vpack.c.b16 %v6825, %v6824
        %v6836 = vpack.c.b16 %v6827, %v6826
        %v6837 = vpack.c.b16 %v6829, %v6828
        %6846 = vmatprep.subr.bf16.mxu0 0
        %6847 = vmatpush1.bf16.msra.mxu0 %v6837
        %6848 = vmatprep.subr.bf16.mxu0 0
        %6849 = vmatpush1.bf16.msra.mxu0 %v6836
        %6850 = vmatprep.subr.bf16.mxu0 0
        %6851 = vmatpush1.bf16.msra.mxu0 %v6835
        %6852 = vmatprep.subr.bf16.mxu0 0
        %6853 = vmatpush1.bf16.msra.mxu0 %v6834
        %6854 = vmatprep.subr.bf16.mxu0 0
        %6855 = vmatpush1.bf16.msra.mxu0 %v6833
        %6856 = vmatprep.subr.bf16.mxu0 0
        %6857 = vmatpush1.bf16.msra.mxu0 %v6832
        %6858 = vmatprep.subr.bf16.mxu0 0
        %6859 = vmatpush1.bf16.msra.mxu0 %v6831
        %6860 = vmatprep.subr.bf16.mxu0 0
        %6861 = vmatpush1.bf16.msra.mxu0 %v6830
        %6862 = vmatprep.subr.bf16.mxu0 0
        %6863 = vmatpush2.bf16.msra.mxu0 0
        %6864 = vmatprep.subr.bf16.mxu0 0
        %6865 = vmatpush2.bf16.msra.mxu0 0
        %6866 = vmatprep.subr.bf16.mxu0 0
        %6867 = vmatpush2.bf16.msra.mxu0 0
        %6868 = vmatprep.subr.bf16.mxu0 0
        %6869 = vmatpush2.bf16.msra.mxu0 0
        %6870 = vmatprep.subr.bf16.mxu0 0
        %6871 = vmatpush2.bf16.msra.mxu0 0
        %6872 = vmatprep.subr.bf16.mxu0 0
        %6873 = vmatpush2.bf16.msra.mxu0 0
        %6874 = vmatprep.subr.bf16.mxu0 0
        %6875 = vmatpush2.bf16.msra.mxu0 0
        %6876 = vmatprep.subr.bf16.mxu0 0
        %6877 = vmatpush2.bf16.msra.mxu0 0
        %6878 = vmatprep.mubr.bf16.mxu0 0
        %6879 = vmatmul.mubr.bf16.gmra.mxu0 %v6385
        %v6880 = vpop.f32.mrf.mxu0
        %v6881 = vadd.f32 0.0, %v6880
        %v6882 = vpop.f32.mrf.mxu0
        %v6883 = vpop.f32.mrf.mxu0
        %v6884 = vadd.f32 0.0, %v6883
        %v6885 = vpop.f32.mrf.mxu0
        %6886 = vmatprep.mubr.bf16.mxu0 0
        %6887 = vmatmul.mubr.bf16.gmra.mxu0 %v6386
        %v6888 = vpop.f32.mrf.mxu0
        %v6889 = vadd.f32 0.0, %v6888
        %v6890 = vpop.f32.mrf.mxu0
        %v6891 = vpop.f32.mrf.mxu0
        %v6892 = vadd.f32 0.0, %v6891
        %v6893 = vpop.f32.mrf.mxu0
        %6894 = vmatprep.mubr.bf16.mxu0 0
        %6895 = vmatmul.mubr.bf16.gmra.mxu0 %v6387
        %v6896 = vpop.f32.mrf.mxu0
        %v6897 = vadd.f32 0.0, %v6896
        %v6898 = vpop.f32.mrf.mxu0
        %v6899 = vpop.f32.mrf.mxu0
        %v6900 = vadd.f32 0.0, %v6899
        %v6901 = vpop.f32.mrf.mxu0
        %6902 = vmatprep.mubr.bf16.mxu0 0
        %6903 = vmatmul.mubr.bf16.gmra.mxu0 %v6388
        %v6904 = vpop.f32.mrf.mxu0
        %v6905 = vadd.f32 0.0, %v6904
        %v6906 = vpop.f32.mrf.mxu0
        %v6907 = vpop.f32.mrf.mxu0
        %v6908 = vadd.f32 0.0, %v6907
        %v6909 = vpop.f32.mrf.mxu0
        %6910 = vmatprep.mubr.bf16.mxu0 0
        %6911 = vmatmul.mubr.bf16.gmra.mxu0 %v6389
        %v6912 = vpop.f32.mrf.mxu0
        %v6913 = vadd.f32 0.0, %v6912
        %v6914 = vpop.f32.mrf.mxu0
        %v6915 = vpop.f32.mrf.mxu0
        %v6916 = vadd.f32 0.0, %v6915
        %v6917 = vpop.f32.mrf.mxu0
        %6918 = vmatprep.mubr.bf16.mxu0 0
        %6919 = vmatmul.mubr.bf16.gmra.mxu0 %v6390
        %v6920 = vpop.f32.mrf.mxu0
        %v6921 = vadd.f32 0.0, %v6920
        %v6922 = vpop.f32.mrf.mxu0
        %v6923 = vpop.f32.mrf.mxu0
        %v6924 = vadd.f32 0.0, %v6923
        %v6925 = vpop.f32.mrf.mxu0
        %6926 = vmatprep.mubr.bf16.mxu0 0
        %6927 = vmatmul.mubr.bf16.gmra.mxu0 %v6391
        %v6928 = vpop.f32.mrf.mxu0
        %v6929 = vadd.f32 0.0, %v6928
        %v6930 = vpop.f32.mrf.mxu0
        %v6931 = vpop.f32.mrf.mxu0
        %v6932 = vadd.f32 0.0, %v6931
        %v6933 = vpop.f32.mrf.mxu0
        %6934 = vmatprep.mubr.bf16.mxu0 0
        %6935 = vmatmul.mubr.bf16.gmra.mxu0 %v6392
        %v6936 = vpop.f32.mrf.mxu0
        %v6937 = vadd.f32 0.0, %v6936
        %v6938 = vpop.f32.mrf.mxu0
        %v6939 = vpop.f32.mrf.mxu0
        %v6940 = vadd.f32 0.0, %v6939
        %v6941 = vpop.f32.mrf.mxu0
        %6942 = vdwg.mxu0
        %v6943 = vrot.slane %v6881, 1
        %v6944 = vrot.slane %v6884, 1
        %v6945 = vrot.slane %v6889, 1
        %v6946 = vrot.slane %v6892, 1
        %v6947 = vrot.slane %v6897, 1
        %v6948 = vrot.slane %v6900, 1
        %v6949 = vrot.slane %v6905, 1
        %v6950 = vrot.slane %v6908, 1
        %v6951 = vrot.slane %v6913, 1
        %v6952 = vrot.slane %v6916, 1
        %v6953 = vrot.slane %v6921, 1
        %v6954 = vrot.slane %v6924, 1
        %v6955 = vrot.slane %v6929, 1
        %v6956 = vrot.slane %v6932, 1
        %v6957 = vrot.slane %v6937, 1
        %v6958 = vrot.slane %v6940, 1
        %v6959 = vsel %vm2076, %v6957, %v6958
        %v6960 = vsel %vm2076, %v6956, %v6957
        %v6961 = vsel %vm2076, %v6955, %v6956
        %v6962 = vsel %vm2076, %v6954, %v6955
        %v6963 = vsel %vm2076, %v6953, %v6954
        %v6964 = vsel %vm2076, %v6952, %v6953
        %v6965 = vsel %vm2076, %v6951, %v6952
        %v6966 = vsel %vm2076, %v6950, %v6951
        %v6967 = vsel %vm2076, %v6949, %v6950
        %v6968 = vsel %vm2076, %v6948, %v6949
        %v6969 = vsel %vm2076, %v6947, %v6948
        %v6970 = vsel %vm2076, %v6946, %v6947
        %v6971 = vsel %vm2076, %v6945, %v6946
        %v6972 = vsel %vm2076, %v6944, %v6945
        %v6973 = vsel %vm2076, %v6943, %v6944
        %v6974 = vsel %vm2076, %v6958, %v6943
        %v6975 = vsel %vm2109, %v6973, 0.0
        %v6976 = vsel %vm2110, %v6972, 0.0
        %v6977 = vsel %vm2111, %v6971, 0.0
        %v6978 = vsel %vm2112, %v6970, 0.0
        %v6979 = vsel %vm2113, %v6969, 0.0
        %v6980 = vsel %vm2114, %v6968, 0.0
        %v6981 = vsel %vm2115, %v6967, 0.0
        %v6982 = vsel %vm2116, %v6966, 0.0
        %v6983 = vsel %vm2117, %v6965, 0.0
        %v6984 = vsel %vm2118, %v6964, 0.0
        %v6985 = vsel %vm2119, %v6963, 0.0
        %v6986 = vsel %vm2120, %v6962, 0.0
        %v6987 = vsel %vm2121, %v6961, 0.0
        %v6988 = vsel %vm2122, %v6960, 0.0
        %v6989 = vsel %vm2123, %v6959, 0.0
        %v6990 = vsel %vm2124, %v6974, 0.0
        %v6991 = vadd.f32 %v6782, %v6975
        %v6992 = vadd.f32 %v6783, %v6976
        %v6993 = vadd.f32 %v6784, %v6977
        %v6994 = vadd.f32 %v6785, %v6978
        %v6995 = vadd.f32 %v6786, %v6979
        %v6996 = vadd.f32 %v6787, %v6980
        %v6997 = vadd.f32 %v6788, %v6981
        %v6998 = vadd.f32 %v6789, %v6982
        %v6999 = vadd.f32 %v6790, %v6983
        %v7000 = vadd.f32 %v6791, %v6984
        %v7001 = vadd.f32 %v6792, %v6985
        %v7002 = vadd.f32 %v6793, %v6986
        %v7003 = vadd.f32 %v6794, %v6987
        %v7004 = vadd.f32 %v6795, %v6988
        %v7005 = vadd.f32 %v6796, %v6989
        %v7006 = vadd.f32 %v6797, %v6990
        %v7007 = vxor.u32 %v6991, 2147483648
        %v7008 = vxor.u32 %v6992, 2147483648
        %v7009 = vxor.u32 %v6993, 2147483648
        %v7010 = vxor.u32 %v6994, 2147483648
        %v7011 = vxor.u32 %v6995, 2147483648
        %v7012 = vxor.u32 %v6996, 2147483648
        %v7013 = vxor.u32 %v6997, 2147483648
        %v7014 = vxor.u32 %v6998, 2147483648
        %v7015 = vxor.u32 %v6999, 2147483648
        %v7016 = vxor.u32 %v7000, 2147483648
        %v7017 = vxor.u32 %v7001, 2147483648
        %v7018 = vxor.u32 %v7002, 2147483648
        %v7019 = vxor.u32 %v7003, 2147483648
        %v7020 = vxor.u32 %v7004, 2147483648
        %v7021 = vxor.u32 %v7005, 2147483648
        %v7022 = vxor.u32 %v7006, 2147483648
        %v7023 = vmul.f32 %v7007, 1.442695
        %v7024 = vpow.pop %v7023
        %v7025 = vmul.f32 %v7008, 1.442695
        %v7026 = vpow.pop %v7025
        %v7027 = vmul.f32 %v7009, 1.442695
        %v7028 = vpow.pop %v7027
        %v7029 = vmul.f32 %v7010, 1.442695
        %v7030 = vpow.pop %v7029
        %v7031 = vmul.f32 %v7011, 1.442695
        %v7032 = vpow.pop %v7031
        %v7033 = vmul.f32 %v7012, 1.442695
        %v7034 = vpow.pop %v7033
        %v7035 = vmul.f32 %v7013, 1.442695
        %v7036 = vpow.pop %v7035
        %v7037 = vmul.f32 %v7014, 1.442695
        %v7038 = vpow.pop %v7037
        %v7039 = vmul.f32 %v7015, 1.442695
        %v7040 = vpow.pop %v7039
        %v7041 = vmul.f32 %v7016, 1.442695
        %v7042 = vpow.pop %v7041
        %v7043 = vmul.f32 %v7017, 1.442695
        %v7044 = vpow.pop %v7043
        %v7045 = vmul.f32 %v7018, 1.442695
        %v7046 = vpow.pop %v7045
        %v7047 = vmul.f32 %v7019, 1.442695
        %v7048 = vpow.pop %v7047
        %v7049 = vmul.f32 %v7020, 1.442695
        %v7050 = vpow.pop %v7049
        %v7051 = vmul.f32 %v7021, 1.442695
        %v7052 = vpow.pop %v7051
        %v7053 = vmul.f32 %v7022, 1.442695
        %v7054 = vpow.pop %v7053
        %v7055 = vadd.f32 %v7024, 1.0
        %v7056 = vadd.f32 %v7026, 1.0
        %v7057 = vadd.f32 %v7028, 1.0
        %v7058 = vadd.f32 %v7030, 1.0
        %v7059 = vadd.f32 %v7032, 1.0
        %v7060 = vadd.f32 %v7034, 1.0
        %v7061 = vadd.f32 %v7036, 1.0
        %v7062 = vadd.f32 %v7038, 1.0
        %v7063 = vadd.f32 %v7040, 1.0
        %v7064 = vadd.f32 %v7042, 1.0
        %v7065 = vadd.f32 %v7044, 1.0
        %v7066 = vadd.f32 %v7046, 1.0
        %v7067 = vadd.f32 %v7048, 1.0
        %v7068 = vadd.f32 %v7050, 1.0
        %v7069 = vadd.f32 %v7052, 1.0
        %v7070 = vadd.f32 %v7054, 1.0
        %v7071 = vrcp.pop %v7055
        %v7072 = vmul.f32 1.0, %v7071
        %v7073 = vrcp.pop %v7056
        %v7074 = vmul.f32 1.0, %v7073
        %v7075 = vrcp.pop %v7057
        %v7076 = vmul.f32 1.0, %v7075
        %v7077 = vrcp.pop %v7058
        %v7078 = vmul.f32 1.0, %v7077
        %v7079 = vrcp.pop %v7059
        %v7080 = vmul.f32 1.0, %v7079
        %v7081 = vrcp.pop %v7060
        %v7082 = vmul.f32 1.0, %v7081
        %v7083 = vrcp.pop %v7061
        %v7084 = vmul.f32 1.0, %v7083
        %v7085 = vrcp.pop %v7062
        %v7086 = vmul.f32 1.0, %v7085
        %v7087 = vrcp.pop %v7063
        %v7088 = vmul.f32 1.0, %v7087
        %v7089 = vrcp.pop %v7064
        %v7090 = vmul.f32 1.0, %v7089
        %v7091 = vrcp.pop %v7065
        %v7092 = vmul.f32 1.0, %v7091
        %v7093 = vrcp.pop %v7066
        %v7094 = vmul.f32 1.0, %v7093
        %v7095 = vrcp.pop %v7067
        %v7096 = vmul.f32 1.0, %v7095
        %v7097 = vrcp.pop %v7068
        %v7098 = vmul.f32 1.0, %v7097
        %v7099 = vrcp.pop %v7069
        %v7100 = vmul.f32 1.0, %v7099
        %v7101 = vrcp.pop %v7070
        %v7102 = vmul.f32 1.0, %v7101
        %v7103 = vadd.f32 %v7072, 1.0
        %v7104 = vadd.f32 %v7074, 1.0
        %v7105 = vadd.f32 %v7076, 1.0
        %v7106 = vadd.f32 %v7078, 1.0
        %v7107 = vadd.f32 %v7080, 1.0
        %v7108 = vadd.f32 %v7082, 1.0
        %v7109 = vadd.f32 %v7084, 1.0
        %v7110 = vadd.f32 %v7086, 1.0
        %v7111 = vadd.f32 %v7088, 1.0
        %v7112 = vadd.f32 %v7090, 1.0
        %v7113 = vadd.f32 %v7092, 1.0
        %v7114 = vadd.f32 %v7094, 1.0
        %v7115 = vadd.f32 %v7096, 1.0
        %v7116 = vadd.f32 %v7098, 1.0
        %v7117 = vadd.f32 %v7100, 1.0
        %v7118 = vadd.f32 %v7102, 1.0
        %v7119 = vmul.f32 %v2189, %v7103
        %v7120 = vmul.f32 %v2190, %v7104
        %v7121 = vmul.f32 %v2191, %v7105
        %v7122 = vmul.f32 %v2192, %v7106
        %v7123 = vmul.f32 %v2193, %v7107
        %v7124 = vmul.f32 %v2194, %v7108
        %v7125 = vmul.f32 %v2195, %v7109
        %v7126 = vmul.f32 %v2196, %v7110
        %v7127 = vmul.f32 %v2197, %v7111
        %v7128 = vmul.f32 %v2198, %v7112
        %v7129 = vmul.f32 %v2199, %v7113
        %v7130 = vmul.f32 %v2200, %v7114
        %v7131 = vmul.f32 %v2201, %v7115
        %v7132 = vmul.f32 %v2202, %v7116
        %v7133 = vmul.f32 %v2203, %v7117
        %v7134 = vmul.f32 %v2204, %v7118
        %7135 = vst [vmem:[%s422] sm:$0xff] %v7119
        %7136 = vst [vmem:[%s422 + $0x8] sm:$0xff] %v7120
        %7137 = vst [vmem:[%s422 + $0x10] sm:$0xff] %v7121
        %7138 = vst [vmem:[%s422 + $0x18] sm:$0xff] %v7122
        %7139 = vst [vmem:[%s422 + $0x20] sm:$0xff] %v7123
        %7140 = vst [vmem:[%s422 + $0x28] sm:$0xff] %v7124
        %7141 = vst [vmem:[%s422 + $0x30] sm:$0xff] %v7125
        %7142 = vst [vmem:[%s422 + $0x38] sm:$0xff] %v7126
        %7143 = vst [vmem:[%s422 + $0x40] sm:$0xff] %v7127
        %7144 = vst [vmem:[%s422 + $0x48] sm:$0xff] %v7128
        %7145 = vst [vmem:[%s422 + $0x50] sm:$0xff] %v7129
        %7146 = vst [vmem:[%s422 + $0x58] sm:$0xff] %v7130
        %7147 = vst [vmem:[%s422 + $0x60] sm:$0xff] %v7131
        %7148 = vst [vmem:[%s422 + $0x68] sm:$0xff] %v7132
        %7149 = vst [vmem:[%s422 + $0x70] sm:$0xff] %v7133
        %7150 = vst [vmem:[%s422 + $0x78] sm:$0xff] %v7134
        %s7151 = sand.u32 %s252, 1
        %s7152 = scalar_lea.sflag [#allocation4], %s7151
        %s7153 = sand.u32 %s252, 1
        %s7154 = smul.addr %s7153, 128
        %s7155 = scalar_lea.vmem [#allocation10], %s7154
        // Predicated region
        $region77: #{tpu_custom_call.1} parent=59 // pred_check
          %p7156 = pneg %p262
        $region78: #{tpu_custom_call.1} parent=59 // pred_check_branch
          %7158 = sbr.rel (%p7156) target = $region80
        $region79: #{tpu_custom_call.1} parent=59 // pred_region
          %s7159 = smul.u32 16, %s29
          %s7161 = ssub.s32 2048, 2048
          %7162 = vsyncadd %s7152, %s7161
          %s7163 = smul.addr %s7159, 128
          %s7164 = scalar_lea.hbm %s10, %s7163
          %s7165 = sshll.u32 %s7155, 4
          %s7166 = int_to_ptr.vmem [resolvable:$true] %s7165
          %7171 = dma.vmem_to_hbm [thread:$0]  %s7166, 2048, %s7164, %s7152, 128, 128, 8
        $region80: #{tpu_custom_call.1} parent=59 // pred_fallthru
          _
      $region60: #{tpu_custom_call.1} parent=5 // pred_fallthru
        _
      %p7172 = scmp.le.s32.totalorder 2, %s24
      // Predicated region
      $region81: #{tpu_custom_call.1} parent=5 // pred_check
        %p7173 = pneg %p7172
      $region82: #{tpu_custom_call.1} parent=5 // pred_check_branch
        %7175 = sbr.rel (%p7173) target = $region84
      $region83: #{tpu_custom_call.1} parent=5 // pred_region
        %s7176 = ssub.s32 %s24, 2
        // Predicated region
        $region85: #{tpu_custom_call.1} parent=83 // pred_check
          %p7177 = pneg %p268
        $region86: #{tpu_custom_call.1} parent=83 // pred_check_branch
          %7179 = sbr.rel (%p7177) target = $region88
        $region87: #{tpu_custom_call.1} parent=83 // pred_region
          %s7180 = sand.u32 %s253, 1
          %s7181 = scalar_lea.sflag [#allocation4], %s7180
          %s7182 = sand.u32 %s253, 1
          %s7183 = smul.addr %s7182, 128
          %s7184 = scalar_lea.vmem [#allocation10], %s7183
          %7185 = dma.done %s7181, 2048
        $region88: #{tpu_custom_call.1} parent=83 // pred_fallthru
          _
      $region84: #{tpu_custom_call.1} parent=5 // pred_fallthru
        _
    $region6: #{tpu_custom_call.1} parent=1 // loop_footer
      %s28 = sadd.s32 1, %s24
    $region7: #{tpu_custom_call.1} parent=1 // loop_footer_branch
      %23 = sbr.rel target = $region3
    $region8: #{tpu_custom_call.1} parent=1 // loop_exit
      _
    %7186 = vsyncpa [#allocation3], 1
    %s7187 = scalar_lea.sflag [#allocation3], 1
    %7188 = vsyncpa %s7187, 1
    %7189 = vsyncpa [#allocation6], 1
    %7190 = vsyncpa [#allocation9], 1
    %7191 = vsyncpa [#allocation4], 1
    %s7192 = scalar_lea.sflag [#allocation4], 1
    %7193 = vsyncpa %s7192, 1

</llo_original>
